<compile_context>
chip_gen: v5e
topology: v5e:2x2
jax: 0.10.0
libtpu: 0.0.40
codegen_flags: <defaults>
</compile_context>

<pallas_src>
import jax
import jax.numpy as jnp
from jax import lax
from jax.experimental import pallas as pl
from jax.experimental.pallas import tpu as pltpu

N_SAMPLES = 2 ** 14
N_FRAMES = N_SAMPLES // 256   # 64
DIM = 32                      # embedding dim (module arg)
K = 7                         # conv kernel size
PAD = 3                       # "same" padding

# lax.dot_general dims: contract lhs dim 1 with rhs dim 1 (rhs transposed).
_TRANS_RHS_DIMS = (((1,), (1,)), ((), ()))


def _leaky_relu(x, slope=0.2):
    # Equivalent to LeakyReLU(0.2) for slope < 1; mul+max instead of cmp+select.
    return jnp.maximum(x, slope * x)


def _tap_stack(h, cin):
    """h: (TB, L, Cin) f32 -> (TB*L, K*Cin) im2col over the 7 taps (zero pad 3)."""
    tb, L, _ = h.shape
    zeros = jnp.zeros((tb, PAD, cin), jnp.float32)
    hp = jnp.concatenate([zeros, h, zeros], axis=1)                  # (TB, L+6, Cin)
    stk = jnp.concatenate([hp[:, k:k + L, :] for k in range(K)], axis=-1)
    return stk.reshape(tb * L, K * cin)                              # leading merge (L % 8 == 0)


def embed_amp_kernel(x_ref, w1_ref, b1_ref, w2_ref, b2_ref, w3t_ref, b3_ref,
                     o_ref):
    # x_ref: (TB, L) f32; w1: (K, 16) bf16; w2: (K*16, 32) bf16;
    # w3t: (dim, K*32) bf16; b1: (1, 16) f32; b2: (1, 32) f32; b3: (dim, 1) f32;
    # o_ref: (dim, TB*L) f32  (transposed, lane-dense output block)
    tb, L = x_ref.shape
    c1 = w1_ref.shape[1]
    c2 = w2_ref.shape[1]

    # ---- layer 1: Conv1d(1, 16, 7) as one (TB*L, 7) @ (7, 16) MXU matmul -----
    x3 = x_ref[...].astype(jnp.float32)[:, :, None]                  # (TB, L, 1)
    stk1 = _tap_stack(x3, 1)                                         # (TB*L, 7)
    h = jnp.dot(stk1.astype(jnp.bfloat16), w1_ref[...],
                preferred_element_type=jnp.float32) + b1_ref[...]
    h = _leaky_relu(h).reshape(tb, L, c1)                            # (TB, L, 16)

    # ---- layer 2: Conv1d(16, 32, 7) as one (TB*L, 112) @ (112, 32) matmul ----
    stk2 = _tap_stack(h, c1)
    h = jnp.dot(stk2.astype(jnp.bfloat16), w2_ref[...],
                preferred_element_type=jnp.float32) + b2_ref[...]
    h = _leaky_relu(h).reshape(tb, L, c2)                            # (TB, L, 32)

    # ---- layer 3: Conv1d(32, dim, 7), produced transposed so the store is
    # lane-dense: (dim, 224) @ (TB*L, 224)^T -> (dim, TB*L) on the MXU ---------
    stk3 = _tap_stack(h, c2)                                         # (TB*L, 224)
    o_t = lax.dot_general(w3t_ref[...], stk3.astype(jnp.bfloat16),
                          _TRANS_RHS_DIMS, preferred_element_type=jnp.float32)
    o_ref[...] = (o_t + b3_ref[...]).astype(o_ref.dtype)


def embed_amp(x, params, block_b=64):
    """x: any shape reshapable to (-1, N_FRAMES). Returns (B, N_FRAMES, dim)."""
    w1, b1, w2, b2, w3, b3 = params
    c1 = w1.shape[2]
    c2 = w2.shape[2]
    dim = w3.shape[2]

    x = x.reshape(-1, N_FRAMES).astype(jnp.float32)                  # (B, L)
    B = x.shape[0]

    # Batch tile: multiple of 8 sublanes (or == B); keep >= 2 grid blocks when
    # possible so both v7x TensorCores get work from the "parallel" axis.
    tb = min(block_b, B)
    if tb < B:
        tb = max(8, (tb // 8) * 8)
    elif B >= 16:
        tb = max(8, ((B // 2 + 7) // 8) * 8)
    n_blocks = -(-B // tb)
    Bp = n_blocks * tb
    if Bp != B:
        x = jnp.concatenate(
            [x, jnp.zeros((Bp - B, N_FRAMES), jnp.float32)], axis=0)

    # Pre-stack weights for tap-stacked matmuls and cast to bf16 (MXU native);
    # biases stay f32 (f32 accumulation inside the kernel).
    w1k = w1.reshape(K * 1, c1).astype(jnp.bfloat16)                 # (7, 16)
    w2k = w2.reshape(K * c1, c2).astype(jnp.bfloat16)                # (112, 32)
    w3t = w3.reshape(K * c2, dim).T.astype(jnp.bfloat16)             # (dim, 224)
    b3t = b3.reshape(dim, 1)                                         # (dim, 1)

    def full2d(a):
        return pl.BlockSpec(a.shape, lambda i: (0, 0))

    out = pl.pallas_call(
        embed_amp_kernel,
        out_shape=jax.ShapeDtypeStruct((dim, Bp * N_FRAMES), jnp.float32),
        grid_spec=pltpu.PrefetchScalarGridSpec(
            num_scalar_prefetch=0,
            grid=(n_blocks,),
            in_specs=[
                pl.BlockSpec((tb, N_FRAMES), lambda i: (i, 0)),      # x
                full2d(w1k), full2d(b1),
                full2d(w2k), full2d(b2),
                full2d(w3t), full2d(b3t),
            ],
            out_specs=pl.BlockSpec((dim, tb * N_FRAMES), lambda i: (0, i)),
        ),
        compiler_params=pltpu.CompilerParams(
            dimension_semantics=("parallel",),
            vmem_limit_bytes=48 * 1024 * 1024,
        ),
    )(x, w1k, b1, w2k, b2, w3t, b3t)

    # (dim, Bp*L) -> (B, L, dim)
    return out.reshape(dim, Bp, N_FRAMES).transpose(1, 2, 0)[:B]


def init_params(key):
    """Deterministic synthetic init; shapes match nn.Conv1d(cin, cout, 7)."""
    ks = jax.random.split(key, 6)

    def conv_init(kw, kb, cin, cout):
        bound = 1.0 / (cin * K) ** 0.5
        # stored as (K, Cin, Cout)  (PyTorch stores (Cout, Cin, K))
        w = jax.random.uniform(kw, (K, cin, cout), jnp.float32, -bound, bound)
        b = jax.random.uniform(kb, (1, cout), jnp.float32, -bound, bound)
        return w, b

    w1, b1 = conv_init(ks[0], ks[1], 1, 16)
    w2, b2 = conv_init(ks[2], ks[3], 16, 32)
    w3, b3 = conv_init(ks[4], ks[5], 32, DIM)
    return (w1, b1, w2, b2, w3, b3)


def embed_amp_ref(x, params):
    """Pure-JAX reference using lax.conv (NCW, same as the PyTorch module)."""
    w1, b1, w2, b2, w3, b3 = params
    h = x.reshape(-1, 1, N_FRAMES).astype(jnp.float32)               # NCW

    def conv(h, w, b):
        w_oiw = jnp.transpose(w, (2, 1, 0))                          # (Cout, Cin, K)
        y = lax.conv_general_dilated(
            h, w_oiw, window_strides=(1,), padding=[(PAD, PAD)],
            dimension_numbers=("NCW", "OIW", "NCW"))
        return y + b.reshape(1, -1, 1)

    h = jax.nn.leaky_relu(conv(h, w1, b1), 0.2)
    h = jax.nn.leaky_relu(conv(h, w2, b2), 0.2)
    h = conv(h, w3, b3)
    return jnp.transpose(h, (0, 2, 1))                               # (B, L, dim)


if __name__ == "__main__":
    key = jax.random.PRNGKey(0)
    kx, kp = jax.random.split(key)

    B = 12
    # Module does x.view(-1, 1, n_frames); feed (B, n_frames).
    x = jax.random.normal(kx, (B, N_FRAMES), dtype=jnp.float32)
    params = init_params(kp)

    # block_b=8 -> tb=8, grid=(2,), Bp=16: exercises batch blocking, padding
    # and the multi-block (both-TC) path at small demo size.
    out = jax.block_until_ready(embed_amp(x, params, block_b=8))
    assert out.shape == (B, N_FRAMES, DIM), out.shape

    ref = jax.block_until_ready(embed_amp_ref(x, params))
    max_err = float(jnp.max(jnp.abs(out - ref)))
    # bf16 matmul operands with f32 accumulation (review item); tolerance
    # relaxed accordingly (f32 activations/biases, per-layer bf16 rounding).
    assert jnp.allclose(out, ref, atol=5e-3, rtol=5e-3), max_err

    print("KERNEL_OK")
</pallas_src>

<mosaic_0001>
module attributes {stable_mosaic.version = 11 : i64} {
  func.func @embed_amp_kernel(%arg0: i32, %arg1: memref<8x64xf32, #tpu.memory_space<vmem>>, %arg2: memref<7x16xbf16, #tpu.memory_space<vmem>>, %arg3: memref<1x16xf32, #tpu.memory_space<vmem>>, %arg4: memref<112x32xbf16, #tpu.memory_space<vmem>>, %arg5: memref<1x32xf32, #tpu.memory_space<vmem>>, %arg6: memref<32x224xbf16, #tpu.memory_space<vmem>>, %arg7: memref<32x1xf32, #tpu.memory_space<vmem>>, %arg8: memref<32x512xf32, #tpu.memory_space<vmem>>) attributes {dimension_semantics = [#tpu.dimension_semantics<parallel>], iteration_bounds = array<i64: 2>, scalar_prefetch = 0 : i64, scratch_operands = 0 : i64, tpu.core_type = #tpu.core_type<tc>, window_params = [{transform_indices = @transform_0, window_bounds = array<i64: 8, 64>}, {pipeline_mode = #tpu.pipeline_mode<synchronous>, transform_indices = @transform_1, window_bounds = array<i64: 7, 16>}, {pipeline_mode = #tpu.pipeline_mode<synchronous>, transform_indices = @transform_2, window_bounds = array<i64: 1, 16>}, {pipeline_mode = #tpu.pipeline_mode<synchronous>, transform_indices = @transform_3, window_bounds = array<i64: 112, 32>}, {pipeline_mode = #tpu.pipeline_mode<synchronous>, transform_indices = @transform_4, window_bounds = array<i64: 1, 32>}, {pipeline_mode = #tpu.pipeline_mode<synchronous>, transform_indices = @transform_5, window_bounds = array<i64: 32, 224>}, {pipeline_mode = #tpu.pipeline_mode<synchronous>, transform_indices = @transform_6, window_bounds = array<i64: 32, 1>}, {transform_indices = @transform_7, window_bounds = array<i64: 32, 512>}]} {
    %c0 = arith.constant 0 : index
    %c0_0 = arith.constant 0 : index
    %0 = vector.load %arg1[%c0, %c0_0] : memref<8x64xf32, #tpu.memory_space<vmem>>, vector<8x64xf32>
    %1 = vector.shape_cast %0 : vector<8x64xf32> to vector<8x64x1xf32>
    %cst = arith.constant 0.000000e+00 : f32
    %2 = vector.broadcast %cst : f32 to vector<8x3x1xf32>
    %3 = tpu.concatenate %2, %1, %2 in 1 : vector<8x3x1xf32>, vector<8x64x1xf32>, vector<8x3x1xf32> -> vector<8x70x1xf32>
    %4 = vector.extract_strided_slice %3 {offsets = [0, 0, 0], sizes = [8, 64, 1], strides = [1, 1, 1]} : vector<8x70x1xf32> to vector<8x64x1xf32>
    %5 = vector.extract_strided_slice %3 {offsets = [0, 1, 0], sizes = [8, 64, 1], strides = [1, 1, 1]} : vector<8x70x1xf32> to vector<8x64x1xf32>
    %6 = vector.extract_strided_slice %3 {offsets = [0, 2, 0], sizes = [8, 64, 1], strides = [1, 1, 1]} : vector<8x70x1xf32> to vector<8x64x1xf32>
    %7 = vector.extract_strided_slice %3 {offsets = [0, 3, 0], sizes = [8, 64, 1], strides = [1, 1, 1]} : vector<8x70x1xf32> to vector<8x64x1xf32>
    %8 = vector.extract_strided_slice %3 {offsets = [0, 4, 0], sizes = [8, 64, 1], strides = [1, 1, 1]} : vector<8x70x1xf32> to vector<8x64x1xf32>
    %9 = vector.extract_strided_slice %3 {offsets = [0, 5, 0], sizes = [8, 64, 1], strides = [1, 1, 1]} : vector<8x70x1xf32> to vector<8x64x1xf32>
    %10 = vector.extract_strided_slice %3 {offsets = [0, 6, 0], sizes = [8, 64, 1], strides = [1, 1, 1]} : vector<8x70x1xf32> to vector<8x64x1xf32>
    %11 = tpu.concatenate %4, %5, %6, %7, %8, %9, %10 in 2 : vector<8x64x1xf32>, vector<8x64x1xf32>, vector<8x64x1xf32>, vector<8x64x1xf32>, vector<8x64x1xf32>, vector<8x64x1xf32>, vector<8x64x1xf32> -> vector<8x64x7xf32>
    %12 = vector.shape_cast %11 : vector<8x64x7xf32> to vector<512x7xf32>
    %13 = arith.truncf %12 : vector<512x7xf32> to vector<512x7xbf16>
    %c0_1 = arith.constant 0 : index
    %c0_2 = arith.constant 0 : index
    %14 = vector.load %arg2[%c0_1, %c0_2] : memref<7x16xbf16, #tpu.memory_space<vmem>>, vector<7x16xbf16>
    %cst_3 = arith.constant dense<0.000000e+00> : vector<512x16xf32>
    %15 = tpu.matmul %13, %14, %cst_3 {dimension_numbers = #tpu.dot_dimension_numbers<[1], [0], [0], [1], [0, 0, 1, 1], [], []>} : vector<512x7xbf16>, vector<7x16xbf16>, vector<512x16xf32> -> vector<512x16xf32>
    %c0_4 = arith.constant 0 : index
    %c0_5 = arith.constant 0 : index
    %16 = vector.load %arg3[%c0_4, %c0_5] : memref<1x16xf32, #tpu.memory_space<vmem>>, vector<1x16xf32>
    %17 = vector.broadcast %16 : vector<1x16xf32> to vector<512x16xf32>
    %18 = arith.addf %15, %17 : vector<512x16xf32>
    %cst_6 = arith.constant 2.000000e-01 : f32
    %19 = vector.broadcast %cst_6 : f32 to vector<512x16xf32>
    %20 = arith.mulf %19, %18 : vector<512x16xf32>
    %21 = arith.maximumf %18, %20 : vector<512x16xf32>
    %22 = vector.shape_cast %21 : vector<512x16xf32> to vector<8x64x16xf32>
    %cst_7 = arith.constant 0.000000e+00 : f32
    %23 = vector.broadcast %cst_7 : f32 to vector<8x3x16xf32>
    %24 = tpu.concatenate %23, %22, %23 in 1 : vector<8x3x16xf32>, vector<8x64x16xf32>, vector<8x3x16xf32> -> vector<8x70x16xf32>
    %25 = vector.extract_strided_slice %24 {offsets = [0, 0, 0], sizes = [8, 64, 16], strides = [1, 1, 1]} : vector<8x70x16xf32> to vector<8x64x16xf32>
    %26 = vector.extract_strided_slice %24 {offsets = [0, 1, 0], sizes = [8, 64, 16], strides = [1, 1, 1]} : vector<8x70x16xf32> to vector<8x64x16xf32>
    %27 = vector.extract_strided_slice %24 {offsets = [0, 2, 0], sizes = [8, 64, 16], strides = [1, 1, 1]} : vector<8x70x16xf32> to vector<8x64x16xf32>
    %28 = vector.extract_strided_slice %24 {offsets = [0, 3, 0], sizes = [8, 64, 16], strides = [1, 1, 1]} : vector<8x70x16xf32> to vector<8x64x16xf32>
    %29 = vector.extract_strided_slice %24 {offsets = [0, 4, 0], sizes = [8, 64, 16], strides = [1, 1, 1]} : vector<8x70x16xf32> to vector<8x64x16xf32>
    %30 = vector.extract_strided_slice %24 {offsets = [0, 5, 0], sizes = [8, 64, 16], strides = [1, 1, 1]} : vector<8x70x16xf32> to vector<8x64x16xf32>
    %31 = vector.extract_strided_slice %24 {offsets = [0, 6, 0], sizes = [8, 64, 16], strides = [1, 1, 1]} : vector<8x70x16xf32> to vector<8x64x16xf32>
    %32 = tpu.concatenate %25, %26, %27, %28, %29, %30, %31 in 2 : vector<8x64x16xf32>, vector<8x64x16xf32>, vector<8x64x16xf32>, vector<8x64x16xf32>, vector<8x64x16xf32>, vector<8x64x16xf32>, vector<8x64x16xf32> -> vector<8x64x112xf32>
    %33 = vector.shape_cast %32 : vector<8x64x112xf32> to vector<512x112xf32>
    %34 = arith.truncf %33 : vector<512x112xf32> to vector<512x112xbf16>
    %c0_8 = arith.constant 0 : index
    %c0_9 = arith.constant 0 : index
    %35 = vector.load %arg4[%c0_8, %c0_9] : memref<112x32xbf16, #tpu.memory_space<vmem>>, vector<112x32xbf16>
    %cst_10 = arith.constant dense<0.000000e+00> : vector<512x32xf32>
    %36 = tpu.matmul %34, %35, %cst_10 {dimension_numbers = #tpu.dot_dimension_numbers<[1], [0], [0], [1], [0, 0, 1, 1], [], []>} : vector<512x112xbf16>, vector<112x32xbf16>, vector<512x32xf32> -> vector<512x32xf32>
    %c0_11 = arith.constant 0 : index
    %c0_12 = arith.constant 0 : index
    %37 = vector.load %arg5[%c0_11, %c0_12] : memref<1x32xf32, #tpu.memory_space<vmem>>, vector<1x32xf32>
    %38 = vector.broadcast %37 : vector<1x32xf32> to vector<512x32xf32>
    %39 = arith.addf %36, %38 : vector<512x32xf32>
    %cst_13 = arith.constant 2.000000e-01 : f32
    %40 = vector.broadcast %cst_13 : f32 to vector<512x32xf32>
    %41 = arith.mulf %40, %39 : vector<512x32xf32>
    %42 = arith.maximumf %39, %41 : vector<512x32xf32>
    %43 = vector.shape_cast %42 : vector<512x32xf32> to vector<8x64x32xf32>
    %cst_14 = arith.constant 0.000000e+00 : f32
    %44 = vector.broadcast %cst_14 : f32 to vector<8x3x32xf32>
    %45 = tpu.concatenate %44, %43, %44 in 1 : vector<8x3x32xf32>, vector<8x64x32xf32>, vector<8x3x32xf32> -> vector<8x70x32xf32>
    %46 = vector.extract_strided_slice %45 {offsets = [0, 0, 0], sizes = [8, 64, 32], strides = [1, 1, 1]} : vector<8x70x32xf32> to vector<8x64x32xf32>
    %47 = vector.extract_strided_slice %45 {offsets = [0, 1, 0], sizes = [8, 64, 32], strides = [1, 1, 1]} : vector<8x70x32xf32> to vector<8x64x32xf32>
    %48 = vector.extract_strided_slice %45 {offsets = [0, 2, 0], sizes = [8, 64, 32], strides = [1, 1, 1]} : vector<8x70x32xf32> to vector<8x64x32xf32>
    %49 = vector.extract_strided_slice %45 {offsets = [0, 3, 0], sizes = [8, 64, 32], strides = [1, 1, 1]} : vector<8x70x32xf32> to vector<8x64x32xf32>
    %50 = vector.extract_strided_slice %45 {offsets = [0, 4, 0], sizes = [8, 64, 32], strides = [1, 1, 1]} : vector<8x70x32xf32> to vector<8x64x32xf32>
    %51 = vector.extract_strided_slice %45 {offsets = [0, 5, 0], sizes = [8, 64, 32], strides = [1, 1, 1]} : vector<8x70x32xf32> to vector<8x64x32xf32>
    %52 = vector.extract_strided_slice %45 {offsets = [0, 6, 0], sizes = [8, 64, 32], strides = [1, 1, 1]} : vector<8x70x32xf32> to vector<8x64x32xf32>
    %53 = tpu.concatenate %46, %47, %48, %49, %50, %51, %52 in 2 : vector<8x64x32xf32>, vector<8x64x32xf32>, vector<8x64x32xf32>, vector<8x64x32xf32>, vector<8x64x32xf32>, vector<8x64x32xf32>, vector<8x64x32xf32> -> vector<8x64x224xf32>
    %54 = vector.shape_cast %53 : vector<8x64x224xf32> to vector<512x224xf32>
    %c0_15 = arith.constant 0 : index
    %c0_16 = arith.constant 0 : index
    %55 = vector.load %arg6[%c0_15, %c0_16] : memref<32x224xbf16, #tpu.memory_space<vmem>>, vector<32x224xbf16>
    %56 = arith.truncf %54 : vector<512x224xf32> to vector<512x224xbf16>
    %cst_17 = arith.constant dense<0.000000e+00> : vector<32x512xf32>
    %57 = tpu.matmul %55, %56, %cst_17 {dimension_numbers = #tpu.dot_dimension_numbers<[1], [1], [0], [0], [0, 0, 1, 0], [], []>} : vector<32x224xbf16>, vector<512x224xbf16>, vector<32x512xf32> -> vector<32x512xf32>
    %c0_18 = arith.constant 0 : index
    %c0_19 = arith.constant 0 : index
    %58 = vector.load %arg7[%c0_18, %c0_19] : memref<32x1xf32, #tpu.memory_space<vmem>>, vector<32x1xf32>
    %59 = vector.broadcast %58 : vector<32x1xf32> to vector<32x512xf32>
    %60 = arith.addf %57, %59 : vector<32x512xf32>
    %c0_20 = arith.constant 0 : index
    %c0_21 = arith.constant 0 : index
    %61 = vector.load %arg8[%c0_20, %c0_21] : memref<32x512xf32, #tpu.memory_space<vmem>>, vector<32x512xf32>
    tpu.vector_store %arg8[%c0_20, %c0_21], %60 {strides = array<i32>} : memref<32x512xf32, #tpu.memory_space<vmem>>, vector<32x512xf32>,
    return
  }
  func.func @transform_0(%arg0: i32) -> (i32, i32) {
    %c0_i32 = arith.constant 0 : i32
    %c0_i32_0 = arith.constant 0 : i32
    return %arg0, %c0_i32 : i32, i32
  }
  func.func @transform_1(%arg0: i32) -> (i32, i32) {
    %c0_i32 = arith.constant 0 : i32
    %c0_i32_0 = arith.constant 0 : i32
    %c0_i32_1 = arith.constant 0 : i32
    return %c0_i32, %c0_i32_0 : i32, i32
  }
  func.func @transform_2(%arg0: i32) -> (i32, i32) {
    %c0_i32 = arith.constant 0 : i32
    %c0_i32_0 = arith.constant 0 : i32
    %c0_i32_1 = arith.constant 0 : i32
    return %c0_i32, %c0_i32_0 : i32, i32
  }
  func.func @transform_3(%arg0: i32) -> (i32, i32) {
    %c0_i32 = arith.constant 0 : i32
    %c0_i32_0 = arith.constant 0 : i32
    %c0_i32_1 = arith.constant 0 : i32
    return %c0_i32, %c0_i32_0 : i32, i32
  }
  func.func @transform_4(%arg0: i32) -> (i32, i32) {
    %c0_i32 = arith.constant 0 : i32
    %c0_i32_0 = arith.constant 0 : i32
    %c0_i32_1 = arith.constant 0 : i32
    return %c0_i32, %c0_i32_0 : i32, i32
  }
  func.func @transform_5(%arg0: i32) -> (i32, i32) {
    %c0_i32 = arith.constant 0 : i32
    %c0_i32_0 = arith.constant 0 : i32
    %c0_i32_1 = arith.constant 0 : i32
    return %c0_i32, %c0_i32_0 : i32, i32
  }
  func.func @transform_6(%arg0: i32) -> (i32, i32) {
    %c0_i32 = arith.constant 0 : i32
    %c0_i32_0 = arith.constant 0 : i32
    %c0_i32_1 = arith.constant 0 : i32
    return %c0_i32, %c0_i32_0 : i32, i32
  }
  func.func @transform_7(%arg0: i32) -> (i32, i32) {
    %c0_i32 = arith.constant 0 : i32
    %c0_i32_0 = arith.constant 0 : i32
    return %c0_i32, %arg0 : i32, i32
  }
}

</mosaic_0001>

<llo_original>
// kernel: tpu_custom_call.1
$region0: #{tpu_custom_call.1}
  #allocation0 [shape = 'u32[]', space=smem, size = 0x4, offset = 0x4, fixed_abs, tag = 'smem constant byte address 0x4 - core index']
  #allocation1 [shape = 'u32[72,128]{1,0:T(1,128)}', space=vmem, size = 0x9000, scoped, tag = 'internal scratch']
  %s0 = inlined_call_operand.vmem [shape: f32[16,64], index: 0, kind: input, shape index: {}]
  %s1 = inlined_call_operand.vmem [shape: bf16[7,16], index: 1, kind: input, shape index: {}]
  %s2 = inlined_call_operand.vmem [shape: f32[1,16], index: 2, kind: input, shape index: {}]
  %s3 = inlined_call_operand.vmem [shape: bf16[112,32], index: 3, kind: input, shape index: {}]
  %s4 = inlined_call_operand.vmem [shape: f32[1,32], index: 4, kind: input, shape index: {}]
  %s5 = inlined_call_operand.vmem [shape: bf16[32,224], index: 5, kind: input, shape index: {}]
  %s6 = inlined_call_operand.vmem [shape: f32[32,1], index: 6, kind: input, shape index: {}]
  %s7 = inlined_call_operand.hbm [shape: f32[32,1024], index: 7, kind: output, shape index: {}]
  %s8 = sld [smem:[#allocation0]]
  $region61: #{tpu_custom_call.1} parent=0
    _
  %s10 = ssub.s32 1, %s8
  %s11 = scalar_select 0, %s10, %s8
  $region1: #{tpu_custom_call.1} parent=0
    #allocation2 [shape = 'u8[131072]{0}', space=vmem, size = 0x20000, scoped, tag = 'output window, operand 0']
    #allocation3 [shape = 's32[2]{0}', space=sflag, size = 0x8, scoped, tag = 'scoped memory for tpu_custom_call.1']
    %12 = vsyncpa [#allocation3], 0
    %s13 = scalar_lea.sflag [#allocation3], 1
    %14 = vsyncpa %s13, 0
    loop: start=0, step=1, limit=4
    $region2: #{tpu_custom_call.1} parent=1 // loop_pre_header
      _
    $region3: #{tpu_custom_call.1} parent=1 // loop_header
      %s16 = sphi 0, %s20
      %p17 = scmp.ge.s32.totalorder %s16, 4
      %s26 = sphi 0, %s28
      %s29 = sphi 0, %s26
      %s30 = sphi 0, %s29
      %s46 = sphi 0, %s30
      %s50 = sphi 0, %s50
      %s52 = sphi 0, %s50
      %s53 = sphi 0, %s52
      %s67 = sphi 0, %s53
      %s71 = sphi 0, %s71
      %s73 = sphi 0, %s71
      %s74 = sphi 0, %s73
      %s88 = sphi 0, %s74
      %s92 = sphi 0, %s92
      %s94 = sphi 0, %s92
      %s95 = sphi 0, %s94
      %s109 = sphi 0, %s95
      %s113 = sphi 0, %s113
      %s115 = sphi 0, %s113
      %s116 = sphi 0, %s115
      %s130 = sphi 0, %s116
      %s134 = sphi 0, %s134
      %s136 = sphi 0, %s134
      %s137 = sphi 0, %s136
      %s151 = sphi 0, %s137
      %s155 = sphi 0, %s155
      %s157 = sphi 0, %s155
      %s158 = sphi 0, %s157
      %s172 = sphi 0, %s158
      %s178 = sphi 0, %s180
      %s181 = sphi 0, %s178
      %s182 = sphi 0, %s181
      %s198 = sphi 0, %s182
    $region4: #{tpu_custom_call.1} parent=1 // loop_header_branch
      %19 = sbr.rel (%p17) target = $region8
    $region5: #{tpu_custom_call.1} parent=1 // loop_body
      %s21 = ssub.s32 %s16, 1
      %s22 = ssub.s32 %s16, 2
      %s23 = sadd.s32 %s16, 1
      %s24 = ssub.s32 %s16, %s23
      %p25 = scmp.eq.s32.totalorder %s24, 0
      %s27 = sadd.s32 %s26, 1
      %s28 = scalar_select %p25, %s26, %s27
      %p31 = pneg %p25
      %p32 = scmp.eq.s32.totalorder %s16, 1
      %p33 = por %p31, %p32
      %p34 = scmp.ne.s32.totalorder %s26, %s29
      %p35 = scmp.eq.s32.totalorder %s16, 0
      %p36 = por %p34, %p35
      %p37 = scmp.ne.s32.totalorder %s26, %s29
      %p38 = scmp.eq.s32.totalorder %s21, 1
      %p39 = por %p37, %p38
      %p40 = scmp.ne.s32.totalorder %s29, %s30
      %p41 = scmp.eq.s32.totalorder %s21, 0
      %p42 = por %p40, %p41
      %p43 = scmp.ne.s32.totalorder %s29, %s30
      %p44 = scmp.eq.s32.totalorder %s22, 1
      %p45 = por %p43, %p44
      %p47 = scmp.ne.s32.totalorder %s30, %s46
      %p48 = scmp.eq.s32.totalorder %s22, 0
      %p49 = por %p47, %p48
      %s51 = sadd.s32 %s50, 1
      %p54 = scmp.eq.s32.totalorder %s16, 1
      %p55 = scmp.ne.s32.totalorder %s50, %s52
      %p56 = scmp.eq.s32.totalorder %s16, 0
      %p57 = por %p55, %p56
      %p58 = scmp.ne.s32.totalorder %s50, %s52
      %p59 = scmp.eq.s32.totalorder %s21, 1
      %p60 = por %p58, %p59
      %p61 = scmp.ne.s32.totalorder %s52, %s53
      %p62 = scmp.eq.s32.totalorder %s21, 0
      %p63 = por %p61, %p62
      %p64 = scmp.ne.s32.totalorder %s52, %s53
      %p65 = scmp.eq.s32.totalorder %s22, 1
      %p66 = por %p64, %p65
      %p68 = scmp.ne.s32.totalorder %s53, %s67
      %p69 = scmp.eq.s32.totalorder %s22, 0
      %p70 = por %p68, %p69
      %s72 = sadd.s32 %s71, 1
      %p75 = scmp.eq.s32.totalorder %s16, 1
      %p76 = scmp.ne.s32.totalorder %s71, %s73
      %p77 = scmp.eq.s32.totalorder %s16, 0
      %p78 = por %p76, %p77
      %p79 = scmp.ne.s32.totalorder %s71, %s73
      %p80 = scmp.eq.s32.totalorder %s21, 1
      %p81 = por %p79, %p80
      %p82 = scmp.ne.s32.totalorder %s73, %s74
      %p83 = scmp.eq.s32.totalorder %s21, 0
      %p84 = por %p82, %p83
      %p85 = scmp.ne.s32.totalorder %s73, %s74
      %p86 = scmp.eq.s32.totalorder %s22, 1
      %p87 = por %p85, %p86
      %p89 = scmp.ne.s32.totalorder %s74, %s88
      %p90 = scmp.eq.s32.totalorder %s22, 0
      %p91 = por %p89, %p90
      %s93 = sadd.s32 %s92, 1
      %p96 = scmp.eq.s32.totalorder %s16, 1
      %p97 = scmp.ne.s32.totalorder %s92, %s94
      %p98 = scmp.eq.s32.totalorder %s16, 0
      %p99 = por %p97, %p98
      %p100 = scmp.ne.s32.totalorder %s92, %s94
      %p101 = scmp.eq.s32.totalorder %s21, 1
      %p102 = por %p100, %p101
      %p103 = scmp.ne.s32.totalorder %s94, %s95
      %p104 = scmp.eq.s32.totalorder %s21, 0
      %p105 = por %p103, %p104
      %p106 = scmp.ne.s32.totalorder %s94, %s95
      %p107 = scmp.eq.s32.totalorder %s22, 1
      %p108 = por %p106, %p107
      %p110 = scmp.ne.s32.totalorder %s95, %s109
      %p111 = scmp.eq.s32.totalorder %s22, 0
      %p112 = por %p110, %p111
      %s114 = sadd.s32 %s113, 1
      %p117 = scmp.eq.s32.totalorder %s16, 1
      %p118 = scmp.ne.s32.totalorder %s113, %s115
      %p119 = scmp.eq.s32.totalorder %s16, 0
      %p120 = por %p118, %p119
      %p121 = scmp.ne.s32.totalorder %s113, %s115
      %p122 = scmp.eq.s32.totalorder %s21, 1
      %p123 = por %p121, %p122
      %p124 = scmp.ne.s32.totalorder %s115, %s116
      %p125 = scmp.eq.s32.totalorder %s21, 0
      %p126 = por %p124, %p125
      %p127 = scmp.ne.s32.totalorder %s115, %s116
      %p128 = scmp.eq.s32.totalorder %s22, 1
      %p129 = por %p127, %p128
      %p131 = scmp.ne.s32.totalorder %s116, %s130
      %p132 = scmp.eq.s32.totalorder %s22, 0
      %p133 = por %p131, %p132
      %s135 = sadd.s32 %s134, 1
      %p138 = scmp.eq.s32.totalorder %s16, 1
      %p139 = scmp.ne.s32.totalorder %s134, %s136
      %p140 = scmp.eq.s32.totalorder %s16, 0
      %p141 = por %p139, %p140
      %p142 = scmp.ne.s32.totalorder %s134, %s136
      %p143 = scmp.eq.s32.totalorder %s21, 1
      %p144 = por %p142, %p143
      %p145 = scmp.ne.s32.totalorder %s136, %s137
      %p146 = scmp.eq.s32.totalorder %s21, 0
      %p147 = por %p145, %p146
      %p148 = scmp.ne.s32.totalorder %s136, %s137
      %p149 = scmp.eq.s32.totalorder %s22, 1
      %p150 = por %p148, %p149
      %p152 = scmp.ne.s32.totalorder %s137, %s151
      %p153 = scmp.eq.s32.totalorder %s22, 0
      %p154 = por %p152, %p153
      %s156 = sadd.s32 %s155, 1
      %p159 = scmp.eq.s32.totalorder %s16, 1
      %p160 = scmp.ne.s32.totalorder %s155, %s157
      %p161 = scmp.eq.s32.totalorder %s16, 0
      %p162 = por %p160, %p161
      %p163 = scmp.ne.s32.totalorder %s155, %s157
      %p164 = scmp.eq.s32.totalorder %s21, 1
      %p165 = por %p163, %p164
      %p166 = scmp.ne.s32.totalorder %s157, %s158
      %p167 = scmp.eq.s32.totalorder %s21, 0
      %p168 = por %p166, %p167
      %p169 = scmp.ne.s32.totalorder %s157, %s158
      %p170 = scmp.eq.s32.totalorder %s22, 1
      %p171 = por %p169, %p170
      %p173 = scmp.ne.s32.totalorder %s158, %s172
      %p174 = scmp.eq.s32.totalorder %s22, 0
      %p175 = por %p173, %p174
      %s176 = ssub.s32 %s16, %s23
      %p177 = scmp.eq.s32.totalorder %s176, 0
      %s179 = sadd.s32 %s178, 1
      %s180 = scalar_select %p177, %s178, %s179
      %p183 = pneg %p177
      %p184 = scmp.eq.s32.totalorder %s16, 1
      %p185 = por %p183, %p184
      %p186 = scmp.ne.s32.totalorder %s178, %s181
      %p187 = scmp.eq.s32.totalorder %s16, 0
      %p188 = por %p186, %p187
      %p189 = scmp.ne.s32.totalorder %s178, %s181
      %p190 = scmp.eq.s32.totalorder %s21, 1
      %p191 = por %p189, %p190
      %p192 = scmp.ne.s32.totalorder %s181, %s182
      %p193 = scmp.eq.s32.totalorder %s21, 0
      %p194 = por %p192, %p193
      %p195 = scmp.ne.s32.totalorder %s181, %s182
      %p196 = scmp.eq.s32.totalorder %s22, 1
      %p197 = por %p195, %p196
      %p199 = scmp.ne.s32.totalorder %s182, %s198
      %p200 = scmp.eq.s32.totalorder %s22, 0
      %p201 = por %p199, %p200
      %p202 = scmp.le.s32.totalorder 1, %s16
      %p203 = scmp.lt.s32.totalorder %s16, 3
      %p204 = pnand %p202, %p203
      %p205 = pneg %p204
      // Predicated region
      $region9: #{tpu_custom_call.1} parent=5 // pred_check
        _
      $region10: #{tpu_custom_call.1} parent=5 // pred_check_branch
        %207 = sbr.rel (%p204) target = $region12
      $region11: #{tpu_custom_call.1} parent=5 // pred_region
        %s208 = ssub.s32 %s16, 1
        // Predicated region
        $region13: #{tpu_custom_call.1} parent=11 // pred_check
          %p209 = pneg %p63
        $region14: #{tpu_custom_call.1} parent=11 // pred_check_branch
          %211 = sbr.rel (%p209) target = $region16
        $region15: #{tpu_custom_call.1} parent=11 // pred_region
          _
        $region16: #{tpu_custom_call.1} parent=11 // pred_fallthru
          _
        // Predicated region
        $region17: #{tpu_custom_call.1} parent=11 // pred_check
          %p212 = pneg %p84
        $region18: #{tpu_custom_call.1} parent=11 // pred_check_branch
          %214 = sbr.rel (%p212) target = $region20
        $region19: #{tpu_custom_call.1} parent=11 // pred_region
          _
        $region20: #{tpu_custom_call.1} parent=11 // pred_fallthru
          _
        // Predicated region
        $region21: #{tpu_custom_call.1} parent=11 // pred_check
          %p215 = pneg %p105
        $region22: #{tpu_custom_call.1} parent=11 // pred_check_branch
          %217 = sbr.rel (%p215) target = $region24
        $region23: #{tpu_custom_call.1} parent=11 // pred_region
          _
        $region24: #{tpu_custom_call.1} parent=11 // pred_fallthru
          _
        // Predicated region
        $region25: #{tpu_custom_call.1} parent=11 // pred_check
          %p218 = pneg %p126
        $region26: #{tpu_custom_call.1} parent=11 // pred_check_branch
          %220 = sbr.rel (%p218) target = $region28
        $region27: #{tpu_custom_call.1} parent=11 // pred_region
          _
        $region28: #{tpu_custom_call.1} parent=11 // pred_fallthru
          _
        // Predicated region
        $region29: #{tpu_custom_call.1} parent=11 // pred_check
          %p221 = pneg %p147
        $region30: #{tpu_custom_call.1} parent=11 // pred_check_branch
          %223 = sbr.rel (%p221) target = $region32
        $region31: #{tpu_custom_call.1} parent=11 // pred_region
          _
        $region32: #{tpu_custom_call.1} parent=11 // pred_fallthru
          _
        // Predicated region
        $region33: #{tpu_custom_call.1} parent=11 // pred_check
          %p224 = pneg %p168
        $region34: #{tpu_custom_call.1} parent=11 // pred_check_branch
          %226 = sbr.rel (%p224) target = $region36
        $region35: #{tpu_custom_call.1} parent=11 // pred_region
          _
        $region36: #{tpu_custom_call.1} parent=11 // pred_fallthru
          _
      $region12: #{tpu_custom_call.1} parent=5 // pred_fallthru
        _
      %p227 = scmp.lt.s32.totalorder %s16, 2
      // Predicated region
      $region37: #{tpu_custom_call.1} parent=5 // pred_check
        %p228 = pneg %p227
      $region38: #{tpu_custom_call.1} parent=5 // pred_check_branch
        %230 = sbr.rel (%p228) target = $region40
      $region39: #{tpu_custom_call.1} parent=5 // pred_region
        // Predicated region
        $region41: #{tpu_custom_call.1} parent=39 // pred_check
          %p231 = pneg %p36
        $region42: #{tpu_custom_call.1} parent=39 // pred_check_branch
          %233 = sbr.rel (%p231) target = $region44
        $region43: #{tpu_custom_call.1} parent=39 // pred_region
          %p234 = scmp.lt.s32.totalorder %s16, 1
          %s235 = scalar_select %p234, %s16, 1
          %s236 = smul.addr %s235, 8
          %s237 = scalar_lea.vmem %s0, %s236
        $region44: #{tpu_custom_call.1} parent=39 // pred_fallthru
          _
      $region40: #{tpu_custom_call.1} parent=5 // pred_fallthru
        _
      %p238 = scmp.le.s32.totalorder 1, %s16
      %p239 = scmp.lt.s32.totalorder %s16, 3
      %p240 = pnand %p238, %p239
      %p241 = pneg %p240
      // Predicated region
      $region45: #{tpu_custom_call.1} parent=5 // pred_check
        _
      $region46: #{tpu_custom_call.1} parent=5 // pred_check_branch
        %243 = sbr.rel (%p240) target = $region48
      $region47: #{tpu_custom_call.1} parent=5 // pred_region
        %s244 = ssub.s32 %s16, 1
        %p245 = scmp.lt.s32.totalorder %s21, 1
        %s246 = scalar_select %p245, %s21, 1
        %s247 = smul.addr %s246, 8
        %s248 = scalar_lea.vmem %s0, %s247
        %p249 = pneg %p42
        %p250 = pneg %p39
        %p251 = pneg %p63
        %p252 = pneg %p60
        %p253 = pneg %p84
        %p254 = pneg %p81
        %p255 = pneg %p105
        %p256 = pneg %p102
        %p257 = pneg %p126
        %p258 = pneg %p123
        %p259 = pneg %p147
        %p260 = pneg %p144
        %p261 = pneg %p168
        %p262 = pneg %p165
        %p263 = pneg %p194
        %p264 = pneg %p191
        %s265 = sand.u32 %s181, 1
        %s266 = scalar_lea.sflag [#allocation3], %s265
        %s267 = sand.u32 %s181, 1
        %s268 = smul.addr %s267, 128
        %s269 = scalar_lea.vmem [#allocation2], %s268
        %p270 = scmp.lt.s32.totalorder %s21, 1
        %s271 = scalar_select %p270, %s21, 1
        %s272 = smul.addr %s271, 8
        %s273 = scalar_lea.vmem %s0, %s272
        %s274 = smul.u32 4, %s21
        %v276 = vld [vmem:[%s273] sm:$0xff]
        %v277 = vperm.slane %v276, 0
        %v278 = vlaneseq
        %v279 = vshrl.u32 %v278, 7
        %281 = vset.pattern.permute.xlu0 %v279
        %282 = vperm.xlu0 %281, %v277
        %v283 = vpop.permute.xlu0 %282
        %v284 = vlaneseq
        %v285 = vshrl.u32 %v284, 7
        %v286 = vadd.s32 %v285, 8
        %287 = vset.pattern.permute.xlu0 %v286
        %288 = vperm.xlu0 %287, %v277
        %v289 = vpop.permute.xlu0 %288
        %v290 = vlaneseq
        %v291 = vshrl.u32 %v290, 7
        %v292 = vadd.s32 %v291, 16
        %293 = vset.pattern.permute.xlu0 %v292
        %294 = vperm.xlu0 %293, %v277
        %v295 = vpop.permute.xlu0 %294
        %v296 = vlaneseq
        %v297 = vshrl.u32 %v296, 7
        %v298 = vadd.s32 %v297, 24
        %299 = vset.pattern.permute.xlu0 %v298
        %300 = vperm.xlu0 %299, %v277
        %v301 = vpop.permute.xlu0 %300
        %v302 = vlaneseq
        %v303 = vshrl.u32 %v302, 7
        %v304 = vadd.s32 %v303, 32
        %305 = vset.pattern.permute.xlu0 %v304
        %306 = vperm.xlu0 %305, %v277
        %v307 = vpop.permute.xlu0 %306
        %v308 = vlaneseq
        %v309 = vshrl.u32 %v308, 7
        %v310 = vadd.s32 %v309, 40
        %311 = vset.pattern.permute.xlu0 %v310
        %312 = vperm.xlu0 %311, %v277
        %v313 = vpop.permute.xlu0 %312
        %v314 = vlaneseq
        %v315 = vshrl.u32 %v314, 7
        %v316 = vadd.s32 %v315, 48
        %317 = vset.pattern.permute.xlu0 %v316
        %318 = vperm.xlu0 %317, %v277
        %v319 = vpop.permute.xlu0 %318
        %v320 = vlaneseq
        %v321 = vshrl.u32 %v320, 7
        %v322 = vadd.s32 %v321, 56
        %323 = vset.pattern.permute.xlu0 %v322
        %324 = vperm.xlu0 %323, %v277
        %v325 = vpop.permute.xlu0 %324
        %v326 = vperm.slane %v276, 1
        %v327 = vlaneseq
        %v328 = vshrl.u32 %v327, 7
        %330 = vset.pattern.permute.xlu0 %v328
        %331 = vperm.xlu0 %330, %v326
        %v332 = vpop.permute.xlu0 %331
        %v333 = vlaneseq
        %v334 = vshrl.u32 %v333, 7
        %v335 = vadd.s32 %v334, 8
        %336 = vset.pattern.permute.xlu0 %v335
        %337 = vperm.xlu0 %336, %v326
        %v338 = vpop.permute.xlu0 %337
        %v339 = vlaneseq
        %v340 = vshrl.u32 %v339, 7
        %v341 = vadd.s32 %v340, 16
        %342 = vset.pattern.permute.xlu0 %v341
        %343 = vperm.xlu0 %342, %v326
        %v344 = vpop.permute.xlu0 %343
        %v345 = vlaneseq
        %v346 = vshrl.u32 %v345, 7
        %v347 = vadd.s32 %v346, 24
        %348 = vset.pattern.permute.xlu0 %v347
        %349 = vperm.xlu0 %348, %v326
        %v350 = vpop.permute.xlu0 %349
        %v351 = vlaneseq
        %v352 = vshrl.u32 %v351, 7
        %v353 = vadd.s32 %v352, 32
        %354 = vset.pattern.permute.xlu0 %v353
        %355 = vperm.xlu0 %354, %v326
        %v356 = vpop.permute.xlu0 %355
        %v357 = vlaneseq
        %v358 = vshrl.u32 %v357, 7
        %v359 = vadd.s32 %v358, 40
        %360 = vset.pattern.permute.xlu0 %v359
        %361 = vperm.xlu0 %360, %v326
        %v362 = vpop.permute.xlu0 %361
        %v363 = vlaneseq
        %v364 = vshrl.u32 %v363, 7
        %v365 = vadd.s32 %v364, 48
        %366 = vset.pattern.permute.xlu0 %v365
        %367 = vperm.xlu0 %366, %v326
        %v368 = vpop.permute.xlu0 %367
        %v369 = vlaneseq
        %v370 = vshrl.u32 %v369, 7
        %v371 = vadd.s32 %v370, 56
        %372 = vset.pattern.permute.xlu0 %v371
        %373 = vperm.xlu0 %372, %v326
        %v374 = vpop.permute.xlu0 %373
        %v375 = vperm.slane %v276, 2
        %v376 = vlaneseq
        %v377 = vshrl.u32 %v376, 7
        %379 = vset.pattern.permute.xlu0 %v377
        %380 = vperm.xlu0 %379, %v375
        %v381 = vpop.permute.xlu0 %380
        %v382 = vlaneseq
        %v383 = vshrl.u32 %v382, 7
        %v384 = vadd.s32 %v383, 8
        %385 = vset.pattern.permute.xlu0 %v384
        %386 = vperm.xlu0 %385, %v375
        %v387 = vpop.permute.xlu0 %386
        %v388 = vlaneseq
        %v389 = vshrl.u32 %v388, 7
        %v390 = vadd.s32 %v389, 16
        %391 = vset.pattern.permute.xlu0 %v390
        %392 = vperm.xlu0 %391, %v375
        %v393 = vpop.permute.xlu0 %392
        %v394 = vlaneseq
        %v395 = vshrl.u32 %v394, 7
        %v396 = vadd.s32 %v395, 24
        %397 = vset.pattern.permute.xlu0 %v396
        %398 = vperm.xlu0 %397, %v375
        %v399 = vpop.permute.xlu0 %398
        %v400 = vlaneseq
        %v401 = vshrl.u32 %v400, 7
        %v402 = vadd.s32 %v401, 32
        %403 = vset.pattern.permute.xlu0 %v402
        %404 = vperm.xlu0 %403, %v375
        %v405 = vpop.permute.xlu0 %404
        %v406 = vlaneseq
        %v407 = vshrl.u32 %v406, 7
        %v408 = vadd.s32 %v407, 40
        %409 = vset.pattern.permute.xlu0 %v408
        %410 = vperm.xlu0 %409, %v375
        %v411 = vpop.permute.xlu0 %410
        %v412 = vlaneseq
        %v413 = vshrl.u32 %v412, 7
        %v414 = vadd.s32 %v413, 48
        %415 = vset.pattern.permute.xlu0 %v414
        %416 = vperm.xlu0 %415, %v375
        %v417 = vpop.permute.xlu0 %416
        %v418 = vlaneseq
        %v419 = vshrl.u32 %v418, 7
        %v420 = vadd.s32 %v419, 56
        %421 = vset.pattern.permute.xlu0 %v420
        %422 = vperm.xlu0 %421, %v375
        %v423 = vpop.permute.xlu0 %422
        %v424 = vperm.slane %v276, 3
        %v425 = vlaneseq
        %v426 = vshrl.u32 %v425, 7
        %428 = vset.pattern.permute.xlu0 %v426
        %429 = vperm.xlu0 %428, %v424
        %v430 = vpop.permute.xlu0 %429
        %v431 = vlaneseq
        %v432 = vshrl.u32 %v431, 7
        %v433 = vadd.s32 %v432, 8
        %434 = vset.pattern.permute.xlu0 %v433
        %435 = vperm.xlu0 %434, %v424
        %v436 = vpop.permute.xlu0 %435
        %v437 = vlaneseq
        %v438 = vshrl.u32 %v437, 7
        %v439 = vadd.s32 %v438, 16
        %440 = vset.pattern.permute.xlu0 %v439
        %441 = vperm.xlu0 %440, %v424
        %v442 = vpop.permute.xlu0 %441
        %v443 = vlaneseq
        %v444 = vshrl.u32 %v443, 7
        %v445 = vadd.s32 %v444, 24
        %446 = vset.pattern.permute.xlu0 %v445
        %447 = vperm.xlu0 %446, %v424
        %v448 = vpop.permute.xlu0 %447
        %v449 = vlaneseq
        %v450 = vshrl.u32 %v449, 7
        %v451 = vadd.s32 %v450, 32
        %452 = vset.pattern.permute.xlu0 %v451
        %453 = vperm.xlu0 %452, %v424
        %v454 = vpop.permute.xlu0 %453
        %v455 = vlaneseq
        %v456 = vshrl.u32 %v455, 7
        %v457 = vadd.s32 %v456, 40
        %458 = vset.pattern.permute.xlu0 %v457
        %459 = vperm.xlu0 %458, %v424
        %v460 = vpop.permute.xlu0 %459
        %v461 = vlaneseq
        %v462 = vshrl.u32 %v461, 7
        %v463 = vadd.s32 %v462, 48
        %464 = vset.pattern.permute.xlu0 %v463
        %465 = vperm.xlu0 %464, %v424
        %v466 = vpop.permute.xlu0 %465
        %v467 = vlaneseq
        %v468 = vshrl.u32 %v467, 7
        %v469 = vadd.s32 %v468, 56
        %470 = vset.pattern.permute.xlu0 %v469
        %471 = vperm.xlu0 %470, %v424
        %v472 = vpop.permute.xlu0 %471
        %v473 = vperm.slane %v276, 4
        %v474 = vlaneseq
        %v475 = vshrl.u32 %v474, 7
        %477 = vset.pattern.permute.xlu0 %v475
        %478 = vperm.xlu0 %477, %v473
        %v479 = vpop.permute.xlu0 %478
        %v480 = vlaneseq
        %v481 = vshrl.u32 %v480, 7
        %v482 = vadd.s32 %v481, 8
        %483 = vset.pattern.permute.xlu0 %v482
        %484 = vperm.xlu0 %483, %v473
        %v485 = vpop.permute.xlu0 %484
        %v486 = vlaneseq
        %v487 = vshrl.u32 %v486, 7
        %v488 = vadd.s32 %v487, 16
        %489 = vset.pattern.permute.xlu0 %v488
        %490 = vperm.xlu0 %489, %v473
        %v491 = vpop.permute.xlu0 %490
        %v492 = vlaneseq
        %v493 = vshrl.u32 %v492, 7
        %v494 = vadd.s32 %v493, 24
        %495 = vset.pattern.permute.xlu0 %v494
        %496 = vperm.xlu0 %495, %v473
        %v497 = vpop.permute.xlu0 %496
        %v498 = vlaneseq
        %v499 = vshrl.u32 %v498, 7
        %v500 = vadd.s32 %v499, 32
        %501 = vset.pattern.permute.xlu0 %v500
        %502 = vperm.xlu0 %501, %v473
        %v503 = vpop.permute.xlu0 %502
        %v504 = vlaneseq
        %v505 = vshrl.u32 %v504, 7
        %v506 = vadd.s32 %v505, 40
        %507 = vset.pattern.permute.xlu0 %v506
        %508 = vperm.xlu0 %507, %v473
        %v509 = vpop.permute.xlu0 %508
        %v510 = vlaneseq
        %v511 = vshrl.u32 %v510, 7
        %v512 = vadd.s32 %v511, 48
        %513 = vset.pattern.permute.xlu0 %v512
        %514 = vperm.xlu0 %513, %v473
        %v515 = vpop.permute.xlu0 %514
        %v516 = vlaneseq
        %v517 = vshrl.u32 %v516, 7
        %v518 = vadd.s32 %v517, 56
        %519 = vset.pattern.permute.xlu0 %v518
        %520 = vperm.xlu0 %519, %v473
        %v521 = vpop.permute.xlu0 %520
        %v522 = vperm.slane %v276, 5
        %v523 = vlaneseq
        %v524 = vshrl.u32 %v523, 7
        %526 = vset.pattern.permute.xlu0 %v524
        %527 = vperm.xlu0 %526, %v522
        %v528 = vpop.permute.xlu0 %527
        %v529 = vlaneseq
        %v530 = vshrl.u32 %v529, 7
        %v531 = vadd.s32 %v530, 8
        %532 = vset.pattern.permute.xlu0 %v531
        %533 = vperm.xlu0 %532, %v522
        %v534 = vpop.permute.xlu0 %533
        %v535 = vlaneseq
        %v536 = vshrl.u32 %v535, 7
        %v537 = vadd.s32 %v536, 16
        %538 = vset.pattern.permute.xlu0 %v537
        %539 = vperm.xlu0 %538, %v522
        %v540 = vpop.permute.xlu0 %539
        %v541 = vlaneseq
        %v542 = vshrl.u32 %v541, 7
        %v543 = vadd.s32 %v542, 24
        %544 = vset.pattern.permute.xlu0 %v543
        %545 = vperm.xlu0 %544, %v522
        %v546 = vpop.permute.xlu0 %545
        %v547 = vlaneseq
        %v548 = vshrl.u32 %v547, 7
        %v549 = vadd.s32 %v548, 32
        %550 = vset.pattern.permute.xlu0 %v549
        %551 = vperm.xlu0 %550, %v522
        %v552 = vpop.permute.xlu0 %551
        %v553 = vlaneseq
        %v554 = vshrl.u32 %v553, 7
        %v555 = vadd.s32 %v554, 40
        %556 = vset.pattern.permute.xlu0 %v555
        %557 = vperm.xlu0 %556, %v522
        %v558 = vpop.permute.xlu0 %557
        %v559 = vlaneseq
        %v560 = vshrl.u32 %v559, 7
        %v561 = vadd.s32 %v560, 48
        %562 = vset.pattern.permute.xlu0 %v561
        %563 = vperm.xlu0 %562, %v522
        %v564 = vpop.permute.xlu0 %563
        %v565 = vlaneseq
        %v566 = vshrl.u32 %v565, 7
        %v567 = vadd.s32 %v566, 56
        %568 = vset.pattern.permute.xlu0 %v567
        %569 = vperm.xlu0 %568, %v522
        %v570 = vpop.permute.xlu0 %569
        %v571 = vperm.slane %v276, 6
        %v572 = vlaneseq
        %v573 = vshrl.u32 %v572, 7
        %575 = vset.pattern.permute.xlu0 %v573
        %576 = vperm.xlu0 %575, %v571
        %v577 = vpop.permute.xlu0 %576
        %v578 = vlaneseq
        %v579 = vshrl.u32 %v578, 7
        %v580 = vadd.s32 %v579, 8
        %581 = vset.pattern.permute.xlu0 %v580
        %582 = vperm.xlu0 %581, %v571
        %v583 = vpop.permute.xlu0 %582
        %v584 = vlaneseq
        %v585 = vshrl.u32 %v584, 7
        %v586 = vadd.s32 %v585, 16
        %587 = vset.pattern.permute.xlu0 %v586
        %588 = vperm.xlu0 %587, %v571
        %v589 = vpop.permute.xlu0 %588
        %v590 = vlaneseq
        %v591 = vshrl.u32 %v590, 7
        %v592 = vadd.s32 %v591, 24
        %593 = vset.pattern.permute.xlu0 %v592
        %594 = vperm.xlu0 %593, %v571
        %v595 = vpop.permute.xlu0 %594
        %v596 = vlaneseq
        %v597 = vshrl.u32 %v596, 7
        %v598 = vadd.s32 %v597, 32
        %599 = vset.pattern.permute.xlu0 %v598
        %600 = vperm.xlu0 %599, %v571
        %v601 = vpop.permute.xlu0 %600
        %v602 = vlaneseq
        %v603 = vshrl.u32 %v602, 7
        %v604 = vadd.s32 %v603, 40
        %605 = vset.pattern.permute.xlu0 %v604
        %606 = vperm.xlu0 %605, %v571
        %v607 = vpop.permute.xlu0 %606
        %v608 = vlaneseq
        %v609 = vshrl.u32 %v608, 7
        %v610 = vadd.s32 %v609, 48
        %611 = vset.pattern.permute.xlu0 %v610
        %612 = vperm.xlu0 %611, %v571
        %v613 = vpop.permute.xlu0 %612
        %v614 = vlaneseq
        %v615 = vshrl.u32 %v614, 7
        %v616 = vadd.s32 %v615, 56
        %617 = vset.pattern.permute.xlu0 %v616
        %618 = vperm.xlu0 %617, %v571
        %v619 = vpop.permute.xlu0 %618
        %v620 = vperm.slane %v276, 7
        %v621 = vlaneseq
        %v622 = vshrl.u32 %v621, 7
        %624 = vset.pattern.permute.xlu0 %v622
        %625 = vperm.xlu0 %624, %v620
        %v626 = vpop.permute.xlu0 %625
        %v627 = vlaneseq
        %v628 = vshrl.u32 %v627, 7
        %v629 = vadd.s32 %v628, 8
        %630 = vset.pattern.permute.xlu0 %v629
        %631 = vperm.xlu0 %630, %v620
        %v632 = vpop.permute.xlu0 %631
        %v633 = vlaneseq
        %v634 = vshrl.u32 %v633, 7
        %v635 = vadd.s32 %v634, 16
        %636 = vset.pattern.permute.xlu0 %v635
        %637 = vperm.xlu0 %636, %v620
        %v638 = vpop.permute.xlu0 %637
        %v639 = vlaneseq
        %v640 = vshrl.u32 %v639, 7
        %v641 = vadd.s32 %v640, 24
        %642 = vset.pattern.permute.xlu0 %v641
        %643 = vperm.xlu0 %642, %v620
        %v644 = vpop.permute.xlu0 %643
        %v645 = vlaneseq
        %v646 = vshrl.u32 %v645, 7
        %v647 = vadd.s32 %v646, 32
        %648 = vset.pattern.permute.xlu0 %v647
        %649 = vperm.xlu0 %648, %v620
        %v650 = vpop.permute.xlu0 %649
        %v651 = vlaneseq
        %v652 = vshrl.u32 %v651, 7
        %v653 = vadd.s32 %v652, 40
        %654 = vset.pattern.permute.xlu0 %v653
        %655 = vperm.xlu0 %654, %v620
        %v656 = vpop.permute.xlu0 %655
        %v657 = vlaneseq
        %v658 = vshrl.u32 %v657, 7
        %v659 = vadd.s32 %v658, 48
        %660 = vset.pattern.permute.xlu0 %v659
        %661 = vperm.xlu0 %660, %v620
        %v662 = vpop.permute.xlu0 %661
        %v663 = vlaneseq
        %v664 = vshrl.u32 %v663, 7
        %v665 = vadd.s32 %v664, 56
        %666 = vset.pattern.permute.xlu0 %v665
        %667 = vperm.xlu0 %666, %v620
        %v668 = vpop.permute.xlu0 %667
        %vm733 = vcmask 1042432
        %v734 = vrot.slane %v283, 5
        %v735 = vrot.slane %v289, 5
        %v736 = vsel %vm733, %v734, %v735
        %v737 = vrot.slane %v295, 5
        %v738 = vsel %vm733, %v735, %v737
        %v739 = vrot.slane %v301, 5
        %v740 = vsel %vm733, %v737, %v739
        %v741 = vrot.slane %v307, 5
        %v742 = vsel %vm733, %v739, %v741
        %v743 = vrot.slane %v313, 5
        %v744 = vsel %vm733, %v741, %v743
        %v745 = vrot.slane %v319, 5
        %v746 = vsel %vm733, %v743, %v745
        %v747 = vrot.slane %v325, 5
        %v748 = vsel %vm733, %v745, %v747
        %v749 = vrot.slane %v332, 5
        %v750 = vrot.slane %v338, 5
        %v751 = vsel %vm733, %v749, %v750
        %v752 = vrot.slane %v344, 5
        %v753 = vsel %vm733, %v750, %v752
        %v754 = vrot.slane %v350, 5
        %v755 = vsel %vm733, %v752, %v754
        %v756 = vrot.slane %v356, 5
        %v757 = vsel %vm733, %v754, %v756
        %v758 = vrot.slane %v362, 5
        %v759 = vsel %vm733, %v756, %v758
        %v760 = vrot.slane %v368, 5
        %v761 = vsel %vm733, %v758, %v760
        %v762 = vrot.slane %v374, 5
        %v763 = vsel %vm733, %v760, %v762
        %v764 = vrot.slane %v381, 5
        %v765 = vrot.slane %v387, 5
        %v766 = vsel %vm733, %v764, %v765
        %v767 = vrot.slane %v393, 5
        %v768 = vsel %vm733, %v765, %v767
        %v769 = vrot.slane %v399, 5
        %v770 = vsel %vm733, %v767, %v769
        %v771 = vrot.slane %v405, 5
        %v772 = vsel %vm733, %v769, %v771
        %v773 = vrot.slane %v411, 5
        %v774 = vsel %vm733, %v771, %v773
        %v775 = vrot.slane %v417, 5
        %v776 = vsel %vm733, %v773, %v775
        %v777 = vrot.slane %v423, 5
        %v778 = vsel %vm733, %v775, %v777
        %v779 = vrot.slane %v430, 5
        %v780 = vrot.slane %v436, 5
        %v781 = vsel %vm733, %v779, %v780
        %v782 = vrot.slane %v442, 5
        %v783 = vsel %vm733, %v780, %v782
        %v784 = vrot.slane %v448, 5
        %v785 = vsel %vm733, %v782, %v784
        %v786 = vrot.slane %v454, 5
        %v787 = vsel %vm733, %v784, %v786
        %v788 = vrot.slane %v460, 5
        %v789 = vsel %vm733, %v786, %v788
        %v790 = vrot.slane %v466, 5
        %v791 = vsel %vm733, %v788, %v790
        %v792 = vrot.slane %v472, 5
        %v793 = vsel %vm733, %v790, %v792
        %v794 = vrot.slane %v479, 5
        %v795 = vrot.slane %v485, 5
        %v796 = vsel %vm733, %v794, %v795
        %v797 = vrot.slane %v491, 5
        %v798 = vsel %vm733, %v795, %v797
        %v799 = vrot.slane %v497, 5
        %v800 = vsel %vm733, %v797, %v799
        %v801 = vrot.slane %v503, 5
        %v802 = vsel %vm733, %v799, %v801
        %v803 = vrot.slane %v509, 5
        %v804 = vsel %vm733, %v801, %v803
        %v805 = vrot.slane %v515, 5
        %v806 = vsel %vm733, %v803, %v805
        %v807 = vrot.slane %v521, 5
        %v808 = vsel %vm733, %v805, %v807
        %v809 = vrot.slane %v528, 5
        %v810 = vrot.slane %v534, 5
        %v811 = vsel %vm733, %v809, %v810
        %v812 = vrot.slane %v540, 5
        %v813 = vsel %vm733, %v810, %v812
        %v814 = vrot.slane %v546, 5
        %v815 = vsel %vm733, %v812, %v814
        %v816 = vrot.slane %v552, 5
        %v817 = vsel %vm733, %v814, %v816
        %v818 = vrot.slane %v558, 5
        %v819 = vsel %vm733, %v816, %v818
        %v820 = vrot.slane %v564, 5
        %v821 = vsel %vm733, %v818, %v820
        %v822 = vrot.slane %v570, 5
        %v823 = vsel %vm733, %v820, %v822
        %v824 = vrot.slane %v577, 5
        %v825 = vrot.slane %v583, 5
        %v826 = vsel %vm733, %v824, %v825
        %v827 = vrot.slane %v589, 5
        %v828 = vsel %vm733, %v825, %v827
        %v829 = vrot.slane %v595, 5
        %v830 = vsel %vm733, %v827, %v829
        %v831 = vrot.slane %v601, 5
        %v832 = vsel %vm733, %v829, %v831
        %v833 = vrot.slane %v607, 5
        %v834 = vsel %vm733, %v831, %v833
        %v835 = vrot.slane %v613, 5
        %v836 = vsel %vm733, %v833, %v835
        %v837 = vrot.slane %v619, 5
        %v838 = vsel %vm733, %v835, %v837
        %v839 = vrot.slane %v626, 5
        %v840 = vrot.slane %v632, 5
        %v841 = vsel %vm733, %v839, %v840
        %v842 = vrot.slane %v638, 5
        %v843 = vsel %vm733, %v840, %v842
        %v844 = vrot.slane %v644, 5
        %v845 = vsel %vm733, %v842, %v844
        %v846 = vrot.slane %v650, 5
        %v847 = vsel %vm733, %v844, %v846
        %v848 = vrot.slane %v656, 5
        %v849 = vsel %vm733, %v846, %v848
        %v850 = vrot.slane %v662, 5
        %v851 = vsel %vm733, %v848, %v850
        %v852 = vrot.slane %v668, 5
        %v853 = vsel %vm733, %v850, %v852
        %v926 = vsel %vm733, 0.0, %v734
        %v927 = vsel %vm733, 0.0, %v749
        %v928 = vsel %vm733, 0.0, %v764
        %v929 = vsel %vm733, 0.0, %v779
        %v930 = vsel %vm733, 0.0, %v794
        %v931 = vsel %vm733, 0.0, %v809
        %v932 = vsel %vm733, 0.0, %v824
        %v933 = vsel %vm733, 0.0, %v839
        %v934 = vsel %vm733, %v747, 0.0
        %v935 = vsel %vm733, %v762, 0.0
        %v936 = vsel %vm733, %v777, 0.0
        %v937 = vsel %vm733, %v792, 0.0
        %v938 = vsel %vm733, %v807, 0.0
        %v939 = vsel %vm733, %v822, 0.0
        %v940 = vsel %vm733, %v837, 0.0
        %v941 = vsel %vm733, %v852, 0.0
        %vm958 = vcmask 1046528
        %v959 = vrot.slane %v926, 1
        %v960 = vrot.slane %v736, 1
        %v961 = vsel %vm958, %v959, %v960
        %v962 = vrot.slane %v738, 1
        %v963 = vsel %vm958, %v960, %v962
        %v964 = vrot.slane %v740, 1
        %v965 = vsel %vm958, %v962, %v964
        %v966 = vrot.slane %v742, 1
        %v967 = vsel %vm958, %v964, %v966
        %v968 = vrot.slane %v744, 1
        %v969 = vsel %vm958, %v966, %v968
        %v970 = vrot.slane %v746, 1
        %v971 = vsel %vm958, %v968, %v970
        %v972 = vrot.slane %v748, 1
        %v973 = vsel %vm958, %v970, %v972
        %v974 = vrot.slane %v934, 1
        %v975 = vsel %vm958, %v972, %v974
        %v976 = vrot.slane %v927, 1
        %v977 = vrot.slane %v751, 1
        %v978 = vsel %vm958, %v976, %v977
        %v979 = vrot.slane %v753, 1
        %v980 = vsel %vm958, %v977, %v979
        %v981 = vrot.slane %v755, 1
        %v982 = vsel %vm958, %v979, %v981
        %v983 = vrot.slane %v757, 1
        %v984 = vsel %vm958, %v981, %v983
        %v985 = vrot.slane %v759, 1
        %v986 = vsel %vm958, %v983, %v985
        %v987 = vrot.slane %v761, 1
        %v988 = vsel %vm958, %v985, %v987
        %v989 = vrot.slane %v763, 1
        %v990 = vsel %vm958, %v987, %v989
        %v991 = vrot.slane %v935, 1
        %v992 = vsel %vm958, %v989, %v991
        %v993 = vrot.slane %v928, 1
        %v994 = vrot.slane %v766, 1
        %v995 = vsel %vm958, %v993, %v994
        %v996 = vrot.slane %v768, 1
        %v997 = vsel %vm958, %v994, %v996
        %v998 = vrot.slane %v770, 1
        %v999 = vsel %vm958, %v996, %v998
        %v1000 = vrot.slane %v772, 1
        %v1001 = vsel %vm958, %v998, %v1000
        %v1002 = vrot.slane %v774, 1
        %v1003 = vsel %vm958, %v1000, %v1002
        %v1004 = vrot.slane %v776, 1
        %v1005 = vsel %vm958, %v1002, %v1004
        %v1006 = vrot.slane %v778, 1
        %v1007 = vsel %vm958, %v1004, %v1006
        %v1008 = vrot.slane %v936, 1
        %v1009 = vsel %vm958, %v1006, %v1008
        %v1010 = vrot.slane %v929, 1
        %v1011 = vrot.slane %v781, 1
        %v1012 = vsel %vm958, %v1010, %v1011
        %v1013 = vrot.slane %v783, 1
        %v1014 = vsel %vm958, %v1011, %v1013
        %v1015 = vrot.slane %v785, 1
        %v1016 = vsel %vm958, %v1013, %v1015
        %v1017 = vrot.slane %v787, 1
        %v1018 = vsel %vm958, %v1015, %v1017
        %v1019 = vrot.slane %v789, 1
        %v1020 = vsel %vm958, %v1017, %v1019
        %v1021 = vrot.slane %v791, 1
        %v1022 = vsel %vm958, %v1019, %v1021
        %v1023 = vrot.slane %v793, 1
        %v1024 = vsel %vm958, %v1021, %v1023
        %v1025 = vrot.slane %v937, 1
        %v1026 = vsel %vm958, %v1023, %v1025
        %v1027 = vrot.slane %v930, 1
        %v1028 = vrot.slane %v796, 1
        %v1029 = vsel %vm958, %v1027, %v1028
        %v1030 = vrot.slane %v798, 1
        %v1031 = vsel %vm958, %v1028, %v1030
        %v1032 = vrot.slane %v800, 1
        %v1033 = vsel %vm958, %v1030, %v1032
        %v1034 = vrot.slane %v802, 1
        %v1035 = vsel %vm958, %v1032, %v1034
        %v1036 = vrot.slane %v804, 1
        %v1037 = vsel %vm958, %v1034, %v1036
        %v1038 = vrot.slane %v806, 1
        %v1039 = vsel %vm958, %v1036, %v1038
        %v1040 = vrot.slane %v808, 1
        %v1041 = vsel %vm958, %v1038, %v1040
        %v1042 = vrot.slane %v938, 1
        %v1043 = vsel %vm958, %v1040, %v1042
        %v1044 = vrot.slane %v931, 1
        %v1045 = vrot.slane %v811, 1
        %v1046 = vsel %vm958, %v1044, %v1045
        %v1047 = vrot.slane %v813, 1
        %v1048 = vsel %vm958, %v1045, %v1047
        %v1049 = vrot.slane %v815, 1
        %v1050 = vsel %vm958, %v1047, %v1049
        %v1051 = vrot.slane %v817, 1
        %v1052 = vsel %vm958, %v1049, %v1051
        %v1053 = vrot.slane %v819, 1
        %v1054 = vsel %vm958, %v1051, %v1053
        %v1055 = vrot.slane %v821, 1
        %v1056 = vsel %vm958, %v1053, %v1055
        %v1057 = vrot.slane %v823, 1
        %v1058 = vsel %vm958, %v1055, %v1057
        %v1059 = vrot.slane %v939, 1
        %v1060 = vsel %vm958, %v1057, %v1059
        %v1061 = vrot.slane %v932, 1
        %v1062 = vrot.slane %v826, 1
        %v1063 = vsel %vm958, %v1061, %v1062
        %v1064 = vrot.slane %v828, 1
        %v1065 = vsel %vm958, %v1062, %v1064
        %v1066 = vrot.slane %v830, 1
        %v1067 = vsel %vm958, %v1064, %v1066
        %v1068 = vrot.slane %v832, 1
        %v1069 = vsel %vm958, %v1066, %v1068
        %v1070 = vrot.slane %v834, 1
        %v1071 = vsel %vm958, %v1068, %v1070
        %v1072 = vrot.slane %v836, 1
        %v1073 = vsel %vm958, %v1070, %v1072
        %v1074 = vrot.slane %v838, 1
        %v1075 = vsel %vm958, %v1072, %v1074
        %v1076 = vrot.slane %v940, 1
        %v1077 = vsel %vm958, %v1074, %v1076
        %v1078 = vrot.slane %v933, 1
        %v1079 = vrot.slane %v841, 1
        %v1080 = vsel %vm958, %v1078, %v1079
        %v1081 = vrot.slane %v843, 1
        %v1082 = vsel %vm958, %v1079, %v1081
        %v1083 = vrot.slane %v845, 1
        %v1084 = vsel %vm958, %v1081, %v1083
        %v1085 = vrot.slane %v847, 1
        %v1086 = vsel %vm958, %v1083, %v1085
        %v1087 = vrot.slane %v849, 1
        %v1088 = vsel %vm958, %v1085, %v1087
        %v1089 = vrot.slane %v851, 1
        %v1090 = vsel %vm958, %v1087, %v1089
        %v1091 = vrot.slane %v853, 1
        %v1092 = vsel %vm958, %v1089, %v1091
        %v1093 = vrot.slane %v941, 1
        %v1094 = vsel %vm958, %v1091, %v1093
        %1095 = vrot.lane.b32.xlu0 %v961, 1
        %v1096 = vpop.permute.xlu0 %1095
        %1097 = vrot.lane.b32.xlu0 %v963, 1
        %v1098 = vpop.permute.xlu0 %1097
        %1099 = vrot.lane.b32.xlu0 %v965, 1
        %v1100 = vpop.permute.xlu0 %1099
        %1101 = vrot.lane.b32.xlu0 %v967, 1
        %v1102 = vpop.permute.xlu0 %1101
        %1103 = vrot.lane.b32.xlu0 %v969, 1
        %v1104 = vpop.permute.xlu0 %1103
        %1105 = vrot.lane.b32.xlu0 %v971, 1
        %v1106 = vpop.permute.xlu0 %1105
        %1107 = vrot.lane.b32.xlu0 %v973, 1
        %v1108 = vpop.permute.xlu0 %1107
        %1109 = vrot.lane.b32.xlu0 %v975, 1
        %v1110 = vpop.permute.xlu0 %1109
        %1111 = vrot.lane.b32.xlu0 %v978, 1
        %v1112 = vpop.permute.xlu0 %1111
        %1113 = vrot.lane.b32.xlu0 %v980, 1
        %v1114 = vpop.permute.xlu0 %1113
        %1115 = vrot.lane.b32.xlu0 %v982, 1
        %v1116 = vpop.permute.xlu0 %1115
        %1117 = vrot.lane.b32.xlu0 %v984, 1
        %v1118 = vpop.permute.xlu0 %1117
        %1119 = vrot.lane.b32.xlu0 %v986, 1
        %v1120 = vpop.permute.xlu0 %1119
        %1121 = vrot.lane.b32.xlu0 %v988, 1
        %v1122 = vpop.permute.xlu0 %1121
        %1123 = vrot.lane.b32.xlu0 %v990, 1
        %v1124 = vpop.permute.xlu0 %1123
        %1125 = vrot.lane.b32.xlu0 %v992, 1
        %v1126 = vpop.permute.xlu0 %1125
        %1127 = vrot.lane.b32.xlu0 %v995, 1
        %v1128 = vpop.permute.xlu0 %1127
        %1129 = vrot.lane.b32.xlu0 %v997, 1
        %v1130 = vpop.permute.xlu0 %1129
        %1131 = vrot.lane.b32.xlu0 %v999, 1
        %v1132 = vpop.permute.xlu0 %1131
        %1133 = vrot.lane.b32.xlu0 %v1001, 1
        %v1134 = vpop.permute.xlu0 %1133
        %1135 = vrot.lane.b32.xlu0 %v1003, 1
        %v1136 = vpop.permute.xlu0 %1135
        %1137 = vrot.lane.b32.xlu0 %v1005, 1
        %v1138 = vpop.permute.xlu0 %1137
        %1139 = vrot.lane.b32.xlu0 %v1007, 1
        %v1140 = vpop.permute.xlu0 %1139
        %1141 = vrot.lane.b32.xlu0 %v1009, 1
        %v1142 = vpop.permute.xlu0 %1141
        %1143 = vrot.lane.b32.xlu0 %v1012, 1
        %v1144 = vpop.permute.xlu0 %1143
        %1145 = vrot.lane.b32.xlu0 %v1014, 1
        %v1146 = vpop.permute.xlu0 %1145
        %1147 = vrot.lane.b32.xlu0 %v1016, 1
        %v1148 = vpop.permute.xlu0 %1147
        %1149 = vrot.lane.b32.xlu0 %v1018, 1
        %v1150 = vpop.permute.xlu0 %1149
        %1151 = vrot.lane.b32.xlu0 %v1020, 1
        %v1152 = vpop.permute.xlu0 %1151
        %1153 = vrot.lane.b32.xlu0 %v1022, 1
        %v1154 = vpop.permute.xlu0 %1153
        %1155 = vrot.lane.b32.xlu0 %v1024, 1
        %v1156 = vpop.permute.xlu0 %1155
        %1157 = vrot.lane.b32.xlu0 %v1026, 1
        %v1158 = vpop.permute.xlu0 %1157
        %1159 = vrot.lane.b32.xlu0 %v1029, 1
        %v1160 = vpop.permute.xlu0 %1159
        %1161 = vrot.lane.b32.xlu0 %v1031, 1
        %v1162 = vpop.permute.xlu0 %1161
        %1163 = vrot.lane.b32.xlu0 %v1033, 1
        %v1164 = vpop.permute.xlu0 %1163
        %1165 = vrot.lane.b32.xlu0 %v1035, 1
        %v1166 = vpop.permute.xlu0 %1165
        %1167 = vrot.lane.b32.xlu0 %v1037, 1
        %v1168 = vpop.permute.xlu0 %1167
        %1169 = vrot.lane.b32.xlu0 %v1039, 1
        %v1170 = vpop.permute.xlu0 %1169
        %1171 = vrot.lane.b32.xlu0 %v1041, 1
        %v1172 = vpop.permute.xlu0 %1171
        %1173 = vrot.lane.b32.xlu0 %v1043, 1
        %v1174 = vpop.permute.xlu0 %1173
        %1175 = vrot.lane.b32.xlu0 %v1046, 1
        %v1176 = vpop.permute.xlu0 %1175
        %1177 = vrot.lane.b32.xlu0 %v1048, 1
        %v1178 = vpop.permute.xlu0 %1177
        %1179 = vrot.lane.b32.xlu0 %v1050, 1
        %v1180 = vpop.permute.xlu0 %1179
        %1181 = vrot.lane.b32.xlu0 %v1052, 1
        %v1182 = vpop.permute.xlu0 %1181
        %1183 = vrot.lane.b32.xlu0 %v1054, 1
        %v1184 = vpop.permute.xlu0 %1183
        %1185 = vrot.lane.b32.xlu0 %v1056, 1
        %v1186 = vpop.permute.xlu0 %1185
        %1187 = vrot.lane.b32.xlu0 %v1058, 1
        %v1188 = vpop.permute.xlu0 %1187
        %1189 = vrot.lane.b32.xlu0 %v1060, 1
        %v1190 = vpop.permute.xlu0 %1189
        %1191 = vrot.lane.b32.xlu0 %v1063, 1
        %v1192 = vpop.permute.xlu0 %1191
        %1193 = vrot.lane.b32.xlu0 %v1065, 1
        %v1194 = vpop.permute.xlu0 %1193
        %1195 = vrot.lane.b32.xlu0 %v1067, 1
        %v1196 = vpop.permute.xlu0 %1195
        %1197 = vrot.lane.b32.xlu0 %v1069, 1
        %v1198 = vpop.permute.xlu0 %1197
        %1199 = vrot.lane.b32.xlu0 %v1071, 1
        %v1200 = vpop.permute.xlu0 %1199
        %1201 = vrot.lane.b32.xlu0 %v1073, 1
        %v1202 = vpop.permute.xlu0 %1201
        %1203 = vrot.lane.b32.xlu0 %v1075, 1
        %v1204 = vpop.permute.xlu0 %1203
        %1205 = vrot.lane.b32.xlu0 %v1077, 1
        %v1206 = vpop.permute.xlu0 %1205
        %1207 = vrot.lane.b32.xlu0 %v1080, 1
        %v1208 = vpop.permute.xlu0 %1207
        %1209 = vrot.lane.b32.xlu0 %v1082, 1
        %v1210 = vpop.permute.xlu0 %1209
        %1211 = vrot.lane.b32.xlu0 %v1084, 1
        %v1212 = vpop.permute.xlu0 %1211
        %1213 = vrot.lane.b32.xlu0 %v1086, 1
        %v1214 = vpop.permute.xlu0 %1213
        %1215 = vrot.lane.b32.xlu0 %v1088, 1
        %v1216 = vpop.permute.xlu0 %1215
        %1217 = vrot.lane.b32.xlu0 %v1090, 1
        %v1218 = vpop.permute.xlu0 %1217
        %1219 = vrot.lane.b32.xlu0 %v1092, 1
        %v1220 = vpop.permute.xlu0 %1219
        %1221 = vrot.lane.b32.xlu0 %v1094, 1
        %v1222 = vpop.permute.xlu0 %1221
        %vm1287 = vcmask 1045504
        %v1288 = vrot.slane %v926, 2
        %v1289 = vrot.slane %v736, 2
        %v1290 = vsel %vm1287, %v1288, %v1289
        %v1291 = vrot.slane %v738, 2
        %v1292 = vsel %vm1287, %v1289, %v1291
        %v1293 = vrot.slane %v740, 2
        %v1294 = vsel %vm1287, %v1291, %v1293
        %v1295 = vrot.slane %v742, 2
        %v1296 = vsel %vm1287, %v1293, %v1295
        %v1297 = vrot.slane %v744, 2
        %v1298 = vsel %vm1287, %v1295, %v1297
        %v1299 = vrot.slane %v746, 2
        %v1300 = vsel %vm1287, %v1297, %v1299
        %v1301 = vrot.slane %v748, 2
        %v1302 = vsel %vm1287, %v1299, %v1301
        %v1303 = vrot.slane %v934, 2
        %v1304 = vsel %vm1287, %v1301, %v1303
        %v1305 = vrot.slane %v927, 2
        %v1306 = vrot.slane %v751, 2
        %v1307 = vsel %vm1287, %v1305, %v1306
        %v1308 = vrot.slane %v753, 2
        %v1309 = vsel %vm1287, %v1306, %v1308
        %v1310 = vrot.slane %v755, 2
        %v1311 = vsel %vm1287, %v1308, %v1310
        %v1312 = vrot.slane %v757, 2
        %v1313 = vsel %vm1287, %v1310, %v1312
        %v1314 = vrot.slane %v759, 2
        %v1315 = vsel %vm1287, %v1312, %v1314
        %v1316 = vrot.slane %v761, 2
        %v1317 = vsel %vm1287, %v1314, %v1316
        %v1318 = vrot.slane %v763, 2
        %v1319 = vsel %vm1287, %v1316, %v1318
        %v1320 = vrot.slane %v935, 2
        %v1321 = vsel %vm1287, %v1318, %v1320
        %v1322 = vrot.slane %v928, 2
        %v1323 = vrot.slane %v766, 2
        %v1324 = vsel %vm1287, %v1322, %v1323
        %v1325 = vrot.slane %v768, 2
        %v1326 = vsel %vm1287, %v1323, %v1325
        %v1327 = vrot.slane %v770, 2
        %v1328 = vsel %vm1287, %v1325, %v1327
        %v1329 = vrot.slane %v772, 2
        %v1330 = vsel %vm1287, %v1327, %v1329
        %v1331 = vrot.slane %v774, 2
        %v1332 = vsel %vm1287, %v1329, %v1331
        %v1333 = vrot.slane %v776, 2
        %v1334 = vsel %vm1287, %v1331, %v1333
        %v1335 = vrot.slane %v778, 2
        %v1336 = vsel %vm1287, %v1333, %v1335
        %v1337 = vrot.slane %v936, 2
        %v1338 = vsel %vm1287, %v1335, %v1337
        %v1339 = vrot.slane %v929, 2
        %v1340 = vrot.slane %v781, 2
        %v1341 = vsel %vm1287, %v1339, %v1340
        %v1342 = vrot.slane %v783, 2
        %v1343 = vsel %vm1287, %v1340, %v1342
        %v1344 = vrot.slane %v785, 2
        %v1345 = vsel %vm1287, %v1342, %v1344
        %v1346 = vrot.slane %v787, 2
        %v1347 = vsel %vm1287, %v1344, %v1346
        %v1348 = vrot.slane %v789, 2
        %v1349 = vsel %vm1287, %v1346, %v1348
        %v1350 = vrot.slane %v791, 2
        %v1351 = vsel %vm1287, %v1348, %v1350
        %v1352 = vrot.slane %v793, 2
        %v1353 = vsel %vm1287, %v1350, %v1352
        %v1354 = vrot.slane %v937, 2
        %v1355 = vsel %vm1287, %v1352, %v1354
        %v1356 = vrot.slane %v930, 2
        %v1357 = vrot.slane %v796, 2
        %v1358 = vsel %vm1287, %v1356, %v1357
        %v1359 = vrot.slane %v798, 2
        %v1360 = vsel %vm1287, %v1357, %v1359
        %v1361 = vrot.slane %v800, 2
        %v1362 = vsel %vm1287, %v1359, %v1361
        %v1363 = vrot.slane %v802, 2
        %v1364 = vsel %vm1287, %v1361, %v1363
        %v1365 = vrot.slane %v804, 2
        %v1366 = vsel %vm1287, %v1363, %v1365
        %v1367 = vrot.slane %v806, 2
        %v1368 = vsel %vm1287, %v1365, %v1367
        %v1369 = vrot.slane %v808, 2
        %v1370 = vsel %vm1287, %v1367, %v1369
        %v1371 = vrot.slane %v938, 2
        %v1372 = vsel %vm1287, %v1369, %v1371
        %v1373 = vrot.slane %v931, 2
        %v1374 = vrot.slane %v811, 2
        %v1375 = vsel %vm1287, %v1373, %v1374
        %v1376 = vrot.slane %v813, 2
        %v1377 = vsel %vm1287, %v1374, %v1376
        %v1378 = vrot.slane %v815, 2
        %v1379 = vsel %vm1287, %v1376, %v1378
        %v1380 = vrot.slane %v817, 2
        %v1381 = vsel %vm1287, %v1378, %v1380
        %v1382 = vrot.slane %v819, 2
        %v1383 = vsel %vm1287, %v1380, %v1382
        %v1384 = vrot.slane %v821, 2
        %v1385 = vsel %vm1287, %v1382, %v1384
        %v1386 = vrot.slane %v823, 2
        %v1387 = vsel %vm1287, %v1384, %v1386
        %v1388 = vrot.slane %v939, 2
        %v1389 = vsel %vm1287, %v1386, %v1388
        %v1390 = vrot.slane %v932, 2
        %v1391 = vrot.slane %v826, 2
        %v1392 = vsel %vm1287, %v1390, %v1391
        %v1393 = vrot.slane %v828, 2
        %v1394 = vsel %vm1287, %v1391, %v1393
        %v1395 = vrot.slane %v830, 2
        %v1396 = vsel %vm1287, %v1393, %v1395
        %v1397 = vrot.slane %v832, 2
        %v1398 = vsel %vm1287, %v1395, %v1397
        %v1399 = vrot.slane %v834, 2
        %v1400 = vsel %vm1287, %v1397, %v1399
        %v1401 = vrot.slane %v836, 2
        %v1402 = vsel %vm1287, %v1399, %v1401
        %v1403 = vrot.slane %v838, 2
        %v1404 = vsel %vm1287, %v1401, %v1403
        %v1405 = vrot.slane %v940, 2
        %v1406 = vsel %vm1287, %v1403, %v1405
        %v1407 = vrot.slane %v933, 2
        %v1408 = vrot.slane %v841, 2
        %v1409 = vsel %vm1287, %v1407, %v1408
        %v1410 = vrot.slane %v843, 2
        %v1411 = vsel %vm1287, %v1408, %v1410
        %v1412 = vrot.slane %v845, 2
        %v1413 = vsel %vm1287, %v1410, %v1412
        %v1414 = vrot.slane %v847, 2
        %v1415 = vsel %vm1287, %v1412, %v1414
        %v1416 = vrot.slane %v849, 2
        %v1417 = vsel %vm1287, %v1414, %v1416
        %v1418 = vrot.slane %v851, 2
        %v1419 = vsel %vm1287, %v1416, %v1418
        %v1420 = vrot.slane %v853, 2
        %v1421 = vsel %vm1287, %v1418, %v1420
        %v1422 = vrot.slane %v941, 2
        %v1423 = vsel %vm1287, %v1420, %v1422
        %1424 = vrot.lane.b32.xlu0 %v1290, 2
        %v1425 = vpop.permute.xlu0 %1424
        %1426 = vrot.lane.b32.xlu0 %v1292, 2
        %v1427 = vpop.permute.xlu0 %1426
        %1428 = vrot.lane.b32.xlu0 %v1294, 2
        %v1429 = vpop.permute.xlu0 %1428
        %1430 = vrot.lane.b32.xlu0 %v1296, 2
        %v1431 = vpop.permute.xlu0 %1430
        %1432 = vrot.lane.b32.xlu0 %v1298, 2
        %v1433 = vpop.permute.xlu0 %1432
        %1434 = vrot.lane.b32.xlu0 %v1300, 2
        %v1435 = vpop.permute.xlu0 %1434
        %1436 = vrot.lane.b32.xlu0 %v1302, 2
        %v1437 = vpop.permute.xlu0 %1436
        %1438 = vrot.lane.b32.xlu0 %v1304, 2
        %v1439 = vpop.permute.xlu0 %1438
        %1440 = vrot.lane.b32.xlu0 %v1307, 2
        %v1441 = vpop.permute.xlu0 %1440
        %1442 = vrot.lane.b32.xlu0 %v1309, 2
        %v1443 = vpop.permute.xlu0 %1442
        %1444 = vrot.lane.b32.xlu0 %v1311, 2
        %v1445 = vpop.permute.xlu0 %1444
        %1446 = vrot.lane.b32.xlu0 %v1313, 2
        %v1447 = vpop.permute.xlu0 %1446
        %1448 = vrot.lane.b32.xlu0 %v1315, 2
        %v1449 = vpop.permute.xlu0 %1448
        %1450 = vrot.lane.b32.xlu0 %v1317, 2
        %v1451 = vpop.permute.xlu0 %1450
        %1452 = vrot.lane.b32.xlu0 %v1319, 2
        %v1453 = vpop.permute.xlu0 %1452
        %1454 = vrot.lane.b32.xlu0 %v1321, 2
        %v1455 = vpop.permute.xlu0 %1454
        %1456 = vrot.lane.b32.xlu0 %v1324, 2
        %v1457 = vpop.permute.xlu0 %1456
        %1458 = vrot.lane.b32.xlu0 %v1326, 2
        %v1459 = vpop.permute.xlu0 %1458
        %1460 = vrot.lane.b32.xlu0 %v1328, 2
        %v1461 = vpop.permute.xlu0 %1460
        %1462 = vrot.lane.b32.xlu0 %v1330, 2
        %v1463 = vpop.permute.xlu0 %1462
        %1464 = vrot.lane.b32.xlu0 %v1332, 2
        %v1465 = vpop.permute.xlu0 %1464
        %1466 = vrot.lane.b32.xlu0 %v1334, 2
        %v1467 = vpop.permute.xlu0 %1466
        %1468 = vrot.lane.b32.xlu0 %v1336, 2
        %v1469 = vpop.permute.xlu0 %1468
        %1470 = vrot.lane.b32.xlu0 %v1338, 2
        %v1471 = vpop.permute.xlu0 %1470
        %1472 = vrot.lane.b32.xlu0 %v1341, 2
        %v1473 = vpop.permute.xlu0 %1472
        %1474 = vrot.lane.b32.xlu0 %v1343, 2
        %v1475 = vpop.permute.xlu0 %1474
        %1476 = vrot.lane.b32.xlu0 %v1345, 2
        %v1477 = vpop.permute.xlu0 %1476
        %1478 = vrot.lane.b32.xlu0 %v1347, 2
        %v1479 = vpop.permute.xlu0 %1478
        %1480 = vrot.lane.b32.xlu0 %v1349, 2
        %v1481 = vpop.permute.xlu0 %1480
        %1482 = vrot.lane.b32.xlu0 %v1351, 2
        %v1483 = vpop.permute.xlu0 %1482
        %1484 = vrot.lane.b32.xlu0 %v1353, 2
        %v1485 = vpop.permute.xlu0 %1484
        %1486 = vrot.lane.b32.xlu0 %v1355, 2
        %v1487 = vpop.permute.xlu0 %1486
        %1488 = vrot.lane.b32.xlu0 %v1358, 2
        %v1489 = vpop.permute.xlu0 %1488
        %1490 = vrot.lane.b32.xlu0 %v1360, 2
        %v1491 = vpop.permute.xlu0 %1490
        %1492 = vrot.lane.b32.xlu0 %v1362, 2
        %v1493 = vpop.permute.xlu0 %1492
        %1494 = vrot.lane.b32.xlu0 %v1364, 2
        %v1495 = vpop.permute.xlu0 %1494
        %1496 = vrot.lane.b32.xlu0 %v1366, 2
        %v1497 = vpop.permute.xlu0 %1496
        %1498 = vrot.lane.b32.xlu0 %v1368, 2
        %v1499 = vpop.permute.xlu0 %1498
        %1500 = vrot.lane.b32.xlu0 %v1370, 2
        %v1501 = vpop.permute.xlu0 %1500
        %1502 = vrot.lane.b32.xlu0 %v1372, 2
        %v1503 = vpop.permute.xlu0 %1502
        %1504 = vrot.lane.b32.xlu0 %v1375, 2
        %v1505 = vpop.permute.xlu0 %1504
        %1506 = vrot.lane.b32.xlu0 %v1377, 2
        %v1507 = vpop.permute.xlu0 %1506
        %1508 = vrot.lane.b32.xlu0 %v1379, 2
        %v1509 = vpop.permute.xlu0 %1508
        %1510 = vrot.lane.b32.xlu0 %v1381, 2
        %v1511 = vpop.permute.xlu0 %1510
        %1512 = vrot.lane.b32.xlu0 %v1383, 2
        %v1513 = vpop.permute.xlu0 %1512
        %1514 = vrot.lane.b32.xlu0 %v1385, 2
        %v1515 = vpop.permute.xlu0 %1514
        %1516 = vrot.lane.b32.xlu0 %v1387, 2
        %v1517 = vpop.permute.xlu0 %1516
        %1518 = vrot.lane.b32.xlu0 %v1389, 2
        %v1519 = vpop.permute.xlu0 %1518
        %1520 = vrot.lane.b32.xlu0 %v1392, 2
        %v1521 = vpop.permute.xlu0 %1520
        %1522 = vrot.lane.b32.xlu0 %v1394, 2
        %v1523 = vpop.permute.xlu0 %1522
        %1524 = vrot.lane.b32.xlu0 %v1396, 2
        %v1525 = vpop.permute.xlu0 %1524
        %1526 = vrot.lane.b32.xlu0 %v1398, 2
        %v1527 = vpop.permute.xlu0 %1526
        %1528 = vrot.lane.b32.xlu0 %v1400, 2
        %v1529 = vpop.permute.xlu0 %1528
        %1530 = vrot.lane.b32.xlu0 %v1402, 2
        %v1531 = vpop.permute.xlu0 %1530
        %1532 = vrot.lane.b32.xlu0 %v1404, 2
        %v1533 = vpop.permute.xlu0 %1532
        %1534 = vrot.lane.b32.xlu0 %v1406, 2
        %v1535 = vpop.permute.xlu0 %1534
        %1536 = vrot.lane.b32.xlu0 %v1409, 2
        %v1537 = vpop.permute.xlu0 %1536
        %1538 = vrot.lane.b32.xlu0 %v1411, 2
        %v1539 = vpop.permute.xlu0 %1538
        %1540 = vrot.lane.b32.xlu0 %v1413, 2
        %v1541 = vpop.permute.xlu0 %1540
        %1542 = vrot.lane.b32.xlu0 %v1415, 2
        %v1543 = vpop.permute.xlu0 %1542
        %1544 = vrot.lane.b32.xlu0 %v1417, 2
        %v1545 = vpop.permute.xlu0 %1544
        %1546 = vrot.lane.b32.xlu0 %v1419, 2
        %v1547 = vpop.permute.xlu0 %1546
        %1548 = vrot.lane.b32.xlu0 %v1421, 2
        %v1549 = vpop.permute.xlu0 %1548
        %1550 = vrot.lane.b32.xlu0 %v1423, 2
        %v1551 = vpop.permute.xlu0 %1550
        %vm1616 = vcmask 1044480
        %v1617 = vrot.slane %v926, 3
        %v1618 = vrot.slane %v736, 3
        %v1619 = vsel %vm1616, %v1617, %v1618
        %v1620 = vrot.slane %v738, 3
        %v1621 = vsel %vm1616, %v1618, %v1620
        %v1622 = vrot.slane %v740, 3
        %v1623 = vsel %vm1616, %v1620, %v1622
        %v1624 = vrot.slane %v742, 3
        %v1625 = vsel %vm1616, %v1622, %v1624
        %v1626 = vrot.slane %v744, 3
        %v1627 = vsel %vm1616, %v1624, %v1626
        %v1628 = vrot.slane %v746, 3
        %v1629 = vsel %vm1616, %v1626, %v1628
        %v1630 = vrot.slane %v748, 3
        %v1631 = vsel %vm1616, %v1628, %v1630
        %v1632 = vrot.slane %v934, 3
        %v1633 = vsel %vm1616, %v1630, %v1632
        %v1634 = vrot.slane %v927, 3
        %v1635 = vrot.slane %v751, 3
        %v1636 = vsel %vm1616, %v1634, %v1635
        %v1637 = vrot.slane %v753, 3
        %v1638 = vsel %vm1616, %v1635, %v1637
        %v1639 = vrot.slane %v755, 3
        %v1640 = vsel %vm1616, %v1637, %v1639
        %v1641 = vrot.slane %v757, 3
        %v1642 = vsel %vm1616, %v1639, %v1641
        %v1643 = vrot.slane %v759, 3
        %v1644 = vsel %vm1616, %v1641, %v1643
        %v1645 = vrot.slane %v761, 3
        %v1646 = vsel %vm1616, %v1643, %v1645
        %v1647 = vrot.slane %v763, 3
        %v1648 = vsel %vm1616, %v1645, %v1647
        %v1649 = vrot.slane %v935, 3
        %v1650 = vsel %vm1616, %v1647, %v1649
        %v1651 = vrot.slane %v928, 3
        %v1652 = vrot.slane %v766, 3
        %v1653 = vsel %vm1616, %v1651, %v1652
        %v1654 = vrot.slane %v768, 3
        %v1655 = vsel %vm1616, %v1652, %v1654
        %v1656 = vrot.slane %v770, 3
        %v1657 = vsel %vm1616, %v1654, %v1656
        %v1658 = vrot.slane %v772, 3
        %v1659 = vsel %vm1616, %v1656, %v1658
        %v1660 = vrot.slane %v774, 3
        %v1661 = vsel %vm1616, %v1658, %v1660
        %v1662 = vrot.slane %v776, 3
        %v1663 = vsel %vm1616, %v1660, %v1662
        %v1664 = vrot.slane %v778, 3
        %v1665 = vsel %vm1616, %v1662, %v1664
        %v1666 = vrot.slane %v936, 3
        %v1667 = vsel %vm1616, %v1664, %v1666
        %v1668 = vrot.slane %v929, 3
        %v1669 = vrot.slane %v781, 3
        %v1670 = vsel %vm1616, %v1668, %v1669
        %v1671 = vrot.slane %v783, 3
        %v1672 = vsel %vm1616, %v1669, %v1671
        %v1673 = vrot.slane %v785, 3
        %v1674 = vsel %vm1616, %v1671, %v1673
        %v1675 = vrot.slane %v787, 3
        %v1676 = vsel %vm1616, %v1673, %v1675
        %v1677 = vrot.slane %v789, 3
        %v1678 = vsel %vm1616, %v1675, %v1677
        %v1679 = vrot.slane %v791, 3
        %v1680 = vsel %vm1616, %v1677, %v1679
        %v1681 = vrot.slane %v793, 3
        %v1682 = vsel %vm1616, %v1679, %v1681
        %v1683 = vrot.slane %v937, 3
        %v1684 = vsel %vm1616, %v1681, %v1683
        %v1685 = vrot.slane %v930, 3
        %v1686 = vrot.slane %v796, 3
        %v1687 = vsel %vm1616, %v1685, %v1686
        %v1688 = vrot.slane %v798, 3
        %v1689 = vsel %vm1616, %v1686, %v1688
        %v1690 = vrot.slane %v800, 3
        %v1691 = vsel %vm1616, %v1688, %v1690
        %v1692 = vrot.slane %v802, 3
        %v1693 = vsel %vm1616, %v1690, %v1692
        %v1694 = vrot.slane %v804, 3
        %v1695 = vsel %vm1616, %v1692, %v1694
        %v1696 = vrot.slane %v806, 3
        %v1697 = vsel %vm1616, %v1694, %v1696
        %v1698 = vrot.slane %v808, 3
        %v1699 = vsel %vm1616, %v1696, %v1698
        %v1700 = vrot.slane %v938, 3
        %v1701 = vsel %vm1616, %v1698, %v1700
        %v1702 = vrot.slane %v931, 3
        %v1703 = vrot.slane %v811, 3
        %v1704 = vsel %vm1616, %v1702, %v1703
        %v1705 = vrot.slane %v813, 3
        %v1706 = vsel %vm1616, %v1703, %v1705
        %v1707 = vrot.slane %v815, 3
        %v1708 = vsel %vm1616, %v1705, %v1707
        %v1709 = vrot.slane %v817, 3
        %v1710 = vsel %vm1616, %v1707, %v1709
        %v1711 = vrot.slane %v819, 3
        %v1712 = vsel %vm1616, %v1709, %v1711
        %v1713 = vrot.slane %v821, 3
        %v1714 = vsel %vm1616, %v1711, %v1713
        %v1715 = vrot.slane %v823, 3
        %v1716 = vsel %vm1616, %v1713, %v1715
        %v1717 = vrot.slane %v939, 3
        %v1718 = vsel %vm1616, %v1715, %v1717
        %v1719 = vrot.slane %v932, 3
        %v1720 = vrot.slane %v826, 3
        %v1721 = vsel %vm1616, %v1719, %v1720
        %v1722 = vrot.slane %v828, 3
        %v1723 = vsel %vm1616, %v1720, %v1722
        %v1724 = vrot.slane %v830, 3
        %v1725 = vsel %vm1616, %v1722, %v1724
        %v1726 = vrot.slane %v832, 3
        %v1727 = vsel %vm1616, %v1724, %v1726
        %v1728 = vrot.slane %v834, 3
        %v1729 = vsel %vm1616, %v1726, %v1728
        %v1730 = vrot.slane %v836, 3
        %v1731 = vsel %vm1616, %v1728, %v1730
        %v1732 = vrot.slane %v838, 3
        %v1733 = vsel %vm1616, %v1730, %v1732
        %v1734 = vrot.slane %v940, 3
        %v1735 = vsel %vm1616, %v1732, %v1734
        %v1736 = vrot.slane %v933, 3
        %v1737 = vrot.slane %v841, 3
        %v1738 = vsel %vm1616, %v1736, %v1737
        %v1739 = vrot.slane %v843, 3
        %v1740 = vsel %vm1616, %v1737, %v1739
        %v1741 = vrot.slane %v845, 3
        %v1742 = vsel %vm1616, %v1739, %v1741
        %v1743 = vrot.slane %v847, 3
        %v1744 = vsel %vm1616, %v1741, %v1743
        %v1745 = vrot.slane %v849, 3
        %v1746 = vsel %vm1616, %v1743, %v1745
        %v1747 = vrot.slane %v851, 3
        %v1748 = vsel %vm1616, %v1745, %v1747
        %v1749 = vrot.slane %v853, 3
        %v1750 = vsel %vm1616, %v1747, %v1749
        %v1751 = vrot.slane %v941, 3
        %v1752 = vsel %vm1616, %v1749, %v1751
        %1753 = vrot.lane.b32.xlu0 %v1619, 3
        %v1754 = vpop.permute.xlu0 %1753
        %1755 = vrot.lane.b32.xlu0 %v1621, 3
        %v1756 = vpop.permute.xlu0 %1755
        %1757 = vrot.lane.b32.xlu0 %v1623, 3
        %v1758 = vpop.permute.xlu0 %1757
        %1759 = vrot.lane.b32.xlu0 %v1625, 3
        %v1760 = vpop.permute.xlu0 %1759
        %1761 = vrot.lane.b32.xlu0 %v1627, 3
        %v1762 = vpop.permute.xlu0 %1761
        %1763 = vrot.lane.b32.xlu0 %v1629, 3
        %v1764 = vpop.permute.xlu0 %1763
        %1765 = vrot.lane.b32.xlu0 %v1631, 3
        %v1766 = vpop.permute.xlu0 %1765
        %1767 = vrot.lane.b32.xlu0 %v1633, 3
        %v1768 = vpop.permute.xlu0 %1767
        %1769 = vrot.lane.b32.xlu0 %v1636, 3
        %v1770 = vpop.permute.xlu0 %1769
        %1771 = vrot.lane.b32.xlu0 %v1638, 3
        %v1772 = vpop.permute.xlu0 %1771
        %1773 = vrot.lane.b32.xlu0 %v1640, 3
        %v1774 = vpop.permute.xlu0 %1773
        %1775 = vrot.lane.b32.xlu0 %v1642, 3
        %v1776 = vpop.permute.xlu0 %1775
        %1777 = vrot.lane.b32.xlu0 %v1644, 3
        %v1778 = vpop.permute.xlu0 %1777
        %1779 = vrot.lane.b32.xlu0 %v1646, 3
        %v1780 = vpop.permute.xlu0 %1779
        %1781 = vrot.lane.b32.xlu0 %v1648, 3
        %v1782 = vpop.permute.xlu0 %1781
        %1783 = vrot.lane.b32.xlu0 %v1650, 3
        %v1784 = vpop.permute.xlu0 %1783
        %1785 = vrot.lane.b32.xlu0 %v1653, 3
        %v1786 = vpop.permute.xlu0 %1785
        %1787 = vrot.lane.b32.xlu0 %v1655, 3
        %v1788 = vpop.permute.xlu0 %1787
        %1789 = vrot.lane.b32.xlu0 %v1657, 3
        %v1790 = vpop.permute.xlu0 %1789
        %1791 = vrot.lane.b32.xlu0 %v1659, 3
        %v1792 = vpop.permute.xlu0 %1791
        %1793 = vrot.lane.b32.xlu0 %v1661, 3
        %v1794 = vpop.permute.xlu0 %1793
        %1795 = vrot.lane.b32.xlu0 %v1663, 3
        %v1796 = vpop.permute.xlu0 %1795
        %1797 = vrot.lane.b32.xlu0 %v1665, 3
        %v1798 = vpop.permute.xlu0 %1797
        %1799 = vrot.lane.b32.xlu0 %v1667, 3
        %v1800 = vpop.permute.xlu0 %1799
        %1801 = vrot.lane.b32.xlu0 %v1670, 3
        %v1802 = vpop.permute.xlu0 %1801
        %1803 = vrot.lane.b32.xlu0 %v1672, 3
        %v1804 = vpop.permute.xlu0 %1803
        %1805 = vrot.lane.b32.xlu0 %v1674, 3
        %v1806 = vpop.permute.xlu0 %1805
        %1807 = vrot.lane.b32.xlu0 %v1676, 3
        %v1808 = vpop.permute.xlu0 %1807
        %1809 = vrot.lane.b32.xlu0 %v1678, 3
        %v1810 = vpop.permute.xlu0 %1809
        %1811 = vrot.lane.b32.xlu0 %v1680, 3
        %v1812 = vpop.permute.xlu0 %1811
        %1813 = vrot.lane.b32.xlu0 %v1682, 3
        %v1814 = vpop.permute.xlu0 %1813
        %1815 = vrot.lane.b32.xlu0 %v1684, 3
        %v1816 = vpop.permute.xlu0 %1815
        %1817 = vrot.lane.b32.xlu0 %v1687, 3
        %v1818 = vpop.permute.xlu0 %1817
        %1819 = vrot.lane.b32.xlu0 %v1689, 3
        %v1820 = vpop.permute.xlu0 %1819
        %1821 = vrot.lane.b32.xlu0 %v1691, 3
        %v1822 = vpop.permute.xlu0 %1821
        %1823 = vrot.lane.b32.xlu0 %v1693, 3
        %v1824 = vpop.permute.xlu0 %1823
        %1825 = vrot.lane.b32.xlu0 %v1695, 3
        %v1826 = vpop.permute.xlu0 %1825
        %1827 = vrot.lane.b32.xlu0 %v1697, 3
        %v1828 = vpop.permute.xlu0 %1827
        %1829 = vrot.lane.b32.xlu0 %v1699, 3
        %v1830 = vpop.permute.xlu0 %1829
        %1831 = vrot.lane.b32.xlu0 %v1701, 3
        %v1832 = vpop.permute.xlu0 %1831
        %1833 = vrot.lane.b32.xlu0 %v1704, 3
        %v1834 = vpop.permute.xlu0 %1833
        %1835 = vrot.lane.b32.xlu0 %v1706, 3
        %v1836 = vpop.permute.xlu0 %1835
        %1837 = vrot.lane.b32.xlu0 %v1708, 3
        %v1838 = vpop.permute.xlu0 %1837
        %1839 = vrot.lane.b32.xlu0 %v1710, 3
        %v1840 = vpop.permute.xlu0 %1839
        %1841 = vrot.lane.b32.xlu0 %v1712, 3
        %v1842 = vpop.permute.xlu0 %1841
        %1843 = vrot.lane.b32.xlu0 %v1714, 3
        %v1844 = vpop.permute.xlu0 %1843
        %1845 = vrot.lane.b32.xlu0 %v1716, 3
        %v1846 = vpop.permute.xlu0 %1845
        %1847 = vrot.lane.b32.xlu0 %v1718, 3
        %v1848 = vpop.permute.xlu0 %1847
        %1849 = vrot.lane.b32.xlu0 %v1721, 3
        %v1850 = vpop.permute.xlu0 %1849
        %1851 = vrot.lane.b32.xlu0 %v1723, 3
        %v1852 = vpop.permute.xlu0 %1851
        %1853 = vrot.lane.b32.xlu0 %v1725, 3
        %v1854 = vpop.permute.xlu0 %1853
        %1855 = vrot.lane.b32.xlu0 %v1727, 3
        %v1856 = vpop.permute.xlu0 %1855
        %1857 = vrot.lane.b32.xlu0 %v1729, 3
        %v1858 = vpop.permute.xlu0 %1857
        %1859 = vrot.lane.b32.xlu0 %v1731, 3
        %v1860 = vpop.permute.xlu0 %1859
        %1861 = vrot.lane.b32.xlu0 %v1733, 3
        %v1862 = vpop.permute.xlu0 %1861
        %1863 = vrot.lane.b32.xlu0 %v1735, 3
        %v1864 = vpop.permute.xlu0 %1863
        %1865 = vrot.lane.b32.xlu0 %v1738, 3
        %v1866 = vpop.permute.xlu0 %1865
        %1867 = vrot.lane.b32.xlu0 %v1740, 3
        %v1868 = vpop.permute.xlu0 %1867
        %1869 = vrot.lane.b32.xlu0 %v1742, 3
        %v1870 = vpop.permute.xlu0 %1869
        %1871 = vrot.lane.b32.xlu0 %v1744, 3
        %v1872 = vpop.permute.xlu0 %1871
        %1873 = vrot.lane.b32.xlu0 %v1746, 3
        %v1874 = vpop.permute.xlu0 %1873
        %1875 = vrot.lane.b32.xlu0 %v1748, 3
        %v1876 = vpop.permute.xlu0 %1875
        %1877 = vrot.lane.b32.xlu0 %v1750, 3
        %v1878 = vpop.permute.xlu0 %1877
        %1879 = vrot.lane.b32.xlu0 %v1752, 3
        %v1880 = vpop.permute.xlu0 %1879
        %vm1945 = vcmask 1043456
        %v1946 = vrot.slane %v926, 4
        %v1947 = vrot.slane %v736, 4
        %v1948 = vsel %vm1945, %v1946, %v1947
        %v1949 = vrot.slane %v738, 4
        %v1950 = vsel %vm1945, %v1947, %v1949
        %v1951 = vrot.slane %v740, 4
        %v1952 = vsel %vm1945, %v1949, %v1951
        %v1953 = vrot.slane %v742, 4
        %v1954 = vsel %vm1945, %v1951, %v1953
        %v1955 = vrot.slane %v744, 4
        %v1956 = vsel %vm1945, %v1953, %v1955
        %v1957 = vrot.slane %v746, 4
        %v1958 = vsel %vm1945, %v1955, %v1957
        %v1959 = vrot.slane %v748, 4
        %v1960 = vsel %vm1945, %v1957, %v1959
        %v1961 = vrot.slane %v934, 4
        %v1962 = vsel %vm1945, %v1959, %v1961
        %v1963 = vrot.slane %v927, 4
        %v1964 = vrot.slane %v751, 4
        %v1965 = vsel %vm1945, %v1963, %v1964
        %v1966 = vrot.slane %v753, 4
        %v1967 = vsel %vm1945, %v1964, %v1966
        %v1968 = vrot.slane %v755, 4
        %v1969 = vsel %vm1945, %v1966, %v1968
        %v1970 = vrot.slane %v757, 4
        %v1971 = vsel %vm1945, %v1968, %v1970
        %v1972 = vrot.slane %v759, 4
        %v1973 = vsel %vm1945, %v1970, %v1972
        %v1974 = vrot.slane %v761, 4
        %v1975 = vsel %vm1945, %v1972, %v1974
        %v1976 = vrot.slane %v763, 4
        %v1977 = vsel %vm1945, %v1974, %v1976
        %v1978 = vrot.slane %v935, 4
        %v1979 = vsel %vm1945, %v1976, %v1978
        %v1980 = vrot.slane %v928, 4
        %v1981 = vrot.slane %v766, 4
        %v1982 = vsel %vm1945, %v1980, %v1981
        %v1983 = vrot.slane %v768, 4
        %v1984 = vsel %vm1945, %v1981, %v1983
        %v1985 = vrot.slane %v770, 4
        %v1986 = vsel %vm1945, %v1983, %v1985
        %v1987 = vrot.slane %v772, 4
        %v1988 = vsel %vm1945, %v1985, %v1987
        %v1989 = vrot.slane %v774, 4
        %v1990 = vsel %vm1945, %v1987, %v1989
        %v1991 = vrot.slane %v776, 4
        %v1992 = vsel %vm1945, %v1989, %v1991
        %v1993 = vrot.slane %v778, 4
        %v1994 = vsel %vm1945, %v1991, %v1993
        %v1995 = vrot.slane %v936, 4
        %v1996 = vsel %vm1945, %v1993, %v1995
        %v1997 = vrot.slane %v929, 4
        %v1998 = vrot.slane %v781, 4
        %v1999 = vsel %vm1945, %v1997, %v1998
        %v2000 = vrot.slane %v783, 4
        %v2001 = vsel %vm1945, %v1998, %v2000
        %v2002 = vrot.slane %v785, 4
        %v2003 = vsel %vm1945, %v2000, %v2002
        %v2004 = vrot.slane %v787, 4
        %v2005 = vsel %vm1945, %v2002, %v2004
        %v2006 = vrot.slane %v789, 4
        %v2007 = vsel %vm1945, %v2004, %v2006
        %v2008 = vrot.slane %v791, 4
        %v2009 = vsel %vm1945, %v2006, %v2008
        %v2010 = vrot.slane %v793, 4
        %v2011 = vsel %vm1945, %v2008, %v2010
        %v2012 = vrot.slane %v937, 4
        %v2013 = vsel %vm1945, %v2010, %v2012
        %v2014 = vrot.slane %v930, 4
        %v2015 = vrot.slane %v796, 4
        %v2016 = vsel %vm1945, %v2014, %v2015
        %v2017 = vrot.slane %v798, 4
        %v2018 = vsel %vm1945, %v2015, %v2017
        %v2019 = vrot.slane %v800, 4
        %v2020 = vsel %vm1945, %v2017, %v2019
        %v2021 = vrot.slane %v802, 4
        %v2022 = vsel %vm1945, %v2019, %v2021
        %v2023 = vrot.slane %v804, 4
        %v2024 = vsel %vm1945, %v2021, %v2023
        %v2025 = vrot.slane %v806, 4
        %v2026 = vsel %vm1945, %v2023, %v2025
        %v2027 = vrot.slane %v808, 4
        %v2028 = vsel %vm1945, %v2025, %v2027
        %v2029 = vrot.slane %v938, 4
        %v2030 = vsel %vm1945, %v2027, %v2029
        %v2031 = vrot.slane %v931, 4
        %v2032 = vrot.slane %v811, 4
        %v2033 = vsel %vm1945, %v2031, %v2032
        %v2034 = vrot.slane %v813, 4
        %v2035 = vsel %vm1945, %v2032, %v2034
        %v2036 = vrot.slane %v815, 4
        %v2037 = vsel %vm1945, %v2034, %v2036
        %v2038 = vrot.slane %v817, 4
        %v2039 = vsel %vm1945, %v2036, %v2038
        %v2040 = vrot.slane %v819, 4
        %v2041 = vsel %vm1945, %v2038, %v2040
        %v2042 = vrot.slane %v821, 4
        %v2043 = vsel %vm1945, %v2040, %v2042
        %v2044 = vrot.slane %v823, 4
        %v2045 = vsel %vm1945, %v2042, %v2044
        %v2046 = vrot.slane %v939, 4
        %v2047 = vsel %vm1945, %v2044, %v2046
        %v2048 = vrot.slane %v932, 4
        %v2049 = vrot.slane %v826, 4
        %v2050 = vsel %vm1945, %v2048, %v2049
        %v2051 = vrot.slane %v828, 4
        %v2052 = vsel %vm1945, %v2049, %v2051
        %v2053 = vrot.slane %v830, 4
        %v2054 = vsel %vm1945, %v2051, %v2053
        %v2055 = vrot.slane %v832, 4
        %v2056 = vsel %vm1945, %v2053, %v2055
        %v2057 = vrot.slane %v834, 4
        %v2058 = vsel %vm1945, %v2055, %v2057
        %v2059 = vrot.slane %v836, 4
        %v2060 = vsel %vm1945, %v2057, %v2059
        %v2061 = vrot.slane %v838, 4
        %v2062 = vsel %vm1945, %v2059, %v2061
        %v2063 = vrot.slane %v940, 4
        %v2064 = vsel %vm1945, %v2061, %v2063
        %v2065 = vrot.slane %v933, 4
        %v2066 = vrot.slane %v841, 4
        %v2067 = vsel %vm1945, %v2065, %v2066
        %v2068 = vrot.slane %v843, 4
        %v2069 = vsel %vm1945, %v2066, %v2068
        %v2070 = vrot.slane %v845, 4
        %v2071 = vsel %vm1945, %v2068, %v2070
        %v2072 = vrot.slane %v847, 4
        %v2073 = vsel %vm1945, %v2070, %v2072
        %v2074 = vrot.slane %v849, 4
        %v2075 = vsel %vm1945, %v2072, %v2074
        %v2076 = vrot.slane %v851, 4
        %v2077 = vsel %vm1945, %v2074, %v2076
        %v2078 = vrot.slane %v853, 4
        %v2079 = vsel %vm1945, %v2076, %v2078
        %v2080 = vrot.slane %v941, 4
        %v2081 = vsel %vm1945, %v2078, %v2080
        %2082 = vrot.lane.b32.xlu0 %v1948, 4
        %v2083 = vpop.permute.xlu0 %2082
        %2084 = vrot.lane.b32.xlu0 %v1950, 4
        %v2085 = vpop.permute.xlu0 %2084
        %2086 = vrot.lane.b32.xlu0 %v1952, 4
        %v2087 = vpop.permute.xlu0 %2086
        %2088 = vrot.lane.b32.xlu0 %v1954, 4
        %v2089 = vpop.permute.xlu0 %2088
        %2090 = vrot.lane.b32.xlu0 %v1956, 4
        %v2091 = vpop.permute.xlu0 %2090
        %2092 = vrot.lane.b32.xlu0 %v1958, 4
        %v2093 = vpop.permute.xlu0 %2092
        %2094 = vrot.lane.b32.xlu0 %v1960, 4
        %v2095 = vpop.permute.xlu0 %2094
        %2096 = vrot.lane.b32.xlu0 %v1962, 4
        %v2097 = vpop.permute.xlu0 %2096
        %2098 = vrot.lane.b32.xlu0 %v1965, 4
        %v2099 = vpop.permute.xlu0 %2098
        %2100 = vrot.lane.b32.xlu0 %v1967, 4
        %v2101 = vpop.permute.xlu0 %2100
        %2102 = vrot.lane.b32.xlu0 %v1969, 4
        %v2103 = vpop.permute.xlu0 %2102
        %2104 = vrot.lane.b32.xlu0 %v1971, 4
        %v2105 = vpop.permute.xlu0 %2104
        %2106 = vrot.lane.b32.xlu0 %v1973, 4
        %v2107 = vpop.permute.xlu0 %2106
        %2108 = vrot.lane.b32.xlu0 %v1975, 4
        %v2109 = vpop.permute.xlu0 %2108
        %2110 = vrot.lane.b32.xlu0 %v1977, 4
        %v2111 = vpop.permute.xlu0 %2110
        %2112 = vrot.lane.b32.xlu0 %v1979, 4
        %v2113 = vpop.permute.xlu0 %2112
        %2114 = vrot.lane.b32.xlu0 %v1982, 4
        %v2115 = vpop.permute.xlu0 %2114
        %2116 = vrot.lane.b32.xlu0 %v1984, 4
        %v2117 = vpop.permute.xlu0 %2116
        %2118 = vrot.lane.b32.xlu0 %v1986, 4
        %v2119 = vpop.permute.xlu0 %2118
        %2120 = vrot.lane.b32.xlu0 %v1988, 4
        %v2121 = vpop.permute.xlu0 %2120
        %2122 = vrot.lane.b32.xlu0 %v1990, 4
        %v2123 = vpop.permute.xlu0 %2122
        %2124 = vrot.lane.b32.xlu0 %v1992, 4
        %v2125 = vpop.permute.xlu0 %2124
        %2126 = vrot.lane.b32.xlu0 %v1994, 4
        %v2127 = vpop.permute.xlu0 %2126
        %2128 = vrot.lane.b32.xlu0 %v1996, 4
        %v2129 = vpop.permute.xlu0 %2128
        %2130 = vrot.lane.b32.xlu0 %v1999, 4
        %v2131 = vpop.permute.xlu0 %2130
        %2132 = vrot.lane.b32.xlu0 %v2001, 4
        %v2133 = vpop.permute.xlu0 %2132
        %2134 = vrot.lane.b32.xlu0 %v2003, 4
        %v2135 = vpop.permute.xlu0 %2134
        %2136 = vrot.lane.b32.xlu0 %v2005, 4
        %v2137 = vpop.permute.xlu0 %2136
        %2138 = vrot.lane.b32.xlu0 %v2007, 4
        %v2139 = vpop.permute.xlu0 %2138
        %2140 = vrot.lane.b32.xlu0 %v2009, 4
        %v2141 = vpop.permute.xlu0 %2140
        %2142 = vrot.lane.b32.xlu0 %v2011, 4
        %v2143 = vpop.permute.xlu0 %2142
        %2144 = vrot.lane.b32.xlu0 %v2013, 4
        %v2145 = vpop.permute.xlu0 %2144
        %2146 = vrot.lane.b32.xlu0 %v2016, 4
        %v2147 = vpop.permute.xlu0 %2146
        %2148 = vrot.lane.b32.xlu0 %v2018, 4
        %v2149 = vpop.permute.xlu0 %2148
        %2150 = vrot.lane.b32.xlu0 %v2020, 4
        %v2151 = vpop.permute.xlu0 %2150
        %2152 = vrot.lane.b32.xlu0 %v2022, 4
        %v2153 = vpop.permute.xlu0 %2152
        %2154 = vrot.lane.b32.xlu0 %v2024, 4
        %v2155 = vpop.permute.xlu0 %2154
        %2156 = vrot.lane.b32.xlu0 %v2026, 4
        %v2157 = vpop.permute.xlu0 %2156
        %2158 = vrot.lane.b32.xlu0 %v2028, 4
        %v2159 = vpop.permute.xlu0 %2158
        %2160 = vrot.lane.b32.xlu0 %v2030, 4
        %v2161 = vpop.permute.xlu0 %2160
        %2162 = vrot.lane.b32.xlu0 %v2033, 4
        %v2163 = vpop.permute.xlu0 %2162
        %2164 = vrot.lane.b32.xlu0 %v2035, 4
        %v2165 = vpop.permute.xlu0 %2164
        %2166 = vrot.lane.b32.xlu0 %v2037, 4
        %v2167 = vpop.permute.xlu0 %2166
        %2168 = vrot.lane.b32.xlu0 %v2039, 4
        %v2169 = vpop.permute.xlu0 %2168
        %2170 = vrot.lane.b32.xlu0 %v2041, 4
        %v2171 = vpop.permute.xlu0 %2170
        %2172 = vrot.lane.b32.xlu0 %v2043, 4
        %v2173 = vpop.permute.xlu0 %2172
        %2174 = vrot.lane.b32.xlu0 %v2045, 4
        %v2175 = vpop.permute.xlu0 %2174
        %2176 = vrot.lane.b32.xlu0 %v2047, 4
        %v2177 = vpop.permute.xlu0 %2176
        %2178 = vrot.lane.b32.xlu0 %v2050, 4
        %v2179 = vpop.permute.xlu0 %2178
        %2180 = vrot.lane.b32.xlu0 %v2052, 4
        %v2181 = vpop.permute.xlu0 %2180
        %2182 = vrot.lane.b32.xlu0 %v2054, 4
        %v2183 = vpop.permute.xlu0 %2182
        %2184 = vrot.lane.b32.xlu0 %v2056, 4
        %v2185 = vpop.permute.xlu0 %2184
        %2186 = vrot.lane.b32.xlu0 %v2058, 4
        %v2187 = vpop.permute.xlu0 %2186
        %2188 = vrot.lane.b32.xlu0 %v2060, 4
        %v2189 = vpop.permute.xlu0 %2188
        %2190 = vrot.lane.b32.xlu0 %v2062, 4
        %v2191 = vpop.permute.xlu0 %2190
        %2192 = vrot.lane.b32.xlu0 %v2064, 4
        %v2193 = vpop.permute.xlu0 %2192
        %2194 = vrot.lane.b32.xlu0 %v2067, 4
        %v2195 = vpop.permute.xlu0 %2194
        %2196 = vrot.lane.b32.xlu0 %v2069, 4
        %v2197 = vpop.permute.xlu0 %2196
        %2198 = vrot.lane.b32.xlu0 %v2071, 4
        %v2199 = vpop.permute.xlu0 %2198
        %2200 = vrot.lane.b32.xlu0 %v2073, 4
        %v2201 = vpop.permute.xlu0 %2200
        %2202 = vrot.lane.b32.xlu0 %v2075, 4
        %v2203 = vpop.permute.xlu0 %2202
        %2204 = vrot.lane.b32.xlu0 %v2077, 4
        %v2205 = vpop.permute.xlu0 %2204
        %2206 = vrot.lane.b32.xlu0 %v2079, 4
        %v2207 = vpop.permute.xlu0 %2206
        %2208 = vrot.lane.b32.xlu0 %v2081, 4
        %v2209 = vpop.permute.xlu0 %2208
        %v2274 = vrot.slane %v926, 5
        %v2275 = vrot.slane %v736, 5
        %v2276 = vsel %vm733, %v2274, %v2275
        %v2277 = vrot.slane %v738, 5
        %v2278 = vsel %vm733, %v2275, %v2277
        %v2279 = vrot.slane %v740, 5
        %v2280 = vsel %vm733, %v2277, %v2279
        %v2281 = vrot.slane %v742, 5
        %v2282 = vsel %vm733, %v2279, %v2281
        %v2283 = vrot.slane %v744, 5
        %v2284 = vsel %vm733, %v2281, %v2283
        %v2285 = vrot.slane %v746, 5
        %v2286 = vsel %vm733, %v2283, %v2285
        %v2287 = vrot.slane %v748, 5
        %v2288 = vsel %vm733, %v2285, %v2287
        %v2289 = vrot.slane %v934, 5
        %v2290 = vsel %vm733, %v2287, %v2289
        %v2291 = vrot.slane %v927, 5
        %v2292 = vrot.slane %v751, 5
        %v2293 = vsel %vm733, %v2291, %v2292
        %v2294 = vrot.slane %v753, 5
        %v2295 = vsel %vm733, %v2292, %v2294
        %v2296 = vrot.slane %v755, 5
        %v2297 = vsel %vm733, %v2294, %v2296
        %v2298 = vrot.slane %v757, 5
        %v2299 = vsel %vm733, %v2296, %v2298
        %v2300 = vrot.slane %v759, 5
        %v2301 = vsel %vm733, %v2298, %v2300
        %v2302 = vrot.slane %v761, 5
        %v2303 = vsel %vm733, %v2300, %v2302
        %v2304 = vrot.slane %v763, 5
        %v2305 = vsel %vm733, %v2302, %v2304
        %v2306 = vrot.slane %v935, 5
        %v2307 = vsel %vm733, %v2304, %v2306
        %v2308 = vrot.slane %v928, 5
        %v2309 = vrot.slane %v766, 5
        %v2310 = vsel %vm733, %v2308, %v2309
        %v2311 = vrot.slane %v768, 5
        %v2312 = vsel %vm733, %v2309, %v2311
        %v2313 = vrot.slane %v770, 5
        %v2314 = vsel %vm733, %v2311, %v2313
        %v2315 = vrot.slane %v772, 5
        %v2316 = vsel %vm733, %v2313, %v2315
        %v2317 = vrot.slane %v774, 5
        %v2318 = vsel %vm733, %v2315, %v2317
        %v2319 = vrot.slane %v776, 5
        %v2320 = vsel %vm733, %v2317, %v2319
        %v2321 = vrot.slane %v778, 5
        %v2322 = vsel %vm733, %v2319, %v2321
        %v2323 = vrot.slane %v936, 5
        %v2324 = vsel %vm733, %v2321, %v2323
        %v2325 = vrot.slane %v929, 5
        %v2326 = vrot.slane %v781, 5
        %v2327 = vsel %vm733, %v2325, %v2326
        %v2328 = vrot.slane %v783, 5
        %v2329 = vsel %vm733, %v2326, %v2328
        %v2330 = vrot.slane %v785, 5
        %v2331 = vsel %vm733, %v2328, %v2330
        %v2332 = vrot.slane %v787, 5
        %v2333 = vsel %vm733, %v2330, %v2332
        %v2334 = vrot.slane %v789, 5
        %v2335 = vsel %vm733, %v2332, %v2334
        %v2336 = vrot.slane %v791, 5
        %v2337 = vsel %vm733, %v2334, %v2336
        %v2338 = vrot.slane %v793, 5
        %v2339 = vsel %vm733, %v2336, %v2338
        %v2340 = vrot.slane %v937, 5
        %v2341 = vsel %vm733, %v2338, %v2340
        %v2342 = vrot.slane %v930, 5
        %v2343 = vrot.slane %v796, 5
        %v2344 = vsel %vm733, %v2342, %v2343
        %v2345 = vrot.slane %v798, 5
        %v2346 = vsel %vm733, %v2343, %v2345
        %v2347 = vrot.slane %v800, 5
        %v2348 = vsel %vm733, %v2345, %v2347
        %v2349 = vrot.slane %v802, 5
        %v2350 = vsel %vm733, %v2347, %v2349
        %v2351 = vrot.slane %v804, 5
        %v2352 = vsel %vm733, %v2349, %v2351
        %v2353 = vrot.slane %v806, 5
        %v2354 = vsel %vm733, %v2351, %v2353
        %v2355 = vrot.slane %v808, 5
        %v2356 = vsel %vm733, %v2353, %v2355
        %v2357 = vrot.slane %v938, 5
        %v2358 = vsel %vm733, %v2355, %v2357
        %v2359 = vrot.slane %v931, 5
        %v2360 = vrot.slane %v811, 5
        %v2361 = vsel %vm733, %v2359, %v2360
        %v2362 = vrot.slane %v813, 5
        %v2363 = vsel %vm733, %v2360, %v2362
        %v2364 = vrot.slane %v815, 5
        %v2365 = vsel %vm733, %v2362, %v2364
        %v2366 = vrot.slane %v817, 5
        %v2367 = vsel %vm733, %v2364, %v2366
        %v2368 = vrot.slane %v819, 5
        %v2369 = vsel %vm733, %v2366, %v2368
        %v2370 = vrot.slane %v821, 5
        %v2371 = vsel %vm733, %v2368, %v2370
        %v2372 = vrot.slane %v823, 5
        %v2373 = vsel %vm733, %v2370, %v2372
        %v2374 = vrot.slane %v939, 5
        %v2375 = vsel %vm733, %v2372, %v2374
        %v2376 = vrot.slane %v932, 5
        %v2377 = vrot.slane %v826, 5
        %v2378 = vsel %vm733, %v2376, %v2377
        %v2379 = vrot.slane %v828, 5
        %v2380 = vsel %vm733, %v2377, %v2379
        %v2381 = vrot.slane %v830, 5
        %v2382 = vsel %vm733, %v2379, %v2381
        %v2383 = vrot.slane %v832, 5
        %v2384 = vsel %vm733, %v2381, %v2383
        %v2385 = vrot.slane %v834, 5
        %v2386 = vsel %vm733, %v2383, %v2385
        %v2387 = vrot.slane %v836, 5
        %v2388 = vsel %vm733, %v2385, %v2387
        %v2389 = vrot.slane %v838, 5
        %v2390 = vsel %vm733, %v2387, %v2389
        %v2391 = vrot.slane %v940, 5
        %v2392 = vsel %vm733, %v2389, %v2391
        %v2393 = vrot.slane %v933, 5
        %v2394 = vrot.slane %v841, 5
        %v2395 = vsel %vm733, %v2393, %v2394
        %v2396 = vrot.slane %v843, 5
        %v2397 = vsel %vm733, %v2394, %v2396
        %v2398 = vrot.slane %v845, 5
        %v2399 = vsel %vm733, %v2396, %v2398
        %v2400 = vrot.slane %v847, 5
        %v2401 = vsel %vm733, %v2398, %v2400
        %v2402 = vrot.slane %v849, 5
        %v2403 = vsel %vm733, %v2400, %v2402
        %v2404 = vrot.slane %v851, 5
        %v2405 = vsel %vm733, %v2402, %v2404
        %v2406 = vrot.slane %v853, 5
        %v2407 = vsel %vm733, %v2404, %v2406
        %v2408 = vrot.slane %v941, 5
        %v2409 = vsel %vm733, %v2406, %v2408
        %2410 = vrot.lane.b32.xlu0 %v2276, 5
        %v2411 = vpop.permute.xlu0 %2410
        %2412 = vrot.lane.b32.xlu0 %v2278, 5
        %v2413 = vpop.permute.xlu0 %2412
        %2414 = vrot.lane.b32.xlu0 %v2280, 5
        %v2415 = vpop.permute.xlu0 %2414
        %2416 = vrot.lane.b32.xlu0 %v2282, 5
        %v2417 = vpop.permute.xlu0 %2416
        %2418 = vrot.lane.b32.xlu0 %v2284, 5
        %v2419 = vpop.permute.xlu0 %2418
        %2420 = vrot.lane.b32.xlu0 %v2286, 5
        %v2421 = vpop.permute.xlu0 %2420
        %2422 = vrot.lane.b32.xlu0 %v2288, 5
        %v2423 = vpop.permute.xlu0 %2422
        %2424 = vrot.lane.b32.xlu0 %v2290, 5
        %v2425 = vpop.permute.xlu0 %2424
        %2426 = vrot.lane.b32.xlu0 %v2293, 5
        %v2427 = vpop.permute.xlu0 %2426
        %2428 = vrot.lane.b32.xlu0 %v2295, 5
        %v2429 = vpop.permute.xlu0 %2428
        %2430 = vrot.lane.b32.xlu0 %v2297, 5
        %v2431 = vpop.permute.xlu0 %2430
        %2432 = vrot.lane.b32.xlu0 %v2299, 5
        %v2433 = vpop.permute.xlu0 %2432
        %2434 = vrot.lane.b32.xlu0 %v2301, 5
        %v2435 = vpop.permute.xlu0 %2434
        %2436 = vrot.lane.b32.xlu0 %v2303, 5
        %v2437 = vpop.permute.xlu0 %2436
        %2438 = vrot.lane.b32.xlu0 %v2305, 5
        %v2439 = vpop.permute.xlu0 %2438
        %2440 = vrot.lane.b32.xlu0 %v2307, 5
        %v2441 = vpop.permute.xlu0 %2440
        %2442 = vrot.lane.b32.xlu0 %v2310, 5
        %v2443 = vpop.permute.xlu0 %2442
        %2444 = vrot.lane.b32.xlu0 %v2312, 5
        %v2445 = vpop.permute.xlu0 %2444
        %2446 = vrot.lane.b32.xlu0 %v2314, 5
        %v2447 = vpop.permute.xlu0 %2446
        %2448 = vrot.lane.b32.xlu0 %v2316, 5
        %v2449 = vpop.permute.xlu0 %2448
        %2450 = vrot.lane.b32.xlu0 %v2318, 5
        %v2451 = vpop.permute.xlu0 %2450
        %2452 = vrot.lane.b32.xlu0 %v2320, 5
        %v2453 = vpop.permute.xlu0 %2452
        %2454 = vrot.lane.b32.xlu0 %v2322, 5
        %v2455 = vpop.permute.xlu0 %2454
        %2456 = vrot.lane.b32.xlu0 %v2324, 5
        %v2457 = vpop.permute.xlu0 %2456
        %2458 = vrot.lane.b32.xlu0 %v2327, 5
        %v2459 = vpop.permute.xlu0 %2458
        %2460 = vrot.lane.b32.xlu0 %v2329, 5
        %v2461 = vpop.permute.xlu0 %2460
        %2462 = vrot.lane.b32.xlu0 %v2331, 5
        %v2463 = vpop.permute.xlu0 %2462
        %2464 = vrot.lane.b32.xlu0 %v2333, 5
        %v2465 = vpop.permute.xlu0 %2464
        %2466 = vrot.lane.b32.xlu0 %v2335, 5
        %v2467 = vpop.permute.xlu0 %2466
        %2468 = vrot.lane.b32.xlu0 %v2337, 5
        %v2469 = vpop.permute.xlu0 %2468
        %2470 = vrot.lane.b32.xlu0 %v2339, 5
        %v2471 = vpop.permute.xlu0 %2470
        %2472 = vrot.lane.b32.xlu0 %v2341, 5
        %v2473 = vpop.permute.xlu0 %2472
        %2474 = vrot.lane.b32.xlu0 %v2344, 5
        %v2475 = vpop.permute.xlu0 %2474
        %2476 = vrot.lane.b32.xlu0 %v2346, 5
        %v2477 = vpop.permute.xlu0 %2476
        %2478 = vrot.lane.b32.xlu0 %v2348, 5
        %v2479 = vpop.permute.xlu0 %2478
        %2480 = vrot.lane.b32.xlu0 %v2350, 5
        %v2481 = vpop.permute.xlu0 %2480
        %2482 = vrot.lane.b32.xlu0 %v2352, 5
        %v2483 = vpop.permute.xlu0 %2482
        %2484 = vrot.lane.b32.xlu0 %v2354, 5
        %v2485 = vpop.permute.xlu0 %2484
        %2486 = vrot.lane.b32.xlu0 %v2356, 5
        %v2487 = vpop.permute.xlu0 %2486
        %2488 = vrot.lane.b32.xlu0 %v2358, 5
        %v2489 = vpop.permute.xlu0 %2488
        %2490 = vrot.lane.b32.xlu0 %v2361, 5
        %v2491 = vpop.permute.xlu0 %2490
        %2492 = vrot.lane.b32.xlu0 %v2363, 5
        %v2493 = vpop.permute.xlu0 %2492
        %2494 = vrot.lane.b32.xlu0 %v2365, 5
        %v2495 = vpop.permute.xlu0 %2494
        %2496 = vrot.lane.b32.xlu0 %v2367, 5
        %v2497 = vpop.permute.xlu0 %2496
        %2498 = vrot.lane.b32.xlu0 %v2369, 5
        %v2499 = vpop.permute.xlu0 %2498
        %2500 = vrot.lane.b32.xlu0 %v2371, 5
        %v2501 = vpop.permute.xlu0 %2500
        %2502 = vrot.lane.b32.xlu0 %v2373, 5
        %v2503 = vpop.permute.xlu0 %2502
        %2504 = vrot.lane.b32.xlu0 %v2375, 5
        %v2505 = vpop.permute.xlu0 %2504
        %2506 = vrot.lane.b32.xlu0 %v2378, 5
        %v2507 = vpop.permute.xlu0 %2506
        %2508 = vrot.lane.b32.xlu0 %v2380, 5
        %v2509 = vpop.permute.xlu0 %2508
        %2510 = vrot.lane.b32.xlu0 %v2382, 5
        %v2511 = vpop.permute.xlu0 %2510
        %2512 = vrot.lane.b32.xlu0 %v2384, 5
        %v2513 = vpop.permute.xlu0 %2512
        %2514 = vrot.lane.b32.xlu0 %v2386, 5
        %v2515 = vpop.permute.xlu0 %2514
        %2516 = vrot.lane.b32.xlu0 %v2388, 5
        %v2517 = vpop.permute.xlu0 %2516
        %2518 = vrot.lane.b32.xlu0 %v2390, 5
        %v2519 = vpop.permute.xlu0 %2518
        %2520 = vrot.lane.b32.xlu0 %v2392, 5
        %v2521 = vpop.permute.xlu0 %2520
        %2522 = vrot.lane.b32.xlu0 %v2395, 5
        %v2523 = vpop.permute.xlu0 %2522
        %2524 = vrot.lane.b32.xlu0 %v2397, 5
        %v2525 = vpop.permute.xlu0 %2524
        %2526 = vrot.lane.b32.xlu0 %v2399, 5
        %v2527 = vpop.permute.xlu0 %2526
        %2528 = vrot.lane.b32.xlu0 %v2401, 5
        %v2529 = vpop.permute.xlu0 %2528
        %2530 = vrot.lane.b32.xlu0 %v2403, 5
        %v2531 = vpop.permute.xlu0 %2530
        %2532 = vrot.lane.b32.xlu0 %v2405, 5
        %v2533 = vpop.permute.xlu0 %2532
        %2534 = vrot.lane.b32.xlu0 %v2407, 5
        %v2535 = vpop.permute.xlu0 %2534
        %2536 = vrot.lane.b32.xlu0 %v2409, 5
        %v2537 = vpop.permute.xlu0 %2536
        %vm2602 = vcmask 1041408
        %v2603 = vrot.slane %v926, 6
        %v2604 = vrot.slane %v736, 6
        %v2605 = vsel %vm2602, %v2603, %v2604
        %v2606 = vrot.slane %v738, 6
        %v2607 = vsel %vm2602, %v2604, %v2606
        %v2608 = vrot.slane %v740, 6
        %v2609 = vsel %vm2602, %v2606, %v2608
        %v2610 = vrot.slane %v742, 6
        %v2611 = vsel %vm2602, %v2608, %v2610
        %v2612 = vrot.slane %v744, 6
        %v2613 = vsel %vm2602, %v2610, %v2612
        %v2614 = vrot.slane %v746, 6
        %v2615 = vsel %vm2602, %v2612, %v2614
        %v2616 = vrot.slane %v748, 6
        %v2617 = vsel %vm2602, %v2614, %v2616
        %v2618 = vrot.slane %v934, 6
        %v2619 = vsel %vm2602, %v2616, %v2618
        %v2620 = vrot.slane %v927, 6
        %v2621 = vrot.slane %v751, 6
        %v2622 = vsel %vm2602, %v2620, %v2621
        %v2623 = vrot.slane %v753, 6
        %v2624 = vsel %vm2602, %v2621, %v2623
        %v2625 = vrot.slane %v755, 6
        %v2626 = vsel %vm2602, %v2623, %v2625
        %v2627 = vrot.slane %v757, 6
        %v2628 = vsel %vm2602, %v2625, %v2627
        %v2629 = vrot.slane %v759, 6
        %v2630 = vsel %vm2602, %v2627, %v2629
        %v2631 = vrot.slane %v761, 6
        %v2632 = vsel %vm2602, %v2629, %v2631
        %v2633 = vrot.slane %v763, 6
        %v2634 = vsel %vm2602, %v2631, %v2633
        %v2635 = vrot.slane %v935, 6
        %v2636 = vsel %vm2602, %v2633, %v2635
        %v2637 = vrot.slane %v928, 6
        %v2638 = vrot.slane %v766, 6
        %v2639 = vsel %vm2602, %v2637, %v2638
        %v2640 = vrot.slane %v768, 6
        %v2641 = vsel %vm2602, %v2638, %v2640
        %v2642 = vrot.slane %v770, 6
        %v2643 = vsel %vm2602, %v2640, %v2642
        %v2644 = vrot.slane %v772, 6
        %v2645 = vsel %vm2602, %v2642, %v2644
        %v2646 = vrot.slane %v774, 6
        %v2647 = vsel %vm2602, %v2644, %v2646
        %v2648 = vrot.slane %v776, 6
        %v2649 = vsel %vm2602, %v2646, %v2648
        %v2650 = vrot.slane %v778, 6
        %v2651 = vsel %vm2602, %v2648, %v2650
        %v2652 = vrot.slane %v936, 6
        %v2653 = vsel %vm2602, %v2650, %v2652
        %v2654 = vrot.slane %v929, 6
        %v2655 = vrot.slane %v781, 6
        %v2656 = vsel %vm2602, %v2654, %v2655
        %v2657 = vrot.slane %v783, 6
        %v2658 = vsel %vm2602, %v2655, %v2657
        %v2659 = vrot.slane %v785, 6
        %v2660 = vsel %vm2602, %v2657, %v2659
        %v2661 = vrot.slane %v787, 6
        %v2662 = vsel %vm2602, %v2659, %v2661
        %v2663 = vrot.slane %v789, 6
        %v2664 = vsel %vm2602, %v2661, %v2663
        %v2665 = vrot.slane %v791, 6
        %v2666 = vsel %vm2602, %v2663, %v2665
        %v2667 = vrot.slane %v793, 6
        %v2668 = vsel %vm2602, %v2665, %v2667
        %v2669 = vrot.slane %v937, 6
        %v2670 = vsel %vm2602, %v2667, %v2669
        %v2671 = vrot.slane %v930, 6
        %v2672 = vrot.slane %v796, 6
        %v2673 = vsel %vm2602, %v2671, %v2672
        %v2674 = vrot.slane %v798, 6
        %v2675 = vsel %vm2602, %v2672, %v2674
        %v2676 = vrot.slane %v800, 6
        %v2677 = vsel %vm2602, %v2674, %v2676
        %v2678 = vrot.slane %v802, 6
        %v2679 = vsel %vm2602, %v2676, %v2678
        %v2680 = vrot.slane %v804, 6
        %v2681 = vsel %vm2602, %v2678, %v2680
        %v2682 = vrot.slane %v806, 6
        %v2683 = vsel %vm2602, %v2680, %v2682
        %v2684 = vrot.slane %v808, 6
        %v2685 = vsel %vm2602, %v2682, %v2684
        %v2686 = vrot.slane %v938, 6
        %v2687 = vsel %vm2602, %v2684, %v2686
        %v2688 = vrot.slane %v931, 6
        %v2689 = vrot.slane %v811, 6
        %v2690 = vsel %vm2602, %v2688, %v2689
        %v2691 = vrot.slane %v813, 6
        %v2692 = vsel %vm2602, %v2689, %v2691
        %v2693 = vrot.slane %v815, 6
        %v2694 = vsel %vm2602, %v2691, %v2693
        %v2695 = vrot.slane %v817, 6
        %v2696 = vsel %vm2602, %v2693, %v2695
        %v2697 = vrot.slane %v819, 6
        %v2698 = vsel %vm2602, %v2695, %v2697
        %v2699 = vrot.slane %v821, 6
        %v2700 = vsel %vm2602, %v2697, %v2699
        %v2701 = vrot.slane %v823, 6
        %v2702 = vsel %vm2602, %v2699, %v2701
        %v2703 = vrot.slane %v939, 6
        %v2704 = vsel %vm2602, %v2701, %v2703
        %v2705 = vrot.slane %v932, 6
        %v2706 = vrot.slane %v826, 6
        %v2707 = vsel %vm2602, %v2705, %v2706
        %v2708 = vrot.slane %v828, 6
        %v2709 = vsel %vm2602, %v2706, %v2708
        %v2710 = vrot.slane %v830, 6
        %v2711 = vsel %vm2602, %v2708, %v2710
        %v2712 = vrot.slane %v832, 6
        %v2713 = vsel %vm2602, %v2710, %v2712
        %v2714 = vrot.slane %v834, 6
        %v2715 = vsel %vm2602, %v2712, %v2714
        %v2716 = vrot.slane %v836, 6
        %v2717 = vsel %vm2602, %v2714, %v2716
        %v2718 = vrot.slane %v838, 6
        %v2719 = vsel %vm2602, %v2716, %v2718
        %v2720 = vrot.slane %v940, 6
        %v2721 = vsel %vm2602, %v2718, %v2720
        %v2722 = vrot.slane %v933, 6
        %v2723 = vrot.slane %v841, 6
        %v2724 = vsel %vm2602, %v2722, %v2723
        %v2725 = vrot.slane %v843, 6
        %v2726 = vsel %vm2602, %v2723, %v2725
        %v2727 = vrot.slane %v845, 6
        %v2728 = vsel %vm2602, %v2725, %v2727
        %v2729 = vrot.slane %v847, 6
        %v2730 = vsel %vm2602, %v2727, %v2729
        %v2731 = vrot.slane %v849, 6
        %v2732 = vsel %vm2602, %v2729, %v2731
        %v2733 = vrot.slane %v851, 6
        %v2734 = vsel %vm2602, %v2731, %v2733
        %v2735 = vrot.slane %v853, 6
        %v2736 = vsel %vm2602, %v2733, %v2735
        %v2737 = vrot.slane %v941, 6
        %v2738 = vsel %vm2602, %v2735, %v2737
        %2739 = vrot.lane.b32.xlu0 %v2605, 6
        %v2740 = vpop.permute.xlu0 %2739
        %2741 = vrot.lane.b32.xlu0 %v2607, 6
        %v2742 = vpop.permute.xlu0 %2741
        %2743 = vrot.lane.b32.xlu0 %v2609, 6
        %v2744 = vpop.permute.xlu0 %2743
        %2745 = vrot.lane.b32.xlu0 %v2611, 6
        %v2746 = vpop.permute.xlu0 %2745
        %2747 = vrot.lane.b32.xlu0 %v2613, 6
        %v2748 = vpop.permute.xlu0 %2747
        %2749 = vrot.lane.b32.xlu0 %v2615, 6
        %v2750 = vpop.permute.xlu0 %2749
        %2751 = vrot.lane.b32.xlu0 %v2617, 6
        %v2752 = vpop.permute.xlu0 %2751
        %2753 = vrot.lane.b32.xlu0 %v2619, 6
        %v2754 = vpop.permute.xlu0 %2753
        %2755 = vrot.lane.b32.xlu0 %v2622, 6
        %v2756 = vpop.permute.xlu0 %2755
        %2757 = vrot.lane.b32.xlu0 %v2624, 6
        %v2758 = vpop.permute.xlu0 %2757
        %2759 = vrot.lane.b32.xlu0 %v2626, 6
        %v2760 = vpop.permute.xlu0 %2759
        %2761 = vrot.lane.b32.xlu0 %v2628, 6
        %v2762 = vpop.permute.xlu0 %2761
        %2763 = vrot.lane.b32.xlu0 %v2630, 6
        %v2764 = vpop.permute.xlu0 %2763
        %2765 = vrot.lane.b32.xlu0 %v2632, 6
        %v2766 = vpop.permute.xlu0 %2765
        %2767 = vrot.lane.b32.xlu0 %v2634, 6
        %v2768 = vpop.permute.xlu0 %2767
        %2769 = vrot.lane.b32.xlu0 %v2636, 6
        %v2770 = vpop.permute.xlu0 %2769
        %2771 = vrot.lane.b32.xlu0 %v2639, 6
        %v2772 = vpop.permute.xlu0 %2771
        %2773 = vrot.lane.b32.xlu0 %v2641, 6
        %v2774 = vpop.permute.xlu0 %2773
        %2775 = vrot.lane.b32.xlu0 %v2643, 6
        %v2776 = vpop.permute.xlu0 %2775
        %2777 = vrot.lane.b32.xlu0 %v2645, 6
        %v2778 = vpop.permute.xlu0 %2777
        %2779 = vrot.lane.b32.xlu0 %v2647, 6
        %v2780 = vpop.permute.xlu0 %2779
        %2781 = vrot.lane.b32.xlu0 %v2649, 6
        %v2782 = vpop.permute.xlu0 %2781
        %2783 = vrot.lane.b32.xlu0 %v2651, 6
        %v2784 = vpop.permute.xlu0 %2783
        %2785 = vrot.lane.b32.xlu0 %v2653, 6
        %v2786 = vpop.permute.xlu0 %2785
        %2787 = vrot.lane.b32.xlu0 %v2656, 6
        %v2788 = vpop.permute.xlu0 %2787
        %2789 = vrot.lane.b32.xlu0 %v2658, 6
        %v2790 = vpop.permute.xlu0 %2789
        %2791 = vrot.lane.b32.xlu0 %v2660, 6
        %v2792 = vpop.permute.xlu0 %2791
        %2793 = vrot.lane.b32.xlu0 %v2662, 6
        %v2794 = vpop.permute.xlu0 %2793
        %2795 = vrot.lane.b32.xlu0 %v2664, 6
        %v2796 = vpop.permute.xlu0 %2795
        %2797 = vrot.lane.b32.xlu0 %v2666, 6
        %v2798 = vpop.permute.xlu0 %2797
        %2799 = vrot.lane.b32.xlu0 %v2668, 6
        %v2800 = vpop.permute.xlu0 %2799
        %2801 = vrot.lane.b32.xlu0 %v2670, 6
        %v2802 = vpop.permute.xlu0 %2801
        %2803 = vrot.lane.b32.xlu0 %v2673, 6
        %v2804 = vpop.permute.xlu0 %2803
        %2805 = vrot.lane.b32.xlu0 %v2675, 6
        %v2806 = vpop.permute.xlu0 %2805
        %2807 = vrot.lane.b32.xlu0 %v2677, 6
        %v2808 = vpop.permute.xlu0 %2807
        %2809 = vrot.lane.b32.xlu0 %v2679, 6
        %v2810 = vpop.permute.xlu0 %2809
        %2811 = vrot.lane.b32.xlu0 %v2681, 6
        %v2812 = vpop.permute.xlu0 %2811
        %2813 = vrot.lane.b32.xlu0 %v2683, 6
        %v2814 = vpop.permute.xlu0 %2813
        %2815 = vrot.lane.b32.xlu0 %v2685, 6
        %v2816 = vpop.permute.xlu0 %2815
        %2817 = vrot.lane.b32.xlu0 %v2687, 6
        %v2818 = vpop.permute.xlu0 %2817
        %2819 = vrot.lane.b32.xlu0 %v2690, 6
        %v2820 = vpop.permute.xlu0 %2819
        %2821 = vrot.lane.b32.xlu0 %v2692, 6
        %v2822 = vpop.permute.xlu0 %2821
        %2823 = vrot.lane.b32.xlu0 %v2694, 6
        %v2824 = vpop.permute.xlu0 %2823
        %2825 = vrot.lane.b32.xlu0 %v2696, 6
        %v2826 = vpop.permute.xlu0 %2825
        %2827 = vrot.lane.b32.xlu0 %v2698, 6
        %v2828 = vpop.permute.xlu0 %2827
        %2829 = vrot.lane.b32.xlu0 %v2700, 6
        %v2830 = vpop.permute.xlu0 %2829
        %2831 = vrot.lane.b32.xlu0 %v2702, 6
        %v2832 = vpop.permute.xlu0 %2831
        %2833 = vrot.lane.b32.xlu0 %v2704, 6
        %v2834 = vpop.permute.xlu0 %2833
        %2835 = vrot.lane.b32.xlu0 %v2707, 6
        %v2836 = vpop.permute.xlu0 %2835
        %2837 = vrot.lane.b32.xlu0 %v2709, 6
        %v2838 = vpop.permute.xlu0 %2837
        %2839 = vrot.lane.b32.xlu0 %v2711, 6
        %v2840 = vpop.permute.xlu0 %2839
        %2841 = vrot.lane.b32.xlu0 %v2713, 6
        %v2842 = vpop.permute.xlu0 %2841
        %2843 = vrot.lane.b32.xlu0 %v2715, 6
        %v2844 = vpop.permute.xlu0 %2843
        %2845 = vrot.lane.b32.xlu0 %v2717, 6
        %v2846 = vpop.permute.xlu0 %2845
        %2847 = vrot.lane.b32.xlu0 %v2719, 6
        %v2848 = vpop.permute.xlu0 %2847
        %2849 = vrot.lane.b32.xlu0 %v2721, 6
        %v2850 = vpop.permute.xlu0 %2849
        %2851 = vrot.lane.b32.xlu0 %v2724, 6
        %v2852 = vpop.permute.xlu0 %2851
        %2853 = vrot.lane.b32.xlu0 %v2726, 6
        %v2854 = vpop.permute.xlu0 %2853
        %2855 = vrot.lane.b32.xlu0 %v2728, 6
        %v2856 = vpop.permute.xlu0 %2855
        %2857 = vrot.lane.b32.xlu0 %v2730, 6
        %v2858 = vpop.permute.xlu0 %2857
        %2859 = vrot.lane.b32.xlu0 %v2732, 6
        %v2860 = vpop.permute.xlu0 %2859
        %2861 = vrot.lane.b32.xlu0 %v2734, 6
        %v2862 = vpop.permute.xlu0 %2861
        %2863 = vrot.lane.b32.xlu0 %v2736, 6
        %v2864 = vpop.permute.xlu0 %2863
        %2865 = vrot.lane.b32.xlu0 %v2738, 6
        %v2866 = vpop.permute.xlu0 %2865
        %vm2931 = vcmask 7168
        %v2932 = vsel %vm2931, %v926, %v1096
        %v2933 = vsel %vm2931, %v736, %v1098
        %v2934 = vsel %vm2931, %v738, %v1100
        %v2935 = vsel %vm2931, %v740, %v1102
        %v2936 = vsel %vm2931, %v742, %v1104
        %v2937 = vsel %vm2931, %v744, %v1106
        %v2938 = vsel %vm2931, %v746, %v1108
        %v2939 = vsel %vm2931, %v748, %v1110
        %v2940 = vsel %vm2931, %v927, %v1112
        %v2941 = vsel %vm2931, %v751, %v1114
        %v2942 = vsel %vm2931, %v753, %v1116
        %v2943 = vsel %vm2931, %v755, %v1118
        %v2944 = vsel %vm2931, %v757, %v1120
        %v2945 = vsel %vm2931, %v759, %v1122
        %v2946 = vsel %vm2931, %v761, %v1124
        %v2947 = vsel %vm2931, %v763, %v1126
        %v2948 = vsel %vm2931, %v928, %v1128
        %v2949 = vsel %vm2931, %v766, %v1130
        %v2950 = vsel %vm2931, %v768, %v1132
        %v2951 = vsel %vm2931, %v770, %v1134
        %v2952 = vsel %vm2931, %v772, %v1136
        %v2953 = vsel %vm2931, %v774, %v1138
        %v2954 = vsel %vm2931, %v776, %v1140
        %v2955 = vsel %vm2931, %v778, %v1142
        %v2956 = vsel %vm2931, %v929, %v1144
        %v2957 = vsel %vm2931, %v781, %v1146
        %v2958 = vsel %vm2931, %v783, %v1148
        %v2959 = vsel %vm2931, %v785, %v1150
        %v2960 = vsel %vm2931, %v787, %v1152
        %v2961 = vsel %vm2931, %v789, %v1154
        %v2962 = vsel %vm2931, %v791, %v1156
        %v2963 = vsel %vm2931, %v793, %v1158
        %v2964 = vsel %vm2931, %v930, %v1160
        %v2965 = vsel %vm2931, %v796, %v1162
        %v2966 = vsel %vm2931, %v798, %v1164
        %v2967 = vsel %vm2931, %v800, %v1166
        %v2968 = vsel %vm2931, %v802, %v1168
        %v2969 = vsel %vm2931, %v804, %v1170
        %v2970 = vsel %vm2931, %v806, %v1172
        %v2971 = vsel %vm2931, %v808, %v1174
        %v2972 = vsel %vm2931, %v931, %v1176
        %v2973 = vsel %vm2931, %v811, %v1178
        %v2974 = vsel %vm2931, %v813, %v1180
        %v2975 = vsel %vm2931, %v815, %v1182
        %v2976 = vsel %vm2931, %v817, %v1184
        %v2977 = vsel %vm2931, %v819, %v1186
        %v2978 = vsel %vm2931, %v821, %v1188
        %v2979 = vsel %vm2931, %v823, %v1190
        %v2980 = vsel %vm2931, %v932, %v1192
        %v2981 = vsel %vm2931, %v826, %v1194
        %v2982 = vsel %vm2931, %v828, %v1196
        %v2983 = vsel %vm2931, %v830, %v1198
        %v2984 = vsel %vm2931, %v832, %v1200
        %v2985 = vsel %vm2931, %v834, %v1202
        %v2986 = vsel %vm2931, %v836, %v1204
        %v2987 = vsel %vm2931, %v838, %v1206
        %v2988 = vsel %vm2931, %v933, %v1208
        %v2989 = vsel %vm2931, %v841, %v1210
        %v2990 = vsel %vm2931, %v843, %v1212
        %v2991 = vsel %vm2931, %v845, %v1214
        %v2992 = vsel %vm2931, %v847, %v1216
        %v2993 = vsel %vm2931, %v849, %v1218
        %v2994 = vsel %vm2931, %v851, %v1220
        %v2995 = vsel %vm2931, %v853, %v1222
        %vm2996 = vcmask 15360
        %v2997 = vsel %vm2996, %v2932, %v1425
        %v2998 = vsel %vm2996, %v2933, %v1427
        %v2999 = vsel %vm2996, %v2934, %v1429
        %v3000 = vsel %vm2996, %v2935, %v1431
        %v3001 = vsel %vm2996, %v2936, %v1433
        %v3002 = vsel %vm2996, %v2937, %v1435
        %v3003 = vsel %vm2996, %v2938, %v1437
        %v3004 = vsel %vm2996, %v2939, %v1439
        %v3005 = vsel %vm2996, %v2940, %v1441
        %v3006 = vsel %vm2996, %v2941, %v1443
        %v3007 = vsel %vm2996, %v2942, %v1445
        %v3008 = vsel %vm2996, %v2943, %v1447
        %v3009 = vsel %vm2996, %v2944, %v1449
        %v3010 = vsel %vm2996, %v2945, %v1451
        %v3011 = vsel %vm2996, %v2946, %v1453
        %v3012 = vsel %vm2996, %v2947, %v1455
        %v3013 = vsel %vm2996, %v2948, %v1457
        %v3014 = vsel %vm2996, %v2949, %v1459
        %v3015 = vsel %vm2996, %v2950, %v1461
        %v3016 = vsel %vm2996, %v2951, %v1463
        %v3017 = vsel %vm2996, %v2952, %v1465
        %v3018 = vsel %vm2996, %v2953, %v1467
        %v3019 = vsel %vm2996, %v2954, %v1469
        %v3020 = vsel %vm2996, %v2955, %v1471
        %v3021 = vsel %vm2996, %v2956, %v1473
        %v3022 = vsel %vm2996, %v2957, %v1475
        %v3023 = vsel %vm2996, %v2958, %v1477
        %v3024 = vsel %vm2996, %v2959, %v1479
        %v3025 = vsel %vm2996, %v2960, %v1481
        %v3026 = vsel %vm2996, %v2961, %v1483
        %v3027 = vsel %vm2996, %v2962, %v1485
        %v3028 = vsel %vm2996, %v2963, %v1487
        %v3029 = vsel %vm2996, %v2964, %v1489
        %v3030 = vsel %vm2996, %v2965, %v1491
        %v3031 = vsel %vm2996, %v2966, %v1493
        %v3032 = vsel %vm2996, %v2967, %v1495
        %v3033 = vsel %vm2996, %v2968, %v1497
        %v3034 = vsel %vm2996, %v2969, %v1499
        %v3035 = vsel %vm2996, %v2970, %v1501
        %v3036 = vsel %vm2996, %v2971, %v1503
        %v3037 = vsel %vm2996, %v2972, %v1505
        %v3038 = vsel %vm2996, %v2973, %v1507
        %v3039 = vsel %vm2996, %v2974, %v1509
        %v3040 = vsel %vm2996, %v2975, %v1511
        %v3041 = vsel %vm2996, %v2976, %v1513
        %v3042 = vsel %vm2996, %v2977, %v1515
        %v3043 = vsel %vm2996, %v2978, %v1517
        %v3044 = vsel %vm2996, %v2979, %v1519
        %v3045 = vsel %vm2996, %v2980, %v1521
        %v3046 = vsel %vm2996, %v2981, %v1523
        %v3047 = vsel %vm2996, %v2982, %v1525
        %v3048 = vsel %vm2996, %v2983, %v1527
        %v3049 = vsel %vm2996, %v2984, %v1529
        %v3050 = vsel %vm2996, %v2985, %v1531
        %v3051 = vsel %vm2996, %v2986, %v1533
        %v3052 = vsel %vm2996, %v2987, %v1535
        %v3053 = vsel %vm2996, %v2988, %v1537
        %v3054 = vsel %vm2996, %v2989, %v1539
        %v3055 = vsel %vm2996, %v2990, %v1541
        %v3056 = vsel %vm2996, %v2991, %v1543
        %v3057 = vsel %vm2996, %v2992, %v1545
        %v3058 = vsel %vm2996, %v2993, %v1547
        %v3059 = vsel %vm2996, %v2994, %v1549
        %v3060 = vsel %vm2996, %v2995, %v1551
        %vm3061 = vcmask 23552
        %v3062 = vsel %vm3061, %v2997, %v1754
        %v3063 = vsel %vm3061, %v2998, %v1756
        %v3064 = vsel %vm3061, %v2999, %v1758
        %v3065 = vsel %vm3061, %v3000, %v1760
        %v3066 = vsel %vm3061, %v3001, %v1762
        %v3067 = vsel %vm3061, %v3002, %v1764
        %v3068 = vsel %vm3061, %v3003, %v1766
        %v3069 = vsel %vm3061, %v3004, %v1768
        %v3070 = vsel %vm3061, %v3005, %v1770
        %v3071 = vsel %vm3061, %v3006, %v1772
        %v3072 = vsel %vm3061, %v3007, %v1774
        %v3073 = vsel %vm3061, %v3008, %v1776
        %v3074 = vsel %vm3061, %v3009, %v1778
        %v3075 = vsel %vm3061, %v3010, %v1780
        %v3076 = vsel %vm3061, %v3011, %v1782
        %v3077 = vsel %vm3061, %v3012, %v1784
        %v3078 = vsel %vm3061, %v3013, %v1786
        %v3079 = vsel %vm3061, %v3014, %v1788
        %v3080 = vsel %vm3061, %v3015, %v1790
        %v3081 = vsel %vm3061, %v3016, %v1792
        %v3082 = vsel %vm3061, %v3017, %v1794
        %v3083 = vsel %vm3061, %v3018, %v1796
        %v3084 = vsel %vm3061, %v3019, %v1798
        %v3085 = vsel %vm3061, %v3020, %v1800
        %v3086 = vsel %vm3061, %v3021, %v1802
        %v3087 = vsel %vm3061, %v3022, %v1804
        %v3088 = vsel %vm3061, %v3023, %v1806
        %v3089 = vsel %vm3061, %v3024, %v1808
        %v3090 = vsel %vm3061, %v3025, %v1810
        %v3091 = vsel %vm3061, %v3026, %v1812
        %v3092 = vsel %vm3061, %v3027, %v1814
        %v3093 = vsel %vm3061, %v3028, %v1816
        %v3094 = vsel %vm3061, %v3029, %v1818
        %v3095 = vsel %vm3061, %v3030, %v1820
        %v3096 = vsel %vm3061, %v3031, %v1822
        %v3097 = vsel %vm3061, %v3032, %v1824
        %v3098 = vsel %vm3061, %v3033, %v1826
        %v3099 = vsel %vm3061, %v3034, %v1828
        %v3100 = vsel %vm3061, %v3035, %v1830
        %v3101 = vsel %vm3061, %v3036, %v1832
        %v3102 = vsel %vm3061, %v3037, %v1834
        %v3103 = vsel %vm3061, %v3038, %v1836
        %v3104 = vsel %vm3061, %v3039, %v1838
        %v3105 = vsel %vm3061, %v3040, %v1840
        %v3106 = vsel %vm3061, %v3041, %v1842
        %v3107 = vsel %vm3061, %v3042, %v1844
        %v3108 = vsel %vm3061, %v3043, %v1846
        %v3109 = vsel %vm3061, %v3044, %v1848
        %v3110 = vsel %vm3061, %v3045, %v1850
        %v3111 = vsel %vm3061, %v3046, %v1852
        %v3112 = vsel %vm3061, %v3047, %v1854
        %v3113 = vsel %vm3061, %v3048, %v1856
        %v3114 = vsel %vm3061, %v3049, %v1858
        %v3115 = vsel %vm3061, %v3050, %v1860
        %v3116 = vsel %vm3061, %v3051, %v1862
        %v3117 = vsel %vm3061, %v3052, %v1864
        %v3118 = vsel %vm3061, %v3053, %v1866
        %v3119 = vsel %vm3061, %v3054, %v1868
        %v3120 = vsel %vm3061, %v3055, %v1870
        %v3121 = vsel %vm3061, %v3056, %v1872
        %v3122 = vsel %vm3061, %v3057, %v1874
        %v3123 = vsel %vm3061, %v3058, %v1876
        %v3124 = vsel %vm3061, %v3059, %v1878
        %v3125 = vsel %vm3061, %v3060, %v1880
        %vm3126 = vcmask 31744
        %v3127 = vsel %vm3126, %v3062, %v2083
        %v3128 = vsel %vm3126, %v3063, %v2085
        %v3129 = vsel %vm3126, %v3064, %v2087
        %v3130 = vsel %vm3126, %v3065, %v2089
        %v3131 = vsel %vm3126, %v3066, %v2091
        %v3132 = vsel %vm3126, %v3067, %v2093
        %v3133 = vsel %vm3126, %v3068, %v2095
        %v3134 = vsel %vm3126, %v3069, %v2097
        %v3135 = vsel %vm3126, %v3070, %v2099
        %v3136 = vsel %vm3126, %v3071, %v2101
        %v3137 = vsel %vm3126, %v3072, %v2103
        %v3138 = vsel %vm3126, %v3073, %v2105
        %v3139 = vsel %vm3126, %v3074, %v2107
        %v3140 = vsel %vm3126, %v3075, %v2109
        %v3141 = vsel %vm3126, %v3076, %v2111
        %v3142 = vsel %vm3126, %v3077, %v2113
        %v3143 = vsel %vm3126, %v3078, %v2115
        %v3144 = vsel %vm3126, %v3079, %v2117
        %v3145 = vsel %vm3126, %v3080, %v2119
        %v3146 = vsel %vm3126, %v3081, %v2121
        %v3147 = vsel %vm3126, %v3082, %v2123
        %v3148 = vsel %vm3126, %v3083, %v2125
        %v3149 = vsel %vm3126, %v3084, %v2127
        %v3150 = vsel %vm3126, %v3085, %v2129
        %v3151 = vsel %vm3126, %v3086, %v2131
        %v3152 = vsel %vm3126, %v3087, %v2133
        %v3153 = vsel %vm3126, %v3088, %v2135
        %v3154 = vsel %vm3126, %v3089, %v2137
        %v3155 = vsel %vm3126, %v3090, %v2139
        %v3156 = vsel %vm3126, %v3091, %v2141
        %v3157 = vsel %vm3126, %v3092, %v2143
        %v3158 = vsel %vm3126, %v3093, %v2145
        %v3159 = vsel %vm3126, %v3094, %v2147
        %v3160 = vsel %vm3126, %v3095, %v2149
        %v3161 = vsel %vm3126, %v3096, %v2151
        %v3162 = vsel %vm3126, %v3097, %v2153
        %v3163 = vsel %vm3126, %v3098, %v2155
        %v3164 = vsel %vm3126, %v3099, %v2157
        %v3165 = vsel %vm3126, %v3100, %v2159
        %v3166 = vsel %vm3126, %v3101, %v2161
        %v3167 = vsel %vm3126, %v3102, %v2163
        %v3168 = vsel %vm3126, %v3103, %v2165
        %v3169 = vsel %vm3126, %v3104, %v2167
        %v3170 = vsel %vm3126, %v3105, %v2169
        %v3171 = vsel %vm3126, %v3106, %v2171
        %v3172 = vsel %vm3126, %v3107, %v2173
        %v3173 = vsel %vm3126, %v3108, %v2175
        %v3174 = vsel %vm3126, %v3109, %v2177
        %v3175 = vsel %vm3126, %v3110, %v2179
        %v3176 = vsel %vm3126, %v3111, %v2181
        %v3177 = vsel %vm3126, %v3112, %v2183
        %v3178 = vsel %vm3126, %v3113, %v2185
        %v3179 = vsel %vm3126, %v3114, %v2187
        %v3180 = vsel %vm3126, %v3115, %v2189
        %v3181 = vsel %vm3126, %v3116, %v2191
        %v3182 = vsel %vm3126, %v3117, %v2193
        %v3183 = vsel %vm3126, %v3118, %v2195
        %v3184 = vsel %vm3126, %v3119, %v2197
        %v3185 = vsel %vm3126, %v3120, %v2199
        %v3186 = vsel %vm3126, %v3121, %v2201
        %v3187 = vsel %vm3126, %v3122, %v2203
        %v3188 = vsel %vm3126, %v3123, %v2205
        %v3189 = vsel %vm3126, %v3124, %v2207
        %v3190 = vsel %vm3126, %v3125, %v2209
        %vm3191 = vcmask 39936
        %v3192 = vsel %vm3191, %v3127, %v2411
        %v3193 = vsel %vm3191, %v3128, %v2413
        %v3194 = vsel %vm3191, %v3129, %v2415
        %v3195 = vsel %vm3191, %v3130, %v2417
        %v3196 = vsel %vm3191, %v3131, %v2419
        %v3197 = vsel %vm3191, %v3132, %v2421
        %v3198 = vsel %vm3191, %v3133, %v2423
        %v3199 = vsel %vm3191, %v3134, %v2425
        %v3200 = vsel %vm3191, %v3135, %v2427
        %v3201 = vsel %vm3191, %v3136, %v2429
        %v3202 = vsel %vm3191, %v3137, %v2431
        %v3203 = vsel %vm3191, %v3138, %v2433
        %v3204 = vsel %vm3191, %v3139, %v2435
        %v3205 = vsel %vm3191, %v3140, %v2437
        %v3206 = vsel %vm3191, %v3141, %v2439
        %v3207 = vsel %vm3191, %v3142, %v2441
        %v3208 = vsel %vm3191, %v3143, %v2443
        %v3209 = vsel %vm3191, %v3144, %v2445
        %v3210 = vsel %vm3191, %v3145, %v2447
        %v3211 = vsel %vm3191, %v3146, %v2449
        %v3212 = vsel %vm3191, %v3147, %v2451
        %v3213 = vsel %vm3191, %v3148, %v2453
        %v3214 = vsel %vm3191, %v3149, %v2455
        %v3215 = vsel %vm3191, %v3150, %v2457
        %v3216 = vsel %vm3191, %v3151, %v2459
        %v3217 = vsel %vm3191, %v3152, %v2461
        %v3218 = vsel %vm3191, %v3153, %v2463
        %v3219 = vsel %vm3191, %v3154, %v2465
        %v3220 = vsel %vm3191, %v3155, %v2467
        %v3221 = vsel %vm3191, %v3156, %v2469
        %v3222 = vsel %vm3191, %v3157, %v2471
        %v3223 = vsel %vm3191, %v3158, %v2473
        %v3224 = vsel %vm3191, %v3159, %v2475
        %v3225 = vsel %vm3191, %v3160, %v2477
        %v3226 = vsel %vm3191, %v3161, %v2479
        %v3227 = vsel %vm3191, %v3162, %v2481
        %v3228 = vsel %vm3191, %v3163, %v2483
        %v3229 = vsel %vm3191, %v3164, %v2485
        %v3230 = vsel %vm3191, %v3165, %v2487
        %v3231 = vsel %vm3191, %v3166, %v2489
        %v3232 = vsel %vm3191, %v3167, %v2491
        %v3233 = vsel %vm3191, %v3168, %v2493
        %v3234 = vsel %vm3191, %v3169, %v2495
        %v3235 = vsel %vm3191, %v3170, %v2497
        %v3236 = vsel %vm3191, %v3171, %v2499
        %v3237 = vsel %vm3191, %v3172, %v2501
        %v3238 = vsel %vm3191, %v3173, %v2503
        %v3239 = vsel %vm3191, %v3174, %v2505
        %v3240 = vsel %vm3191, %v3175, %v2507
        %v3241 = vsel %vm3191, %v3176, %v2509
        %v3242 = vsel %vm3191, %v3177, %v2511
        %v3243 = vsel %vm3191, %v3178, %v2513
        %v3244 = vsel %vm3191, %v3179, %v2515
        %v3245 = vsel %vm3191, %v3180, %v2517
        %v3246 = vsel %vm3191, %v3181, %v2519
        %v3247 = vsel %vm3191, %v3182, %v2521
        %v3248 = vsel %vm3191, %v3183, %v2523
        %v3249 = vsel %vm3191, %v3184, %v2525
        %v3250 = vsel %vm3191, %v3185, %v2527
        %v3251 = vsel %vm3191, %v3186, %v2529
        %v3252 = vsel %vm3191, %v3187, %v2531
        %v3253 = vsel %vm3191, %v3188, %v2533
        %v3254 = vsel %vm3191, %v3189, %v2535
        %v3255 = vsel %vm3191, %v3190, %v2537
        %vm3256 = vcmask 48128
        %v3257 = vsel %vm3256, %v3192, %v2740
        %v3258 = vsel %vm3256, %v3193, %v2742
        %v3259 = vsel %vm3256, %v3194, %v2744
        %v3260 = vsel %vm3256, %v3195, %v2746
        %v3261 = vsel %vm3256, %v3196, %v2748
        %v3262 = vsel %vm3256, %v3197, %v2750
        %v3263 = vsel %vm3256, %v3198, %v2752
        %v3264 = vsel %vm3256, %v3199, %v2754
        %v3265 = vsel %vm3256, %v3200, %v2756
        %v3266 = vsel %vm3256, %v3201, %v2758
        %v3267 = vsel %vm3256, %v3202, %v2760
        %v3268 = vsel %vm3256, %v3203, %v2762
        %v3269 = vsel %vm3256, %v3204, %v2764
        %v3270 = vsel %vm3256, %v3205, %v2766
        %v3271 = vsel %vm3256, %v3206, %v2768
        %v3272 = vsel %vm3256, %v3207, %v2770
        %v3273 = vsel %vm3256, %v3208, %v2772
        %v3274 = vsel %vm3256, %v3209, %v2774
        %v3275 = vsel %vm3256, %v3210, %v2776
        %v3276 = vsel %vm3256, %v3211, %v2778
        %v3277 = vsel %vm3256, %v3212, %v2780
        %v3278 = vsel %vm3256, %v3213, %v2782
        %v3279 = vsel %vm3256, %v3214, %v2784
        %v3280 = vsel %vm3256, %v3215, %v2786
        %v3281 = vsel %vm3256, %v3216, %v2788
        %v3282 = vsel %vm3256, %v3217, %v2790
        %v3283 = vsel %vm3256, %v3218, %v2792
        %v3284 = vsel %vm3256, %v3219, %v2794
        %v3285 = vsel %vm3256, %v3220, %v2796
        %v3286 = vsel %vm3256, %v3221, %v2798
        %v3287 = vsel %vm3256, %v3222, %v2800
        %v3288 = vsel %vm3256, %v3223, %v2802
        %v3289 = vsel %vm3256, %v3224, %v2804
        %v3290 = vsel %vm3256, %v3225, %v2806
        %v3291 = vsel %vm3256, %v3226, %v2808
        %v3292 = vsel %vm3256, %v3227, %v2810
        %v3293 = vsel %vm3256, %v3228, %v2812
        %v3294 = vsel %vm3256, %v3229, %v2814
        %v3295 = vsel %vm3256, %v3230, %v2816
        %v3296 = vsel %vm3256, %v3231, %v2818
        %v3297 = vsel %vm3256, %v3232, %v2820
        %v3298 = vsel %vm3256, %v3233, %v2822
        %v3299 = vsel %vm3256, %v3234, %v2824
        %v3300 = vsel %vm3256, %v3235, %v2826
        %v3301 = vsel %vm3256, %v3236, %v2828
        %v3302 = vsel %vm3256, %v3237, %v2830
        %v3303 = vsel %vm3256, %v3238, %v2832
        %v3304 = vsel %vm3256, %v3239, %v2834
        %v3305 = vsel %vm3256, %v3240, %v2836
        %v3306 = vsel %vm3256, %v3241, %v2838
        %v3307 = vsel %vm3256, %v3242, %v2840
        %v3308 = vsel %vm3256, %v3243, %v2842
        %v3309 = vsel %vm3256, %v3244, %v2844
        %v3310 = vsel %vm3256, %v3245, %v2846
        %v3311 = vsel %vm3256, %v3246, %v2848
        %v3312 = vsel %vm3256, %v3247, %v2850
        %v3313 = vsel %vm3256, %v3248, %v2852
        %v3314 = vsel %vm3256, %v3249, %v2854
        %v3315 = vsel %vm3256, %v3250, %v2856
        %v3316 = vsel %vm3256, %v3251, %v2858
        %v3317 = vsel %vm3256, %v3252, %v2860
        %v3318 = vsel %vm3256, %v3253, %v2862
        %v3319 = vsel %vm3256, %v3254, %v2864
        %v3320 = vsel %vm3256, %v3255, %v2866
        %v3321 = vpack.c.bf16 %v3258, %v3257
        %v3322 = vpack.c.bf16 %v3260, %v3259
        %v3323 = vpack.c.bf16 %v3262, %v3261
        %v3324 = vpack.c.bf16 %v3264, %v3263
        %v3325 = vpack.c.bf16 %v3266, %v3265
        %v3326 = vpack.c.bf16 %v3268, %v3267
        %v3327 = vpack.c.bf16 %v3270, %v3269
        %v3328 = vpack.c.bf16 %v3272, %v3271
        %v3329 = vpack.c.bf16 %v3274, %v3273
        %v3330 = vpack.c.bf16 %v3276, %v3275
        %v3331 = vpack.c.bf16 %v3278, %v3277
        %v3332 = vpack.c.bf16 %v3280, %v3279
        %v3333 = vpack.c.bf16 %v3282, %v3281
        %v3334 = vpack.c.bf16 %v3284, %v3283
        %v3335 = vpack.c.bf16 %v3286, %v3285
        %v3336 = vpack.c.bf16 %v3288, %v3287
        %v3337 = vpack.c.bf16 %v3290, %v3289
        %v3338 = vpack.c.bf16 %v3292, %v3291
        %v3339 = vpack.c.bf16 %v3294, %v3293
        %v3340 = vpack.c.bf16 %v3296, %v3295
        %v3341 = vpack.c.bf16 %v3298, %v3297
        %v3342 = vpack.c.bf16 %v3300, %v3299
        %v3343 = vpack.c.bf16 %v3302, %v3301
        %v3344 = vpack.c.bf16 %v3304, %v3303
        %v3345 = vpack.c.bf16 %v3306, %v3305
        %v3346 = vpack.c.bf16 %v3308, %v3307
        %v3347 = vpack.c.bf16 %v3310, %v3309
        %v3348 = vpack.c.bf16 %v3312, %v3311
        %v3349 = vpack.c.bf16 %v3314, %v3313
        %v3350 = vpack.c.bf16 %v3316, %v3315
        %v3351 = vpack.c.bf16 %v3318, %v3317
        %v3352 = vpack.c.bf16 %v3320, %v3319
        %v3353 = vld [vmem:[%s1] sm:$0xf]
        %v3354 = vld [vmem:[%s2] sm:$0x1]
        %v3356 = vperm.slane %v3354, 0
        %vm3358 = vcmask 56320
        %v3360 = vsel %vm3358, %v3321, 0
        %v3363 = vsel %vm3358, %v3322, 0
        %v3366 = vsel %vm3358, %v3323, 0
        %v3369 = vsel %vm3358, %v3324, 0
        %v3372 = vsel %vm3358, %v3325, 0
        %v3375 = vsel %vm3358, %v3326, 0
        %v3378 = vsel %vm3358, %v3327, 0
        %v3381 = vsel %vm3358, %v3328, 0
        %v3384 = vsel %vm3358, %v3329, 0
        %v3387 = vsel %vm3358, %v3330, 0
        %v3390 = vsel %vm3358, %v3331, 0
        %v3393 = vsel %vm3358, %v3332, 0
        %v3396 = vsel %vm3358, %v3333, 0
        %v3399 = vsel %vm3358, %v3334, 0
        %v3402 = vsel %vm3358, %v3335, 0
        %v3405 = vsel %vm3358, %v3336, 0
        %v3408 = vsel %vm3358, %v3337, 0
        %v3411 = vsel %vm3358, %v3338, 0
        %v3414 = vsel %vm3358, %v3339, 0
        %v3417 = vsel %vm3358, %v3340, 0
        %v3420 = vsel %vm3358, %v3341, 0
        %v3423 = vsel %vm3358, %v3342, 0
        %v3426 = vsel %vm3358, %v3343, 0
        %v3429 = vsel %vm3358, %v3344, 0
        %v3432 = vsel %vm3358, %v3345, 0
        %v3435 = vsel %vm3358, %v3346, 0
        %v3438 = vsel %vm3358, %v3347, 0
        %v3441 = vsel %vm3358, %v3348, 0
        %v3444 = vsel %vm3358, %v3349, 0
        %v3447 = vsel %vm3358, %v3350, 0
        %v3450 = vsel %vm3358, %v3351, 0
        %v3453 = vsel %vm3358, %v3352, 0
        %v3455 = vsel %vm733, 4294967295, 65535
        %v3456 = vsel %vm1945, %v3455, 0
        %v3458 = vand.u32 %v3353, %v3456
        %3460 = vmatpush.bf16.msra.mxu0 0
        %3461 = vmatpush.bf16.msra.mxu0 0
        %3462 = vmatpush.bf16.msra.mxu0 0
        %3463 = vmatpush.bf16.msra.mxu0 0
        %3464 = vmatpush.bf16.msra.mxu0 0
        %3465 = vmatpush.bf16.msra.mxu0 0
        %3466 = vmatpush.bf16.msra.mxu0 0
        %3467 = vmatpush.bf16.msra.mxu0 %v3458
        %3468 = vmatmul.bf16.gmra.mxu0 %v3360
        %v3469 = vpop.f32.mrf.mxu0
        %v3470 = vadd.f32 %v3356, %v3469
        %v3471 = vpop.f32.mrf.mxu0
        %v3472 = vadd.f32 %v3356, %v3471
        %3473 = vmatmul.bf16.gmra.mxu0 %v3363
        %v3474 = vpop.f32.mrf.mxu0
        %v3475 = vadd.f32 %v3356, %v3474
        %v3476 = vpop.f32.mrf.mxu0
        %v3477 = vadd.f32 %v3356, %v3476
        %3478 = vmatmul.bf16.gmra.mxu0 %v3366
        %v3479 = vpop.f32.mrf.mxu0
        %v3480 = vadd.f32 %v3356, %v3479
        %v3481 = vpop.f32.mrf.mxu0
        %v3482 = vadd.f32 %v3356, %v3481
        %3483 = vmatmul.bf16.gmra.mxu0 %v3369
        %v3484 = vpop.f32.mrf.mxu0
        %v3485 = vadd.f32 %v3356, %v3484
        %v3486 = vpop.f32.mrf.mxu0
        %v3487 = vadd.f32 %v3356, %v3486
        %3488 = vmatmul.bf16.gmra.mxu0 %v3372
        %v3489 = vpop.f32.mrf.mxu0
        %v3490 = vadd.f32 %v3356, %v3489
        %v3491 = vpop.f32.mrf.mxu0
        %v3492 = vadd.f32 %v3356, %v3491
        %3493 = vmatmul.bf16.gmra.mxu0 %v3375
        %v3494 = vpop.f32.mrf.mxu0
        %v3495 = vadd.f32 %v3356, %v3494
        %v3496 = vpop.f32.mrf.mxu0
        %v3497 = vadd.f32 %v3356, %v3496
        %3498 = vmatmul.bf16.gmra.mxu0 %v3378
        %v3499 = vpop.f32.mrf.mxu0
        %v3500 = vadd.f32 %v3356, %v3499
        %v3501 = vpop.f32.mrf.mxu0
        %v3502 = vadd.f32 %v3356, %v3501
        %3503 = vmatmul.bf16.gmra.mxu0 %v3381
        %v3504 = vpop.f32.mrf.mxu0
        %v3505 = vadd.f32 %v3356, %v3504
        %v3506 = vpop.f32.mrf.mxu0
        %v3507 = vadd.f32 %v3356, %v3506
        %3508 = vmatmul.bf16.gmra.mxu0 %v3384
        %v3509 = vpop.f32.mrf.mxu0
        %v3510 = vadd.f32 %v3356, %v3509
        %v3511 = vpop.f32.mrf.mxu0
        %v3512 = vadd.f32 %v3356, %v3511
        %3513 = vmatmul.bf16.gmra.mxu0 %v3387
        %v3514 = vpop.f32.mrf.mxu0
        %v3515 = vadd.f32 %v3356, %v3514
        %v3516 = vpop.f32.mrf.mxu0
        %v3517 = vadd.f32 %v3356, %v3516
        %3518 = vmatmul.bf16.gmra.mxu0 %v3390
        %v3519 = vpop.f32.mrf.mxu0
        %v3520 = vadd.f32 %v3356, %v3519
        %v3521 = vpop.f32.mrf.mxu0
        %v3522 = vadd.f32 %v3356, %v3521
        %3523 = vmatmul.bf16.gmra.mxu0 %v3393
        %v3524 = vpop.f32.mrf.mxu0
        %v3525 = vadd.f32 %v3356, %v3524
        %v3526 = vpop.f32.mrf.mxu0
        %v3527 = vadd.f32 %v3356, %v3526
        %3528 = vmatmul.bf16.gmra.mxu0 %v3396
        %v3529 = vpop.f32.mrf.mxu0
        %v3530 = vadd.f32 %v3356, %v3529
        %v3531 = vpop.f32.mrf.mxu0
        %v3532 = vadd.f32 %v3356, %v3531
        %3533 = vmatmul.bf16.gmra.mxu0 %v3399
        %v3534 = vpop.f32.mrf.mxu0
        %v3535 = vadd.f32 %v3356, %v3534
        %v3536 = vpop.f32.mrf.mxu0
        %v3537 = vadd.f32 %v3356, %v3536
        %3538 = vmatmul.bf16.gmra.mxu0 %v3402
        %v3539 = vpop.f32.mrf.mxu0
        %v3540 = vadd.f32 %v3356, %v3539
        %v3541 = vpop.f32.mrf.mxu0
        %v3542 = vadd.f32 %v3356, %v3541
        %3543 = vmatmul.bf16.gmra.mxu0 %v3405
        %v3544 = vpop.f32.mrf.mxu0
        %v3545 = vadd.f32 %v3356, %v3544
        %v3546 = vpop.f32.mrf.mxu0
        %v3547 = vadd.f32 %v3356, %v3546
        %3548 = vmatmul.bf16.gmra.mxu0 %v3408
        %v3549 = vpop.f32.mrf.mxu0
        %v3550 = vadd.f32 %v3356, %v3549
        %v3551 = vpop.f32.mrf.mxu0
        %v3552 = vadd.f32 %v3356, %v3551
        %3553 = vmatmul.bf16.gmra.mxu0 %v3411
        %v3554 = vpop.f32.mrf.mxu0
        %v3555 = vadd.f32 %v3356, %v3554
        %v3556 = vpop.f32.mrf.mxu0
        %v3557 = vadd.f32 %v3356, %v3556
        %3558 = vmatmul.bf16.gmra.mxu0 %v3414
        %v3559 = vpop.f32.mrf.mxu0
        %v3560 = vadd.f32 %v3356, %v3559
        %v3561 = vpop.f32.mrf.mxu0
        %v3562 = vadd.f32 %v3356, %v3561
        %3563 = vmatmul.bf16.gmra.mxu0 %v3417
        %v3564 = vpop.f32.mrf.mxu0
        %v3565 = vadd.f32 %v3356, %v3564
        %v3566 = vpop.f32.mrf.mxu0
        %v3567 = vadd.f32 %v3356, %v3566
        %3568 = vmatmul.bf16.gmra.mxu0 %v3420
        %v3569 = vpop.f32.mrf.mxu0
        %v3570 = vadd.f32 %v3356, %v3569
        %v3571 = vpop.f32.mrf.mxu0
        %v3572 = vadd.f32 %v3356, %v3571
        %3573 = vmatmul.bf16.gmra.mxu0 %v3423
        %v3574 = vpop.f32.mrf.mxu0
        %v3575 = vadd.f32 %v3356, %v3574
        %v3576 = vpop.f32.mrf.mxu0
        %v3577 = vadd.f32 %v3356, %v3576
        %3578 = vmatmul.bf16.gmra.mxu0 %v3426
        %v3579 = vpop.f32.mrf.mxu0
        %v3580 = vadd.f32 %v3356, %v3579
        %v3581 = vpop.f32.mrf.mxu0
        %v3582 = vadd.f32 %v3356, %v3581
        %3583 = vmatmul.bf16.gmra.mxu0 %v3429
        %v3584 = vpop.f32.mrf.mxu0
        %v3585 = vadd.f32 %v3356, %v3584
        %v3586 = vpop.f32.mrf.mxu0
        %v3587 = vadd.f32 %v3356, %v3586
        %3588 = vmatmul.bf16.gmra.mxu0 %v3432
        %v3589 = vpop.f32.mrf.mxu0
        %v3590 = vadd.f32 %v3356, %v3589
        %v3591 = vpop.f32.mrf.mxu0
        %v3592 = vadd.f32 %v3356, %v3591
        %3593 = vmatmul.bf16.gmra.mxu0 %v3435
        %v3594 = vpop.f32.mrf.mxu0
        %v3595 = vadd.f32 %v3356, %v3594
        %v3596 = vpop.f32.mrf.mxu0
        %v3597 = vadd.f32 %v3356, %v3596
        %3598 = vmatmul.bf16.gmra.mxu0 %v3438
        %v3599 = vpop.f32.mrf.mxu0
        %v3600 = vadd.f32 %v3356, %v3599
        %v3601 = vpop.f32.mrf.mxu0
        %v3602 = vadd.f32 %v3356, %v3601
        %3603 = vmatmul.bf16.gmra.mxu0 %v3441
        %v3604 = vpop.f32.mrf.mxu0
        %v3605 = vadd.f32 %v3356, %v3604
        %v3606 = vpop.f32.mrf.mxu0
        %v3607 = vadd.f32 %v3356, %v3606
        %3608 = vmatmul.bf16.gmra.mxu0 %v3444
        %v3609 = vpop.f32.mrf.mxu0
        %v3610 = vadd.f32 %v3356, %v3609
        %v3611 = vpop.f32.mrf.mxu0
        %v3612 = vadd.f32 %v3356, %v3611
        %3613 = vmatmul.bf16.gmra.mxu0 %v3447
        %v3614 = vpop.f32.mrf.mxu0
        %v3615 = vadd.f32 %v3356, %v3614
        %v3616 = vpop.f32.mrf.mxu0
        %v3617 = vadd.f32 %v3356, %v3616
        %3618 = vmatmul.bf16.gmra.mxu0 %v3450
        %v3619 = vpop.f32.mrf.mxu0
        %v3620 = vadd.f32 %v3356, %v3619
        %v3621 = vpop.f32.mrf.mxu0
        %v3622 = vadd.f32 %v3356, %v3621
        %3623 = vmatmul.bf16.gmra.mxu0 %v3453
        %v3624 = vpop.f32.mrf.mxu0
        %v3625 = vadd.f32 %v3356, %v3624
        %v3626 = vpop.f32.mrf.mxu0
        %v3627 = vadd.f32 %v3356, %v3626
        %3628 = vdwg.mxu0
        %v3629 = vmul.f32 %v3470, 0.2
        %v3630 = vmul.f32 %v3472, 0.2
        %v3631 = vmul.f32 %v3475, 0.2
        %v3632 = vmul.f32 %v3477, 0.2
        %v3633 = vmul.f32 %v3480, 0.2
        %v3634 = vmul.f32 %v3482, 0.2
        %v3635 = vmul.f32 %v3485, 0.2
        %v3636 = vmul.f32 %v3487, 0.2
        %v3637 = vmul.f32 %v3490, 0.2
        %v3638 = vmul.f32 %v3492, 0.2
        %v3639 = vmul.f32 %v3495, 0.2
        %v3640 = vmul.f32 %v3497, 0.2
        %v3641 = vmul.f32 %v3500, 0.2
        %v3642 = vmul.f32 %v3502, 0.2
        %v3643 = vmul.f32 %v3505, 0.2
        %v3644 = vmul.f32 %v3507, 0.2
        %v3645 = vmul.f32 %v3510, 0.2
        %v3646 = vmul.f32 %v3512, 0.2
        %v3647 = vmul.f32 %v3515, 0.2
        %v3648 = vmul.f32 %v3517, 0.2
        %v3649 = vmul.f32 %v3520, 0.2
        %v3650 = vmul.f32 %v3522, 0.2
        %v3651 = vmul.f32 %v3525, 0.2
        %v3652 = vmul.f32 %v3527, 0.2
        %v3653 = vmul.f32 %v3530, 0.2
        %v3654 = vmul.f32 %v3532, 0.2
        %v3655 = vmul.f32 %v3535, 0.2
        %v3656 = vmul.f32 %v3537, 0.2
        %v3657 = vmul.f32 %v3540, 0.2
        %v3658 = vmul.f32 %v3542, 0.2
        %v3659 = vmul.f32 %v3545, 0.2
        %v3660 = vmul.f32 %v3547, 0.2
        %v3661 = vmul.f32 %v3550, 0.2
        %v3662 = vmul.f32 %v3552, 0.2
        %v3663 = vmul.f32 %v3555, 0.2
        %v3664 = vmul.f32 %v3557, 0.2
        %v3665 = vmul.f32 %v3560, 0.2
        %v3666 = vmul.f32 %v3562, 0.2
        %v3667 = vmul.f32 %v3565, 0.2
        %v3668 = vmul.f32 %v3567, 0.2
        %v3669 = vmul.f32 %v3570, 0.2
        %v3670 = vmul.f32 %v3572, 0.2
        %v3671 = vmul.f32 %v3575, 0.2
        %v3672 = vmul.f32 %v3577, 0.2
        %v3673 = vmul.f32 %v3580, 0.2
        %v3674 = vmul.f32 %v3582, 0.2
        %v3675 = vmul.f32 %v3585, 0.2
        %v3676 = vmul.f32 %v3587, 0.2
        %v3677 = vmul.f32 %v3590, 0.2
        %v3678 = vmul.f32 %v3592, 0.2
        %v3679 = vmul.f32 %v3595, 0.2
        %v3680 = vmul.f32 %v3597, 0.2
        %v3681 = vmul.f32 %v3600, 0.2
        %v3682 = vmul.f32 %v3602, 0.2
        %v3683 = vmul.f32 %v3605, 0.2
        %v3684 = vmul.f32 %v3607, 0.2
        %v3685 = vmul.f32 %v3610, 0.2
        %v3686 = vmul.f32 %v3612, 0.2
        %v3687 = vmul.f32 %v3615, 0.2
        %v3688 = vmul.f32 %v3617, 0.2
        %v3689 = vmul.f32 %v3620, 0.2
        %v3690 = vmul.f32 %v3622, 0.2
        %v3691 = vmul.f32 %v3625, 0.2
        %v3692 = vmul.f32 %v3627, 0.2
        %v3693 = vmax.f32 %v3470, %v3629
        %v3694 = vmax.f32 %v3472, %v3630
        %v3695 = vmax.f32 %v3475, %v3631
        %v3696 = vmax.f32 %v3477, %v3632
        %v3697 = vmax.f32 %v3480, %v3633
        %v3698 = vmax.f32 %v3482, %v3634
        %v3699 = vmax.f32 %v3485, %v3635
        %v3700 = vmax.f32 %v3487, %v3636
        %v3701 = vmax.f32 %v3490, %v3637
        %v3702 = vmax.f32 %v3492, %v3638
        %v3703 = vmax.f32 %v3495, %v3639
        %v3704 = vmax.f32 %v3497, %v3640
        %v3705 = vmax.f32 %v3500, %v3641
        %v3706 = vmax.f32 %v3502, %v3642
        %v3707 = vmax.f32 %v3505, %v3643
        %v3708 = vmax.f32 %v3507, %v3644
        %v3709 = vmax.f32 %v3510, %v3645
        %v3710 = vmax.f32 %v3512, %v3646
        %v3711 = vmax.f32 %v3515, %v3647
        %v3712 = vmax.f32 %v3517, %v3648
        %v3713 = vmax.f32 %v3520, %v3649
        %v3714 = vmax.f32 %v3522, %v3650
        %v3715 = vmax.f32 %v3525, %v3651
        %v3716 = vmax.f32 %v3527, %v3652
        %v3717 = vmax.f32 %v3530, %v3653
        %v3718 = vmax.f32 %v3532, %v3654
        %v3719 = vmax.f32 %v3535, %v3655
        %v3720 = vmax.f32 %v3537, %v3656
        %v3721 = vmax.f32 %v3540, %v3657
        %v3722 = vmax.f32 %v3542, %v3658
        %v3723 = vmax.f32 %v3545, %v3659
        %v3724 = vmax.f32 %v3547, %v3660
        %v3725 = vmax.f32 %v3550, %v3661
        %v3726 = vmax.f32 %v3552, %v3662
        %v3727 = vmax.f32 %v3555, %v3663
        %v3728 = vmax.f32 %v3557, %v3664
        %v3729 = vmax.f32 %v3560, %v3665
        %v3730 = vmax.f32 %v3562, %v3666
        %v3731 = vmax.f32 %v3565, %v3667
        %v3732 = vmax.f32 %v3567, %v3668
        %v3733 = vmax.f32 %v3570, %v3669
        %v3734 = vmax.f32 %v3572, %v3670
        %v3735 = vmax.f32 %v3575, %v3671
        %v3736 = vmax.f32 %v3577, %v3672
        %v3737 = vmax.f32 %v3580, %v3673
        %v3738 = vmax.f32 %v3582, %v3674
        %v3739 = vmax.f32 %v3585, %v3675
        %v3740 = vmax.f32 %v3587, %v3676
        %v3741 = vmax.f32 %v3590, %v3677
        %v3742 = vmax.f32 %v3592, %v3678
        %v3743 = vmax.f32 %v3595, %v3679
        %v3744 = vmax.f32 %v3597, %v3680
        %v3745 = vmax.f32 %v3600, %v3681
        %v3746 = vmax.f32 %v3602, %v3682
        %v3747 = vmax.f32 %v3605, %v3683
        %v3748 = vmax.f32 %v3607, %v3684
        %v3749 = vmax.f32 %v3610, %v3685
        %v3750 = vmax.f32 %v3612, %v3686
        %v3751 = vmax.f32 %v3615, %v3687
        %v3752 = vmax.f32 %v3617, %v3688
        %v3753 = vmax.f32 %v3620, %v3689
        %v3754 = vmax.f32 %v3622, %v3690
        %v3755 = vmax.f32 %v3625, %v3691
        %v3756 = vmax.f32 %v3627, %v3692
        %v3821 = vrot.slane %v3693, 5
        %v3822 = vrot.slane %v3694, 5
        %v3823 = vsel %vm733, %v3821, %v3822
        %v3824 = vrot.slane %v3695, 5
        %v3825 = vsel %vm733, %v3822, %v3824
        %v3826 = vrot.slane %v3696, 5
        %v3827 = vsel %vm733, %v3824, %v3826
        %v3828 = vrot.slane %v3697, 5
        %v3829 = vsel %vm733, %v3826, %v3828
        %v3830 = vrot.slane %v3698, 5
        %v3831 = vsel %vm733, %v3828, %v3830
        %v3832 = vrot.slane %v3699, 5
        %v3833 = vsel %vm733, %v3830, %v3832
        %v3834 = vrot.slane %v3700, 5
        %v3835 = vsel %vm733, %v3832, %v3834
        %v3836 = vrot.slane %v3701, 5
        %v3837 = vrot.slane %v3702, 5
        %v3838 = vsel %vm733, %v3836, %v3837
        %v3839 = vrot.slane %v3703, 5
        %v3840 = vsel %vm733, %v3837, %v3839
        %v3841 = vrot.slane %v3704, 5
        %v3842 = vsel %vm733, %v3839, %v3841
        %v3843 = vrot.slane %v3705, 5
        %v3844 = vsel %vm733, %v3841, %v3843
        %v3845 = vrot.slane %v3706, 5
        %v3846 = vsel %vm733, %v3843, %v3845
        %v3847 = vrot.slane %v3707, 5
        %v3848 = vsel %vm733, %v3845, %v3847
        %v3849 = vrot.slane %v3708, 5
        %v3850 = vsel %vm733, %v3847, %v3849
        %v3851 = vrot.slane %v3709, 5
        %v3852 = vrot.slane %v3710, 5
        %v3853 = vsel %vm733, %v3851, %v3852
        %v3854 = vrot.slane %v3711, 5
        %v3855 = vsel %vm733, %v3852, %v3854
        %v3856 = vrot.slane %v3712, 5
        %v3857 = vsel %vm733, %v3854, %v3856
        %v3858 = vrot.slane %v3713, 5
        %v3859 = vsel %vm733, %v3856, %v3858
        %v3860 = vrot.slane %v3714, 5
        %v3861 = vsel %vm733, %v3858, %v3860
        %v3862 = vrot.slane %v3715, 5
        %v3863 = vsel %vm733, %v3860, %v3862
        %v3864 = vrot.slane %v3716, 5
        %v3865 = vsel %vm733, %v3862, %v3864
        %v3866 = vrot.slane %v3717, 5
        %v3867 = vrot.slane %v3718, 5
        %v3868 = vsel %vm733, %v3866, %v3867
        %v3869 = vrot.slane %v3719, 5
        %v3870 = vsel %vm733, %v3867, %v3869
        %v3871 = vrot.slane %v3720, 5
        %v3872 = vsel %vm733, %v3869, %v3871
        %v3873 = vrot.slane %v3721, 5
        %v3874 = vsel %vm733, %v3871, %v3873
        %v3875 = vrot.slane %v3722, 5
        %v3876 = vsel %vm733, %v3873, %v3875
        %v3877 = vrot.slane %v3723, 5
        %v3878 = vsel %vm733, %v3875, %v3877
        %v3879 = vrot.slane %v3724, 5
        %v3880 = vsel %vm733, %v3877, %v3879
        %v3881 = vrot.slane %v3725, 5
        %v3882 = vrot.slane %v3726, 5
        %v3883 = vsel %vm733, %v3881, %v3882
        %v3884 = vrot.slane %v3727, 5
        %v3885 = vsel %vm733, %v3882, %v3884
        %v3886 = vrot.slane %v3728, 5
        %v3887 = vsel %vm733, %v3884, %v3886
        %v3888 = vrot.slane %v3729, 5
        %v3889 = vsel %vm733, %v3886, %v3888
        %v3890 = vrot.slane %v3730, 5
        %v3891 = vsel %vm733, %v3888, %v3890
        %v3892 = vrot.slane %v3731, 5
        %v3893 = vsel %vm733, %v3890, %v3892
        %v3894 = vrot.slane %v3732, 5
        %v3895 = vsel %vm733, %v3892, %v3894
        %v3896 = vrot.slane %v3733, 5
        %v3897 = vrot.slane %v3734, 5
        %v3898 = vsel %vm733, %v3896, %v3897
        %v3899 = vrot.slane %v3735, 5
        %v3900 = vsel %vm733, %v3897, %v3899
        %v3901 = vrot.slane %v3736, 5
        %v3902 = vsel %vm733, %v3899, %v3901
        %v3903 = vrot.slane %v3737, 5
        %v3904 = vsel %vm733, %v3901, %v3903
        %v3905 = vrot.slane %v3738, 5
        %v3906 = vsel %vm733, %v3903, %v3905
        %v3907 = vrot.slane %v3739, 5
        %v3908 = vsel %vm733, %v3905, %v3907
        %v3909 = vrot.slane %v3740, 5
        %v3910 = vsel %vm733, %v3907, %v3909
        %v3911 = vrot.slane %v3741, 5
        %v3912 = vrot.slane %v3742, 5
        %v3913 = vsel %vm733, %v3911, %v3912
        %v3914 = vrot.slane %v3743, 5
        %v3915 = vsel %vm733, %v3912, %v3914
        %v3916 = vrot.slane %v3744, 5
        %v3917 = vsel %vm733, %v3914, %v3916
        %v3918 = vrot.slane %v3745, 5
        %v3919 = vsel %vm733, %v3916, %v3918
        %v3920 = vrot.slane %v3746, 5
        %v3921 = vsel %vm733, %v3918, %v3920
        %v3922 = vrot.slane %v3747, 5
        %v3923 = vsel %vm733, %v3920, %v3922
        %v3924 = vrot.slane %v3748, 5
        %v3925 = vsel %vm733, %v3922, %v3924
        %v3926 = vrot.slane %v3749, 5
        %v3927 = vrot.slane %v3750, 5
        %v3928 = vsel %vm733, %v3926, %v3927
        %v3929 = vrot.slane %v3751, 5
        %v3930 = vsel %vm733, %v3927, %v3929
        %v3931 = vrot.slane %v3752, 5
        %v3932 = vsel %vm733, %v3929, %v3931
        %v3933 = vrot.slane %v3753, 5
        %v3934 = vsel %vm733, %v3931, %v3933
        %v3935 = vrot.slane %v3754, 5
        %v3936 = vsel %vm733, %v3933, %v3935
        %v3937 = vrot.slane %v3755, 5
        %v3938 = vsel %vm733, %v3935, %v3937
        %v3939 = vrot.slane %v3756, 5
        %v3940 = vsel %vm733, %v3937, %v3939
        %v4013 = vsel %vm733, 0.0, %v3821
        %v4014 = vsel %vm733, 0.0, %v3836
        %v4015 = vsel %vm733, 0.0, %v3851
        %v4016 = vsel %vm733, 0.0, %v3866
        %v4017 = vsel %vm733, 0.0, %v3881
        %v4018 = vsel %vm733, 0.0, %v3896
        %v4019 = vsel %vm733, 0.0, %v3911
        %v4020 = vsel %vm733, 0.0, %v3926
        %v4021 = vsel %vm733, %v3834, 0.0
        %v4022 = vsel %vm733, %v3849, 0.0
        %v4023 = vsel %vm733, %v3864, 0.0
        %v4024 = vsel %vm733, %v3879, 0.0
        %v4025 = vsel %vm733, %v3894, 0.0
        %v4026 = vsel %vm733, %v3909, 0.0
        %v4027 = vsel %vm733, %v3924, 0.0
        %v4028 = vsel %vm733, %v3939, 0.0
        %v4045 = vrot.slane %v4013, 1
        %v4046 = vrot.slane %v3823, 1
        %v4047 = vsel %vm958, %v4045, %v4046
        %v4048 = vrot.slane %v3825, 1
        %v4049 = vsel %vm958, %v4046, %v4048
        %v4050 = vrot.slane %v3827, 1
        %v4051 = vsel %vm958, %v4048, %v4050
        %v4052 = vrot.slane %v3829, 1
        %v4053 = vsel %vm958, %v4050, %v4052
        %v4054 = vrot.slane %v3831, 1
        %v4055 = vsel %vm958, %v4052, %v4054
        %v4056 = vrot.slane %v3833, 1
        %v4057 = vsel %vm958, %v4054, %v4056
        %v4058 = vrot.slane %v3835, 1
        %v4059 = vsel %vm958, %v4056, %v4058
        %v4060 = vrot.slane %v4021, 1
        %v4061 = vsel %vm958, %v4058, %v4060
        %v4062 = vrot.slane %v4014, 1
        %v4063 = vrot.slane %v3838, 1
        %v4064 = vsel %vm958, %v4062, %v4063
        %v4065 = vrot.slane %v3840, 1
        %v4066 = vsel %vm958, %v4063, %v4065
        %v4067 = vrot.slane %v3842, 1
        %v4068 = vsel %vm958, %v4065, %v4067
        %v4069 = vrot.slane %v3844, 1
        %v4070 = vsel %vm958, %v4067, %v4069
        %v4071 = vrot.slane %v3846, 1
        %v4072 = vsel %vm958, %v4069, %v4071
        %v4073 = vrot.slane %v3848, 1
        %v4074 = vsel %vm958, %v4071, %v4073
        %v4075 = vrot.slane %v3850, 1
        %v4076 = vsel %vm958, %v4073, %v4075
        %v4077 = vrot.slane %v4022, 1
        %v4078 = vsel %vm958, %v4075, %v4077
        %v4079 = vrot.slane %v4015, 1
        %v4080 = vrot.slane %v3853, 1
        %v4081 = vsel %vm958, %v4079, %v4080
        %v4082 = vrot.slane %v3855, 1
        %v4083 = vsel %vm958, %v4080, %v4082
        %v4084 = vrot.slane %v3857, 1
        %v4085 = vsel %vm958, %v4082, %v4084
        %v4086 = vrot.slane %v3859, 1
        %v4087 = vsel %vm958, %v4084, %v4086
        %v4088 = vrot.slane %v3861, 1
        %v4089 = vsel %vm958, %v4086, %v4088
        %v4090 = vrot.slane %v3863, 1
        %v4091 = vsel %vm958, %v4088, %v4090
        %v4092 = vrot.slane %v3865, 1
        %v4093 = vsel %vm958, %v4090, %v4092
        %v4094 = vrot.slane %v4023, 1
        %v4095 = vsel %vm958, %v4092, %v4094
        %v4096 = vrot.slane %v4016, 1
        %v4097 = vrot.slane %v3868, 1
        %v4098 = vsel %vm958, %v4096, %v4097
        %v4099 = vrot.slane %v3870, 1
        %v4100 = vsel %vm958, %v4097, %v4099
        %v4101 = vrot.slane %v3872, 1
        %v4102 = vsel %vm958, %v4099, %v4101
        %v4103 = vrot.slane %v3874, 1
        %v4104 = vsel %vm958, %v4101, %v4103
        %v4105 = vrot.slane %v3876, 1
        %v4106 = vsel %vm958, %v4103, %v4105
        %v4107 = vrot.slane %v3878, 1
        %v4108 = vsel %vm958, %v4105, %v4107
        %v4109 = vrot.slane %v3880, 1
        %v4110 = vsel %vm958, %v4107, %v4109
        %v4111 = vrot.slane %v4024, 1
        %v4112 = vsel %vm958, %v4109, %v4111
        %v4113 = vrot.slane %v4017, 1
        %v4114 = vrot.slane %v3883, 1
        %v4115 = vsel %vm958, %v4113, %v4114
        %v4116 = vrot.slane %v3885, 1
        %v4117 = vsel %vm958, %v4114, %v4116
        %v4118 = vrot.slane %v3887, 1
        %v4119 = vsel %vm958, %v4116, %v4118
        %v4120 = vrot.slane %v3889, 1
        %v4121 = vsel %vm958, %v4118, %v4120
        %v4122 = vrot.slane %v3891, 1
        %v4123 = vsel %vm958, %v4120, %v4122
        %v4124 = vrot.slane %v3893, 1
        %v4125 = vsel %vm958, %v4122, %v4124
        %v4126 = vrot.slane %v3895, 1
        %v4127 = vsel %vm958, %v4124, %v4126
        %v4128 = vrot.slane %v4025, 1
        %v4129 = vsel %vm958, %v4126, %v4128
        %v4130 = vrot.slane %v4018, 1
        %v4131 = vrot.slane %v3898, 1
        %v4132 = vsel %vm958, %v4130, %v4131
        %v4133 = vrot.slane %v3900, 1
        %v4134 = vsel %vm958, %v4131, %v4133
        %v4135 = vrot.slane %v3902, 1
        %v4136 = vsel %vm958, %v4133, %v4135
        %v4137 = vrot.slane %v3904, 1
        %v4138 = vsel %vm958, %v4135, %v4137
        %v4139 = vrot.slane %v3906, 1
        %v4140 = vsel %vm958, %v4137, %v4139
        %v4141 = vrot.slane %v3908, 1
        %v4142 = vsel %vm958, %v4139, %v4141
        %v4143 = vrot.slane %v3910, 1
        %v4144 = vsel %vm958, %v4141, %v4143
        %v4145 = vrot.slane %v4026, 1
        %v4146 = vsel %vm958, %v4143, %v4145
        %v4147 = vrot.slane %v4019, 1
        %v4148 = vrot.slane %v3913, 1
        %v4149 = vsel %vm958, %v4147, %v4148
        %v4150 = vrot.slane %v3915, 1
        %v4151 = vsel %vm958, %v4148, %v4150
        %v4152 = vrot.slane %v3917, 1
        %v4153 = vsel %vm958, %v4150, %v4152
        %v4154 = vrot.slane %v3919, 1
        %v4155 = vsel %vm958, %v4152, %v4154
        %v4156 = vrot.slane %v3921, 1
        %v4157 = vsel %vm958, %v4154, %v4156
        %v4158 = vrot.slane %v3923, 1
        %v4159 = vsel %vm958, %v4156, %v4158
        %v4160 = vrot.slane %v3925, 1
        %v4161 = vsel %vm958, %v4158, %v4160
        %v4162 = vrot.slane %v4027, 1
        %v4163 = vsel %vm958, %v4160, %v4162
        %v4164 = vrot.slane %v4020, 1
        %v4165 = vrot.slane %v3928, 1
        %v4166 = vsel %vm958, %v4164, %v4165
        %v4167 = vrot.slane %v3930, 1
        %v4168 = vsel %vm958, %v4165, %v4167
        %v4169 = vrot.slane %v3932, 1
        %v4170 = vsel %vm958, %v4167, %v4169
        %v4171 = vrot.slane %v3934, 1
        %v4172 = vsel %vm958, %v4169, %v4171
        %v4173 = vrot.slane %v3936, 1
        %v4174 = vsel %vm958, %v4171, %v4173
        %v4175 = vrot.slane %v3938, 1
        %v4176 = vsel %vm958, %v4173, %v4175
        %v4177 = vrot.slane %v3940, 1
        %v4178 = vsel %vm958, %v4175, %v4177
        %v4179 = vrot.slane %v4028, 1
        %v4180 = vsel %vm958, %v4177, %v4179
        %4181 = vrot.lane.b32.xlu0 %v4047, 16
        %v4182 = vpop.permute.xlu0 %4181
        %4183 = vrot.lane.b32.xlu0 %v4049, 16
        %v4184 = vpop.permute.xlu0 %4183
        %4185 = vrot.lane.b32.xlu0 %v4051, 16
        %v4186 = vpop.permute.xlu0 %4185
        %4187 = vrot.lane.b32.xlu0 %v4053, 16
        %v4188 = vpop.permute.xlu0 %4187
        %4189 = vrot.lane.b32.xlu0 %v4055, 16
        %v4190 = vpop.permute.xlu0 %4189
        %4191 = vrot.lane.b32.xlu0 %v4057, 16
        %v4192 = vpop.permute.xlu0 %4191
        %4193 = vrot.lane.b32.xlu0 %v4059, 16
        %v4194 = vpop.permute.xlu0 %4193
        %4195 = vrot.lane.b32.xlu0 %v4061, 16
        %v4196 = vpop.permute.xlu0 %4195
        %4197 = vrot.lane.b32.xlu0 %v4064, 16
        %v4198 = vpop.permute.xlu0 %4197
        %4199 = vrot.lane.b32.xlu0 %v4066, 16
        %v4200 = vpop.permute.xlu0 %4199
        %4201 = vrot.lane.b32.xlu0 %v4068, 16
        %v4202 = vpop.permute.xlu0 %4201
        %4203 = vrot.lane.b32.xlu0 %v4070, 16
        %v4204 = vpop.permute.xlu0 %4203
        %4205 = vrot.lane.b32.xlu0 %v4072, 16
        %v4206 = vpop.permute.xlu0 %4205
        %4207 = vrot.lane.b32.xlu0 %v4074, 16
        %v4208 = vpop.permute.xlu0 %4207
        %4209 = vrot.lane.b32.xlu0 %v4076, 16
        %v4210 = vpop.permute.xlu0 %4209
        %4211 = vrot.lane.b32.xlu0 %v4078, 16
        %v4212 = vpop.permute.xlu0 %4211
        %4213 = vrot.lane.b32.xlu0 %v4081, 16
        %v4214 = vpop.permute.xlu0 %4213
        %4215 = vrot.lane.b32.xlu0 %v4083, 16
        %v4216 = vpop.permute.xlu0 %4215
        %4217 = vrot.lane.b32.xlu0 %v4085, 16
        %v4218 = vpop.permute.xlu0 %4217
        %4219 = vrot.lane.b32.xlu0 %v4087, 16
        %v4220 = vpop.permute.xlu0 %4219
        %4221 = vrot.lane.b32.xlu0 %v4089, 16
        %v4222 = vpop.permute.xlu0 %4221
        %4223 = vrot.lane.b32.xlu0 %v4091, 16
        %v4224 = vpop.permute.xlu0 %4223
        %4225 = vrot.lane.b32.xlu0 %v4093, 16
        %v4226 = vpop.permute.xlu0 %4225
        %4227 = vrot.lane.b32.xlu0 %v4095, 16
        %v4228 = vpop.permute.xlu0 %4227
        %4229 = vrot.lane.b32.xlu0 %v4098, 16
        %v4230 = vpop.permute.xlu0 %4229
        %4231 = vrot.lane.b32.xlu0 %v4100, 16
        %v4232 = vpop.permute.xlu0 %4231
        %4233 = vrot.lane.b32.xlu0 %v4102, 16
        %v4234 = vpop.permute.xlu0 %4233
        %4235 = vrot.lane.b32.xlu0 %v4104, 16
        %v4236 = vpop.permute.xlu0 %4235
        %4237 = vrot.lane.b32.xlu0 %v4106, 16
        %v4238 = vpop.permute.xlu0 %4237
        %4239 = vrot.lane.b32.xlu0 %v4108, 16
        %v4240 = vpop.permute.xlu0 %4239
        %4241 = vrot.lane.b32.xlu0 %v4110, 16
        %v4242 = vpop.permute.xlu0 %4241
        %4243 = vrot.lane.b32.xlu0 %v4112, 16
        %v4244 = vpop.permute.xlu0 %4243
        %4245 = vrot.lane.b32.xlu0 %v4115, 16
        %v4246 = vpop.permute.xlu0 %4245
        %4247 = vrot.lane.b32.xlu0 %v4117, 16
        %v4248 = vpop.permute.xlu0 %4247
        %4249 = vrot.lane.b32.xlu0 %v4119, 16
        %v4250 = vpop.permute.xlu0 %4249
        %4251 = vrot.lane.b32.xlu0 %v4121, 16
        %v4252 = vpop.permute.xlu0 %4251
        %4253 = vrot.lane.b32.xlu0 %v4123, 16
        %v4254 = vpop.permute.xlu0 %4253
        %4255 = vrot.lane.b32.xlu0 %v4125, 16
        %v4256 = vpop.permute.xlu0 %4255
        %4257 = vrot.lane.b32.xlu0 %v4127, 16
        %v4258 = vpop.permute.xlu0 %4257
        %4259 = vrot.lane.b32.xlu0 %v4129, 16
        %v4260 = vpop.permute.xlu0 %4259
        %4261 = vrot.lane.b32.xlu0 %v4132, 16
        %v4262 = vpop.permute.xlu0 %4261
        %4263 = vrot.lane.b32.xlu0 %v4134, 16
        %v4264 = vpop.permute.xlu0 %4263
        %4265 = vrot.lane.b32.xlu0 %v4136, 16
        %v4266 = vpop.permute.xlu0 %4265
        %4267 = vrot.lane.b32.xlu0 %v4138, 16
        %v4268 = vpop.permute.xlu0 %4267
        %4269 = vrot.lane.b32.xlu0 %v4140, 16
        %v4270 = vpop.permute.xlu0 %4269
        %4271 = vrot.lane.b32.xlu0 %v4142, 16
        %v4272 = vpop.permute.xlu0 %4271
        %4273 = vrot.lane.b32.xlu0 %v4144, 16
        %v4274 = vpop.permute.xlu0 %4273
        %4275 = vrot.lane.b32.xlu0 %v4146, 16
        %v4276 = vpop.permute.xlu0 %4275
        %4277 = vrot.lane.b32.xlu0 %v4149, 16
        %v4278 = vpop.permute.xlu0 %4277
        %4279 = vrot.lane.b32.xlu0 %v4151, 16
        %v4280 = vpop.permute.xlu0 %4279
        %4281 = vrot.lane.b32.xlu0 %v4153, 16
        %v4282 = vpop.permute.xlu0 %4281
        %4283 = vrot.lane.b32.xlu0 %v4155, 16
        %v4284 = vpop.permute.xlu0 %4283
        %4285 = vrot.lane.b32.xlu0 %v4157, 16
        %v4286 = vpop.permute.xlu0 %4285
        %4287 = vrot.lane.b32.xlu0 %v4159, 16
        %v4288 = vpop.permute.xlu0 %4287
        %4289 = vrot.lane.b32.xlu0 %v4161, 16
        %v4290 = vpop.permute.xlu0 %4289
        %4291 = vrot.lane.b32.xlu0 %v4163, 16
        %v4292 = vpop.permute.xlu0 %4291
        %4293 = vrot.lane.b32.xlu0 %v4166, 16
        %v4294 = vpop.permute.xlu0 %4293
        %4295 = vrot.lane.b32.xlu0 %v4168, 16
        %v4296 = vpop.permute.xlu0 %4295
        %4297 = vrot.lane.b32.xlu0 %v4170, 16
        %v4298 = vpop.permute.xlu0 %4297
        %4299 = vrot.lane.b32.xlu0 %v4172, 16
        %v4300 = vpop.permute.xlu0 %4299
        %4301 = vrot.lane.b32.xlu0 %v4174, 16
        %v4302 = vpop.permute.xlu0 %4301
        %4303 = vrot.lane.b32.xlu0 %v4176, 16
        %v4304 = vpop.permute.xlu0 %4303
        %4305 = vrot.lane.b32.xlu0 %v4178, 16
        %v4306 = vpop.permute.xlu0 %4305
        %4307 = vrot.lane.b32.xlu0 %v4180, 16
        %v4308 = vpop.permute.xlu0 %4307
        %v4373 = vrot.slane %v4013, 2
        %v4374 = vrot.slane %v3823, 2
        %v4375 = vsel %vm1287, %v4373, %v4374
        %v4376 = vrot.slane %v3825, 2
        %v4377 = vsel %vm1287, %v4374, %v4376
        %v4378 = vrot.slane %v3827, 2
        %v4379 = vsel %vm1287, %v4376, %v4378
        %v4380 = vrot.slane %v3829, 2
        %v4381 = vsel %vm1287, %v4378, %v4380
        %v4382 = vrot.slane %v3831, 2
        %v4383 = vsel %vm1287, %v4380, %v4382
        %v4384 = vrot.slane %v3833, 2
        %v4385 = vsel %vm1287, %v4382, %v4384
        %v4386 = vrot.slane %v3835, 2
        %v4387 = vsel %vm1287, %v4384, %v4386
        %v4388 = vrot.slane %v4021, 2
        %v4389 = vsel %vm1287, %v4386, %v4388
        %v4390 = vrot.slane %v4014, 2
        %v4391 = vrot.slane %v3838, 2
        %v4392 = vsel %vm1287, %v4390, %v4391
        %v4393 = vrot.slane %v3840, 2
        %v4394 = vsel %vm1287, %v4391, %v4393
        %v4395 = vrot.slane %v3842, 2
        %v4396 = vsel %vm1287, %v4393, %v4395
        %v4397 = vrot.slane %v3844, 2
        %v4398 = vsel %vm1287, %v4395, %v4397
        %v4399 = vrot.slane %v3846, 2
        %v4400 = vsel %vm1287, %v4397, %v4399
        %v4401 = vrot.slane %v3848, 2
        %v4402 = vsel %vm1287, %v4399, %v4401
        %v4403 = vrot.slane %v3850, 2
        %v4404 = vsel %vm1287, %v4401, %v4403
        %v4405 = vrot.slane %v4022, 2
        %v4406 = vsel %vm1287, %v4403, %v4405
        %v4407 = vrot.slane %v4015, 2
        %v4408 = vrot.slane %v3853, 2
        %v4409 = vsel %vm1287, %v4407, %v4408
        %v4410 = vrot.slane %v3855, 2
        %v4411 = vsel %vm1287, %v4408, %v4410
        %v4412 = vrot.slane %v3857, 2
        %v4413 = vsel %vm1287, %v4410, %v4412
        %v4414 = vrot.slane %v3859, 2
        %v4415 = vsel %vm1287, %v4412, %v4414
        %v4416 = vrot.slane %v3861, 2
        %v4417 = vsel %vm1287, %v4414, %v4416
        %v4418 = vrot.slane %v3863, 2
        %v4419 = vsel %vm1287, %v4416, %v4418
        %v4420 = vrot.slane %v3865, 2
        %v4421 = vsel %vm1287, %v4418, %v4420
        %v4422 = vrot.slane %v4023, 2
        %v4423 = vsel %vm1287, %v4420, %v4422
        %v4424 = vrot.slane %v4016, 2
        %v4425 = vrot.slane %v3868, 2
        %v4426 = vsel %vm1287, %v4424, %v4425
        %v4427 = vrot.slane %v3870, 2
        %v4428 = vsel %vm1287, %v4425, %v4427
        %v4429 = vrot.slane %v3872, 2
        %v4430 = vsel %vm1287, %v4427, %v4429
        %v4431 = vrot.slane %v3874, 2
        %v4432 = vsel %vm1287, %v4429, %v4431
        %v4433 = vrot.slane %v3876, 2
        %v4434 = vsel %vm1287, %v4431, %v4433
        %v4435 = vrot.slane %v3878, 2
        %v4436 = vsel %vm1287, %v4433, %v4435
        %v4437 = vrot.slane %v3880, 2
        %v4438 = vsel %vm1287, %v4435, %v4437
        %v4439 = vrot.slane %v4024, 2
        %v4440 = vsel %vm1287, %v4437, %v4439
        %v4441 = vrot.slane %v4017, 2
        %v4442 = vrot.slane %v3883, 2
        %v4443 = vsel %vm1287, %v4441, %v4442
        %v4444 = vrot.slane %v3885, 2
        %v4445 = vsel %vm1287, %v4442, %v4444
        %v4446 = vrot.slane %v3887, 2
        %v4447 = vsel %vm1287, %v4444, %v4446
        %v4448 = vrot.slane %v3889, 2
        %v4449 = vsel %vm1287, %v4446, %v4448
        %v4450 = vrot.slane %v3891, 2
        %v4451 = vsel %vm1287, %v4448, %v4450
        %v4452 = vrot.slane %v3893, 2
        %v4453 = vsel %vm1287, %v4450, %v4452
        %v4454 = vrot.slane %v3895, 2
        %v4455 = vsel %vm1287, %v4452, %v4454
        %v4456 = vrot.slane %v4025, 2
        %v4457 = vsel %vm1287, %v4454, %v4456
        %v4458 = vrot.slane %v4018, 2
        %v4459 = vrot.slane %v3898, 2
        %v4460 = vsel %vm1287, %v4458, %v4459
        %v4461 = vrot.slane %v3900, 2
        %v4462 = vsel %vm1287, %v4459, %v4461
        %v4463 = vrot.slane %v3902, 2
        %v4464 = vsel %vm1287, %v4461, %v4463
        %v4465 = vrot.slane %v3904, 2
        %v4466 = vsel %vm1287, %v4463, %v4465
        %v4467 = vrot.slane %v3906, 2
        %v4468 = vsel %vm1287, %v4465, %v4467
        %v4469 = vrot.slane %v3908, 2
        %v4470 = vsel %vm1287, %v4467, %v4469
        %v4471 = vrot.slane %v3910, 2
        %v4472 = vsel %vm1287, %v4469, %v4471
        %v4473 = vrot.slane %v4026, 2
        %v4474 = vsel %vm1287, %v4471, %v4473
        %v4475 = vrot.slane %v4019, 2
        %v4476 = vrot.slane %v3913, 2
        %v4477 = vsel %vm1287, %v4475, %v4476
        %v4478 = vrot.slane %v3915, 2
        %v4479 = vsel %vm1287, %v4476, %v4478
        %v4480 = vrot.slane %v3917, 2
        %v4481 = vsel %vm1287, %v4478, %v4480
        %v4482 = vrot.slane %v3919, 2
        %v4483 = vsel %vm1287, %v4480, %v4482
        %v4484 = vrot.slane %v3921, 2
        %v4485 = vsel %vm1287, %v4482, %v4484
        %v4486 = vrot.slane %v3923, 2
        %v4487 = vsel %vm1287, %v4484, %v4486
        %v4488 = vrot.slane %v3925, 2
        %v4489 = vsel %vm1287, %v4486, %v4488
        %v4490 = vrot.slane %v4027, 2
        %v4491 = vsel %vm1287, %v4488, %v4490
        %v4492 = vrot.slane %v4020, 2
        %v4493 = vrot.slane %v3928, 2
        %v4494 = vsel %vm1287, %v4492, %v4493
        %v4495 = vrot.slane %v3930, 2
        %v4496 = vsel %vm1287, %v4493, %v4495
        %v4497 = vrot.slane %v3932, 2
        %v4498 = vsel %vm1287, %v4495, %v4497
        %v4499 = vrot.slane %v3934, 2
        %v4500 = vsel %vm1287, %v4497, %v4499
        %v4501 = vrot.slane %v3936, 2
        %v4502 = vsel %vm1287, %v4499, %v4501
        %v4503 = vrot.slane %v3938, 2
        %v4504 = vsel %vm1287, %v4501, %v4503
        %v4505 = vrot.slane %v3940, 2
        %v4506 = vsel %vm1287, %v4503, %v4505
        %v4507 = vrot.slane %v4028, 2
        %v4508 = vsel %vm1287, %v4505, %v4507
        %4509 = vrot.lane.b32.xlu0 %v4375, 32
        %v4510 = vpop.permute.xlu0 %4509
        %4511 = vrot.lane.b32.xlu0 %v4377, 32
        %v4512 = vpop.permute.xlu0 %4511
        %4513 = vrot.lane.b32.xlu0 %v4379, 32
        %v4514 = vpop.permute.xlu0 %4513
        %4515 = vrot.lane.b32.xlu0 %v4381, 32
        %v4516 = vpop.permute.xlu0 %4515
        %4517 = vrot.lane.b32.xlu0 %v4383, 32
        %v4518 = vpop.permute.xlu0 %4517
        %4519 = vrot.lane.b32.xlu0 %v4385, 32
        %v4520 = vpop.permute.xlu0 %4519
        %4521 = vrot.lane.b32.xlu0 %v4387, 32
        %v4522 = vpop.permute.xlu0 %4521
        %4523 = vrot.lane.b32.xlu0 %v4389, 32
        %v4524 = vpop.permute.xlu0 %4523
        %4525 = vrot.lane.b32.xlu0 %v4392, 32
        %v4526 = vpop.permute.xlu0 %4525
        %4527 = vrot.lane.b32.xlu0 %v4394, 32
        %v4528 = vpop.permute.xlu0 %4527
        %4529 = vrot.lane.b32.xlu0 %v4396, 32
        %v4530 = vpop.permute.xlu0 %4529
        %4531 = vrot.lane.b32.xlu0 %v4398, 32
        %v4532 = vpop.permute.xlu0 %4531
        %4533 = vrot.lane.b32.xlu0 %v4400, 32
        %v4534 = vpop.permute.xlu0 %4533
        %4535 = vrot.lane.b32.xlu0 %v4402, 32
        %v4536 = vpop.permute.xlu0 %4535
        %4537 = vrot.lane.b32.xlu0 %v4404, 32
        %v4538 = vpop.permute.xlu0 %4537
        %4539 = vrot.lane.b32.xlu0 %v4406, 32
        %v4540 = vpop.permute.xlu0 %4539
        %4541 = vrot.lane.b32.xlu0 %v4409, 32
        %v4542 = vpop.permute.xlu0 %4541
        %4543 = vrot.lane.b32.xlu0 %v4411, 32
        %v4544 = vpop.permute.xlu0 %4543
        %4545 = vrot.lane.b32.xlu0 %v4413, 32
        %v4546 = vpop.permute.xlu0 %4545
        %4547 = vrot.lane.b32.xlu0 %v4415, 32
        %v4548 = vpop.permute.xlu0 %4547
        %4549 = vrot.lane.b32.xlu0 %v4417, 32
        %v4550 = vpop.permute.xlu0 %4549
        %4551 = vrot.lane.b32.xlu0 %v4419, 32
        %v4552 = vpop.permute.xlu0 %4551
        %4553 = vrot.lane.b32.xlu0 %v4421, 32
        %v4554 = vpop.permute.xlu0 %4553
        %4555 = vrot.lane.b32.xlu0 %v4423, 32
        %v4556 = vpop.permute.xlu0 %4555
        %4557 = vrot.lane.b32.xlu0 %v4426, 32
        %v4558 = vpop.permute.xlu0 %4557
        %4559 = vrot.lane.b32.xlu0 %v4428, 32
        %v4560 = vpop.permute.xlu0 %4559
        %4561 = vrot.lane.b32.xlu0 %v4430, 32
        %v4562 = vpop.permute.xlu0 %4561
        %4563 = vrot.lane.b32.xlu0 %v4432, 32
        %v4564 = vpop.permute.xlu0 %4563
        %4565 = vrot.lane.b32.xlu0 %v4434, 32
        %v4566 = vpop.permute.xlu0 %4565
        %4567 = vrot.lane.b32.xlu0 %v4436, 32
        %v4568 = vpop.permute.xlu0 %4567
        %4569 = vrot.lane.b32.xlu0 %v4438, 32
        %v4570 = vpop.permute.xlu0 %4569
        %4571 = vrot.lane.b32.xlu0 %v4440, 32
        %v4572 = vpop.permute.xlu0 %4571
        %4573 = vrot.lane.b32.xlu0 %v4443, 32
        %v4574 = vpop.permute.xlu0 %4573
        %4575 = vrot.lane.b32.xlu0 %v4445, 32
        %v4576 = vpop.permute.xlu0 %4575
        %4577 = vrot.lane.b32.xlu0 %v4447, 32
        %v4578 = vpop.permute.xlu0 %4577
        %4579 = vrot.lane.b32.xlu0 %v4449, 32
        %v4580 = vpop.permute.xlu0 %4579
        %4581 = vrot.lane.b32.xlu0 %v4451, 32
        %v4582 = vpop.permute.xlu0 %4581
        %4583 = vrot.lane.b32.xlu0 %v4453, 32
        %v4584 = vpop.permute.xlu0 %4583
        %4585 = vrot.lane.b32.xlu0 %v4455, 32
        %v4586 = vpop.permute.xlu0 %4585
        %4587 = vrot.lane.b32.xlu0 %v4457, 32
        %v4588 = vpop.permute.xlu0 %4587
        %4589 = vrot.lane.b32.xlu0 %v4460, 32
        %v4590 = vpop.permute.xlu0 %4589
        %4591 = vrot.lane.b32.xlu0 %v4462, 32
        %v4592 = vpop.permute.xlu0 %4591
        %4593 = vrot.lane.b32.xlu0 %v4464, 32
        %v4594 = vpop.permute.xlu0 %4593
        %4595 = vrot.lane.b32.xlu0 %v4466, 32
        %v4596 = vpop.permute.xlu0 %4595
        %4597 = vrot.lane.b32.xlu0 %v4468, 32
        %v4598 = vpop.permute.xlu0 %4597
        %4599 = vrot.lane.b32.xlu0 %v4470, 32
        %v4600 = vpop.permute.xlu0 %4599
        %4601 = vrot.lane.b32.xlu0 %v4472, 32
        %v4602 = vpop.permute.xlu0 %4601
        %4603 = vrot.lane.b32.xlu0 %v4474, 32
        %v4604 = vpop.permute.xlu0 %4603
        %4605 = vrot.lane.b32.xlu0 %v4477, 32
        %v4606 = vpop.permute.xlu0 %4605
        %4607 = vrot.lane.b32.xlu0 %v4479, 32
        %v4608 = vpop.permute.xlu0 %4607
        %4609 = vrot.lane.b32.xlu0 %v4481, 32
        %v4610 = vpop.permute.xlu0 %4609
        %4611 = vrot.lane.b32.xlu0 %v4483, 32
        %v4612 = vpop.permute.xlu0 %4611
        %4613 = vrot.lane.b32.xlu0 %v4485, 32
        %v4614 = vpop.permute.xlu0 %4613
        %4615 = vrot.lane.b32.xlu0 %v4487, 32
        %v4616 = vpop.permute.xlu0 %4615
        %4617 = vrot.lane.b32.xlu0 %v4489, 32
        %v4618 = vpop.permute.xlu0 %4617
        %4619 = vrot.lane.b32.xlu0 %v4491, 32
        %v4620 = vpop.permute.xlu0 %4619
        %4621 = vrot.lane.b32.xlu0 %v4494, 32
        %v4622 = vpop.permute.xlu0 %4621
        %4623 = vrot.lane.b32.xlu0 %v4496, 32
        %v4624 = vpop.permute.xlu0 %4623
        %4625 = vrot.lane.b32.xlu0 %v4498, 32
        %v4626 = vpop.permute.xlu0 %4625
        %4627 = vrot.lane.b32.xlu0 %v4500, 32
        %v4628 = vpop.permute.xlu0 %4627
        %4629 = vrot.lane.b32.xlu0 %v4502, 32
        %v4630 = vpop.permute.xlu0 %4629
        %4631 = vrot.lane.b32.xlu0 %v4504, 32
        %v4632 = vpop.permute.xlu0 %4631
        %4633 = vrot.lane.b32.xlu0 %v4506, 32
        %v4634 = vpop.permute.xlu0 %4633
        %4635 = vrot.lane.b32.xlu0 %v4508, 32
        %v4636 = vpop.permute.xlu0 %4635
        %v4701 = vrot.slane %v4013, 3
        %v4702 = vrot.slane %v3823, 3
        %v4703 = vsel %vm1616, %v4701, %v4702
        %v4704 = vrot.slane %v3825, 3
        %v4705 = vsel %vm1616, %v4702, %v4704
        %v4706 = vrot.slane %v3827, 3
        %v4707 = vsel %vm1616, %v4704, %v4706
        %v4708 = vrot.slane %v3829, 3
        %v4709 = vsel %vm1616, %v4706, %v4708
        %v4710 = vrot.slane %v3831, 3
        %v4711 = vsel %vm1616, %v4708, %v4710
        %v4712 = vrot.slane %v3833, 3
        %v4713 = vsel %vm1616, %v4710, %v4712
        %v4714 = vrot.slane %v3835, 3
        %v4715 = vsel %vm1616, %v4712, %v4714
        %v4716 = vrot.slane %v4021, 3
        %v4717 = vsel %vm1616, %v4714, %v4716
        %v4718 = vrot.slane %v4014, 3
        %v4719 = vrot.slane %v3838, 3
        %v4720 = vsel %vm1616, %v4718, %v4719
        %v4721 = vrot.slane %v3840, 3
        %v4722 = vsel %vm1616, %v4719, %v4721
        %v4723 = vrot.slane %v3842, 3
        %v4724 = vsel %vm1616, %v4721, %v4723
        %v4725 = vrot.slane %v3844, 3
        %v4726 = vsel %vm1616, %v4723, %v4725
        %v4727 = vrot.slane %v3846, 3
        %v4728 = vsel %vm1616, %v4725, %v4727
        %v4729 = vrot.slane %v3848, 3
        %v4730 = vsel %vm1616, %v4727, %v4729
        %v4731 = vrot.slane %v3850, 3
        %v4732 = vsel %vm1616, %v4729, %v4731
        %v4733 = vrot.slane %v4022, 3
        %v4734 = vsel %vm1616, %v4731, %v4733
        %v4735 = vrot.slane %v4015, 3
        %v4736 = vrot.slane %v3853, 3
        %v4737 = vsel %vm1616, %v4735, %v4736
        %v4738 = vrot.slane %v3855, 3
        %v4739 = vsel %vm1616, %v4736, %v4738
        %v4740 = vrot.slane %v3857, 3
        %v4741 = vsel %vm1616, %v4738, %v4740
        %v4742 = vrot.slane %v3859, 3
        %v4743 = vsel %vm1616, %v4740, %v4742
        %v4744 = vrot.slane %v3861, 3
        %v4745 = vsel %vm1616, %v4742, %v4744
        %v4746 = vrot.slane %v3863, 3
        %v4747 = vsel %vm1616, %v4744, %v4746
        %v4748 = vrot.slane %v3865, 3
        %v4749 = vsel %vm1616, %v4746, %v4748
        %v4750 = vrot.slane %v4023, 3
        %v4751 = vsel %vm1616, %v4748, %v4750
        %v4752 = vrot.slane %v4016, 3
        %v4753 = vrot.slane %v3868, 3
        %v4754 = vsel %vm1616, %v4752, %v4753
        %v4755 = vrot.slane %v3870, 3
        %v4756 = vsel %vm1616, %v4753, %v4755
        %v4757 = vrot.slane %v3872, 3
        %v4758 = vsel %vm1616, %v4755, %v4757
        %v4759 = vrot.slane %v3874, 3
        %v4760 = vsel %vm1616, %v4757, %v4759
        %v4761 = vrot.slane %v3876, 3
        %v4762 = vsel %vm1616, %v4759, %v4761
        %v4763 = vrot.slane %v3878, 3
        %v4764 = vsel %vm1616, %v4761, %v4763
        %v4765 = vrot.slane %v3880, 3
        %v4766 = vsel %vm1616, %v4763, %v4765
        %v4767 = vrot.slane %v4024, 3
        %v4768 = vsel %vm1616, %v4765, %v4767
        %v4769 = vrot.slane %v4017, 3
        %v4770 = vrot.slane %v3883, 3
        %v4771 = vsel %vm1616, %v4769, %v4770
        %v4772 = vrot.slane %v3885, 3
        %v4773 = vsel %vm1616, %v4770, %v4772
        %v4774 = vrot.slane %v3887, 3
        %v4775 = vsel %vm1616, %v4772, %v4774
        %v4776 = vrot.slane %v3889, 3
        %v4777 = vsel %vm1616, %v4774, %v4776
        %v4778 = vrot.slane %v3891, 3
        %v4779 = vsel %vm1616, %v4776, %v4778
        %v4780 = vrot.slane %v3893, 3
        %v4781 = vsel %vm1616, %v4778, %v4780
        %v4782 = vrot.slane %v3895, 3
        %v4783 = vsel %vm1616, %v4780, %v4782
        %v4784 = vrot.slane %v4025, 3
        %v4785 = vsel %vm1616, %v4782, %v4784
        %v4786 = vrot.slane %v4018, 3
        %v4787 = vrot.slane %v3898, 3
        %v4788 = vsel %vm1616, %v4786, %v4787
        %v4789 = vrot.slane %v3900, 3
        %v4790 = vsel %vm1616, %v4787, %v4789
        %v4791 = vrot.slane %v3902, 3
        %v4792 = vsel %vm1616, %v4789, %v4791
        %v4793 = vrot.slane %v3904, 3
        %v4794 = vsel %vm1616, %v4791, %v4793
        %v4795 = vrot.slane %v3906, 3
        %v4796 = vsel %vm1616, %v4793, %v4795
        %v4797 = vrot.slane %v3908, 3
        %v4798 = vsel %vm1616, %v4795, %v4797
        %v4799 = vrot.slane %v3910, 3
        %v4800 = vsel %vm1616, %v4797, %v4799
        %v4801 = vrot.slane %v4026, 3
        %v4802 = vsel %vm1616, %v4799, %v4801
        %v4803 = vrot.slane %v4019, 3
        %v4804 = vrot.slane %v3913, 3
        %v4805 = vsel %vm1616, %v4803, %v4804
        %v4806 = vrot.slane %v3915, 3
        %v4807 = vsel %vm1616, %v4804, %v4806
        %v4808 = vrot.slane %v3917, 3
        %v4809 = vsel %vm1616, %v4806, %v4808
        %v4810 = vrot.slane %v3919, 3
        %v4811 = vsel %vm1616, %v4808, %v4810
        %v4812 = vrot.slane %v3921, 3
        %v4813 = vsel %vm1616, %v4810, %v4812
        %v4814 = vrot.slane %v3923, 3
        %v4815 = vsel %vm1616, %v4812, %v4814
        %v4816 = vrot.slane %v3925, 3
        %v4817 = vsel %vm1616, %v4814, %v4816
        %v4818 = vrot.slane %v4027, 3
        %v4819 = vsel %vm1616, %v4816, %v4818
        %v4820 = vrot.slane %v4020, 3
        %v4821 = vrot.slane %v3928, 3
        %v4822 = vsel %vm1616, %v4820, %v4821
        %v4823 = vrot.slane %v3930, 3
        %v4824 = vsel %vm1616, %v4821, %v4823
        %v4825 = vrot.slane %v3932, 3
        %v4826 = vsel %vm1616, %v4823, %v4825
        %v4827 = vrot.slane %v3934, 3
        %v4828 = vsel %vm1616, %v4825, %v4827
        %v4829 = vrot.slane %v3936, 3
        %v4830 = vsel %vm1616, %v4827, %v4829
        %v4831 = vrot.slane %v3938, 3
        %v4832 = vsel %vm1616, %v4829, %v4831
        %v4833 = vrot.slane %v3940, 3
        %v4834 = vsel %vm1616, %v4831, %v4833
        %v4835 = vrot.slane %v4028, 3
        %v4836 = vsel %vm1616, %v4833, %v4835
        %4837 = vrot.lane.b32.xlu0 %v4703, 48
        %v4838 = vpop.permute.xlu0 %4837
        %4839 = vrot.lane.b32.xlu0 %v4705, 48
        %v4840 = vpop.permute.xlu0 %4839
        %4841 = vrot.lane.b32.xlu0 %v4707, 48
        %v4842 = vpop.permute.xlu0 %4841
        %4843 = vrot.lane.b32.xlu0 %v4709, 48
        %v4844 = vpop.permute.xlu0 %4843
        %4845 = vrot.lane.b32.xlu0 %v4711, 48
        %v4846 = vpop.permute.xlu0 %4845
        %4847 = vrot.lane.b32.xlu0 %v4713, 48
        %v4848 = vpop.permute.xlu0 %4847
        %4849 = vrot.lane.b32.xlu0 %v4715, 48
        %v4850 = vpop.permute.xlu0 %4849
        %4851 = vrot.lane.b32.xlu0 %v4717, 48
        %v4852 = vpop.permute.xlu0 %4851
        %4853 = vrot.lane.b32.xlu0 %v4720, 48
        %v4854 = vpop.permute.xlu0 %4853
        %4855 = vrot.lane.b32.xlu0 %v4722, 48
        %v4856 = vpop.permute.xlu0 %4855
        %4857 = vrot.lane.b32.xlu0 %v4724, 48
        %v4858 = vpop.permute.xlu0 %4857
        %4859 = vrot.lane.b32.xlu0 %v4726, 48
        %v4860 = vpop.permute.xlu0 %4859
        %4861 = vrot.lane.b32.xlu0 %v4728, 48
        %v4862 = vpop.permute.xlu0 %4861
        %4863 = vrot.lane.b32.xlu0 %v4730, 48
        %v4864 = vpop.permute.xlu0 %4863
        %4865 = vrot.lane.b32.xlu0 %v4732, 48
        %v4866 = vpop.permute.xlu0 %4865
        %4867 = vrot.lane.b32.xlu0 %v4734, 48
        %v4868 = vpop.permute.xlu0 %4867
        %4869 = vrot.lane.b32.xlu0 %v4737, 48
        %v4870 = vpop.permute.xlu0 %4869
        %4871 = vrot.lane.b32.xlu0 %v4739, 48
        %v4872 = vpop.permute.xlu0 %4871
        %4873 = vrot.lane.b32.xlu0 %v4741, 48
        %v4874 = vpop.permute.xlu0 %4873
        %4875 = vrot.lane.b32.xlu0 %v4743, 48
        %v4876 = vpop.permute.xlu0 %4875
        %4877 = vrot.lane.b32.xlu0 %v4745, 48
        %v4878 = vpop.permute.xlu0 %4877
        %4879 = vrot.lane.b32.xlu0 %v4747, 48
        %v4880 = vpop.permute.xlu0 %4879
        %4881 = vrot.lane.b32.xlu0 %v4749, 48
        %v4882 = vpop.permute.xlu0 %4881
        %4883 = vrot.lane.b32.xlu0 %v4751, 48
        %v4884 = vpop.permute.xlu0 %4883
        %4885 = vrot.lane.b32.xlu0 %v4754, 48
        %v4886 = vpop.permute.xlu0 %4885
        %4887 = vrot.lane.b32.xlu0 %v4756, 48
        %v4888 = vpop.permute.xlu0 %4887
        %4889 = vrot.lane.b32.xlu0 %v4758, 48
        %v4890 = vpop.permute.xlu0 %4889
        %4891 = vrot.lane.b32.xlu0 %v4760, 48
        %v4892 = vpop.permute.xlu0 %4891
        %4893 = vrot.lane.b32.xlu0 %v4762, 48
        %v4894 = vpop.permute.xlu0 %4893
        %4895 = vrot.lane.b32.xlu0 %v4764, 48
        %v4896 = vpop.permute.xlu0 %4895
        %4897 = vrot.lane.b32.xlu0 %v4766, 48
        %v4898 = vpop.permute.xlu0 %4897
        %4899 = vrot.lane.b32.xlu0 %v4768, 48
        %v4900 = vpop.permute.xlu0 %4899
        %4901 = vrot.lane.b32.xlu0 %v4771, 48
        %v4902 = vpop.permute.xlu0 %4901
        %4903 = vrot.lane.b32.xlu0 %v4773, 48
        %v4904 = vpop.permute.xlu0 %4903
        %4905 = vrot.lane.b32.xlu0 %v4775, 48
        %v4906 = vpop.permute.xlu0 %4905
        %4907 = vrot.lane.b32.xlu0 %v4777, 48
        %v4908 = vpop.permute.xlu0 %4907
        %4909 = vrot.lane.b32.xlu0 %v4779, 48
        %v4910 = vpop.permute.xlu0 %4909
        %4911 = vrot.lane.b32.xlu0 %v4781, 48
        %v4912 = vpop.permute.xlu0 %4911
        %4913 = vrot.lane.b32.xlu0 %v4783, 48
        %v4914 = vpop.permute.xlu0 %4913
        %4915 = vrot.lane.b32.xlu0 %v4785, 48
        %v4916 = vpop.permute.xlu0 %4915
        %4917 = vrot.lane.b32.xlu0 %v4788, 48
        %v4918 = vpop.permute.xlu0 %4917
        %4919 = vrot.lane.b32.xlu0 %v4790, 48
        %v4920 = vpop.permute.xlu0 %4919
        %4921 = vrot.lane.b32.xlu0 %v4792, 48
        %v4922 = vpop.permute.xlu0 %4921
        %4923 = vrot.lane.b32.xlu0 %v4794, 48
        %v4924 = vpop.permute.xlu0 %4923
        %4925 = vrot.lane.b32.xlu0 %v4796, 48
        %v4926 = vpop.permute.xlu0 %4925
        %4927 = vrot.lane.b32.xlu0 %v4798, 48
        %v4928 = vpop.permute.xlu0 %4927
        %4929 = vrot.lane.b32.xlu0 %v4800, 48
        %v4930 = vpop.permute.xlu0 %4929
        %4931 = vrot.lane.b32.xlu0 %v4802, 48
        %v4932 = vpop.permute.xlu0 %4931
        %4933 = vrot.lane.b32.xlu0 %v4805, 48
        %v4934 = vpop.permute.xlu0 %4933
        %4935 = vrot.lane.b32.xlu0 %v4807, 48
        %v4936 = vpop.permute.xlu0 %4935
        %4937 = vrot.lane.b32.xlu0 %v4809, 48
        %v4938 = vpop.permute.xlu0 %4937
        %4939 = vrot.lane.b32.xlu0 %v4811, 48
        %v4940 = vpop.permute.xlu0 %4939
        %4941 = vrot.lane.b32.xlu0 %v4813, 48
        %v4942 = vpop.permute.xlu0 %4941
        %4943 = vrot.lane.b32.xlu0 %v4815, 48
        %v4944 = vpop.permute.xlu0 %4943
        %4945 = vrot.lane.b32.xlu0 %v4817, 48
        %v4946 = vpop.permute.xlu0 %4945
        %4947 = vrot.lane.b32.xlu0 %v4819, 48
        %v4948 = vpop.permute.xlu0 %4947
        %4949 = vrot.lane.b32.xlu0 %v4822, 48
        %v4950 = vpop.permute.xlu0 %4949
        %4951 = vrot.lane.b32.xlu0 %v4824, 48
        %v4952 = vpop.permute.xlu0 %4951
        %4953 = vrot.lane.b32.xlu0 %v4826, 48
        %v4954 = vpop.permute.xlu0 %4953
        %4955 = vrot.lane.b32.xlu0 %v4828, 48
        %v4956 = vpop.permute.xlu0 %4955
        %4957 = vrot.lane.b32.xlu0 %v4830, 48
        %v4958 = vpop.permute.xlu0 %4957
        %4959 = vrot.lane.b32.xlu0 %v4832, 48
        %v4960 = vpop.permute.xlu0 %4959
        %4961 = vrot.lane.b32.xlu0 %v4834, 48
        %v4962 = vpop.permute.xlu0 %4961
        %4963 = vrot.lane.b32.xlu0 %v4836, 48
        %v4964 = vpop.permute.xlu0 %4963
        %v5029 = vrot.slane %v4013, 4
        %v5030 = vrot.slane %v3823, 4
        %v5031 = vsel %vm1945, %v5029, %v5030
        %v5032 = vrot.slane %v3825, 4
        %v5033 = vsel %vm1945, %v5030, %v5032
        %v5034 = vrot.slane %v3827, 4
        %v5035 = vsel %vm1945, %v5032, %v5034
        %v5036 = vrot.slane %v3829, 4
        %v5037 = vsel %vm1945, %v5034, %v5036
        %v5038 = vrot.slane %v3831, 4
        %v5039 = vsel %vm1945, %v5036, %v5038
        %v5040 = vrot.slane %v3833, 4
        %v5041 = vsel %vm1945, %v5038, %v5040
        %v5042 = vrot.slane %v3835, 4
        %v5043 = vsel %vm1945, %v5040, %v5042
        %v5044 = vrot.slane %v4021, 4
        %v5045 = vsel %vm1945, %v5042, %v5044
        %v5046 = vrot.slane %v4014, 4
        %v5047 = vrot.slane %v3838, 4
        %v5048 = vsel %vm1945, %v5046, %v5047
        %v5049 = vrot.slane %v3840, 4
        %v5050 = vsel %vm1945, %v5047, %v5049
        %v5051 = vrot.slane %v3842, 4
        %v5052 = vsel %vm1945, %v5049, %v5051
        %v5053 = vrot.slane %v3844, 4
        %v5054 = vsel %vm1945, %v5051, %v5053
        %v5055 = vrot.slane %v3846, 4
        %v5056 = vsel %vm1945, %v5053, %v5055
        %v5057 = vrot.slane %v3848, 4
        %v5058 = vsel %vm1945, %v5055, %v5057
        %v5059 = vrot.slane %v3850, 4
        %v5060 = vsel %vm1945, %v5057, %v5059
        %v5061 = vrot.slane %v4022, 4
        %v5062 = vsel %vm1945, %v5059, %v5061
        %v5063 = vrot.slane %v4015, 4
        %v5064 = vrot.slane %v3853, 4
        %v5065 = vsel %vm1945, %v5063, %v5064
        %v5066 = vrot.slane %v3855, 4
        %v5067 = vsel %vm1945, %v5064, %v5066
        %v5068 = vrot.slane %v3857, 4
        %v5069 = vsel %vm1945, %v5066, %v5068
        %v5070 = vrot.slane %v3859, 4
        %v5071 = vsel %vm1945, %v5068, %v5070
        %v5072 = vrot.slane %v3861, 4
        %v5073 = vsel %vm1945, %v5070, %v5072
        %v5074 = vrot.slane %v3863, 4
        %v5075 = vsel %vm1945, %v5072, %v5074
        %v5076 = vrot.slane %v3865, 4
        %v5077 = vsel %vm1945, %v5074, %v5076
        %v5078 = vrot.slane %v4023, 4
        %v5079 = vsel %vm1945, %v5076, %v5078
        %v5080 = vrot.slane %v4016, 4
        %v5081 = vrot.slane %v3868, 4
        %v5082 = vsel %vm1945, %v5080, %v5081
        %v5083 = vrot.slane %v3870, 4
        %v5084 = vsel %vm1945, %v5081, %v5083
        %v5085 = vrot.slane %v3872, 4
        %v5086 = vsel %vm1945, %v5083, %v5085
        %v5087 = vrot.slane %v3874, 4
        %v5088 = vsel %vm1945, %v5085, %v5087
        %v5089 = vrot.slane %v3876, 4
        %v5090 = vsel %vm1945, %v5087, %v5089
        %v5091 = vrot.slane %v3878, 4
        %v5092 = vsel %vm1945, %v5089, %v5091
        %v5093 = vrot.slane %v3880, 4
        %v5094 = vsel %vm1945, %v5091, %v5093
        %v5095 = vrot.slane %v4024, 4
        %v5096 = vsel %vm1945, %v5093, %v5095
        %v5097 = vrot.slane %v4017, 4
        %v5098 = vrot.slane %v3883, 4
        %v5099 = vsel %vm1945, %v5097, %v5098
        %v5100 = vrot.slane %v3885, 4
        %v5101 = vsel %vm1945, %v5098, %v5100
        %v5102 = vrot.slane %v3887, 4
        %v5103 = vsel %vm1945, %v5100, %v5102
        %v5104 = vrot.slane %v3889, 4
        %v5105 = vsel %vm1945, %v5102, %v5104
        %v5106 = vrot.slane %v3891, 4
        %v5107 = vsel %vm1945, %v5104, %v5106
        %v5108 = vrot.slane %v3893, 4
        %v5109 = vsel %vm1945, %v5106, %v5108
        %v5110 = vrot.slane %v3895, 4
        %v5111 = vsel %vm1945, %v5108, %v5110
        %v5112 = vrot.slane %v4025, 4
        %v5113 = vsel %vm1945, %v5110, %v5112
        %v5114 = vrot.slane %v4018, 4
        %v5115 = vrot.slane %v3898, 4
        %v5116 = vsel %vm1945, %v5114, %v5115
        %v5117 = vrot.slane %v3900, 4
        %v5118 = vsel %vm1945, %v5115, %v5117
        %v5119 = vrot.slane %v3902, 4
        %v5120 = vsel %vm1945, %v5117, %v5119
        %v5121 = vrot.slane %v3904, 4
        %v5122 = vsel %vm1945, %v5119, %v5121
        %v5123 = vrot.slane %v3906, 4
        %v5124 = vsel %vm1945, %v5121, %v5123
        %v5125 = vrot.slane %v3908, 4
        %v5126 = vsel %vm1945, %v5123, %v5125
        %v5127 = vrot.slane %v3910, 4
        %v5128 = vsel %vm1945, %v5125, %v5127
        %v5129 = vrot.slane %v4026, 4
        %v5130 = vsel %vm1945, %v5127, %v5129
        %v5131 = vrot.slane %v4019, 4
        %v5132 = vrot.slane %v3913, 4
        %v5133 = vsel %vm1945, %v5131, %v5132
        %v5134 = vrot.slane %v3915, 4
        %v5135 = vsel %vm1945, %v5132, %v5134
        %v5136 = vrot.slane %v3917, 4
        %v5137 = vsel %vm1945, %v5134, %v5136
        %v5138 = vrot.slane %v3919, 4
        %v5139 = vsel %vm1945, %v5136, %v5138
        %v5140 = vrot.slane %v3921, 4
        %v5141 = vsel %vm1945, %v5138, %v5140
        %v5142 = vrot.slane %v3923, 4
        %v5143 = vsel %vm1945, %v5140, %v5142
        %v5144 = vrot.slane %v3925, 4
        %v5145 = vsel %vm1945, %v5142, %v5144
        %v5146 = vrot.slane %v4027, 4
        %v5147 = vsel %vm1945, %v5144, %v5146
        %v5148 = vrot.slane %v4020, 4
        %v5149 = vrot.slane %v3928, 4
        %v5150 = vsel %vm1945, %v5148, %v5149
        %v5151 = vrot.slane %v3930, 4
        %v5152 = vsel %vm1945, %v5149, %v5151
        %v5153 = vrot.slane %v3932, 4
        %v5154 = vsel %vm1945, %v5151, %v5153
        %v5155 = vrot.slane %v3934, 4
        %v5156 = vsel %vm1945, %v5153, %v5155
        %v5157 = vrot.slane %v3936, 4
        %v5158 = vsel %vm1945, %v5155, %v5157
        %v5159 = vrot.slane %v3938, 4
        %v5160 = vsel %vm1945, %v5157, %v5159
        %v5161 = vrot.slane %v3940, 4
        %v5162 = vsel %vm1945, %v5159, %v5161
        %v5163 = vrot.slane %v4028, 4
        %v5164 = vsel %vm1945, %v5161, %v5163
        %5165 = vrot.lane.b32.xlu0 %v5031, 64
        %v5166 = vpop.permute.xlu0 %5165
        %5167 = vrot.lane.b32.xlu0 %v5033, 64
        %v5168 = vpop.permute.xlu0 %5167
        %5169 = vrot.lane.b32.xlu0 %v5035, 64
        %v5170 = vpop.permute.xlu0 %5169
        %5171 = vrot.lane.b32.xlu0 %v5037, 64
        %v5172 = vpop.permute.xlu0 %5171
        %5173 = vrot.lane.b32.xlu0 %v5039, 64
        %v5174 = vpop.permute.xlu0 %5173
        %5175 = vrot.lane.b32.xlu0 %v5041, 64
        %v5176 = vpop.permute.xlu0 %5175
        %5177 = vrot.lane.b32.xlu0 %v5043, 64
        %v5178 = vpop.permute.xlu0 %5177
        %5179 = vrot.lane.b32.xlu0 %v5045, 64
        %v5180 = vpop.permute.xlu0 %5179
        %5181 = vrot.lane.b32.xlu0 %v5048, 64
        %v5182 = vpop.permute.xlu0 %5181
        %5183 = vrot.lane.b32.xlu0 %v5050, 64
        %v5184 = vpop.permute.xlu0 %5183
        %5185 = vrot.lane.b32.xlu0 %v5052, 64
        %v5186 = vpop.permute.xlu0 %5185
        %5187 = vrot.lane.b32.xlu0 %v5054, 64
        %v5188 = vpop.permute.xlu0 %5187
        %5189 = vrot.lane.b32.xlu0 %v5056, 64
        %v5190 = vpop.permute.xlu0 %5189
        %5191 = vrot.lane.b32.xlu0 %v5058, 64
        %v5192 = vpop.permute.xlu0 %5191
        %5193 = vrot.lane.b32.xlu0 %v5060, 64
        %v5194 = vpop.permute.xlu0 %5193
        %5195 = vrot.lane.b32.xlu0 %v5062, 64
        %v5196 = vpop.permute.xlu0 %5195
        %5197 = vrot.lane.b32.xlu0 %v5065, 64
        %v5198 = vpop.permute.xlu0 %5197
        %5199 = vrot.lane.b32.xlu0 %v5067, 64
        %v5200 = vpop.permute.xlu0 %5199
        %5201 = vrot.lane.b32.xlu0 %v5069, 64
        %v5202 = vpop.permute.xlu0 %5201
        %5203 = vrot.lane.b32.xlu0 %v5071, 64
        %v5204 = vpop.permute.xlu0 %5203
        %5205 = vrot.lane.b32.xlu0 %v5073, 64
        %v5206 = vpop.permute.xlu0 %5205
        %5207 = vrot.lane.b32.xlu0 %v5075, 64
        %v5208 = vpop.permute.xlu0 %5207
        %5209 = vrot.lane.b32.xlu0 %v5077, 64
        %v5210 = vpop.permute.xlu0 %5209
        %5211 = vrot.lane.b32.xlu0 %v5079, 64
        %v5212 = vpop.permute.xlu0 %5211
        %5213 = vrot.lane.b32.xlu0 %v5082, 64
        %v5214 = vpop.permute.xlu0 %5213
        %5215 = vrot.lane.b32.xlu0 %v5084, 64
        %v5216 = vpop.permute.xlu0 %5215
        %5217 = vrot.lane.b32.xlu0 %v5086, 64
        %v5218 = vpop.permute.xlu0 %5217
        %5219 = vrot.lane.b32.xlu0 %v5088, 64
        %v5220 = vpop.permute.xlu0 %5219
        %5221 = vrot.lane.b32.xlu0 %v5090, 64
        %v5222 = vpop.permute.xlu0 %5221
        %5223 = vrot.lane.b32.xlu0 %v5092, 64
        %v5224 = vpop.permute.xlu0 %5223
        %5225 = vrot.lane.b32.xlu0 %v5094, 64
        %v5226 = vpop.permute.xlu0 %5225
        %5227 = vrot.lane.b32.xlu0 %v5096, 64
        %v5228 = vpop.permute.xlu0 %5227
        %5229 = vrot.lane.b32.xlu0 %v5099, 64
        %v5230 = vpop.permute.xlu0 %5229
        %5231 = vrot.lane.b32.xlu0 %v5101, 64
        %v5232 = vpop.permute.xlu0 %5231
        %5233 = vrot.lane.b32.xlu0 %v5103, 64
        %v5234 = vpop.permute.xlu0 %5233
        %5235 = vrot.lane.b32.xlu0 %v5105, 64
        %v5236 = vpop.permute.xlu0 %5235
        %5237 = vrot.lane.b32.xlu0 %v5107, 64
        %v5238 = vpop.permute.xlu0 %5237
        %5239 = vrot.lane.b32.xlu0 %v5109, 64
        %v5240 = vpop.permute.xlu0 %5239
        %5241 = vrot.lane.b32.xlu0 %v5111, 64
        %v5242 = vpop.permute.xlu0 %5241
        %5243 = vrot.lane.b32.xlu0 %v5113, 64
        %v5244 = vpop.permute.xlu0 %5243
        %5245 = vrot.lane.b32.xlu0 %v5116, 64
        %v5246 = vpop.permute.xlu0 %5245
        %5247 = vrot.lane.b32.xlu0 %v5118, 64
        %v5248 = vpop.permute.xlu0 %5247
        %5249 = vrot.lane.b32.xlu0 %v5120, 64
        %v5250 = vpop.permute.xlu0 %5249
        %5251 = vrot.lane.b32.xlu0 %v5122, 64
        %v5252 = vpop.permute.xlu0 %5251
        %5253 = vrot.lane.b32.xlu0 %v5124, 64
        %v5254 = vpop.permute.xlu0 %5253
        %5255 = vrot.lane.b32.xlu0 %v5126, 64
        %v5256 = vpop.permute.xlu0 %5255
        %5257 = vrot.lane.b32.xlu0 %v5128, 64
        %v5258 = vpop.permute.xlu0 %5257
        %5259 = vrot.lane.b32.xlu0 %v5130, 64
        %v5260 = vpop.permute.xlu0 %5259
        %5261 = vrot.lane.b32.xlu0 %v5133, 64
        %v5262 = vpop.permute.xlu0 %5261
        %5263 = vrot.lane.b32.xlu0 %v5135, 64
        %v5264 = vpop.permute.xlu0 %5263
        %5265 = vrot.lane.b32.xlu0 %v5137, 64
        %v5266 = vpop.permute.xlu0 %5265
        %5267 = vrot.lane.b32.xlu0 %v5139, 64
        %v5268 = vpop.permute.xlu0 %5267
        %5269 = vrot.lane.b32.xlu0 %v5141, 64
        %v5270 = vpop.permute.xlu0 %5269
        %5271 = vrot.lane.b32.xlu0 %v5143, 64
        %v5272 = vpop.permute.xlu0 %5271
        %5273 = vrot.lane.b32.xlu0 %v5145, 64
        %v5274 = vpop.permute.xlu0 %5273
        %5275 = vrot.lane.b32.xlu0 %v5147, 64
        %v5276 = vpop.permute.xlu0 %5275
        %5277 = vrot.lane.b32.xlu0 %v5150, 64
        %v5278 = vpop.permute.xlu0 %5277
        %5279 = vrot.lane.b32.xlu0 %v5152, 64
        %v5280 = vpop.permute.xlu0 %5279
        %5281 = vrot.lane.b32.xlu0 %v5154, 64
        %v5282 = vpop.permute.xlu0 %5281
        %5283 = vrot.lane.b32.xlu0 %v5156, 64
        %v5284 = vpop.permute.xlu0 %5283
        %5285 = vrot.lane.b32.xlu0 %v5158, 64
        %v5286 = vpop.permute.xlu0 %5285
        %5287 = vrot.lane.b32.xlu0 %v5160, 64
        %v5288 = vpop.permute.xlu0 %5287
        %5289 = vrot.lane.b32.xlu0 %v5162, 64
        %v5290 = vpop.permute.xlu0 %5289
        %5291 = vrot.lane.b32.xlu0 %v5164, 64
        %v5292 = vpop.permute.xlu0 %5291
        %v5357 = vrot.slane %v4013, 5
        %v5358 = vrot.slane %v3823, 5
        %v5359 = vsel %vm733, %v5357, %v5358
        %v5360 = vrot.slane %v3825, 5
        %v5361 = vsel %vm733, %v5358, %v5360
        %v5362 = vrot.slane %v3827, 5
        %v5363 = vsel %vm733, %v5360, %v5362
        %v5364 = vrot.slane %v3829, 5
        %v5365 = vsel %vm733, %v5362, %v5364
        %v5366 = vrot.slane %v3831, 5
        %v5367 = vsel %vm733, %v5364, %v5366
        %v5368 = vrot.slane %v3833, 5
        %v5369 = vsel %vm733, %v5366, %v5368
        %v5370 = vrot.slane %v3835, 5
        %v5371 = vsel %vm733, %v5368, %v5370
        %v5372 = vrot.slane %v4021, 5
        %v5373 = vsel %vm733, %v5370, %v5372
        %v5374 = vrot.slane %v4014, 5
        %v5375 = vrot.slane %v3838, 5
        %v5376 = vsel %vm733, %v5374, %v5375
        %v5377 = vrot.slane %v3840, 5
        %v5378 = vsel %vm733, %v5375, %v5377
        %v5379 = vrot.slane %v3842, 5
        %v5380 = vsel %vm733, %v5377, %v5379
        %v5381 = vrot.slane %v3844, 5
        %v5382 = vsel %vm733, %v5379, %v5381
        %v5383 = vrot.slane %v3846, 5
        %v5384 = vsel %vm733, %v5381, %v5383
        %v5385 = vrot.slane %v3848, 5
        %v5386 = vsel %vm733, %v5383, %v5385
        %v5387 = vrot.slane %v3850, 5
        %v5388 = vsel %vm733, %v5385, %v5387
        %v5389 = vrot.slane %v4022, 5
        %v5390 = vsel %vm733, %v5387, %v5389
        %v5391 = vrot.slane %v4015, 5
        %v5392 = vrot.slane %v3853, 5
        %v5393 = vsel %vm733, %v5391, %v5392
        %v5394 = vrot.slane %v3855, 5
        %v5395 = vsel %vm733, %v5392, %v5394
        %v5396 = vrot.slane %v3857, 5
        %v5397 = vsel %vm733, %v5394, %v5396
        %v5398 = vrot.slane %v3859, 5
        %v5399 = vsel %vm733, %v5396, %v5398
        %v5400 = vrot.slane %v3861, 5
        %v5401 = vsel %vm733, %v5398, %v5400
        %v5402 = vrot.slane %v3863, 5
        %v5403 = vsel %vm733, %v5400, %v5402
        %v5404 = vrot.slane %v3865, 5
        %v5405 = vsel %vm733, %v5402, %v5404
        %v5406 = vrot.slane %v4023, 5
        %v5407 = vsel %vm733, %v5404, %v5406
        %v5408 = vrot.slane %v4016, 5
        %v5409 = vrot.slane %v3868, 5
        %v5410 = vsel %vm733, %v5408, %v5409
        %v5411 = vrot.slane %v3870, 5
        %v5412 = vsel %vm733, %v5409, %v5411
        %v5413 = vrot.slane %v3872, 5
        %v5414 = vsel %vm733, %v5411, %v5413
        %v5415 = vrot.slane %v3874, 5
        %v5416 = vsel %vm733, %v5413, %v5415
        %v5417 = vrot.slane %v3876, 5
        %v5418 = vsel %vm733, %v5415, %v5417
        %v5419 = vrot.slane %v3878, 5
        %v5420 = vsel %vm733, %v5417, %v5419
        %v5421 = vrot.slane %v3880, 5
        %v5422 = vsel %vm733, %v5419, %v5421
        %v5423 = vrot.slane %v4024, 5
        %v5424 = vsel %vm733, %v5421, %v5423
        %v5425 = vrot.slane %v4017, 5
        %v5426 = vrot.slane %v3883, 5
        %v5427 = vsel %vm733, %v5425, %v5426
        %v5428 = vrot.slane %v3885, 5
        %v5429 = vsel %vm733, %v5426, %v5428
        %v5430 = vrot.slane %v3887, 5
        %v5431 = vsel %vm733, %v5428, %v5430
        %v5432 = vrot.slane %v3889, 5
        %v5433 = vsel %vm733, %v5430, %v5432
        %v5434 = vrot.slane %v3891, 5
        %v5435 = vsel %vm733, %v5432, %v5434
        %v5436 = vrot.slane %v3893, 5
        %v5437 = vsel %vm733, %v5434, %v5436
        %v5438 = vrot.slane %v3895, 5
        %v5439 = vsel %vm733, %v5436, %v5438
        %v5440 = vrot.slane %v4025, 5
        %v5441 = vsel %vm733, %v5438, %v5440
        %v5442 = vrot.slane %v4018, 5
        %v5443 = vrot.slane %v3898, 5
        %v5444 = vsel %vm733, %v5442, %v5443
        %v5445 = vrot.slane %v3900, 5
        %v5446 = vsel %vm733, %v5443, %v5445
        %v5447 = vrot.slane %v3902, 5
        %v5448 = vsel %vm733, %v5445, %v5447
        %v5449 = vrot.slane %v3904, 5
        %v5450 = vsel %vm733, %v5447, %v5449
        %v5451 = vrot.slane %v3906, 5
        %v5452 = vsel %vm733, %v5449, %v5451
        %v5453 = vrot.slane %v3908, 5
        %v5454 = vsel %vm733, %v5451, %v5453
        %v5455 = vrot.slane %v3910, 5
        %v5456 = vsel %vm733, %v5453, %v5455
        %v5457 = vrot.slane %v4026, 5
        %v5458 = vsel %vm733, %v5455, %v5457
        %v5459 = vrot.slane %v4019, 5
        %v5460 = vrot.slane %v3913, 5
        %v5461 = vsel %vm733, %v5459, %v5460
        %v5462 = vrot.slane %v3915, 5
        %v5463 = vsel %vm733, %v5460, %v5462
        %v5464 = vrot.slane %v3917, 5
        %v5465 = vsel %vm733, %v5462, %v5464
        %v5466 = vrot.slane %v3919, 5
        %v5467 = vsel %vm733, %v5464, %v5466
        %v5468 = vrot.slane %v3921, 5
        %v5469 = vsel %vm733, %v5466, %v5468
        %v5470 = vrot.slane %v3923, 5
        %v5471 = vsel %vm733, %v5468, %v5470
        %v5472 = vrot.slane %v3925, 5
        %v5473 = vsel %vm733, %v5470, %v5472
        %v5474 = vrot.slane %v4027, 5
        %v5475 = vsel %vm733, %v5472, %v5474
        %v5476 = vrot.slane %v4020, 5
        %v5477 = vrot.slane %v3928, 5
        %v5478 = vsel %vm733, %v5476, %v5477
        %v5479 = vrot.slane %v3930, 5
        %v5480 = vsel %vm733, %v5477, %v5479
        %v5481 = vrot.slane %v3932, 5
        %v5482 = vsel %vm733, %v5479, %v5481
        %v5483 = vrot.slane %v3934, 5
        %v5484 = vsel %vm733, %v5481, %v5483
        %v5485 = vrot.slane %v3936, 5
        %v5486 = vsel %vm733, %v5483, %v5485
        %v5487 = vrot.slane %v3938, 5
        %v5488 = vsel %vm733, %v5485, %v5487
        %v5489 = vrot.slane %v3940, 5
        %v5490 = vsel %vm733, %v5487, %v5489
        %v5491 = vrot.slane %v4028, 5
        %v5492 = vsel %vm733, %v5489, %v5491
        %5493 = vrot.lane.b32.xlu0 %v5359, 80
        %v5494 = vpop.permute.xlu0 %5493
        %5495 = vrot.lane.b32.xlu0 %v5361, 80
        %v5496 = vpop.permute.xlu0 %5495
        %5497 = vrot.lane.b32.xlu0 %v5363, 80
        %v5498 = vpop.permute.xlu0 %5497
        %5499 = vrot.lane.b32.xlu0 %v5365, 80
        %v5500 = vpop.permute.xlu0 %5499
        %5501 = vrot.lane.b32.xlu0 %v5367, 80
        %v5502 = vpop.permute.xlu0 %5501
        %5503 = vrot.lane.b32.xlu0 %v5369, 80
        %v5504 = vpop.permute.xlu0 %5503
        %5505 = vrot.lane.b32.xlu0 %v5371, 80
        %v5506 = vpop.permute.xlu0 %5505
        %5507 = vrot.lane.b32.xlu0 %v5373, 80
        %v5508 = vpop.permute.xlu0 %5507
        %5509 = vrot.lane.b32.xlu0 %v5376, 80
        %v5510 = vpop.permute.xlu0 %5509
        %5511 = vrot.lane.b32.xlu0 %v5378, 80
        %v5512 = vpop.permute.xlu0 %5511
        %5513 = vrot.lane.b32.xlu0 %v5380, 80
        %v5514 = vpop.permute.xlu0 %5513
        %5515 = vrot.lane.b32.xlu0 %v5382, 80
        %v5516 = vpop.permute.xlu0 %5515
        %5517 = vrot.lane.b32.xlu0 %v5384, 80
        %v5518 = vpop.permute.xlu0 %5517
        %5519 = vrot.lane.b32.xlu0 %v5386, 80
        %v5520 = vpop.permute.xlu0 %5519
        %5521 = vrot.lane.b32.xlu0 %v5388, 80
        %v5522 = vpop.permute.xlu0 %5521
        %5523 = vrot.lane.b32.xlu0 %v5390, 80
        %v5524 = vpop.permute.xlu0 %5523
        %5525 = vrot.lane.b32.xlu0 %v5393, 80
        %v5526 = vpop.permute.xlu0 %5525
        %5527 = vrot.lane.b32.xlu0 %v5395, 80
        %v5528 = vpop.permute.xlu0 %5527
        %5529 = vrot.lane.b32.xlu0 %v5397, 80
        %v5530 = vpop.permute.xlu0 %5529
        %5531 = vrot.lane.b32.xlu0 %v5399, 80
        %v5532 = vpop.permute.xlu0 %5531
        %5533 = vrot.lane.b32.xlu0 %v5401, 80
        %v5534 = vpop.permute.xlu0 %5533
        %5535 = vrot.lane.b32.xlu0 %v5403, 80
        %v5536 = vpop.permute.xlu0 %5535
        %5537 = vrot.lane.b32.xlu0 %v5405, 80
        %v5538 = vpop.permute.xlu0 %5537
        %5539 = vrot.lane.b32.xlu0 %v5407, 80
        %v5540 = vpop.permute.xlu0 %5539
        %5541 = vrot.lane.b32.xlu0 %v5410, 80
        %v5542 = vpop.permute.xlu0 %5541
        %5543 = vrot.lane.b32.xlu0 %v5412, 80
        %v5544 = vpop.permute.xlu0 %5543
        %5545 = vrot.lane.b32.xlu0 %v5414, 80
        %v5546 = vpop.permute.xlu0 %5545
        %5547 = vrot.lane.b32.xlu0 %v5416, 80
        %v5548 = vpop.permute.xlu0 %5547
        %5549 = vrot.lane.b32.xlu0 %v5418, 80
        %v5550 = vpop.permute.xlu0 %5549
        %5551 = vrot.lane.b32.xlu0 %v5420, 80
        %v5552 = vpop.permute.xlu0 %5551
        %5553 = vrot.lane.b32.xlu0 %v5422, 80
        %v5554 = vpop.permute.xlu0 %5553
        %5555 = vrot.lane.b32.xlu0 %v5424, 80
        %v5556 = vpop.permute.xlu0 %5555
        %5557 = vrot.lane.b32.xlu0 %v5427, 80
        %v5558 = vpop.permute.xlu0 %5557
        %5559 = vrot.lane.b32.xlu0 %v5429, 80
        %v5560 = vpop.permute.xlu0 %5559
        %5561 = vrot.lane.b32.xlu0 %v5431, 80
        %v5562 = vpop.permute.xlu0 %5561
        %5563 = vrot.lane.b32.xlu0 %v5433, 80
        %v5564 = vpop.permute.xlu0 %5563
        %5565 = vrot.lane.b32.xlu0 %v5435, 80
        %v5566 = vpop.permute.xlu0 %5565
        %5567 = vrot.lane.b32.xlu0 %v5437, 80
        %v5568 = vpop.permute.xlu0 %5567
        %5569 = vrot.lane.b32.xlu0 %v5439, 80
        %v5570 = vpop.permute.xlu0 %5569
        %5571 = vrot.lane.b32.xlu0 %v5441, 80
        %v5572 = vpop.permute.xlu0 %5571
        %5573 = vrot.lane.b32.xlu0 %v5444, 80
        %v5574 = vpop.permute.xlu0 %5573
        %5575 = vrot.lane.b32.xlu0 %v5446, 80
        %v5576 = vpop.permute.xlu0 %5575
        %5577 = vrot.lane.b32.xlu0 %v5448, 80
        %v5578 = vpop.permute.xlu0 %5577
        %5579 = vrot.lane.b32.xlu0 %v5450, 80
        %v5580 = vpop.permute.xlu0 %5579
        %5581 = vrot.lane.b32.xlu0 %v5452, 80
        %v5582 = vpop.permute.xlu0 %5581
        %5583 = vrot.lane.b32.xlu0 %v5454, 80
        %v5584 = vpop.permute.xlu0 %5583
        %5585 = vrot.lane.b32.xlu0 %v5456, 80
        %v5586 = vpop.permute.xlu0 %5585
        %5587 = vrot.lane.b32.xlu0 %v5458, 80
        %v5588 = vpop.permute.xlu0 %5587
        %5589 = vrot.lane.b32.xlu0 %v5461, 80
        %v5590 = vpop.permute.xlu0 %5589
        %5591 = vrot.lane.b32.xlu0 %v5463, 80
        %v5592 = vpop.permute.xlu0 %5591
        %5593 = vrot.lane.b32.xlu0 %v5465, 80
        %v5594 = vpop.permute.xlu0 %5593
        %5595 = vrot.lane.b32.xlu0 %v5467, 80
        %v5596 = vpop.permute.xlu0 %5595
        %5597 = vrot.lane.b32.xlu0 %v5469, 80
        %v5598 = vpop.permute.xlu0 %5597
        %5599 = vrot.lane.b32.xlu0 %v5471, 80
        %v5600 = vpop.permute.xlu0 %5599
        %5601 = vrot.lane.b32.xlu0 %v5473, 80
        %v5602 = vpop.permute.xlu0 %5601
        %5603 = vrot.lane.b32.xlu0 %v5475, 80
        %v5604 = vpop.permute.xlu0 %5603
        %5605 = vrot.lane.b32.xlu0 %v5478, 80
        %v5606 = vpop.permute.xlu0 %5605
        %5607 = vrot.lane.b32.xlu0 %v5480, 80
        %v5608 = vpop.permute.xlu0 %5607
        %5609 = vrot.lane.b32.xlu0 %v5482, 80
        %v5610 = vpop.permute.xlu0 %5609
        %5611 = vrot.lane.b32.xlu0 %v5484, 80
        %v5612 = vpop.permute.xlu0 %5611
        %5613 = vrot.lane.b32.xlu0 %v5486, 80
        %v5614 = vpop.permute.xlu0 %5613
        %5615 = vrot.lane.b32.xlu0 %v5488, 80
        %v5616 = vpop.permute.xlu0 %5615
        %5617 = vrot.lane.b32.xlu0 %v5490, 80
        %v5618 = vpop.permute.xlu0 %5617
        %5619 = vrot.lane.b32.xlu0 %v5492, 80
        %v5620 = vpop.permute.xlu0 %5619
        %v5685 = vrot.slane %v4013, 6
        %v5686 = vrot.slane %v3823, 6
        %v5687 = vsel %vm2602, %v5685, %v5686
        %v5688 = vrot.slane %v3825, 6
        %v5689 = vsel %vm2602, %v5686, %v5688
        %v5690 = vrot.slane %v3827, 6
        %v5691 = vsel %vm2602, %v5688, %v5690
        %v5692 = vrot.slane %v3829, 6
        %v5693 = vsel %vm2602, %v5690, %v5692
        %v5694 = vrot.slane %v3831, 6
        %v5695 = vsel %vm2602, %v5692, %v5694
        %v5696 = vrot.slane %v3833, 6
        %v5697 = vsel %vm2602, %v5694, %v5696
        %v5698 = vrot.slane %v3835, 6
        %v5699 = vsel %vm2602, %v5696, %v5698
        %v5700 = vrot.slane %v4021, 6
        %v5701 = vsel %vm2602, %v5698, %v5700
        %v5702 = vrot.slane %v4014, 6
        %v5703 = vrot.slane %v3838, 6
        %v5704 = vsel %vm2602, %v5702, %v5703
        %v5705 = vrot.slane %v3840, 6
        %v5706 = vsel %vm2602, %v5703, %v5705
        %v5707 = vrot.slane %v3842, 6
        %v5708 = vsel %vm2602, %v5705, %v5707
        %v5709 = vrot.slane %v3844, 6
        %v5710 = vsel %vm2602, %v5707, %v5709
        %v5711 = vrot.slane %v3846, 6
        %v5712 = vsel %vm2602, %v5709, %v5711
        %v5713 = vrot.slane %v3848, 6
        %v5714 = vsel %vm2602, %v5711, %v5713
        %v5715 = vrot.slane %v3850, 6
        %v5716 = vsel %vm2602, %v5713, %v5715
        %v5717 = vrot.slane %v4022, 6
        %v5718 = vsel %vm2602, %v5715, %v5717
        %v5719 = vrot.slane %v4015, 6
        %v5720 = vrot.slane %v3853, 6
        %v5721 = vsel %vm2602, %v5719, %v5720
        %v5722 = vrot.slane %v3855, 6
        %v5723 = vsel %vm2602, %v5720, %v5722
        %v5724 = vrot.slane %v3857, 6
        %v5725 = vsel %vm2602, %v5722, %v5724
        %v5726 = vrot.slane %v3859, 6
        %v5727 = vsel %vm2602, %v5724, %v5726
        %v5728 = vrot.slane %v3861, 6
        %v5729 = vsel %vm2602, %v5726, %v5728
        %v5730 = vrot.slane %v3863, 6
        %v5731 = vsel %vm2602, %v5728, %v5730
        %v5732 = vrot.slane %v3865, 6
        %v5733 = vsel %vm2602, %v5730, %v5732
        %v5734 = vrot.slane %v4023, 6
        %v5735 = vsel %vm2602, %v5732, %v5734
        %v5736 = vrot.slane %v4016, 6
        %v5737 = vrot.slane %v3868, 6
        %v5738 = vsel %vm2602, %v5736, %v5737
        %v5739 = vrot.slane %v3870, 6
        %v5740 = vsel %vm2602, %v5737, %v5739
        %v5741 = vrot.slane %v3872, 6
        %v5742 = vsel %vm2602, %v5739, %v5741
        %v5743 = vrot.slane %v3874, 6
        %v5744 = vsel %vm2602, %v5741, %v5743
        %v5745 = vrot.slane %v3876, 6
        %v5746 = vsel %vm2602, %v5743, %v5745
        %v5747 = vrot.slane %v3878, 6
        %v5748 = vsel %vm2602, %v5745, %v5747
        %v5749 = vrot.slane %v3880, 6
        %v5750 = vsel %vm2602, %v5747, %v5749
        %v5751 = vrot.slane %v4024, 6
        %v5752 = vsel %vm2602, %v5749, %v5751
        %v5753 = vrot.slane %v4017, 6
        %v5754 = vrot.slane %v3883, 6
        %v5755 = vsel %vm2602, %v5753, %v5754
        %v5756 = vrot.slane %v3885, 6
        %v5757 = vsel %vm2602, %v5754, %v5756
        %v5758 = vrot.slane %v3887, 6
        %v5759 = vsel %vm2602, %v5756, %v5758
        %v5760 = vrot.slane %v3889, 6
        %v5761 = vsel %vm2602, %v5758, %v5760
        %v5762 = vrot.slane %v3891, 6
        %v5763 = vsel %vm2602, %v5760, %v5762
        %v5764 = vrot.slane %v3893, 6
        %v5765 = vsel %vm2602, %v5762, %v5764
        %v5766 = vrot.slane %v3895, 6
        %v5767 = vsel %vm2602, %v5764, %v5766
        %v5768 = vrot.slane %v4025, 6
        %v5769 = vsel %vm2602, %v5766, %v5768
        %v5770 = vrot.slane %v4018, 6
        %v5771 = vrot.slane %v3898, 6
        %v5772 = vsel %vm2602, %v5770, %v5771
        %v5773 = vrot.slane %v3900, 6
        %v5774 = vsel %vm2602, %v5771, %v5773
        %v5775 = vrot.slane %v3902, 6
        %v5776 = vsel %vm2602, %v5773, %v5775
        %v5777 = vrot.slane %v3904, 6
        %v5778 = vsel %vm2602, %v5775, %v5777
        %v5779 = vrot.slane %v3906, 6
        %v5780 = vsel %vm2602, %v5777, %v5779
        %v5781 = vrot.slane %v3908, 6
        %v5782 = vsel %vm2602, %v5779, %v5781
        %v5783 = vrot.slane %v3910, 6
        %v5784 = vsel %vm2602, %v5781, %v5783
        %v5785 = vrot.slane %v4026, 6
        %v5786 = vsel %vm2602, %v5783, %v5785
        %v5787 = vrot.slane %v4019, 6
        %v5788 = vrot.slane %v3913, 6
        %v5789 = vsel %vm2602, %v5787, %v5788
        %v5790 = vrot.slane %v3915, 6
        %v5791 = vsel %vm2602, %v5788, %v5790
        %v5792 = vrot.slane %v3917, 6
        %v5793 = vsel %vm2602, %v5790, %v5792
        %v5794 = vrot.slane %v3919, 6
        %v5795 = vsel %vm2602, %v5792, %v5794
        %v5796 = vrot.slane %v3921, 6
        %v5797 = vsel %vm2602, %v5794, %v5796
        %v5798 = vrot.slane %v3923, 6
        %v5799 = vsel %vm2602, %v5796, %v5798
        %v5800 = vrot.slane %v3925, 6
        %v5801 = vsel %vm2602, %v5798, %v5800
        %v5802 = vrot.slane %v4027, 6
        %v5803 = vsel %vm2602, %v5800, %v5802
        %v5804 = vrot.slane %v4020, 6
        %v5805 = vrot.slane %v3928, 6
        %v5806 = vsel %vm2602, %v5804, %v5805
        %v5807 = vrot.slane %v3930, 6
        %v5808 = vsel %vm2602, %v5805, %v5807
        %v5809 = vrot.slane %v3932, 6
        %v5810 = vsel %vm2602, %v5807, %v5809
        %v5811 = vrot.slane %v3934, 6
        %v5812 = vsel %vm2602, %v5809, %v5811
        %v5813 = vrot.slane %v3936, 6
        %v5814 = vsel %vm2602, %v5811, %v5813
        %v5815 = vrot.slane %v3938, 6
        %v5816 = vsel %vm2602, %v5813, %v5815
        %v5817 = vrot.slane %v3940, 6
        %v5818 = vsel %vm2602, %v5815, %v5817
        %v5819 = vrot.slane %v4028, 6
        %v5820 = vsel %vm2602, %v5817, %v5819
        %5821 = vrot.lane.b32.xlu0 %v5687, 96
        %v5822 = vpop.permute.xlu0 %5821
        %5823 = vrot.lane.b32.xlu0 %v5689, 96
        %v5824 = vpop.permute.xlu0 %5823
        %5825 = vrot.lane.b32.xlu0 %v5691, 96
        %v5826 = vpop.permute.xlu0 %5825
        %5827 = vrot.lane.b32.xlu0 %v5693, 96
        %v5828 = vpop.permute.xlu0 %5827
        %5829 = vrot.lane.b32.xlu0 %v5695, 96
        %v5830 = vpop.permute.xlu0 %5829
        %5831 = vrot.lane.b32.xlu0 %v5697, 96
        %v5832 = vpop.permute.xlu0 %5831
        %5833 = vrot.lane.b32.xlu0 %v5699, 96
        %v5834 = vpop.permute.xlu0 %5833
        %5835 = vrot.lane.b32.xlu0 %v5701, 96
        %v5836 = vpop.permute.xlu0 %5835
        %5837 = vrot.lane.b32.xlu0 %v5704, 96
        %v5838 = vpop.permute.xlu0 %5837
        %5839 = vrot.lane.b32.xlu0 %v5706, 96
        %v5840 = vpop.permute.xlu0 %5839
        %5841 = vrot.lane.b32.xlu0 %v5708, 96
        %v5842 = vpop.permute.xlu0 %5841
        %5843 = vrot.lane.b32.xlu0 %v5710, 96
        %v5844 = vpop.permute.xlu0 %5843
        %5845 = vrot.lane.b32.xlu0 %v5712, 96
        %v5846 = vpop.permute.xlu0 %5845
        %5847 = vrot.lane.b32.xlu0 %v5714, 96
        %v5848 = vpop.permute.xlu0 %5847
        %5849 = vrot.lane.b32.xlu0 %v5716, 96
        %v5850 = vpop.permute.xlu0 %5849
        %5851 = vrot.lane.b32.xlu0 %v5718, 96
        %v5852 = vpop.permute.xlu0 %5851
        %5853 = vrot.lane.b32.xlu0 %v5721, 96
        %v5854 = vpop.permute.xlu0 %5853
        %5855 = vrot.lane.b32.xlu0 %v5723, 96
        %v5856 = vpop.permute.xlu0 %5855
        %5857 = vrot.lane.b32.xlu0 %v5725, 96
        %v5858 = vpop.permute.xlu0 %5857
        %5859 = vrot.lane.b32.xlu0 %v5727, 96
        %v5860 = vpop.permute.xlu0 %5859
        %5861 = vrot.lane.b32.xlu0 %v5729, 96
        %v5862 = vpop.permute.xlu0 %5861
        %5863 = vrot.lane.b32.xlu0 %v5731, 96
        %v5864 = vpop.permute.xlu0 %5863
        %5865 = vrot.lane.b32.xlu0 %v5733, 96
        %v5866 = vpop.permute.xlu0 %5865
        %5867 = vrot.lane.b32.xlu0 %v5735, 96
        %v5868 = vpop.permute.xlu0 %5867
        %5869 = vrot.lane.b32.xlu0 %v5738, 96
        %v5870 = vpop.permute.xlu0 %5869
        %5871 = vrot.lane.b32.xlu0 %v5740, 96
        %v5872 = vpop.permute.xlu0 %5871
        %5873 = vrot.lane.b32.xlu0 %v5742, 96
        %v5874 = vpop.permute.xlu0 %5873
        %5875 = vrot.lane.b32.xlu0 %v5744, 96
        %v5876 = vpop.permute.xlu0 %5875
        %5877 = vrot.lane.b32.xlu0 %v5746, 96
        %v5878 = vpop.permute.xlu0 %5877
        %5879 = vrot.lane.b32.xlu0 %v5748, 96
        %v5880 = vpop.permute.xlu0 %5879
        %5881 = vrot.lane.b32.xlu0 %v5750, 96
        %v5882 = vpop.permute.xlu0 %5881
        %5883 = vrot.lane.b32.xlu0 %v5752, 96
        %v5884 = vpop.permute.xlu0 %5883
        %5885 = vrot.lane.b32.xlu0 %v5755, 96
        %v5886 = vpop.permute.xlu0 %5885
        %5887 = vrot.lane.b32.xlu0 %v5757, 96
        %v5888 = vpop.permute.xlu0 %5887
        %5889 = vrot.lane.b32.xlu0 %v5759, 96
        %v5890 = vpop.permute.xlu0 %5889
        %5891 = vrot.lane.b32.xlu0 %v5761, 96
        %v5892 = vpop.permute.xlu0 %5891
        %5893 = vrot.lane.b32.xlu0 %v5763, 96
        %v5894 = vpop.permute.xlu0 %5893
        %5895 = vrot.lane.b32.xlu0 %v5765, 96
        %v5896 = vpop.permute.xlu0 %5895
        %5897 = vrot.lane.b32.xlu0 %v5767, 96
        %v5898 = vpop.permute.xlu0 %5897
        %5899 = vrot.lane.b32.xlu0 %v5769, 96
        %v5900 = vpop.permute.xlu0 %5899
        %5901 = vrot.lane.b32.xlu0 %v5772, 96
        %v5902 = vpop.permute.xlu0 %5901
        %5903 = vrot.lane.b32.xlu0 %v5774, 96
        %v5904 = vpop.permute.xlu0 %5903
        %5905 = vrot.lane.b32.xlu0 %v5776, 96
        %v5906 = vpop.permute.xlu0 %5905
        %5907 = vrot.lane.b32.xlu0 %v5778, 96
        %v5908 = vpop.permute.xlu0 %5907
        %5909 = vrot.lane.b32.xlu0 %v5780, 96
        %v5910 = vpop.permute.xlu0 %5909
        %5911 = vrot.lane.b32.xlu0 %v5782, 96
        %v5912 = vpop.permute.xlu0 %5911
        %5913 = vrot.lane.b32.xlu0 %v5784, 96
        %v5914 = vpop.permute.xlu0 %5913
        %5915 = vrot.lane.b32.xlu0 %v5786, 96
        %v5916 = vpop.permute.xlu0 %5915
        %5917 = vrot.lane.b32.xlu0 %v5789, 96
        %v5918 = vpop.permute.xlu0 %5917
        %5919 = vrot.lane.b32.xlu0 %v5791, 96
        %v5920 = vpop.permute.xlu0 %5919
        %5921 = vrot.lane.b32.xlu0 %v5793, 96
        %v5922 = vpop.permute.xlu0 %5921
        %5923 = vrot.lane.b32.xlu0 %v5795, 96
        %v5924 = vpop.permute.xlu0 %5923
        %5925 = vrot.lane.b32.xlu0 %v5797, 96
        %v5926 = vpop.permute.xlu0 %5925
        %5927 = vrot.lane.b32.xlu0 %v5799, 96
        %v5928 = vpop.permute.xlu0 %5927
        %5929 = vrot.lane.b32.xlu0 %v5801, 96
        %v5930 = vpop.permute.xlu0 %5929
        %5931 = vrot.lane.b32.xlu0 %v5803, 96
        %v5932 = vpop.permute.xlu0 %5931
        %5933 = vrot.lane.b32.xlu0 %v5806, 96
        %v5934 = vpop.permute.xlu0 %5933
        %5935 = vrot.lane.b32.xlu0 %v5808, 96
        %v5936 = vpop.permute.xlu0 %5935
        %5937 = vrot.lane.b32.xlu0 %v5810, 96
        %v5938 = vpop.permute.xlu0 %5937
        %5939 = vrot.lane.b32.xlu0 %v5812, 96
        %v5940 = vpop.permute.xlu0 %5939
        %5941 = vrot.lane.b32.xlu0 %v5814, 96
        %v5942 = vpop.permute.xlu0 %5941
        %5943 = vrot.lane.b32.xlu0 %v5816, 96
        %v5944 = vpop.permute.xlu0 %5943
        %5945 = vrot.lane.b32.xlu0 %v5818, 96
        %v5946 = vpop.permute.xlu0 %5945
        %5947 = vrot.lane.b32.xlu0 %v5820, 96
        %v5948 = vpop.permute.xlu0 %5947
        %vm6013 = vcmask 130048
        %v6014 = vsel %vm6013, %v4013, %v4182
        %v6015 = vsel %vm6013, %v3823, %v4184
        %v6016 = vsel %vm6013, %v3825, %v4186
        %v6017 = vsel %vm6013, %v3827, %v4188
        %v6018 = vsel %vm6013, %v3829, %v4190
        %v6019 = vsel %vm6013, %v3831, %v4192
        %v6020 = vsel %vm6013, %v3833, %v4194
        %v6021 = vsel %vm6013, %v3835, %v4196
        %v6022 = vsel %vm6013, %v4014, %v4198
        %v6023 = vsel %vm6013, %v3838, %v4200
        %v6024 = vsel %vm6013, %v3840, %v4202
        %v6025 = vsel %vm6013, %v3842, %v4204
        %v6026 = vsel %vm6013, %v3844, %v4206
        %v6027 = vsel %vm6013, %v3846, %v4208
        %v6028 = vsel %vm6013, %v3848, %v4210
        %v6029 = vsel %vm6013, %v3850, %v4212
        %v6030 = vsel %vm6013, %v4015, %v4214
        %v6031 = vsel %vm6013, %v3853, %v4216
        %v6032 = vsel %vm6013, %v3855, %v4218
        %v6033 = vsel %vm6013, %v3857, %v4220
        %v6034 = vsel %vm6013, %v3859, %v4222
        %v6035 = vsel %vm6013, %v3861, %v4224
        %v6036 = vsel %vm6013, %v3863, %v4226
        %v6037 = vsel %vm6013, %v3865, %v4228
        %v6038 = vsel %vm6013, %v4016, %v4230
        %v6039 = vsel %vm6013, %v3868, %v4232
        %v6040 = vsel %vm6013, %v3870, %v4234
        %v6041 = vsel %vm6013, %v3872, %v4236
        %v6042 = vsel %vm6013, %v3874, %v4238
        %v6043 = vsel %vm6013, %v3876, %v4240
        %v6044 = vsel %vm6013, %v3878, %v4242
        %v6045 = vsel %vm6013, %v3880, %v4244
        %v6046 = vsel %vm6013, %v4017, %v4246
        %v6047 = vsel %vm6013, %v3883, %v4248
        %v6048 = vsel %vm6013, %v3885, %v4250
        %v6049 = vsel %vm6013, %v3887, %v4252
        %v6050 = vsel %vm6013, %v3889, %v4254
        %v6051 = vsel %vm6013, %v3891, %v4256
        %v6052 = vsel %vm6013, %v3893, %v4258
        %v6053 = vsel %vm6013, %v3895, %v4260
        %v6054 = vsel %vm6013, %v4018, %v4262
        %v6055 = vsel %vm6013, %v3898, %v4264
        %v6056 = vsel %vm6013, %v3900, %v4266
        %v6057 = vsel %vm6013, %v3902, %v4268
        %v6058 = vsel %vm6013, %v3904, %v4270
        %v6059 = vsel %vm6013, %v3906, %v4272
        %v6060 = vsel %vm6013, %v3908, %v4274
        %v6061 = vsel %vm6013, %v3910, %v4276
        %v6062 = vsel %vm6013, %v4019, %v4278
        %v6063 = vsel %vm6013, %v3913, %v4280
        %v6064 = vsel %vm6013, %v3915, %v4282
        %v6065 = vsel %vm6013, %v3917, %v4284
        %v6066 = vsel %vm6013, %v3919, %v4286
        %v6067 = vsel %vm6013, %v3921, %v4288
        %v6068 = vsel %vm6013, %v3923, %v4290
        %v6069 = vsel %vm6013, %v3925, %v4292
        %v6070 = vsel %vm6013, %v4020, %v4294
        %v6071 = vsel %vm6013, %v3928, %v4296
        %v6072 = vsel %vm6013, %v3930, %v4298
        %v6073 = vsel %vm6013, %v3932, %v4300
        %v6074 = vsel %vm6013, %v3934, %v4302
        %v6075 = vsel %vm6013, %v3936, %v4304
        %v6076 = vsel %vm6013, %v3938, %v4306
        %v6077 = vsel %vm6013, %v3940, %v4308
        %vm6078 = vcmask 261120
        %v6079 = vsel %vm6078, %v6014, %v4510
        %v6080 = vsel %vm6078, %v6015, %v4512
        %v6081 = vsel %vm6078, %v6016, %v4514
        %v6082 = vsel %vm6078, %v6017, %v4516
        %v6083 = vsel %vm6078, %v6018, %v4518
        %v6084 = vsel %vm6078, %v6019, %v4520
        %v6085 = vsel %vm6078, %v6020, %v4522
        %v6086 = vsel %vm6078, %v6021, %v4524
        %v6087 = vsel %vm6078, %v6022, %v4526
        %v6088 = vsel %vm6078, %v6023, %v4528
        %v6089 = vsel %vm6078, %v6024, %v4530
        %v6090 = vsel %vm6078, %v6025, %v4532
        %v6091 = vsel %vm6078, %v6026, %v4534
        %v6092 = vsel %vm6078, %v6027, %v4536
        %v6093 = vsel %vm6078, %v6028, %v4538
        %v6094 = vsel %vm6078, %v6029, %v4540
        %v6095 = vsel %vm6078, %v6030, %v4542
        %v6096 = vsel %vm6078, %v6031, %v4544
        %v6097 = vsel %vm6078, %v6032, %v4546
        %v6098 = vsel %vm6078, %v6033, %v4548
        %v6099 = vsel %vm6078, %v6034, %v4550
        %v6100 = vsel %vm6078, %v6035, %v4552
        %v6101 = vsel %vm6078, %v6036, %v4554
        %v6102 = vsel %vm6078, %v6037, %v4556
        %v6103 = vsel %vm6078, %v6038, %v4558
        %v6104 = vsel %vm6078, %v6039, %v4560
        %v6105 = vsel %vm6078, %v6040, %v4562
        %v6106 = vsel %vm6078, %v6041, %v4564
        %v6107 = vsel %vm6078, %v6042, %v4566
        %v6108 = vsel %vm6078, %v6043, %v4568
        %v6109 = vsel %vm6078, %v6044, %v4570
        %v6110 = vsel %vm6078, %v6045, %v4572
        %v6111 = vsel %vm6078, %v6046, %v4574
        %v6112 = vsel %vm6078, %v6047, %v4576
        %v6113 = vsel %vm6078, %v6048, %v4578
        %v6114 = vsel %vm6078, %v6049, %v4580
        %v6115 = vsel %vm6078, %v6050, %v4582
        %v6116 = vsel %vm6078, %v6051, %v4584
        %v6117 = vsel %vm6078, %v6052, %v4586
        %v6118 = vsel %vm6078, %v6053, %v4588
        %v6119 = vsel %vm6078, %v6054, %v4590
        %v6120 = vsel %vm6078, %v6055, %v4592
        %v6121 = vsel %vm6078, %v6056, %v4594
        %v6122 = vsel %vm6078, %v6057, %v4596
        %v6123 = vsel %vm6078, %v6058, %v4598
        %v6124 = vsel %vm6078, %v6059, %v4600
        %v6125 = vsel %vm6078, %v6060, %v4602
        %v6126 = vsel %vm6078, %v6061, %v4604
        %v6127 = vsel %vm6078, %v6062, %v4606
        %v6128 = vsel %vm6078, %v6063, %v4608
        %v6129 = vsel %vm6078, %v6064, %v4610
        %v6130 = vsel %vm6078, %v6065, %v4612
        %v6131 = vsel %vm6078, %v6066, %v4614
        %v6132 = vsel %vm6078, %v6067, %v4616
        %v6133 = vsel %vm6078, %v6068, %v4618
        %v6134 = vsel %vm6078, %v6069, %v4620
        %v6135 = vsel %vm6078, %v6070, %v4622
        %v6136 = vsel %vm6078, %v6071, %v4624
        %v6137 = vsel %vm6078, %v6072, %v4626
        %v6138 = vsel %vm6078, %v6073, %v4628
        %v6139 = vsel %vm6078, %v6074, %v4630
        %v6140 = vsel %vm6078, %v6075, %v4632
        %v6141 = vsel %vm6078, %v6076, %v4634
        %v6142 = vsel %vm6078, %v6077, %v4636
        %vm6143 = vcmask 392192
        %v6144 = vsel %vm6143, %v6079, %v4838
        %v6145 = vsel %vm6143, %v6080, %v4840
        %v6146 = vsel %vm6143, %v6081, %v4842
        %v6147 = vsel %vm6143, %v6082, %v4844
        %v6148 = vsel %vm6143, %v6083, %v4846
        %v6149 = vsel %vm6143, %v6084, %v4848
        %v6150 = vsel %vm6143, %v6085, %v4850
        %v6151 = vsel %vm6143, %v6086, %v4852
        %v6152 = vsel %vm6143, %v6087, %v4854
        %v6153 = vsel %vm6143, %v6088, %v4856
        %v6154 = vsel %vm6143, %v6089, %v4858
        %v6155 = vsel %vm6143, %v6090, %v4860
        %v6156 = vsel %vm6143, %v6091, %v4862
        %v6157 = vsel %vm6143, %v6092, %v4864
        %v6158 = vsel %vm6143, %v6093, %v4866
        %v6159 = vsel %vm6143, %v6094, %v4868
        %v6160 = vsel %vm6143, %v6095, %v4870
        %v6161 = vsel %vm6143, %v6096, %v4872
        %v6162 = vsel %vm6143, %v6097, %v4874
        %v6163 = vsel %vm6143, %v6098, %v4876
        %v6164 = vsel %vm6143, %v6099, %v4878
        %v6165 = vsel %vm6143, %v6100, %v4880
        %v6166 = vsel %vm6143, %v6101, %v4882
        %v6167 = vsel %vm6143, %v6102, %v4884
        %v6168 = vsel %vm6143, %v6103, %v4886
        %v6169 = vsel %vm6143, %v6104, %v4888
        %v6170 = vsel %vm6143, %v6105, %v4890
        %v6171 = vsel %vm6143, %v6106, %v4892
        %v6172 = vsel %vm6143, %v6107, %v4894
        %v6173 = vsel %vm6143, %v6108, %v4896
        %v6174 = vsel %vm6143, %v6109, %v4898
        %v6175 = vsel %vm6143, %v6110, %v4900
        %v6176 = vsel %vm6143, %v6111, %v4902
        %v6177 = vsel %vm6143, %v6112, %v4904
        %v6178 = vsel %vm6143, %v6113, %v4906
        %v6179 = vsel %vm6143, %v6114, %v4908
        %v6180 = vsel %vm6143, %v6115, %v4910
        %v6181 = vsel %vm6143, %v6116, %v4912
        %v6182 = vsel %vm6143, %v6117, %v4914
        %v6183 = vsel %vm6143, %v6118, %v4916
        %v6184 = vsel %vm6143, %v6119, %v4918
        %v6185 = vsel %vm6143, %v6120, %v4920
        %v6186 = vsel %vm6143, %v6121, %v4922
        %v6187 = vsel %vm6143, %v6122, %v4924
        %v6188 = vsel %vm6143, %v6123, %v4926
        %v6189 = vsel %vm6143, %v6124, %v4928
        %v6190 = vsel %vm6143, %v6125, %v4930
        %v6191 = vsel %vm6143, %v6126, %v4932
        %v6192 = vsel %vm6143, %v6127, %v4934
        %v6193 = vsel %vm6143, %v6128, %v4936
        %v6194 = vsel %vm6143, %v6129, %v4938
        %v6195 = vsel %vm6143, %v6130, %v4940
        %v6196 = vsel %vm6143, %v6131, %v4942
        %v6197 = vsel %vm6143, %v6132, %v4944
        %v6198 = vsel %vm6143, %v6133, %v4946
        %v6199 = vsel %vm6143, %v6134, %v4948
        %v6200 = vsel %vm6143, %v6135, %v4950
        %v6201 = vsel %vm6143, %v6136, %v4952
        %v6202 = vsel %vm6143, %v6137, %v4954
        %v6203 = vsel %vm6143, %v6138, %v4956
        %v6204 = vsel %vm6143, %v6139, %v4958
        %v6205 = vsel %vm6143, %v6140, %v4960
        %v6206 = vsel %vm6143, %v6141, %v4962
        %v6207 = vsel %vm6143, %v6142, %v4964
        %vm6208 = vcmask 523264
        %v6209 = vsel %vm6208, %v6144, %v5166
        %v6210 = vsel %vm6208, %v6145, %v5168
        %v6211 = vsel %vm6208, %v6146, %v5170
        %v6212 = vsel %vm6208, %v6147, %v5172
        %v6213 = vsel %vm6208, %v6148, %v5174
        %v6214 = vsel %vm6208, %v6149, %v5176
        %v6215 = vsel %vm6208, %v6150, %v5178
        %v6216 = vsel %vm6208, %v6151, %v5180
        %v6217 = vsel %vm6208, %v6152, %v5182
        %v6218 = vsel %vm6208, %v6153, %v5184
        %v6219 = vsel %vm6208, %v6154, %v5186
        %v6220 = vsel %vm6208, %v6155, %v5188
        %v6221 = vsel %vm6208, %v6156, %v5190
        %v6222 = vsel %vm6208, %v6157, %v5192
        %v6223 = vsel %vm6208, %v6158, %v5194
        %v6224 = vsel %vm6208, %v6159, %v5196
        %v6225 = vsel %vm6208, %v6160, %v5198
        %v6226 = vsel %vm6208, %v6161, %v5200
        %v6227 = vsel %vm6208, %v6162, %v5202
        %v6228 = vsel %vm6208, %v6163, %v5204
        %v6229 = vsel %vm6208, %v6164, %v5206
        %v6230 = vsel %vm6208, %v6165, %v5208
        %v6231 = vsel %vm6208, %v6166, %v5210
        %v6232 = vsel %vm6208, %v6167, %v5212
        %v6233 = vsel %vm6208, %v6168, %v5214
        %v6234 = vsel %vm6208, %v6169, %v5216
        %v6235 = vsel %vm6208, %v6170, %v5218
        %v6236 = vsel %vm6208, %v6171, %v5220
        %v6237 = vsel %vm6208, %v6172, %v5222
        %v6238 = vsel %vm6208, %v6173, %v5224
        %v6239 = vsel %vm6208, %v6174, %v5226
        %v6240 = vsel %vm6208, %v6175, %v5228
        %v6241 = vsel %vm6208, %v6176, %v5230
        %v6242 = vsel %vm6208, %v6177, %v5232
        %v6243 = vsel %vm6208, %v6178, %v5234
        %v6244 = vsel %vm6208, %v6179, %v5236
        %v6245 = vsel %vm6208, %v6180, %v5238
        %v6246 = vsel %vm6208, %v6181, %v5240
        %v6247 = vsel %vm6208, %v6182, %v5242
        %v6248 = vsel %vm6208, %v6183, %v5244
        %v6249 = vsel %vm6208, %v6184, %v5246
        %v6250 = vsel %vm6208, %v6185, %v5248
        %v6251 = vsel %vm6208, %v6186, %v5250
        %v6252 = vsel %vm6208, %v6187, %v5252
        %v6253 = vsel %vm6208, %v6188, %v5254
        %v6254 = vsel %vm6208, %v6189, %v5256
        %v6255 = vsel %vm6208, %v6190, %v5258
        %v6256 = vsel %vm6208, %v6191, %v5260
        %v6257 = vsel %vm6208, %v6192, %v5262
        %v6258 = vsel %vm6208, %v6193, %v5264
        %v6259 = vsel %vm6208, %v6194, %v5266
        %v6260 = vsel %vm6208, %v6195, %v5268
        %v6261 = vsel %vm6208, %v6196, %v5270
        %v6262 = vsel %vm6208, %v6197, %v5272
        %v6263 = vsel %vm6208, %v6198, %v5274
        %v6264 = vsel %vm6208, %v6199, %v5276
        %v6265 = vsel %vm6208, %v6200, %v5278
        %v6266 = vsel %vm6208, %v6201, %v5280
        %v6267 = vsel %vm6208, %v6202, %v5282
        %v6268 = vsel %vm6208, %v6203, %v5284
        %v6269 = vsel %vm6208, %v6204, %v5286
        %v6270 = vsel %vm6208, %v6205, %v5288
        %v6271 = vsel %vm6208, %v6206, %v5290
        %v6272 = vsel %vm6208, %v6207, %v5292
        %vm6273 = vcmask 654336
        %v6274 = vsel %vm6273, %v6209, %v5494
        %v6275 = vsel %vm6273, %v6210, %v5496
        %v6276 = vsel %vm6273, %v6211, %v5498
        %v6277 = vsel %vm6273, %v6212, %v5500
        %v6278 = vsel %vm6273, %v6213, %v5502
        %v6279 = vsel %vm6273, %v6214, %v5504
        %v6280 = vsel %vm6273, %v6215, %v5506
        %v6281 = vsel %vm6273, %v6216, %v5508
        %v6282 = vsel %vm6273, %v6217, %v5510
        %v6283 = vsel %vm6273, %v6218, %v5512
        %v6284 = vsel %vm6273, %v6219, %v5514
        %v6285 = vsel %vm6273, %v6220, %v5516
        %v6286 = vsel %vm6273, %v6221, %v5518
        %v6287 = vsel %vm6273, %v6222, %v5520
        %v6288 = vsel %vm6273, %v6223, %v5522
        %v6289 = vsel %vm6273, %v6224, %v5524
        %v6290 = vsel %vm6273, %v6225, %v5526
        %v6291 = vsel %vm6273, %v6226, %v5528
        %v6292 = vsel %vm6273, %v6227, %v5530
        %v6293 = vsel %vm6273, %v6228, %v5532
        %v6294 = vsel %vm6273, %v6229, %v5534
        %v6295 = vsel %vm6273, %v6230, %v5536
        %v6296 = vsel %vm6273, %v6231, %v5538
        %v6297 = vsel %vm6273, %v6232, %v5540
        %v6298 = vsel %vm6273, %v6233, %v5542
        %v6299 = vsel %vm6273, %v6234, %v5544
        %v6300 = vsel %vm6273, %v6235, %v5546
        %v6301 = vsel %vm6273, %v6236, %v5548
        %v6302 = vsel %vm6273, %v6237, %v5550
        %v6303 = vsel %vm6273, %v6238, %v5552
        %v6304 = vsel %vm6273, %v6239, %v5554
        %v6305 = vsel %vm6273, %v6240, %v5556
        %v6306 = vsel %vm6273, %v6241, %v5558
        %v6307 = vsel %vm6273, %v6242, %v5560
        %v6308 = vsel %vm6273, %v6243, %v5562
        %v6309 = vsel %vm6273, %v6244, %v5564
        %v6310 = vsel %vm6273, %v6245, %v5566
        %v6311 = vsel %vm6273, %v6246, %v5568
        %v6312 = vsel %vm6273, %v6247, %v5570
        %v6313 = vsel %vm6273, %v6248, %v5572
        %v6314 = vsel %vm6273, %v6249, %v5574
        %v6315 = vsel %vm6273, %v6250, %v5576
        %v6316 = vsel %vm6273, %v6251, %v5578
        %v6317 = vsel %vm6273, %v6252, %v5580
        %v6318 = vsel %vm6273, %v6253, %v5582
        %v6319 = vsel %vm6273, %v6254, %v5584
        %v6320 = vsel %vm6273, %v6255, %v5586
        %v6321 = vsel %vm6273, %v6256, %v5588
        %v6322 = vsel %vm6273, %v6257, %v5590
        %v6323 = vsel %vm6273, %v6258, %v5592
        %v6324 = vsel %vm6273, %v6259, %v5594
        %v6325 = vsel %vm6273, %v6260, %v5596
        %v6326 = vsel %vm6273, %v6261, %v5598
        %v6327 = vsel %vm6273, %v6262, %v5600
        %v6328 = vsel %vm6273, %v6263, %v5602
        %v6329 = vsel %vm6273, %v6264, %v5604
        %v6330 = vsel %vm6273, %v6265, %v5606
        %v6331 = vsel %vm6273, %v6266, %v5608
        %v6332 = vsel %vm6273, %v6267, %v5610
        %v6333 = vsel %vm6273, %v6268, %v5612
        %v6334 = vsel %vm6273, %v6269, %v5614
        %v6335 = vsel %vm6273, %v6270, %v5616
        %v6336 = vsel %vm6273, %v6271, %v5618
        %v6337 = vsel %vm6273, %v6272, %v5620
        %vm6338 = vcmask 785408
        %v6339 = vsel %vm6338, %v6274, %v5822
        %v6340 = vsel %vm6338, %v6275, %v5824
        %v6341 = vsel %vm6338, %v6276, %v5826
        %v6342 = vsel %vm6338, %v6277, %v5828
        %v6343 = vsel %vm6338, %v6278, %v5830
        %v6344 = vsel %vm6338, %v6279, %v5832
        %v6345 = vsel %vm6338, %v6280, %v5834
        %v6346 = vsel %vm6338, %v6281, %v5836
        %v6347 = vsel %vm6338, %v6282, %v5838
        %v6348 = vsel %vm6338, %v6283, %v5840
        %v6349 = vsel %vm6338, %v6284, %v5842
        %v6350 = vsel %vm6338, %v6285, %v5844
        %v6351 = vsel %vm6338, %v6286, %v5846
        %v6352 = vsel %vm6338, %v6287, %v5848
        %v6353 = vsel %vm6338, %v6288, %v5850
        %v6354 = vsel %vm6338, %v6289, %v5852
        %v6355 = vsel %vm6338, %v6290, %v5854
        %v6356 = vsel %vm6338, %v6291, %v5856
        %v6357 = vsel %vm6338, %v6292, %v5858
        %v6358 = vsel %vm6338, %v6293, %v5860
        %v6359 = vsel %vm6338, %v6294, %v5862
        %v6360 = vsel %vm6338, %v6295, %v5864
        %v6361 = vsel %vm6338, %v6296, %v5866
        %v6362 = vsel %vm6338, %v6297, %v5868
        %v6363 = vsel %vm6338, %v6298, %v5870
        %v6364 = vsel %vm6338, %v6299, %v5872
        %v6365 = vsel %vm6338, %v6300, %v5874
        %v6366 = vsel %vm6338, %v6301, %v5876
        %v6367 = vsel %vm6338, %v6302, %v5878
        %v6368 = vsel %vm6338, %v6303, %v5880
        %v6369 = vsel %vm6338, %v6304, %v5882
        %v6370 = vsel %vm6338, %v6305, %v5884
        %v6371 = vsel %vm6338, %v6306, %v5886
        %v6372 = vsel %vm6338, %v6307, %v5888
        %v6373 = vsel %vm6338, %v6308, %v5890
        %v6374 = vsel %vm6338, %v6309, %v5892
        %v6375 = vsel %vm6338, %v6310, %v5894
        %v6376 = vsel %vm6338, %v6311, %v5896
        %v6377 = vsel %vm6338, %v6312, %v5898
        %v6378 = vsel %vm6338, %v6313, %v5900
        %v6379 = vsel %vm6338, %v6314, %v5902
        %v6380 = vsel %vm6338, %v6315, %v5904
        %v6381 = vsel %vm6338, %v6316, %v5906
        %v6382 = vsel %vm6338, %v6317, %v5908
        %v6383 = vsel %vm6338, %v6318, %v5910
        %v6384 = vsel %vm6338, %v6319, %v5912
        %v6385 = vsel %vm6338, %v6320, %v5914
        %v6386 = vsel %vm6338, %v6321, %v5916
        %v6387 = vsel %vm6338, %v6322, %v5918
        %v6388 = vsel %vm6338, %v6323, %v5920
        %v6389 = vsel %vm6338, %v6324, %v5922
        %v6390 = vsel %vm6338, %v6325, %v5924
        %v6391 = vsel %vm6338, %v6326, %v5926
        %v6392 = vsel %vm6338, %v6327, %v5928
        %v6393 = vsel %vm6338, %v6328, %v5930
        %v6394 = vsel %vm6338, %v6329, %v5932
        %v6395 = vsel %vm6338, %v6330, %v5934
        %v6396 = vsel %vm6338, %v6331, %v5936
        %v6397 = vsel %vm6338, %v6332, %v5938
        %v6398 = vsel %vm6338, %v6333, %v5940
        %v6399 = vsel %vm6338, %v6334, %v5942
        %v6400 = vsel %vm6338, %v6335, %v5944
        %v6401 = vsel %vm6338, %v6336, %v5946
        %v6402 = vsel %vm6338, %v6337, %v5948
        %v6403 = vpack.c.bf16 %v6340, %v6339
        %v6404 = vpack.c.bf16 %v6342, %v6341
        %v6405 = vpack.c.bf16 %v6344, %v6343
        %v6406 = vpack.c.bf16 %v6346, %v6345
        %v6407 = vpack.c.bf16 %v6348, %v6347
        %v6408 = vpack.c.bf16 %v6350, %v6349
        %v6409 = vpack.c.bf16 %v6352, %v6351
        %v6410 = vpack.c.bf16 %v6354, %v6353
        %v6411 = vpack.c.bf16 %v6356, %v6355
        %v6412 = vpack.c.bf16 %v6358, %v6357
        %v6413 = vpack.c.bf16 %v6360, %v6359
        %v6414 = vpack.c.bf16 %v6362, %v6361
        %v6415 = vpack.c.bf16 %v6364, %v6363
        %v6416 = vpack.c.bf16 %v6366, %v6365
        %v6417 = vpack.c.bf16 %v6368, %v6367
        %v6418 = vpack.c.bf16 %v6370, %v6369
        %v6419 = vpack.c.bf16 %v6372, %v6371
        %v6420 = vpack.c.bf16 %v6374, %v6373
        %v6421 = vpack.c.bf16 %v6376, %v6375
        %v6422 = vpack.c.bf16 %v6378, %v6377
        %v6423 = vpack.c.bf16 %v6380, %v6379
        %v6424 = vpack.c.bf16 %v6382, %v6381
        %v6425 = vpack.c.bf16 %v6384, %v6383
        %v6426 = vpack.c.bf16 %v6386, %v6385
        %v6427 = vpack.c.bf16 %v6388, %v6387
        %v6428 = vpack.c.bf16 %v6390, %v6389
        %v6429 = vpack.c.bf16 %v6392, %v6391
        %v6430 = vpack.c.bf16 %v6394, %v6393
        %v6431 = vpack.c.bf16 %v6396, %v6395
        %v6432 = vpack.c.bf16 %v6398, %v6397
        %v6433 = vpack.c.bf16 %v6400, %v6399
        %v6434 = vpack.c.bf16 %v6402, %v6401
        %v6435 = vld [vmem:[%s3] sm:$0xf]
        %v6436 = vld [vmem:[%s3 + $0x4] sm:$0xf]
        %v6437 = vld [vmem:[%s3 + $0x8] sm:$0xf]
        %v6438 = vld [vmem:[%s3 + $0xc] sm:$0xf]
        %v6439 = vld [vmem:[%s3 + $0x10] sm:$0xf]
        %v6440 = vld [vmem:[%s3 + $0x14] sm:$0xf]
        %v6441 = vld [vmem:[%s3 + $0x18] sm:$0xf]
        %v6442 = vld [vmem:[%s3 + $0x1c] sm:$0xf]
        %v6443 = vld [vmem:[%s3 + $0x20] sm:$0xf]
        %v6444 = vld [vmem:[%s3 + $0x24] sm:$0xf]
        %v6445 = vld [vmem:[%s3 + $0x28] sm:$0xf]
        %v6446 = vld [vmem:[%s3 + $0x2c] sm:$0xf]
        %v6447 = vld [vmem:[%s3 + $0x30] sm:$0xf]
        %v6448 = vld [vmem:[%s3 + $0x34] sm:$0xf]
        %v6449 = vld [vmem:[%s4] sm:$0x1]
        %v6451 = vperm.slane %v6449, 0
        %v6467 = vunpack.c.l.b16 %v6435
        %v6468 = vunpack.c.l.b16 %v6436
        %v6469 = vunpack.c.l.b16 %v6437
        %v6470 = vunpack.c.l.b16 %v6438
        %v6471 = vunpack.c.l.b16 %v6439
        %v6472 = vunpack.c.l.b16 %v6440
        %v6473 = vunpack.c.l.b16 %v6441
        %v6474 = vunpack.c.l.b16 %v6442
        %v6475 = vunpack.c.l.b16 %v6443
        %v6476 = vunpack.c.l.b16 %v6444
        %v6477 = vunpack.c.l.b16 %v6445
        %v6478 = vunpack.c.l.b16 %v6446
        %v6479 = vunpack.c.l.b16 %v6447
        %v6480 = vunpack.c.l.b16 %v6448
        %v6481 = vpack.c.b16 %v6468, %v6467
        %v6482 = vpack.c.b16 %v6470, %v6469
        %v6483 = vpack.c.b16 %v6472, %v6471
        %v6484 = vpack.c.b16 %v6474, %v6473
        %v6485 = vpack.c.b16 %v6476, %v6475
        %v6486 = vpack.c.b16 %v6478, %v6477
        %v6487 = vpack.c.b16 %v6480, %v6479
        %vm6495 = vcmask 916480
        %v6497 = vsel %vm6495, %v6403, 0
        %v6500 = vsel %vm6495, %v6404, 0
        %v6503 = vsel %vm6495, %v6405, 0
        %v6506 = vsel %vm6495, %v6406, 0
        %v6509 = vsel %vm6495, %v6407, 0
        %v6512 = vsel %vm6495, %v6408, 0
        %v6515 = vsel %vm6495, %v6409, 0
        %v6518 = vsel %vm6495, %v6410, 0
        %v6521 = vsel %vm6495, %v6411, 0
        %v6524 = vsel %vm6495, %v6412, 0
        %v6527 = vsel %vm6495, %v6413, 0
        %v6530 = vsel %vm6495, %v6414, 0
        %v6533 = vsel %vm6495, %v6415, 0
        %v6536 = vsel %vm6495, %v6416, 0
        %v6539 = vsel %vm6495, %v6417, 0
        %v6542 = vsel %vm6495, %v6418, 0
        %v6545 = vsel %vm6495, %v6419, 0
        %v6548 = vsel %vm6495, %v6420, 0
        %v6551 = vsel %vm6495, %v6421, 0
        %v6554 = vsel %vm6495, %v6422, 0
        %v6557 = vsel %vm6495, %v6423, 0
        %v6560 = vsel %vm6495, %v6424, 0
        %v6563 = vsel %vm6495, %v6425, 0
        %v6566 = vsel %vm6495, %v6426, 0
        %v6569 = vsel %vm6495, %v6427, 0
        %v6572 = vsel %vm6495, %v6428, 0
        %v6575 = vsel %vm6495, %v6429, 0
        %v6578 = vsel %vm6495, %v6430, 0
        %v6581 = vsel %vm6495, %v6431, 0
        %v6584 = vsel %vm6495, %v6432, 0
        %v6587 = vsel %vm6495, %v6433, 0
        %v6590 = vsel %vm6495, %v6434, 0
        %6592 = vmatpush.bf16.msra.mxu0 0
        %6593 = vmatpush.bf16.msra.mxu0 %v6487
        %6594 = vmatpush.bf16.msra.mxu0 %v6486
        %6595 = vmatpush.bf16.msra.mxu0 %v6485
        %6596 = vmatpush.bf16.msra.mxu0 %v6484
        %6597 = vmatpush.bf16.msra.mxu0 %v6483
        %6598 = vmatpush.bf16.msra.mxu0 %v6482
        %6599 = vmatpush.bf16.msra.mxu0 %v6481
        %6600 = vmatmul.bf16.gmra.mxu0 %v6497
        %v6601 = vpop.f32.mrf.mxu0
        %v6602 = vadd.f32 %v6451, %v6601
        %v6603 = vpop.f32.mrf.mxu0
        %v6604 = vadd.f32 %v6451, %v6603
        %6605 = vmatmul.bf16.gmra.mxu0 %v6500
        %v6606 = vpop.f32.mrf.mxu0
        %v6607 = vadd.f32 %v6451, %v6606
        %v6608 = vpop.f32.mrf.mxu0
        %v6609 = vadd.f32 %v6451, %v6608
        %6610 = vmatmul.bf16.gmra.mxu0 %v6503
        %v6611 = vpop.f32.mrf.mxu0
        %v6612 = vadd.f32 %v6451, %v6611
        %v6613 = vpop.f32.mrf.mxu0
        %v6614 = vadd.f32 %v6451, %v6613
        %6615 = vmatmul.bf16.gmra.mxu0 %v6506
        %v6616 = vpop.f32.mrf.mxu0
        %v6617 = vadd.f32 %v6451, %v6616
        %v6618 = vpop.f32.mrf.mxu0
        %v6619 = vadd.f32 %v6451, %v6618
        %6620 = vmatmul.bf16.gmra.mxu0 %v6509
        %v6621 = vpop.f32.mrf.mxu0
        %v6622 = vadd.f32 %v6451, %v6621
        %v6623 = vpop.f32.mrf.mxu0
        %v6624 = vadd.f32 %v6451, %v6623
        %6625 = vmatmul.bf16.gmra.mxu0 %v6512
        %v6626 = vpop.f32.mrf.mxu0
        %v6627 = vadd.f32 %v6451, %v6626
        %v6628 = vpop.f32.mrf.mxu0
        %v6629 = vadd.f32 %v6451, %v6628
        %6630 = vmatmul.bf16.gmra.mxu0 %v6515
        %v6631 = vpop.f32.mrf.mxu0
        %v6632 = vadd.f32 %v6451, %v6631
        %v6633 = vpop.f32.mrf.mxu0
        %v6634 = vadd.f32 %v6451, %v6633
        %6635 = vmatmul.bf16.gmra.mxu0 %v6518
        %v6636 = vpop.f32.mrf.mxu0
        %v6637 = vadd.f32 %v6451, %v6636
        %v6638 = vpop.f32.mrf.mxu0
        %v6639 = vadd.f32 %v6451, %v6638
        %6640 = vmatmul.bf16.gmra.mxu0 %v6521
        %v6641 = vpop.f32.mrf.mxu0
        %v6642 = vadd.f32 %v6451, %v6641
        %v6643 = vpop.f32.mrf.mxu0
        %v6644 = vadd.f32 %v6451, %v6643
        %6645 = vmatmul.bf16.gmra.mxu0 %v6524
        %v6646 = vpop.f32.mrf.mxu0
        %v6647 = vadd.f32 %v6451, %v6646
        %v6648 = vpop.f32.mrf.mxu0
        %v6649 = vadd.f32 %v6451, %v6648
        %6650 = vmatmul.bf16.gmra.mxu0 %v6527
        %v6651 = vpop.f32.mrf.mxu0
        %v6652 = vadd.f32 %v6451, %v6651
        %v6653 = vpop.f32.mrf.mxu0
        %v6654 = vadd.f32 %v6451, %v6653
        %6655 = vmatmul.bf16.gmra.mxu0 %v6530
        %v6656 = vpop.f32.mrf.mxu0
        %v6657 = vadd.f32 %v6451, %v6656
        %v6658 = vpop.f32.mrf.mxu0
        %v6659 = vadd.f32 %v6451, %v6658
        %6660 = vmatmul.bf16.gmra.mxu0 %v6533
        %v6661 = vpop.f32.mrf.mxu0
        %v6662 = vadd.f32 %v6451, %v6661
        %v6663 = vpop.f32.mrf.mxu0
        %v6664 = vadd.f32 %v6451, %v6663
        %6665 = vmatmul.bf16.gmra.mxu0 %v6536
        %v6666 = vpop.f32.mrf.mxu0
        %v6667 = vadd.f32 %v6451, %v6666
        %v6668 = vpop.f32.mrf.mxu0
        %v6669 = vadd.f32 %v6451, %v6668
        %6670 = vmatmul.bf16.gmra.mxu0 %v6539
        %v6671 = vpop.f32.mrf.mxu0
        %v6672 = vadd.f32 %v6451, %v6671
        %v6673 = vpop.f32.mrf.mxu0
        %v6674 = vadd.f32 %v6451, %v6673
        %6675 = vmatmul.bf16.gmra.mxu0 %v6542
        %v6676 = vpop.f32.mrf.mxu0
        %v6677 = vadd.f32 %v6451, %v6676
        %v6678 = vpop.f32.mrf.mxu0
        %v6679 = vadd.f32 %v6451, %v6678
        %6680 = vmatmul.bf16.gmra.mxu0 %v6545
        %v6681 = vpop.f32.mrf.mxu0
        %v6682 = vadd.f32 %v6451, %v6681
        %v6683 = vpop.f32.mrf.mxu0
        %v6684 = vadd.f32 %v6451, %v6683
        %6685 = vmatmul.bf16.gmra.mxu0 %v6548
        %v6686 = vpop.f32.mrf.mxu0
        %v6687 = vadd.f32 %v6451, %v6686
        %v6688 = vpop.f32.mrf.mxu0
        %v6689 = vadd.f32 %v6451, %v6688
        %6690 = vmatmul.bf16.gmra.mxu0 %v6551
        %v6691 = vpop.f32.mrf.mxu0
        %v6692 = vadd.f32 %v6451, %v6691
        %v6693 = vpop.f32.mrf.mxu0
        %v6694 = vadd.f32 %v6451, %v6693
        %6695 = vmatmul.bf16.gmra.mxu0 %v6554
        %v6696 = vpop.f32.mrf.mxu0
        %v6697 = vadd.f32 %v6451, %v6696
        %v6698 = vpop.f32.mrf.mxu0
        %v6699 = vadd.f32 %v6451, %v6698
        %6700 = vmatmul.bf16.gmra.mxu0 %v6557
        %v6701 = vpop.f32.mrf.mxu0
        %v6702 = vadd.f32 %v6451, %v6701
        %v6703 = vpop.f32.mrf.mxu0
        %v6704 = vadd.f32 %v6451, %v6703
        %6705 = vmatmul.bf16.gmra.mxu0 %v6560
        %v6706 = vpop.f32.mrf.mxu0
        %v6707 = vadd.f32 %v6451, %v6706
        %v6708 = vpop.f32.mrf.mxu0
        %v6709 = vadd.f32 %v6451, %v6708
        %6710 = vmatmul.bf16.gmra.mxu0 %v6563
        %v6711 = vpop.f32.mrf.mxu0
        %v6712 = vadd.f32 %v6451, %v6711
        %v6713 = vpop.f32.mrf.mxu0
        %v6714 = vadd.f32 %v6451, %v6713
        %6715 = vmatmul.bf16.gmra.mxu0 %v6566
        %v6716 = vpop.f32.mrf.mxu0
        %v6717 = vadd.f32 %v6451, %v6716
        %v6718 = vpop.f32.mrf.mxu0
        %v6719 = vadd.f32 %v6451, %v6718
        %6720 = vmatmul.bf16.gmra.mxu0 %v6569
        %v6721 = vpop.f32.mrf.mxu0
        %v6722 = vadd.f32 %v6451, %v6721
        %v6723 = vpop.f32.mrf.mxu0
        %v6724 = vadd.f32 %v6451, %v6723
        %6725 = vmatmul.bf16.gmra.mxu0 %v6572
        %v6726 = vpop.f32.mrf.mxu0
        %v6727 = vadd.f32 %v6451, %v6726
        %v6728 = vpop.f32.mrf.mxu0
        %v6729 = vadd.f32 %v6451, %v6728
        %6730 = vmatmul.bf16.gmra.mxu0 %v6575
        %v6731 = vpop.f32.mrf.mxu0
        %v6732 = vadd.f32 %v6451, %v6731
        %v6733 = vpop.f32.mrf.mxu0
        %v6734 = vadd.f32 %v6451, %v6733
        %6735 = vmatmul.bf16.gmra.mxu0 %v6578
        %v6736 = vpop.f32.mrf.mxu0
        %v6737 = vadd.f32 %v6451, %v6736
        %v6738 = vpop.f32.mrf.mxu0
        %v6739 = vadd.f32 %v6451, %v6738
        %6740 = vmatmul.bf16.gmra.mxu0 %v6581
        %v6741 = vpop.f32.mrf.mxu0
        %v6742 = vadd.f32 %v6451, %v6741
        %v6743 = vpop.f32.mrf.mxu0
        %v6744 = vadd.f32 %v6451, %v6743
        %6745 = vmatmul.bf16.gmra.mxu0 %v6584
        %v6746 = vpop.f32.mrf.mxu0
        %v6747 = vadd.f32 %v6451, %v6746
        %v6748 = vpop.f32.mrf.mxu0
        %v6749 = vadd.f32 %v6451, %v6748
        %6750 = vmatmul.bf16.gmra.mxu0 %v6587
        %v6751 = vpop.f32.mrf.mxu0
        %v6752 = vadd.f32 %v6451, %v6751
        %v6753 = vpop.f32.mrf.mxu0
        %v6754 = vadd.f32 %v6451, %v6753
        %6755 = vmatmul.bf16.gmra.mxu0 %v6590
        %v6756 = vpop.f32.mrf.mxu0
        %v6757 = vadd.f32 %v6451, %v6756
        %v6758 = vpop.f32.mrf.mxu0
        %v6759 = vadd.f32 %v6451, %v6758
        %6760 = vdwg.mxu0
        %v6761 = vmul.f32 %v6602, 0.2
        %v6762 = vmul.f32 %v6604, 0.2
        %v6763 = vmul.f32 %v6607, 0.2
        %v6764 = vmul.f32 %v6609, 0.2
        %v6765 = vmul.f32 %v6612, 0.2
        %v6766 = vmul.f32 %v6614, 0.2
        %v6767 = vmul.f32 %v6617, 0.2
        %v6768 = vmul.f32 %v6619, 0.2
        %v6769 = vmul.f32 %v6622, 0.2
        %v6770 = vmul.f32 %v6624, 0.2
        %v6771 = vmul.f32 %v6627, 0.2
        %v6772 = vmul.f32 %v6629, 0.2
        %v6773 = vmul.f32 %v6632, 0.2
        %v6774 = vmul.f32 %v6634, 0.2
        %v6775 = vmul.f32 %v6637, 0.2
        %v6776 = vmul.f32 %v6639, 0.2
        %v6777 = vmul.f32 %v6642, 0.2
        %v6778 = vmul.f32 %v6644, 0.2
        %v6779 = vmul.f32 %v6647, 0.2
        %v6780 = vmul.f32 %v6649, 0.2
        %v6781 = vmul.f32 %v6652, 0.2
        %v6782 = vmul.f32 %v6654, 0.2
        %v6783 = vmul.f32 %v6657, 0.2
        %v6784 = vmul.f32 %v6659, 0.2
        %v6785 = vmul.f32 %v6662, 0.2
        %v6786 = vmul.f32 %v6664, 0.2
        %v6787 = vmul.f32 %v6667, 0.2
        %v6788 = vmul.f32 %v6669, 0.2
        %v6789 = vmul.f32 %v6672, 0.2
        %v6790 = vmul.f32 %v6674, 0.2
        %v6791 = vmul.f32 %v6677, 0.2
        %v6792 = vmul.f32 %v6679, 0.2
        %v6793 = vmul.f32 %v6682, 0.2
        %v6794 = vmul.f32 %v6684, 0.2
        %v6795 = vmul.f32 %v6687, 0.2
        %v6796 = vmul.f32 %v6689, 0.2
        %v6797 = vmul.f32 %v6692, 0.2
        %v6798 = vmul.f32 %v6694, 0.2
        %v6799 = vmul.f32 %v6697, 0.2
        %v6800 = vmul.f32 %v6699, 0.2
        %v6801 = vmul.f32 %v6702, 0.2
        %v6802 = vmul.f32 %v6704, 0.2
        %v6803 = vmul.f32 %v6707, 0.2
        %v6804 = vmul.f32 %v6709, 0.2
        %v6805 = vmul.f32 %v6712, 0.2
        %v6806 = vmul.f32 %v6714, 0.2
        %v6807 = vmul.f32 %v6717, 0.2
        %v6808 = vmul.f32 %v6719, 0.2
        %v6809 = vmul.f32 %v6722, 0.2
        %v6810 = vmul.f32 %v6724, 0.2
        %v6811 = vmul.f32 %v6727, 0.2
        %v6812 = vmul.f32 %v6729, 0.2
        %v6813 = vmul.f32 %v6732, 0.2
        %v6814 = vmul.f32 %v6734, 0.2
        %v6815 = vmul.f32 %v6737, 0.2
        %v6816 = vmul.f32 %v6739, 0.2
        %v6817 = vmul.f32 %v6742, 0.2
        %v6818 = vmul.f32 %v6744, 0.2
        %v6819 = vmul.f32 %v6747, 0.2
        %v6820 = vmul.f32 %v6749, 0.2
        %v6821 = vmul.f32 %v6752, 0.2
        %v6822 = vmul.f32 %v6754, 0.2
        %v6823 = vmul.f32 %v6757, 0.2
        %v6824 = vmul.f32 %v6759, 0.2
        %v6825 = vmax.f32 %v6602, %v6761
        %v6826 = vmax.f32 %v6604, %v6762
        %v6827 = vmax.f32 %v6607, %v6763
        %v6828 = vmax.f32 %v6609, %v6764
        %v6829 = vmax.f32 %v6612, %v6765
        %v6830 = vmax.f32 %v6614, %v6766
        %v6831 = vmax.f32 %v6617, %v6767
        %v6832 = vmax.f32 %v6619, %v6768
        %v6833 = vmax.f32 %v6622, %v6769
        %v6834 = vmax.f32 %v6624, %v6770
        %v6835 = vmax.f32 %v6627, %v6771
        %v6836 = vmax.f32 %v6629, %v6772
        %v6837 = vmax.f32 %v6632, %v6773
        %v6838 = vmax.f32 %v6634, %v6774
        %v6839 = vmax.f32 %v6637, %v6775
        %v6840 = vmax.f32 %v6639, %v6776
        %v6841 = vmax.f32 %v6642, %v6777
        %v6842 = vmax.f32 %v6644, %v6778
        %v6843 = vmax.f32 %v6647, %v6779
        %v6844 = vmax.f32 %v6649, %v6780
        %v6845 = vmax.f32 %v6652, %v6781
        %v6846 = vmax.f32 %v6654, %v6782
        %v6847 = vmax.f32 %v6657, %v6783
        %v6848 = vmax.f32 %v6659, %v6784
        %v6849 = vmax.f32 %v6662, %v6785
        %v6850 = vmax.f32 %v6664, %v6786
        %v6851 = vmax.f32 %v6667, %v6787
        %v6852 = vmax.f32 %v6669, %v6788
        %v6853 = vmax.f32 %v6672, %v6789
        %v6854 = vmax.f32 %v6674, %v6790
        %v6855 = vmax.f32 %v6677, %v6791
        %v6856 = vmax.f32 %v6679, %v6792
        %v6857 = vmax.f32 %v6682, %v6793
        %v6858 = vmax.f32 %v6684, %v6794
        %v6859 = vmax.f32 %v6687, %v6795
        %v6860 = vmax.f32 %v6689, %v6796
        %v6861 = vmax.f32 %v6692, %v6797
        %v6862 = vmax.f32 %v6694, %v6798
        %v6863 = vmax.f32 %v6697, %v6799
        %v6864 = vmax.f32 %v6699, %v6800
        %v6865 = vmax.f32 %v6702, %v6801
        %v6866 = vmax.f32 %v6704, %v6802
        %v6867 = vmax.f32 %v6707, %v6803
        %v6868 = vmax.f32 %v6709, %v6804
        %v6869 = vmax.f32 %v6712, %v6805
        %v6870 = vmax.f32 %v6714, %v6806
        %v6871 = vmax.f32 %v6717, %v6807
        %v6872 = vmax.f32 %v6719, %v6808
        %v6873 = vmax.f32 %v6722, %v6809
        %v6874 = vmax.f32 %v6724, %v6810
        %v6875 = vmax.f32 %v6727, %v6811
        %v6876 = vmax.f32 %v6729, %v6812
        %v6877 = vmax.f32 %v6732, %v6813
        %v6878 = vmax.f32 %v6734, %v6814
        %v6879 = vmax.f32 %v6737, %v6815
        %v6880 = vmax.f32 %v6739, %v6816
        %v6881 = vmax.f32 %v6742, %v6817
        %v6882 = vmax.f32 %v6744, %v6818
        %v6883 = vmax.f32 %v6747, %v6819
        %v6884 = vmax.f32 %v6749, %v6820
        %v6885 = vmax.f32 %v6752, %v6821
        %v6886 = vmax.f32 %v6754, %v6822
        %v6887 = vmax.f32 %v6757, %v6823
        %v6888 = vmax.f32 %v6759, %v6824
        %v6953 = vrot.slane %v6825, 5
        %v6954 = vrot.slane %v6826, 5
        %v6955 = vsel %vm733, %v6953, %v6954
        %v6956 = vrot.slane %v6827, 5
        %v6957 = vsel %vm733, %v6954, %v6956
        %v6958 = vrot.slane %v6828, 5
        %v6959 = vsel %vm733, %v6956, %v6958
        %v6960 = vrot.slane %v6829, 5
        %v6961 = vsel %vm733, %v6958, %v6960
        %v6962 = vrot.slane %v6830, 5
        %v6963 = vsel %vm733, %v6960, %v6962
        %v6964 = vrot.slane %v6831, 5
        %v6965 = vsel %vm733, %v6962, %v6964
        %v6966 = vrot.slane %v6832, 5
        %v6967 = vsel %vm733, %v6964, %v6966
        %v6968 = vrot.slane %v6833, 5
        %v6969 = vrot.slane %v6834, 5
        %v6970 = vsel %vm733, %v6968, %v6969
        %v6971 = vrot.slane %v6835, 5
        %v6972 = vsel %vm733, %v6969, %v6971
        %v6973 = vrot.slane %v6836, 5
        %v6974 = vsel %vm733, %v6971, %v6973
        %v6975 = vrot.slane %v6837, 5
        %v6976 = vsel %vm733, %v6973, %v6975
        %v6977 = vrot.slane %v6838, 5
        %v6978 = vsel %vm733, %v6975, %v6977
        %v6979 = vrot.slane %v6839, 5
        %v6980 = vsel %vm733, %v6977, %v6979
        %v6981 = vrot.slane %v6840, 5
        %v6982 = vsel %vm733, %v6979, %v6981
        %v6983 = vrot.slane %v6841, 5
        %v6984 = vrot.slane %v6842, 5
        %v6985 = vsel %vm733, %v6983, %v6984
        %v6986 = vrot.slane %v6843, 5
        %v6987 = vsel %vm733, %v6984, %v6986
        %v6988 = vrot.slane %v6844, 5
        %v6989 = vsel %vm733, %v6986, %v6988
        %v6990 = vrot.slane %v6845, 5
        %v6991 = vsel %vm733, %v6988, %v6990
        %v6992 = vrot.slane %v6846, 5
        %v6993 = vsel %vm733, %v6990, %v6992
        %v6994 = vrot.slane %v6847, 5
        %v6995 = vsel %vm733, %v6992, %v6994
        %v6996 = vrot.slane %v6848, 5
        %v6997 = vsel %vm733, %v6994, %v6996
        %v6998 = vrot.slane %v6849, 5
        %v6999 = vrot.slane %v6850, 5
        %v7000 = vsel %vm733, %v6998, %v6999
        %v7001 = vrot.slane %v6851, 5
        %v7002 = vsel %vm733, %v6999, %v7001
        %v7003 = vrot.slane %v6852, 5
        %v7004 = vsel %vm733, %v7001, %v7003
        %v7005 = vrot.slane %v6853, 5
        %v7006 = vsel %vm733, %v7003, %v7005
        %v7007 = vrot.slane %v6854, 5
        %v7008 = vsel %vm733, %v7005, %v7007
        %v7009 = vrot.slane %v6855, 5
        %v7010 = vsel %vm733, %v7007, %v7009
        %v7011 = vrot.slane %v6856, 5
        %v7012 = vsel %vm733, %v7009, %v7011
        %v7013 = vrot.slane %v6857, 5
        %v7014 = vrot.slane %v6858, 5
        %v7015 = vsel %vm733, %v7013, %v7014
        %v7016 = vrot.slane %v6859, 5
        %v7017 = vsel %vm733, %v7014, %v7016
        %v7018 = vrot.slane %v6860, 5
        %v7019 = vsel %vm733, %v7016, %v7018
        %v7020 = vrot.slane %v6861, 5
        %v7021 = vsel %vm733, %v7018, %v7020
        %v7022 = vrot.slane %v6862, 5
        %v7023 = vsel %vm733, %v7020, %v7022
        %v7024 = vrot.slane %v6863, 5
        %v7025 = vsel %vm733, %v7022, %v7024
        %v7026 = vrot.slane %v6864, 5
        %v7027 = vsel %vm733, %v7024, %v7026
        %v7028 = vrot.slane %v6865, 5
        %v7029 = vrot.slane %v6866, 5
        %v7030 = vsel %vm733, %v7028, %v7029
        %v7031 = vrot.slane %v6867, 5
        %v7032 = vsel %vm733, %v7029, %v7031
        %v7033 = vrot.slane %v6868, 5
        %v7034 = vsel %vm733, %v7031, %v7033
        %v7035 = vrot.slane %v6869, 5
        %v7036 = vsel %vm733, %v7033, %v7035
        %v7037 = vrot.slane %v6870, 5
        %v7038 = vsel %vm733, %v7035, %v7037
        %v7039 = vrot.slane %v6871, 5
        %v7040 = vsel %vm733, %v7037, %v7039
        %v7041 = vrot.slane %v6872, 5
        %v7042 = vsel %vm733, %v7039, %v7041
        %v7043 = vrot.slane %v6873, 5
        %v7044 = vrot.slane %v6874, 5
        %v7045 = vsel %vm733, %v7043, %v7044
        %v7046 = vrot.slane %v6875, 5
        %v7047 = vsel %vm733, %v7044, %v7046
        %v7048 = vrot.slane %v6876, 5
        %v7049 = vsel %vm733, %v7046, %v7048
        %v7050 = vrot.slane %v6877, 5
        %v7051 = vsel %vm733, %v7048, %v7050
        %v7052 = vrot.slane %v6878, 5
        %v7053 = vsel %vm733, %v7050, %v7052
        %v7054 = vrot.slane %v6879, 5
        %v7055 = vsel %vm733, %v7052, %v7054
        %v7056 = vrot.slane %v6880, 5
        %v7057 = vsel %vm733, %v7054, %v7056
        %v7058 = vrot.slane %v6881, 5
        %v7059 = vrot.slane %v6882, 5
        %v7060 = vsel %vm733, %v7058, %v7059
        %v7061 = vrot.slane %v6883, 5
        %v7062 = vsel %vm733, %v7059, %v7061
        %v7063 = vrot.slane %v6884, 5
        %v7064 = vsel %vm733, %v7061, %v7063
        %v7065 = vrot.slane %v6885, 5
        %v7066 = vsel %vm733, %v7063, %v7065
        %v7067 = vrot.slane %v6886, 5
        %v7068 = vsel %vm733, %v7065, %v7067
        %v7069 = vrot.slane %v6887, 5
        %v7070 = vsel %vm733, %v7067, %v7069
        %v7071 = vrot.slane %v6888, 5
        %v7072 = vsel %vm733, %v7069, %v7071
        %v7145 = vsel %vm733, 0.0, %v6953
        %v7146 = vsel %vm733, 0.0, %v6968
        %v7147 = vsel %vm733, 0.0, %v6983
        %v7148 = vsel %vm733, 0.0, %v6998
        %v7149 = vsel %vm733, 0.0, %v7013
        %v7150 = vsel %vm733, 0.0, %v7028
        %v7151 = vsel %vm733, 0.0, %v7043
        %v7152 = vsel %vm733, 0.0, %v7058
        %v7153 = vsel %vm733, %v6966, 0.0
        %v7154 = vsel %vm733, %v6981, 0.0
        %v7155 = vsel %vm733, %v6996, 0.0
        %v7156 = vsel %vm733, %v7011, 0.0
        %v7157 = vsel %vm733, %v7026, 0.0
        %v7158 = vsel %vm733, %v7041, 0.0
        %v7159 = vsel %vm733, %v7056, 0.0
        %v7160 = vsel %vm733, %v7071, 0.0
        %v7177 = vrot.slane %v7145, 1
        %v7178 = vrot.slane %v6955, 1
        %v7179 = vsel %vm958, %v7177, %v7178
        %v7180 = vrot.slane %v6957, 1
        %v7181 = vsel %vm958, %v7178, %v7180
        %v7182 = vrot.slane %v6959, 1
        %v7183 = vsel %vm958, %v7180, %v7182
        %v7184 = vrot.slane %v6961, 1
        %v7185 = vsel %vm958, %v7182, %v7184
        %v7186 = vrot.slane %v6963, 1
        %v7187 = vsel %vm958, %v7184, %v7186
        %v7188 = vrot.slane %v6965, 1
        %v7189 = vsel %vm958, %v7186, %v7188
        %v7190 = vrot.slane %v6967, 1
        %v7191 = vsel %vm958, %v7188, %v7190
        %v7192 = vrot.slane %v7153, 1
        %v7193 = vsel %vm958, %v7190, %v7192
        %v7194 = vrot.slane %v7146, 1
        %v7195 = vrot.slane %v6970, 1
        %v7196 = vsel %vm958, %v7194, %v7195
        %v7197 = vrot.slane %v6972, 1
        %v7198 = vsel %vm958, %v7195, %v7197
        %v7199 = vrot.slane %v6974, 1
        %v7200 = vsel %vm958, %v7197, %v7199
        %v7201 = vrot.slane %v6976, 1
        %v7202 = vsel %vm958, %v7199, %v7201
        %v7203 = vrot.slane %v6978, 1
        %v7204 = vsel %vm958, %v7201, %v7203
        %v7205 = vrot.slane %v6980, 1
        %v7206 = vsel %vm958, %v7203, %v7205
        %v7207 = vrot.slane %v6982, 1
        %v7208 = vsel %vm958, %v7205, %v7207
        %v7209 = vrot.slane %v7154, 1
        %v7210 = vsel %vm958, %v7207, %v7209
        %v7211 = vrot.slane %v7147, 1
        %v7212 = vrot.slane %v6985, 1
        %v7213 = vsel %vm958, %v7211, %v7212
        %v7214 = vrot.slane %v6987, 1
        %v7215 = vsel %vm958, %v7212, %v7214
        %v7216 = vrot.slane %v6989, 1
        %v7217 = vsel %vm958, %v7214, %v7216
        %v7218 = vrot.slane %v6991, 1
        %v7219 = vsel %vm958, %v7216, %v7218
        %v7220 = vrot.slane %v6993, 1
        %v7221 = vsel %vm958, %v7218, %v7220
        %v7222 = vrot.slane %v6995, 1
        %v7223 = vsel %vm958, %v7220, %v7222
        %v7224 = vrot.slane %v6997, 1
        %v7225 = vsel %vm958, %v7222, %v7224
        %v7226 = vrot.slane %v7155, 1
        %v7227 = vsel %vm958, %v7224, %v7226
        %v7228 = vrot.slane %v7148, 1
        %v7229 = vrot.slane %v7000, 1
        %v7230 = vsel %vm958, %v7228, %v7229
        %v7231 = vrot.slane %v7002, 1
        %v7232 = vsel %vm958, %v7229, %v7231
        %v7233 = vrot.slane %v7004, 1
        %v7234 = vsel %vm958, %v7231, %v7233
        %v7235 = vrot.slane %v7006, 1
        %v7236 = vsel %vm958, %v7233, %v7235
        %v7237 = vrot.slane %v7008, 1
        %v7238 = vsel %vm958, %v7235, %v7237
        %v7239 = vrot.slane %v7010, 1
        %v7240 = vsel %vm958, %v7237, %v7239
        %v7241 = vrot.slane %v7012, 1
        %v7242 = vsel %vm958, %v7239, %v7241
        %v7243 = vrot.slane %v7156, 1
        %v7244 = vsel %vm958, %v7241, %v7243
        %v7245 = vrot.slane %v7149, 1
        %v7246 = vrot.slane %v7015, 1
        %v7247 = vsel %vm958, %v7245, %v7246
        %v7248 = vrot.slane %v7017, 1
        %v7249 = vsel %vm958, %v7246, %v7248
        %v7250 = vrot.slane %v7019, 1
        %v7251 = vsel %vm958, %v7248, %v7250
        %v7252 = vrot.slane %v7021, 1
        %v7253 = vsel %vm958, %v7250, %v7252
        %v7254 = vrot.slane %v7023, 1
        %v7255 = vsel %vm958, %v7252, %v7254
        %v7256 = vrot.slane %v7025, 1
        %v7257 = vsel %vm958, %v7254, %v7256
        %v7258 = vrot.slane %v7027, 1
        %v7259 = vsel %vm958, %v7256, %v7258
        %v7260 = vrot.slane %v7157, 1
        %v7261 = vsel %vm958, %v7258, %v7260
        %v7262 = vrot.slane %v7150, 1
        %v7263 = vrot.slane %v7030, 1
        %v7264 = vsel %vm958, %v7262, %v7263
        %v7265 = vrot.slane %v7032, 1
        %v7266 = vsel %vm958, %v7263, %v7265
        %v7267 = vrot.slane %v7034, 1
        %v7268 = vsel %vm958, %v7265, %v7267
        %v7269 = vrot.slane %v7036, 1
        %v7270 = vsel %vm958, %v7267, %v7269
        %v7271 = vrot.slane %v7038, 1
        %v7272 = vsel %vm958, %v7269, %v7271
        %v7273 = vrot.slane %v7040, 1
        %v7274 = vsel %vm958, %v7271, %v7273
        %v7275 = vrot.slane %v7042, 1
        %v7276 = vsel %vm958, %v7273, %v7275
        %v7277 = vrot.slane %v7158, 1
        %v7278 = vsel %vm958, %v7275, %v7277
        %v7279 = vrot.slane %v7151, 1
        %v7280 = vrot.slane %v7045, 1
        %v7281 = vsel %vm958, %v7279, %v7280
        %v7282 = vrot.slane %v7047, 1
        %v7283 = vsel %vm958, %v7280, %v7282
        %v7284 = vrot.slane %v7049, 1
        %v7285 = vsel %vm958, %v7282, %v7284
        %v7286 = vrot.slane %v7051, 1
        %v7287 = vsel %vm958, %v7284, %v7286
        %v7288 = vrot.slane %v7053, 1
        %v7289 = vsel %vm958, %v7286, %v7288
        %v7290 = vrot.slane %v7055, 1
        %v7291 = vsel %vm958, %v7288, %v7290
        %v7292 = vrot.slane %v7057, 1
        %v7293 = vsel %vm958, %v7290, %v7292
        %v7294 = vrot.slane %v7159, 1
        %v7295 = vsel %vm958, %v7292, %v7294
        %v7296 = vrot.slane %v7152, 1
        %v7297 = vrot.slane %v7060, 1
        %v7298 = vsel %vm958, %v7296, %v7297
        %v7299 = vrot.slane %v7062, 1
        %v7300 = vsel %vm958, %v7297, %v7299
        %v7301 = vrot.slane %v7064, 1
        %v7302 = vsel %vm958, %v7299, %v7301
        %v7303 = vrot.slane %v7066, 1
        %v7304 = vsel %vm958, %v7301, %v7303
        %v7305 = vrot.slane %v7068, 1
        %v7306 = vsel %vm958, %v7303, %v7305
        %v7307 = vrot.slane %v7070, 1
        %v7308 = vsel %vm958, %v7305, %v7307
        %v7309 = vrot.slane %v7072, 1
        %v7310 = vsel %vm958, %v7307, %v7309
        %v7311 = vrot.slane %v7160, 1
        %v7312 = vsel %vm958, %v7309, %v7311
        %7313 = vrot.lane.b32.xlu0 %v7179, 32
        %v7314 = vpop.permute.xlu0 %7313
        %7315 = vrot.lane.b32.xlu0 %v7181, 32
        %v7316 = vpop.permute.xlu0 %7315
        %7317 = vrot.lane.b32.xlu0 %v7183, 32
        %v7318 = vpop.permute.xlu0 %7317
        %7319 = vrot.lane.b32.xlu0 %v7185, 32
        %v7320 = vpop.permute.xlu0 %7319
        %7321 = vrot.lane.b32.xlu0 %v7187, 32
        %v7322 = vpop.permute.xlu0 %7321
        %7323 = vrot.lane.b32.xlu0 %v7189, 32
        %v7324 = vpop.permute.xlu0 %7323
        %7325 = vrot.lane.b32.xlu0 %v7191, 32
        %v7326 = vpop.permute.xlu0 %7325
        %7327 = vrot.lane.b32.xlu0 %v7193, 32
        %v7328 = vpop.permute.xlu0 %7327
        %7329 = vrot.lane.b32.xlu0 %v7196, 32
        %v7330 = vpop.permute.xlu0 %7329
        %7331 = vrot.lane.b32.xlu0 %v7198, 32
        %v7332 = vpop.permute.xlu0 %7331
        %7333 = vrot.lane.b32.xlu0 %v7200, 32
        %v7334 = vpop.permute.xlu0 %7333
        %7335 = vrot.lane.b32.xlu0 %v7202, 32
        %v7336 = vpop.permute.xlu0 %7335
        %7337 = vrot.lane.b32.xlu0 %v7204, 32
        %v7338 = vpop.permute.xlu0 %7337
        %7339 = vrot.lane.b32.xlu0 %v7206, 32
        %v7340 = vpop.permute.xlu0 %7339
        %7341 = vrot.lane.b32.xlu0 %v7208, 32
        %v7342 = vpop.permute.xlu0 %7341
        %7343 = vrot.lane.b32.xlu0 %v7210, 32
        %v7344 = vpop.permute.xlu0 %7343
        %7345 = vrot.lane.b32.xlu0 %v7213, 32
        %v7346 = vpop.permute.xlu0 %7345
        %7347 = vrot.lane.b32.xlu0 %v7215, 32
        %v7348 = vpop.permute.xlu0 %7347
        %7349 = vrot.lane.b32.xlu0 %v7217, 32
        %v7350 = vpop.permute.xlu0 %7349
        %7351 = vrot.lane.b32.xlu0 %v7219, 32
        %v7352 = vpop.permute.xlu0 %7351
        %7353 = vrot.lane.b32.xlu0 %v7221, 32
        %v7354 = vpop.permute.xlu0 %7353
        %7355 = vrot.lane.b32.xlu0 %v7223, 32
        %v7356 = vpop.permute.xlu0 %7355
        %7357 = vrot.lane.b32.xlu0 %v7225, 32
        %v7358 = vpop.permute.xlu0 %7357
        %7359 = vrot.lane.b32.xlu0 %v7227, 32
        %v7360 = vpop.permute.xlu0 %7359
        %7361 = vrot.lane.b32.xlu0 %v7230, 32
        %v7362 = vpop.permute.xlu0 %7361
        %7363 = vrot.lane.b32.xlu0 %v7232, 32
        %v7364 = vpop.permute.xlu0 %7363
        %7365 = vrot.lane.b32.xlu0 %v7234, 32
        %v7366 = vpop.permute.xlu0 %7365
        %7367 = vrot.lane.b32.xlu0 %v7236, 32
        %v7368 = vpop.permute.xlu0 %7367
        %7369 = vrot.lane.b32.xlu0 %v7238, 32
        %v7370 = vpop.permute.xlu0 %7369
        %7371 = vrot.lane.b32.xlu0 %v7240, 32
        %v7372 = vpop.permute.xlu0 %7371
        %7373 = vrot.lane.b32.xlu0 %v7242, 32
        %v7374 = vpop.permute.xlu0 %7373
        %7375 = vrot.lane.b32.xlu0 %v7244, 32
        %v7376 = vpop.permute.xlu0 %7375
        %7377 = vrot.lane.b32.xlu0 %v7247, 32
        %v7378 = vpop.permute.xlu0 %7377
        %7379 = vrot.lane.b32.xlu0 %v7249, 32
        %v7380 = vpop.permute.xlu0 %7379
        %7381 = vrot.lane.b32.xlu0 %v7251, 32
        %v7382 = vpop.permute.xlu0 %7381
        %7383 = vrot.lane.b32.xlu0 %v7253, 32
        %v7384 = vpop.permute.xlu0 %7383
        %7385 = vrot.lane.b32.xlu0 %v7255, 32
        %v7386 = vpop.permute.xlu0 %7385
        %7387 = vrot.lane.b32.xlu0 %v7257, 32
        %v7388 = vpop.permute.xlu0 %7387
        %7389 = vrot.lane.b32.xlu0 %v7259, 32
        %v7390 = vpop.permute.xlu0 %7389
        %7391 = vrot.lane.b32.xlu0 %v7261, 32
        %v7392 = vpop.permute.xlu0 %7391
        %7393 = vrot.lane.b32.xlu0 %v7264, 32
        %v7394 = vpop.permute.xlu0 %7393
        %7395 = vrot.lane.b32.xlu0 %v7266, 32
        %v7396 = vpop.permute.xlu0 %7395
        %7397 = vrot.lane.b32.xlu0 %v7268, 32
        %v7398 = vpop.permute.xlu0 %7397
        %7399 = vrot.lane.b32.xlu0 %v7270, 32
        %v7400 = vpop.permute.xlu0 %7399
        %7401 = vrot.lane.b32.xlu0 %v7272, 32
        %v7402 = vpop.permute.xlu0 %7401
        %7403 = vrot.lane.b32.xlu0 %v7274, 32
        %v7404 = vpop.permute.xlu0 %7403
        %7405 = vrot.lane.b32.xlu0 %v7276, 32
        %v7406 = vpop.permute.xlu0 %7405
        %7407 = vrot.lane.b32.xlu0 %v7278, 32
        %v7408 = vpop.permute.xlu0 %7407
        %7409 = vrot.lane.b32.xlu0 %v7281, 32
        %v7410 = vpop.permute.xlu0 %7409
        %7411 = vrot.lane.b32.xlu0 %v7283, 32
        %v7412 = vpop.permute.xlu0 %7411
        %7413 = vrot.lane.b32.xlu0 %v7285, 32
        %v7414 = vpop.permute.xlu0 %7413
        %7415 = vrot.lane.b32.xlu0 %v7287, 32
        %v7416 = vpop.permute.xlu0 %7415
        %7417 = vrot.lane.b32.xlu0 %v7289, 32
        %v7418 = vpop.permute.xlu0 %7417
        %7419 = vrot.lane.b32.xlu0 %v7291, 32
        %v7420 = vpop.permute.xlu0 %7419
        %7421 = vrot.lane.b32.xlu0 %v7293, 32
        %v7422 = vpop.permute.xlu0 %7421
        %7423 = vrot.lane.b32.xlu0 %v7295, 32
        %v7424 = vpop.permute.xlu0 %7423
        %7425 = vrot.lane.b32.xlu0 %v7298, 32
        %v7426 = vpop.permute.xlu0 %7425
        %7427 = vrot.lane.b32.xlu0 %v7300, 32
        %v7428 = vpop.permute.xlu0 %7427
        %7429 = vrot.lane.b32.xlu0 %v7302, 32
        %v7430 = vpop.permute.xlu0 %7429
        %7431 = vrot.lane.b32.xlu0 %v7304, 32
        %v7432 = vpop.permute.xlu0 %7431
        %7433 = vrot.lane.b32.xlu0 %v7306, 32
        %v7434 = vpop.permute.xlu0 %7433
        %7435 = vrot.lane.b32.xlu0 %v7308, 32
        %v7436 = vpop.permute.xlu0 %7435
        %7437 = vrot.lane.b32.xlu0 %v7310, 32
        %v7438 = vpop.permute.xlu0 %7437
        %7439 = vrot.lane.b32.xlu0 %v7312, 32
        %v7440 = vpop.permute.xlu0 %7439
        %v7505 = vrot.slane %v7145, 2
        %v7506 = vrot.slane %v6955, 2
        %v7507 = vsel %vm1287, %v7505, %v7506
        %v7508 = vrot.slane %v6957, 2
        %v7509 = vsel %vm1287, %v7506, %v7508
        %v7510 = vrot.slane %v6959, 2
        %v7511 = vsel %vm1287, %v7508, %v7510
        %v7512 = vrot.slane %v6961, 2
        %v7513 = vsel %vm1287, %v7510, %v7512
        %v7514 = vrot.slane %v6963, 2
        %v7515 = vsel %vm1287, %v7512, %v7514
        %v7516 = vrot.slane %v6965, 2
        %v7517 = vsel %vm1287, %v7514, %v7516
        %v7518 = vrot.slane %v6967, 2
        %v7519 = vsel %vm1287, %v7516, %v7518
        %v7520 = vrot.slane %v7153, 2
        %v7521 = vsel %vm1287, %v7518, %v7520
        %v7522 = vrot.slane %v7146, 2
        %v7523 = vrot.slane %v6970, 2
        %v7524 = vsel %vm1287, %v7522, %v7523
        %v7525 = vrot.slane %v6972, 2
        %v7526 = vsel %vm1287, %v7523, %v7525
        %v7527 = vrot.slane %v6974, 2
        %v7528 = vsel %vm1287, %v7525, %v7527
        %v7529 = vrot.slane %v6976, 2
        %v7530 = vsel %vm1287, %v7527, %v7529
        %v7531 = vrot.slane %v6978, 2
        %v7532 = vsel %vm1287, %v7529, %v7531
        %v7533 = vrot.slane %v6980, 2
        %v7534 = vsel %vm1287, %v7531, %v7533
        %v7535 = vrot.slane %v6982, 2
        %v7536 = vsel %vm1287, %v7533, %v7535
        %v7537 = vrot.slane %v7154, 2
        %v7538 = vsel %vm1287, %v7535, %v7537
        %v7539 = vrot.slane %v7147, 2
        %v7540 = vrot.slane %v6985, 2
        %v7541 = vsel %vm1287, %v7539, %v7540
        %v7542 = vrot.slane %v6987, 2
        %v7543 = vsel %vm1287, %v7540, %v7542
        %v7544 = vrot.slane %v6989, 2
        %v7545 = vsel %vm1287, %v7542, %v7544
        %v7546 = vrot.slane %v6991, 2
        %v7547 = vsel %vm1287, %v7544, %v7546
        %v7548 = vrot.slane %v6993, 2
        %v7549 = vsel %vm1287, %v7546, %v7548
        %v7550 = vrot.slane %v6995, 2
        %v7551 = vsel %vm1287, %v7548, %v7550
        %v7552 = vrot.slane %v6997, 2
        %v7553 = vsel %vm1287, %v7550, %v7552
        %v7554 = vrot.slane %v7155, 2
        %v7555 = vsel %vm1287, %v7552, %v7554
        %v7556 = vrot.slane %v7148, 2
        %v7557 = vrot.slane %v7000, 2
        %v7558 = vsel %vm1287, %v7556, %v7557
        %v7559 = vrot.slane %v7002, 2
        %v7560 = vsel %vm1287, %v7557, %v7559
        %v7561 = vrot.slane %v7004, 2
        %v7562 = vsel %vm1287, %v7559, %v7561
        %v7563 = vrot.slane %v7006, 2
        %v7564 = vsel %vm1287, %v7561, %v7563
        %v7565 = vrot.slane %v7008, 2
        %v7566 = vsel %vm1287, %v7563, %v7565
        %v7567 = vrot.slane %v7010, 2
        %v7568 = vsel %vm1287, %v7565, %v7567
        %v7569 = vrot.slane %v7012, 2
        %v7570 = vsel %vm1287, %v7567, %v7569
        %v7571 = vrot.slane %v7156, 2
        %v7572 = vsel %vm1287, %v7569, %v7571
        %v7573 = vrot.slane %v7149, 2
        %v7574 = vrot.slane %v7015, 2
        %v7575 = vsel %vm1287, %v7573, %v7574
        %v7576 = vrot.slane %v7017, 2
        %v7577 = vsel %vm1287, %v7574, %v7576
        %v7578 = vrot.slane %v7019, 2
        %v7579 = vsel %vm1287, %v7576, %v7578
        %v7580 = vrot.slane %v7021, 2
        %v7581 = vsel %vm1287, %v7578, %v7580
        %v7582 = vrot.slane %v7023, 2
        %v7583 = vsel %vm1287, %v7580, %v7582
        %v7584 = vrot.slane %v7025, 2
        %v7585 = vsel %vm1287, %v7582, %v7584
        %v7586 = vrot.slane %v7027, 2
        %v7587 = vsel %vm1287, %v7584, %v7586
        %v7588 = vrot.slane %v7157, 2
        %v7589 = vsel %vm1287, %v7586, %v7588
        %v7590 = vrot.slane %v7150, 2
        %v7591 = vrot.slane %v7030, 2
        %v7592 = vsel %vm1287, %v7590, %v7591
        %v7593 = vrot.slane %v7032, 2
        %v7594 = vsel %vm1287, %v7591, %v7593
        %v7595 = vrot.slane %v7034, 2
        %v7596 = vsel %vm1287, %v7593, %v7595
        %v7597 = vrot.slane %v7036, 2
        %v7598 = vsel %vm1287, %v7595, %v7597
        %v7599 = vrot.slane %v7038, 2
        %v7600 = vsel %vm1287, %v7597, %v7599
        %v7601 = vrot.slane %v7040, 2
        %v7602 = vsel %vm1287, %v7599, %v7601
        %v7603 = vrot.slane %v7042, 2
        %v7604 = vsel %vm1287, %v7601, %v7603
        %v7605 = vrot.slane %v7158, 2
        %v7606 = vsel %vm1287, %v7603, %v7605
        %v7607 = vrot.slane %v7151, 2
        %v7608 = vrot.slane %v7045, 2
        %v7609 = vsel %vm1287, %v7607, %v7608
        %v7610 = vrot.slane %v7047, 2
        %v7611 = vsel %vm1287, %v7608, %v7610
        %v7612 = vrot.slane %v7049, 2
        %v7613 = vsel %vm1287, %v7610, %v7612
        %v7614 = vrot.slane %v7051, 2
        %v7615 = vsel %vm1287, %v7612, %v7614
        %v7616 = vrot.slane %v7053, 2
        %v7617 = vsel %vm1287, %v7614, %v7616
        %v7618 = vrot.slane %v7055, 2
        %v7619 = vsel %vm1287, %v7616, %v7618
        %v7620 = vrot.slane %v7057, 2
        %v7621 = vsel %vm1287, %v7618, %v7620
        %v7622 = vrot.slane %v7159, 2
        %v7623 = vsel %vm1287, %v7620, %v7622
        %v7624 = vrot.slane %v7152, 2
        %v7625 = vrot.slane %v7060, 2
        %v7626 = vsel %vm1287, %v7624, %v7625
        %v7627 = vrot.slane %v7062, 2
        %v7628 = vsel %vm1287, %v7625, %v7627
        %v7629 = vrot.slane %v7064, 2
        %v7630 = vsel %vm1287, %v7627, %v7629
        %v7631 = vrot.slane %v7066, 2
        %v7632 = vsel %vm1287, %v7629, %v7631
        %v7633 = vrot.slane %v7068, 2
        %v7634 = vsel %vm1287, %v7631, %v7633
        %v7635 = vrot.slane %v7070, 2
        %v7636 = vsel %vm1287, %v7633, %v7635
        %v7637 = vrot.slane %v7072, 2
        %v7638 = vsel %vm1287, %v7635, %v7637
        %v7639 = vrot.slane %v7160, 2
        %v7640 = vsel %vm1287, %v7637, %v7639
        %7641 = vrot.lane.b32.xlu0 %v7507, 64
        %v7642 = vpop.permute.xlu0 %7641
        %7643 = vrot.lane.b32.xlu0 %v7509, 64
        %v7644 = vpop.permute.xlu0 %7643
        %7645 = vrot.lane.b32.xlu0 %v7511, 64
        %v7646 = vpop.permute.xlu0 %7645
        %7647 = vrot.lane.b32.xlu0 %v7513, 64
        %v7648 = vpop.permute.xlu0 %7647
        %7649 = vrot.lane.b32.xlu0 %v7515, 64
        %v7650 = vpop.permute.xlu0 %7649
        %7651 = vrot.lane.b32.xlu0 %v7517, 64
        %v7652 = vpop.permute.xlu0 %7651
        %7653 = vrot.lane.b32.xlu0 %v7519, 64
        %v7654 = vpop.permute.xlu0 %7653
        %7655 = vrot.lane.b32.xlu0 %v7521, 64
        %v7656 = vpop.permute.xlu0 %7655
        %7657 = vrot.lane.b32.xlu0 %v7524, 64
        %v7658 = vpop.permute.xlu0 %7657
        %7659 = vrot.lane.b32.xlu0 %v7526, 64
        %v7660 = vpop.permute.xlu0 %7659
        %7661 = vrot.lane.b32.xlu0 %v7528, 64
        %v7662 = vpop.permute.xlu0 %7661
        %7663 = vrot.lane.b32.xlu0 %v7530, 64
        %v7664 = vpop.permute.xlu0 %7663
        %7665 = vrot.lane.b32.xlu0 %v7532, 64
        %v7666 = vpop.permute.xlu0 %7665
        %7667 = vrot.lane.b32.xlu0 %v7534, 64
        %v7668 = vpop.permute.xlu0 %7667
        %7669 = vrot.lane.b32.xlu0 %v7536, 64
        %v7670 = vpop.permute.xlu0 %7669
        %7671 = vrot.lane.b32.xlu0 %v7538, 64
        %v7672 = vpop.permute.xlu0 %7671
        %7673 = vrot.lane.b32.xlu0 %v7541, 64
        %v7674 = vpop.permute.xlu0 %7673
        %7675 = vrot.lane.b32.xlu0 %v7543, 64
        %v7676 = vpop.permute.xlu0 %7675
        %7677 = vrot.lane.b32.xlu0 %v7545, 64
        %v7678 = vpop.permute.xlu0 %7677
        %7679 = vrot.lane.b32.xlu0 %v7547, 64
        %v7680 = vpop.permute.xlu0 %7679
        %7681 = vrot.lane.b32.xlu0 %v7549, 64
        %v7682 = vpop.permute.xlu0 %7681
        %7683 = vrot.lane.b32.xlu0 %v7551, 64
        %v7684 = vpop.permute.xlu0 %7683
        %7685 = vrot.lane.b32.xlu0 %v7553, 64
        %v7686 = vpop.permute.xlu0 %7685
        %7687 = vrot.lane.b32.xlu0 %v7555, 64
        %v7688 = vpop.permute.xlu0 %7687
        %7689 = vrot.lane.b32.xlu0 %v7558, 64
        %v7690 = vpop.permute.xlu0 %7689
        %7691 = vrot.lane.b32.xlu0 %v7560, 64
        %v7692 = vpop.permute.xlu0 %7691
        %7693 = vrot.lane.b32.xlu0 %v7562, 64
        %v7694 = vpop.permute.xlu0 %7693
        %7695 = vrot.lane.b32.xlu0 %v7564, 64
        %v7696 = vpop.permute.xlu0 %7695
        %7697 = vrot.lane.b32.xlu0 %v7566, 64
        %v7698 = vpop.permute.xlu0 %7697
        %7699 = vrot.lane.b32.xlu0 %v7568, 64
        %v7700 = vpop.permute.xlu0 %7699
        %7701 = vrot.lane.b32.xlu0 %v7570, 64
        %v7702 = vpop.permute.xlu0 %7701
        %7703 = vrot.lane.b32.xlu0 %v7572, 64
        %v7704 = vpop.permute.xlu0 %7703
        %7705 = vrot.lane.b32.xlu0 %v7575, 64
        %v7706 = vpop.permute.xlu0 %7705
        %7707 = vrot.lane.b32.xlu0 %v7577, 64
        %v7708 = vpop.permute.xlu0 %7707
        %7709 = vrot.lane.b32.xlu0 %v7579, 64
        %v7710 = vpop.permute.xlu0 %7709
        %7711 = vrot.lane.b32.xlu0 %v7581, 64
        %v7712 = vpop.permute.xlu0 %7711
        %7713 = vrot.lane.b32.xlu0 %v7583, 64
        %v7714 = vpop.permute.xlu0 %7713
        %7715 = vrot.lane.b32.xlu0 %v7585, 64
        %v7716 = vpop.permute.xlu0 %7715
        %7717 = vrot.lane.b32.xlu0 %v7587, 64
        %v7718 = vpop.permute.xlu0 %7717
        %7719 = vrot.lane.b32.xlu0 %v7589, 64
        %v7720 = vpop.permute.xlu0 %7719
        %7721 = vrot.lane.b32.xlu0 %v7592, 64
        %v7722 = vpop.permute.xlu0 %7721
        %7723 = vrot.lane.b32.xlu0 %v7594, 64
        %v7724 = vpop.permute.xlu0 %7723
        %7725 = vrot.lane.b32.xlu0 %v7596, 64
        %v7726 = vpop.permute.xlu0 %7725
        %7727 = vrot.lane.b32.xlu0 %v7598, 64
        %v7728 = vpop.permute.xlu0 %7727
        %7729 = vrot.lane.b32.xlu0 %v7600, 64
        %v7730 = vpop.permute.xlu0 %7729
        %7731 = vrot.lane.b32.xlu0 %v7602, 64
        %v7732 = vpop.permute.xlu0 %7731
        %7733 = vrot.lane.b32.xlu0 %v7604, 64
        %v7734 = vpop.permute.xlu0 %7733
        %7735 = vrot.lane.b32.xlu0 %v7606, 64
        %v7736 = vpop.permute.xlu0 %7735
        %7737 = vrot.lane.b32.xlu0 %v7609, 64
        %v7738 = vpop.permute.xlu0 %7737
        %7739 = vrot.lane.b32.xlu0 %v7611, 64
        %v7740 = vpop.permute.xlu0 %7739
        %7741 = vrot.lane.b32.xlu0 %v7613, 64
        %v7742 = vpop.permute.xlu0 %7741
        %7743 = vrot.lane.b32.xlu0 %v7615, 64
        %v7744 = vpop.permute.xlu0 %7743
        %7745 = vrot.lane.b32.xlu0 %v7617, 64
        %v7746 = vpop.permute.xlu0 %7745
        %7747 = vrot.lane.b32.xlu0 %v7619, 64
        %v7748 = vpop.permute.xlu0 %7747
        %7749 = vrot.lane.b32.xlu0 %v7621, 64
        %v7750 = vpop.permute.xlu0 %7749
        %7751 = vrot.lane.b32.xlu0 %v7623, 64
        %v7752 = vpop.permute.xlu0 %7751
        %7753 = vrot.lane.b32.xlu0 %v7626, 64
        %v7754 = vpop.permute.xlu0 %7753
        %7755 = vrot.lane.b32.xlu0 %v7628, 64
        %v7756 = vpop.permute.xlu0 %7755
        %7757 = vrot.lane.b32.xlu0 %v7630, 64
        %v7758 = vpop.permute.xlu0 %7757
        %7759 = vrot.lane.b32.xlu0 %v7632, 64
        %v7760 = vpop.permute.xlu0 %7759
        %7761 = vrot.lane.b32.xlu0 %v7634, 64
        %v7762 = vpop.permute.xlu0 %7761
        %7763 = vrot.lane.b32.xlu0 %v7636, 64
        %v7764 = vpop.permute.xlu0 %7763
        %7765 = vrot.lane.b32.xlu0 %v7638, 64
        %v7766 = vpop.permute.xlu0 %7765
        %7767 = vrot.lane.b32.xlu0 %v7640, 64
        %v7768 = vpop.permute.xlu0 %7767
        %v7833 = vrot.slane %v7145, 3
        %v7834 = vrot.slane %v6955, 3
        %v7835 = vsel %vm1616, %v7833, %v7834
        %v7836 = vrot.slane %v6957, 3
        %v7837 = vsel %vm1616, %v7834, %v7836
        %v7838 = vrot.slane %v6959, 3
        %v7839 = vsel %vm1616, %v7836, %v7838
        %v7840 = vrot.slane %v6961, 3
        %v7841 = vsel %vm1616, %v7838, %v7840
        %v7842 = vrot.slane %v6963, 3
        %v7843 = vsel %vm1616, %v7840, %v7842
        %v7844 = vrot.slane %v6965, 3
        %v7845 = vsel %vm1616, %v7842, %v7844
        %v7846 = vrot.slane %v6967, 3
        %v7847 = vsel %vm1616, %v7844, %v7846
        %v7848 = vrot.slane %v7153, 3
        %v7849 = vsel %vm1616, %v7846, %v7848
        %v7850 = vrot.slane %v7146, 3
        %v7851 = vrot.slane %v6970, 3
        %v7852 = vsel %vm1616, %v7850, %v7851
        %v7853 = vrot.slane %v6972, 3
        %v7854 = vsel %vm1616, %v7851, %v7853
        %v7855 = vrot.slane %v6974, 3
        %v7856 = vsel %vm1616, %v7853, %v7855
        %v7857 = vrot.slane %v6976, 3
        %v7858 = vsel %vm1616, %v7855, %v7857
        %v7859 = vrot.slane %v6978, 3
        %v7860 = vsel %vm1616, %v7857, %v7859
        %v7861 = vrot.slane %v6980, 3
        %v7862 = vsel %vm1616, %v7859, %v7861
        %v7863 = vrot.slane %v6982, 3
        %v7864 = vsel %vm1616, %v7861, %v7863
        %v7865 = vrot.slane %v7154, 3
        %v7866 = vsel %vm1616, %v7863, %v7865
        %v7867 = vrot.slane %v7147, 3
        %v7868 = vrot.slane %v6985, 3
        %v7869 = vsel %vm1616, %v7867, %v7868
        %v7870 = vrot.slane %v6987, 3
        %v7871 = vsel %vm1616, %v7868, %v7870
        %v7872 = vrot.slane %v6989, 3
        %v7873 = vsel %vm1616, %v7870, %v7872
        %v7874 = vrot.slane %v6991, 3
        %v7875 = vsel %vm1616, %v7872, %v7874
        %v7876 = vrot.slane %v6993, 3
        %v7877 = vsel %vm1616, %v7874, %v7876
        %v7878 = vrot.slane %v6995, 3
        %v7879 = vsel %vm1616, %v7876, %v7878
        %v7880 = vrot.slane %v6997, 3
        %v7881 = vsel %vm1616, %v7878, %v7880
        %v7882 = vrot.slane %v7155, 3
        %v7883 = vsel %vm1616, %v7880, %v7882
        %v7884 = vrot.slane %v7148, 3
        %v7885 = vrot.slane %v7000, 3
        %v7886 = vsel %vm1616, %v7884, %v7885
        %v7887 = vrot.slane %v7002, 3
        %v7888 = vsel %vm1616, %v7885, %v7887
        %v7889 = vrot.slane %v7004, 3
        %v7890 = vsel %vm1616, %v7887, %v7889
        %v7891 = vrot.slane %v7006, 3
        %v7892 = vsel %vm1616, %v7889, %v7891
        %v7893 = vrot.slane %v7008, 3
        %v7894 = vsel %vm1616, %v7891, %v7893
        %v7895 = vrot.slane %v7010, 3
        %v7896 = vsel %vm1616, %v7893, %v7895
        %v7897 = vrot.slane %v7012, 3
        %v7898 = vsel %vm1616, %v7895, %v7897
        %v7899 = vrot.slane %v7156, 3
        %v7900 = vsel %vm1616, %v7897, %v7899
        %v7901 = vrot.slane %v7149, 3
        %v7902 = vrot.slane %v7015, 3
        %v7903 = vsel %vm1616, %v7901, %v7902
        %v7904 = vrot.slane %v7017, 3
        %v7905 = vsel %vm1616, %v7902, %v7904
        %v7906 = vrot.slane %v7019, 3
        %v7907 = vsel %vm1616, %v7904, %v7906
        %v7908 = vrot.slane %v7021, 3
        %v7909 = vsel %vm1616, %v7906, %v7908
        %v7910 = vrot.slane %v7023, 3
        %v7911 = vsel %vm1616, %v7908, %v7910
        %v7912 = vrot.slane %v7025, 3
        %v7913 = vsel %vm1616, %v7910, %v7912
        %v7914 = vrot.slane %v7027, 3
        %v7915 = vsel %vm1616, %v7912, %v7914
        %v7916 = vrot.slane %v7157, 3
        %v7917 = vsel %vm1616, %v7914, %v7916
        %v7918 = vrot.slane %v7150, 3
        %v7919 = vrot.slane %v7030, 3
        %v7920 = vsel %vm1616, %v7918, %v7919
        %v7921 = vrot.slane %v7032, 3
        %v7922 = vsel %vm1616, %v7919, %v7921
        %v7923 = vrot.slane %v7034, 3
        %v7924 = vsel %vm1616, %v7921, %v7923
        %v7925 = vrot.slane %v7036, 3
        %v7926 = vsel %vm1616, %v7923, %v7925
        %v7927 = vrot.slane %v7038, 3
        %v7928 = vsel %vm1616, %v7925, %v7927
        %v7929 = vrot.slane %v7040, 3
        %v7930 = vsel %vm1616, %v7927, %v7929
        %v7931 = vrot.slane %v7042, 3
        %v7932 = vsel %vm1616, %v7929, %v7931
        %v7933 = vrot.slane %v7158, 3
        %v7934 = vsel %vm1616, %v7931, %v7933
        %v7935 = vrot.slane %v7151, 3
        %v7936 = vrot.slane %v7045, 3
        %v7937 = vsel %vm1616, %v7935, %v7936
        %v7938 = vrot.slane %v7047, 3
        %v7939 = vsel %vm1616, %v7936, %v7938
        %v7940 = vrot.slane %v7049, 3
        %v7941 = vsel %vm1616, %v7938, %v7940
        %v7942 = vrot.slane %v7051, 3
        %v7943 = vsel %vm1616, %v7940, %v7942
        %v7944 = vrot.slane %v7053, 3
        %v7945 = vsel %vm1616, %v7942, %v7944
        %v7946 = vrot.slane %v7055, 3
        %v7947 = vsel %vm1616, %v7944, %v7946
        %v7948 = vrot.slane %v7057, 3
        %v7949 = vsel %vm1616, %v7946, %v7948
        %v7950 = vrot.slane %v7159, 3
        %v7951 = vsel %vm1616, %v7948, %v7950
        %v7952 = vrot.slane %v7152, 3
        %v7953 = vrot.slane %v7060, 3
        %v7954 = vsel %vm1616, %v7952, %v7953
        %v7955 = vrot.slane %v7062, 3
        %v7956 = vsel %vm1616, %v7953, %v7955
        %v7957 = vrot.slane %v7064, 3
        %v7958 = vsel %vm1616, %v7955, %v7957
        %v7959 = vrot.slane %v7066, 3
        %v7960 = vsel %vm1616, %v7957, %v7959
        %v7961 = vrot.slane %v7068, 3
        %v7962 = vsel %vm1616, %v7959, %v7961
        %v7963 = vrot.slane %v7070, 3
        %v7964 = vsel %vm1616, %v7961, %v7963
        %v7965 = vrot.slane %v7072, 3
        %v7966 = vsel %vm1616, %v7963, %v7965
        %v7967 = vrot.slane %v7160, 3
        %v7968 = vsel %vm1616, %v7965, %v7967
        %7969 = vrot.lane.b32.xlu0 %v7835, 96
        %v7970 = vpop.permute.xlu0 %7969
        %7971 = vrot.lane.b32.xlu0 %v7837, 96
        %v7972 = vpop.permute.xlu0 %7971
        %7973 = vrot.lane.b32.xlu0 %v7839, 96
        %v7974 = vpop.permute.xlu0 %7973
        %7975 = vrot.lane.b32.xlu0 %v7841, 96
        %v7976 = vpop.permute.xlu0 %7975
        %7977 = vrot.lane.b32.xlu0 %v7843, 96
        %v7978 = vpop.permute.xlu0 %7977
        %7979 = vrot.lane.b32.xlu0 %v7845, 96
        %v7980 = vpop.permute.xlu0 %7979
        %7981 = vrot.lane.b32.xlu0 %v7847, 96
        %v7982 = vpop.permute.xlu0 %7981
        %7983 = vrot.lane.b32.xlu0 %v7849, 96
        %v7984 = vpop.permute.xlu0 %7983
        %7985 = vrot.lane.b32.xlu0 %v7852, 96
        %v7986 = vpop.permute.xlu0 %7985
        %7987 = vrot.lane.b32.xlu0 %v7854, 96
        %v7988 = vpop.permute.xlu0 %7987
        %7989 = vrot.lane.b32.xlu0 %v7856, 96
        %v7990 = vpop.permute.xlu0 %7989
        %7991 = vrot.lane.b32.xlu0 %v7858, 96
        %v7992 = vpop.permute.xlu0 %7991
        %7993 = vrot.lane.b32.xlu0 %v7860, 96
        %v7994 = vpop.permute.xlu0 %7993
        %7995 = vrot.lane.b32.xlu0 %v7862, 96
        %v7996 = vpop.permute.xlu0 %7995
        %7997 = vrot.lane.b32.xlu0 %v7864, 96
        %v7998 = vpop.permute.xlu0 %7997
        %7999 = vrot.lane.b32.xlu0 %v7866, 96
        %v8000 = vpop.permute.xlu0 %7999
        %8001 = vrot.lane.b32.xlu0 %v7869, 96
        %v8002 = vpop.permute.xlu0 %8001
        %8003 = vrot.lane.b32.xlu0 %v7871, 96
        %v8004 = vpop.permute.xlu0 %8003
        %8005 = vrot.lane.b32.xlu0 %v7873, 96
        %v8006 = vpop.permute.xlu0 %8005
        %8007 = vrot.lane.b32.xlu0 %v7875, 96
        %v8008 = vpop.permute.xlu0 %8007
        %8009 = vrot.lane.b32.xlu0 %v7877, 96
        %v8010 = vpop.permute.xlu0 %8009
        %8011 = vrot.lane.b32.xlu0 %v7879, 96
        %v8012 = vpop.permute.xlu0 %8011
        %8013 = vrot.lane.b32.xlu0 %v7881, 96
        %v8014 = vpop.permute.xlu0 %8013
        %8015 = vrot.lane.b32.xlu0 %v7883, 96
        %v8016 = vpop.permute.xlu0 %8015
        %8017 = vrot.lane.b32.xlu0 %v7886, 96
        %v8018 = vpop.permute.xlu0 %8017
        %8019 = vrot.lane.b32.xlu0 %v7888, 96
        %v8020 = vpop.permute.xlu0 %8019
        %8021 = vrot.lane.b32.xlu0 %v7890, 96
        %v8022 = vpop.permute.xlu0 %8021
        %8023 = vrot.lane.b32.xlu0 %v7892, 96
        %v8024 = vpop.permute.xlu0 %8023
        %8025 = vrot.lane.b32.xlu0 %v7894, 96
        %v8026 = vpop.permute.xlu0 %8025
        %8027 = vrot.lane.b32.xlu0 %v7896, 96
        %v8028 = vpop.permute.xlu0 %8027
        %8029 = vrot.lane.b32.xlu0 %v7898, 96
        %v8030 = vpop.permute.xlu0 %8029
        %8031 = vrot.lane.b32.xlu0 %v7900, 96
        %v8032 = vpop.permute.xlu0 %8031
        %8033 = vrot.lane.b32.xlu0 %v7903, 96
        %v8034 = vpop.permute.xlu0 %8033
        %8035 = vrot.lane.b32.xlu0 %v7905, 96
        %v8036 = vpop.permute.xlu0 %8035
        %8037 = vrot.lane.b32.xlu0 %v7907, 96
        %v8038 = vpop.permute.xlu0 %8037
        %8039 = vrot.lane.b32.xlu0 %v7909, 96
        %v8040 = vpop.permute.xlu0 %8039
        %8041 = vrot.lane.b32.xlu0 %v7911, 96
        %v8042 = vpop.permute.xlu0 %8041
        %8043 = vrot.lane.b32.xlu0 %v7913, 96
        %v8044 = vpop.permute.xlu0 %8043
        %8045 = vrot.lane.b32.xlu0 %v7915, 96
        %v8046 = vpop.permute.xlu0 %8045
        %8047 = vrot.lane.b32.xlu0 %v7917, 96
        %v8048 = vpop.permute.xlu0 %8047
        %8049 = vrot.lane.b32.xlu0 %v7920, 96
        %v8050 = vpop.permute.xlu0 %8049
        %8051 = vrot.lane.b32.xlu0 %v7922, 96
        %v8052 = vpop.permute.xlu0 %8051
        %8053 = vrot.lane.b32.xlu0 %v7924, 96
        %v8054 = vpop.permute.xlu0 %8053
        %8055 = vrot.lane.b32.xlu0 %v7926, 96
        %v8056 = vpop.permute.xlu0 %8055
        %8057 = vrot.lane.b32.xlu0 %v7928, 96
        %v8058 = vpop.permute.xlu0 %8057
        %8059 = vrot.lane.b32.xlu0 %v7930, 96
        %v8060 = vpop.permute.xlu0 %8059
        %8061 = vrot.lane.b32.xlu0 %v7932, 96
        %v8062 = vpop.permute.xlu0 %8061
        %8063 = vrot.lane.b32.xlu0 %v7934, 96
        %v8064 = vpop.permute.xlu0 %8063
        %8065 = vrot.lane.b32.xlu0 %v7937, 96
        %v8066 = vpop.permute.xlu0 %8065
        %8067 = vrot.lane.b32.xlu0 %v7939, 96
        %v8068 = vpop.permute.xlu0 %8067
        %8069 = vrot.lane.b32.xlu0 %v7941, 96
        %v8070 = vpop.permute.xlu0 %8069
        %8071 = vrot.lane.b32.xlu0 %v7943, 96
        %v8072 = vpop.permute.xlu0 %8071
        %8073 = vrot.lane.b32.xlu0 %v7945, 96
        %v8074 = vpop.permute.xlu0 %8073
        %8075 = vrot.lane.b32.xlu0 %v7947, 96
        %v8076 = vpop.permute.xlu0 %8075
        %8077 = vrot.lane.b32.xlu0 %v7949, 96
        %v8078 = vpop.permute.xlu0 %8077
        %8079 = vrot.lane.b32.xlu0 %v7951, 96
        %v8080 = vpop.permute.xlu0 %8079
        %8081 = vrot.lane.b32.xlu0 %v7954, 96
        %v8082 = vpop.permute.xlu0 %8081
        %8083 = vrot.lane.b32.xlu0 %v7956, 96
        %v8084 = vpop.permute.xlu0 %8083
        %8085 = vrot.lane.b32.xlu0 %v7958, 96
        %v8086 = vpop.permute.xlu0 %8085
        %8087 = vrot.lane.b32.xlu0 %v7960, 96
        %v8088 = vpop.permute.xlu0 %8087
        %8089 = vrot.lane.b32.xlu0 %v7962, 96
        %v8090 = vpop.permute.xlu0 %8089
        %8091 = vrot.lane.b32.xlu0 %v7964, 96
        %v8092 = vpop.permute.xlu0 %8091
        %8093 = vrot.lane.b32.xlu0 %v7966, 96
        %v8094 = vpop.permute.xlu0 %8093
        %8095 = vrot.lane.b32.xlu0 %v7968, 96
        %v8096 = vpop.permute.xlu0 %8095
        %v8161 = vrot.slane %v7145, 4
        %v8162 = vrot.slane %v6955, 4
        %v8163 = vsel %vm1945, %v8161, %v8162
        %v8164 = vrot.slane %v6957, 4
        %v8165 = vsel %vm1945, %v8162, %v8164
        %v8166 = vrot.slane %v6959, 4
        %v8167 = vsel %vm1945, %v8164, %v8166
        %v8168 = vrot.slane %v6961, 4
        %v8169 = vsel %vm1945, %v8166, %v8168
        %v8170 = vrot.slane %v6963, 4
        %v8171 = vsel %vm1945, %v8168, %v8170
        %v8172 = vrot.slane %v6965, 4
        %v8173 = vsel %vm1945, %v8170, %v8172
        %v8174 = vrot.slane %v6967, 4
        %v8175 = vsel %vm1945, %v8172, %v8174
        %v8176 = vrot.slane %v7153, 4
        %v8177 = vsel %vm1945, %v8174, %v8176
        %v8178 = vrot.slane %v7146, 4
        %v8179 = vrot.slane %v6970, 4
        %v8180 = vsel %vm1945, %v8178, %v8179
        %v8181 = vrot.slane %v6972, 4
        %v8182 = vsel %vm1945, %v8179, %v8181
        %v8183 = vrot.slane %v6974, 4
        %v8184 = vsel %vm1945, %v8181, %v8183
        %v8185 = vrot.slane %v6976, 4
        %v8186 = vsel %vm1945, %v8183, %v8185
        %v8187 = vrot.slane %v6978, 4
        %v8188 = vsel %vm1945, %v8185, %v8187
        %v8189 = vrot.slane %v6980, 4
        %v8190 = vsel %vm1945, %v8187, %v8189
        %v8191 = vrot.slane %v6982, 4
        %v8192 = vsel %vm1945, %v8189, %v8191
        %v8193 = vrot.slane %v7154, 4
        %v8194 = vsel %vm1945, %v8191, %v8193
        %v8195 = vrot.slane %v7147, 4
        %v8196 = vrot.slane %v6985, 4
        %v8197 = vsel %vm1945, %v8195, %v8196
        %v8198 = vrot.slane %v6987, 4
        %v8199 = vsel %vm1945, %v8196, %v8198
        %v8200 = vrot.slane %v6989, 4
        %v8201 = vsel %vm1945, %v8198, %v8200
        %v8202 = vrot.slane %v6991, 4
        %v8203 = vsel %vm1945, %v8200, %v8202
        %v8204 = vrot.slane %v6993, 4
        %v8205 = vsel %vm1945, %v8202, %v8204
        %v8206 = vrot.slane %v6995, 4
        %v8207 = vsel %vm1945, %v8204, %v8206
        %v8208 = vrot.slane %v6997, 4
        %v8209 = vsel %vm1945, %v8206, %v8208
        %v8210 = vrot.slane %v7155, 4
        %v8211 = vsel %vm1945, %v8208, %v8210
        %v8212 = vrot.slane %v7148, 4
        %v8213 = vrot.slane %v7000, 4
        %v8214 = vsel %vm1945, %v8212, %v8213
        %v8215 = vrot.slane %v7002, 4
        %v8216 = vsel %vm1945, %v8213, %v8215
        %v8217 = vrot.slane %v7004, 4
        %v8218 = vsel %vm1945, %v8215, %v8217
        %v8219 = vrot.slane %v7006, 4
        %v8220 = vsel %vm1945, %v8217, %v8219
        %v8221 = vrot.slane %v7008, 4
        %v8222 = vsel %vm1945, %v8219, %v8221
        %v8223 = vrot.slane %v7010, 4
        %v8224 = vsel %vm1945, %v8221, %v8223
        %v8225 = vrot.slane %v7012, 4
        %v8226 = vsel %vm1945, %v8223, %v8225
        %v8227 = vrot.slane %v7156, 4
        %v8228 = vsel %vm1945, %v8225, %v8227
        %v8229 = vrot.slane %v7149, 4
        %v8230 = vrot.slane %v7015, 4
        %v8231 = vsel %vm1945, %v8229, %v8230
        %v8232 = vrot.slane %v7017, 4
        %v8233 = vsel %vm1945, %v8230, %v8232
        %v8234 = vrot.slane %v7019, 4
        %v8235 = vsel %vm1945, %v8232, %v8234
        %v8236 = vrot.slane %v7021, 4
        %v8237 = vsel %vm1945, %v8234, %v8236
        %v8238 = vrot.slane %v7023, 4
        %v8239 = vsel %vm1945, %v8236, %v8238
        %v8240 = vrot.slane %v7025, 4
        %v8241 = vsel %vm1945, %v8238, %v8240
        %v8242 = vrot.slane %v7027, 4
        %v8243 = vsel %vm1945, %v8240, %v8242
        %v8244 = vrot.slane %v7157, 4
        %v8245 = vsel %vm1945, %v8242, %v8244
        %v8246 = vrot.slane %v7150, 4
        %v8247 = vrot.slane %v7030, 4
        %v8248 = vsel %vm1945, %v8246, %v8247
        %v8249 = vrot.slane %v7032, 4
        %v8250 = vsel %vm1945, %v8247, %v8249
        %v8251 = vrot.slane %v7034, 4
        %v8252 = vsel %vm1945, %v8249, %v8251
        %v8253 = vrot.slane %v7036, 4
        %v8254 = vsel %vm1945, %v8251, %v8253
        %v8255 = vrot.slane %v7038, 4
        %v8256 = vsel %vm1945, %v8253, %v8255
        %v8257 = vrot.slane %v7040, 4
        %v8258 = vsel %vm1945, %v8255, %v8257
        %v8259 = vrot.slane %v7042, 4
        %v8260 = vsel %vm1945, %v8257, %v8259
        %v8261 = vrot.slane %v7158, 4
        %v8262 = vsel %vm1945, %v8259, %v8261
        %v8263 = vrot.slane %v7151, 4
        %v8264 = vrot.slane %v7045, 4
        %v8265 = vsel %vm1945, %v8263, %v8264
        %v8266 = vrot.slane %v7047, 4
        %v8267 = vsel %vm1945, %v8264, %v8266
        %v8268 = vrot.slane %v7049, 4
        %v8269 = vsel %vm1945, %v8266, %v8268
        %v8270 = vrot.slane %v7051, 4
        %v8271 = vsel %vm1945, %v8268, %v8270
        %v8272 = vrot.slane %v7053, 4
        %v8273 = vsel %vm1945, %v8270, %v8272
        %v8274 = vrot.slane %v7055, 4
        %v8275 = vsel %vm1945, %v8272, %v8274
        %v8276 = vrot.slane %v7057, 4
        %v8277 = vsel %vm1945, %v8274, %v8276
        %v8278 = vrot.slane %v7159, 4
        %v8279 = vsel %vm1945, %v8276, %v8278
        %v8280 = vrot.slane %v7152, 4
        %v8281 = vrot.slane %v7060, 4
        %v8282 = vsel %vm1945, %v8280, %v8281
        %v8283 = vrot.slane %v7062, 4
        %v8284 = vsel %vm1945, %v8281, %v8283
        %v8285 = vrot.slane %v7064, 4
        %v8286 = vsel %vm1945, %v8283, %v8285
        %v8287 = vrot.slane %v7066, 4
        %v8288 = vsel %vm1945, %v8285, %v8287
        %v8289 = vrot.slane %v7068, 4
        %v8290 = vsel %vm1945, %v8287, %v8289
        %v8291 = vrot.slane %v7070, 4
        %v8292 = vsel %vm1945, %v8289, %v8291
        %v8293 = vrot.slane %v7072, 4
        %v8294 = vsel %vm1945, %v8291, %v8293
        %v8295 = vrot.slane %v7160, 4
        %v8296 = vsel %vm1945, %v8293, %v8295
        %v8361 = vrot.slane %v7145, 5
        %v8362 = vrot.slane %v6955, 5
        %v8363 = vsel %vm733, %v8361, %v8362
        %v8364 = vrot.slane %v6957, 5
        %v8365 = vsel %vm733, %v8362, %v8364
        %v8366 = vrot.slane %v6959, 5
        %v8367 = vsel %vm733, %v8364, %v8366
        %v8368 = vrot.slane %v6961, 5
        %v8369 = vsel %vm733, %v8366, %v8368
        %v8370 = vrot.slane %v6963, 5
        %v8371 = vsel %vm733, %v8368, %v8370
        %v8372 = vrot.slane %v6965, 5
        %v8373 = vsel %vm733, %v8370, %v8372
        %v8374 = vrot.slane %v6967, 5
        %v8375 = vsel %vm733, %v8372, %v8374
        %v8376 = vrot.slane %v7153, 5
        %v8377 = vsel %vm733, %v8374, %v8376
        %v8378 = vrot.slane %v7146, 5
        %v8379 = vrot.slane %v6970, 5
        %v8380 = vsel %vm733, %v8378, %v8379
        %v8381 = vrot.slane %v6972, 5
        %v8382 = vsel %vm733, %v8379, %v8381
        %v8383 = vrot.slane %v6974, 5
        %v8384 = vsel %vm733, %v8381, %v8383
        %v8385 = vrot.slane %v6976, 5
        %v8386 = vsel %vm733, %v8383, %v8385
        %v8387 = vrot.slane %v6978, 5
        %v8388 = vsel %vm733, %v8385, %v8387
        %v8389 = vrot.slane %v6980, 5
        %v8390 = vsel %vm733, %v8387, %v8389
        %v8391 = vrot.slane %v6982, 5
        %v8392 = vsel %vm733, %v8389, %v8391
        %v8393 = vrot.slane %v7154, 5
        %v8394 = vsel %vm733, %v8391, %v8393
        %v8395 = vrot.slane %v7147, 5
        %v8396 = vrot.slane %v6985, 5
        %v8397 = vsel %vm733, %v8395, %v8396
        %v8398 = vrot.slane %v6987, 5
        %v8399 = vsel %vm733, %v8396, %v8398
        %v8400 = vrot.slane %v6989, 5
        %v8401 = vsel %vm733, %v8398, %v8400
        %v8402 = vrot.slane %v6991, 5
        %v8403 = vsel %vm733, %v8400, %v8402
        %v8404 = vrot.slane %v6993, 5
        %v8405 = vsel %vm733, %v8402, %v8404
        %v8406 = vrot.slane %v6995, 5
        %v8407 = vsel %vm733, %v8404, %v8406
        %v8408 = vrot.slane %v6997, 5
        %v8409 = vsel %vm733, %v8406, %v8408
        %v8410 = vrot.slane %v7155, 5
        %v8411 = vsel %vm733, %v8408, %v8410
        %v8412 = vrot.slane %v7148, 5
        %v8413 = vrot.slane %v7000, 5
        %v8414 = vsel %vm733, %v8412, %v8413
        %v8415 = vrot.slane %v7002, 5
        %v8416 = vsel %vm733, %v8413, %v8415
        %v8417 = vrot.slane %v7004, 5
        %v8418 = vsel %vm733, %v8415, %v8417
        %v8419 = vrot.slane %v7006, 5
        %v8420 = vsel %vm733, %v8417, %v8419
        %v8421 = vrot.slane %v7008, 5
        %v8422 = vsel %vm733, %v8419, %v8421
        %v8423 = vrot.slane %v7010, 5
        %v8424 = vsel %vm733, %v8421, %v8423
        %v8425 = vrot.slane %v7012, 5
        %v8426 = vsel %vm733, %v8423, %v8425
        %v8427 = vrot.slane %v7156, 5
        %v8428 = vsel %vm733, %v8425, %v8427
        %v8429 = vrot.slane %v7149, 5
        %v8430 = vrot.slane %v7015, 5
        %v8431 = vsel %vm733, %v8429, %v8430
        %v8432 = vrot.slane %v7017, 5
        %v8433 = vsel %vm733, %v8430, %v8432
        %v8434 = vrot.slane %v7019, 5
        %v8435 = vsel %vm733, %v8432, %v8434
        %v8436 = vrot.slane %v7021, 5
        %v8437 = vsel %vm733, %v8434, %v8436
        %v8438 = vrot.slane %v7023, 5
        %v8439 = vsel %vm733, %v8436, %v8438
        %v8440 = vrot.slane %v7025, 5
        %v8441 = vsel %vm733, %v8438, %v8440
        %v8442 = vrot.slane %v7027, 5
        %v8443 = vsel %vm733, %v8440, %v8442
        %v8444 = vrot.slane %v7157, 5
        %v8445 = vsel %vm733, %v8442, %v8444
        %v8446 = vrot.slane %v7150, 5
        %v8447 = vrot.slane %v7030, 5
        %v8448 = vsel %vm733, %v8446, %v8447
        %v8449 = vrot.slane %v7032, 5
        %v8450 = vsel %vm733, %v8447, %v8449
        %v8451 = vrot.slane %v7034, 5
        %v8452 = vsel %vm733, %v8449, %v8451
        %v8453 = vrot.slane %v7036, 5
        %v8454 = vsel %vm733, %v8451, %v8453
        %v8455 = vrot.slane %v7038, 5
        %v8456 = vsel %vm733, %v8453, %v8455
        %v8457 = vrot.slane %v7040, 5
        %v8458 = vsel %vm733, %v8455, %v8457
        %v8459 = vrot.slane %v7042, 5
        %v8460 = vsel %vm733, %v8457, %v8459
        %v8461 = vrot.slane %v7158, 5
        %v8462 = vsel %vm733, %v8459, %v8461
        %v8463 = vrot.slane %v7151, 5
        %v8464 = vrot.slane %v7045, 5
        %v8465 = vsel %vm733, %v8463, %v8464
        %v8466 = vrot.slane %v7047, 5
        %v8467 = vsel %vm733, %v8464, %v8466
        %v8468 = vrot.slane %v7049, 5
        %v8469 = vsel %vm733, %v8466, %v8468
        %v8470 = vrot.slane %v7051, 5
        %v8471 = vsel %vm733, %v8468, %v8470
        %v8472 = vrot.slane %v7053, 5
        %v8473 = vsel %vm733, %v8470, %v8472
        %v8474 = vrot.slane %v7055, 5
        %v8475 = vsel %vm733, %v8472, %v8474
        %v8476 = vrot.slane %v7057, 5
        %v8477 = vsel %vm733, %v8474, %v8476
        %v8478 = vrot.slane %v7159, 5
        %v8479 = vsel %vm733, %v8476, %v8478
        %v8480 = vrot.slane %v7152, 5
        %v8481 = vrot.slane %v7060, 5
        %v8482 = vsel %vm733, %v8480, %v8481
        %v8483 = vrot.slane %v7062, 5
        %v8484 = vsel %vm733, %v8481, %v8483
        %v8485 = vrot.slane %v7064, 5
        %v8486 = vsel %vm733, %v8483, %v8485
        %v8487 = vrot.slane %v7066, 5
        %v8488 = vsel %vm733, %v8485, %v8487
        %v8489 = vrot.slane %v7068, 5
        %v8490 = vsel %vm733, %v8487, %v8489
        %v8491 = vrot.slane %v7070, 5
        %v8492 = vsel %vm733, %v8489, %v8491
        %v8493 = vrot.slane %v7072, 5
        %v8494 = vsel %vm733, %v8491, %v8493
        %v8495 = vrot.slane %v7160, 5
        %v8496 = vsel %vm733, %v8493, %v8495
        %8497 = vrot.lane.b32.xlu0 %v8363, 32
        %v8498 = vpop.permute.xlu0 %8497
        %8499 = vrot.lane.b32.xlu0 %v8365, 32
        %v8500 = vpop.permute.xlu0 %8499
        %8501 = vrot.lane.b32.xlu0 %v8367, 32
        %v8502 = vpop.permute.xlu0 %8501
        %8503 = vrot.lane.b32.xlu0 %v8369, 32
        %v8504 = vpop.permute.xlu0 %8503
        %8505 = vrot.lane.b32.xlu0 %v8371, 32
        %v8506 = vpop.permute.xlu0 %8505
        %8507 = vrot.lane.b32.xlu0 %v8373, 32
        %v8508 = vpop.permute.xlu0 %8507
        %8509 = vrot.lane.b32.xlu0 %v8375, 32
        %v8510 = vpop.permute.xlu0 %8509
        %8511 = vrot.lane.b32.xlu0 %v8377, 32
        %v8512 = vpop.permute.xlu0 %8511
        %8513 = vrot.lane.b32.xlu0 %v8380, 32
        %v8514 = vpop.permute.xlu0 %8513
        %8515 = vrot.lane.b32.xlu0 %v8382, 32
        %v8516 = vpop.permute.xlu0 %8515
        %8517 = vrot.lane.b32.xlu0 %v8384, 32
        %v8518 = vpop.permute.xlu0 %8517
        %8519 = vrot.lane.b32.xlu0 %v8386, 32
        %v8520 = vpop.permute.xlu0 %8519
        %8521 = vrot.lane.b32.xlu0 %v8388, 32
        %v8522 = vpop.permute.xlu0 %8521
        %8523 = vrot.lane.b32.xlu0 %v8390, 32
        %v8524 = vpop.permute.xlu0 %8523
        %8525 = vrot.lane.b32.xlu0 %v8392, 32
        %v8526 = vpop.permute.xlu0 %8525
        %8527 = vrot.lane.b32.xlu0 %v8394, 32
        %v8528 = vpop.permute.xlu0 %8527
        %8529 = vrot.lane.b32.xlu0 %v8397, 32
        %v8530 = vpop.permute.xlu0 %8529
        %8531 = vrot.lane.b32.xlu0 %v8399, 32
        %v8532 = vpop.permute.xlu0 %8531
        %8533 = vrot.lane.b32.xlu0 %v8401, 32
        %v8534 = vpop.permute.xlu0 %8533
        %8535 = vrot.lane.b32.xlu0 %v8403, 32
        %v8536 = vpop.permute.xlu0 %8535
        %8537 = vrot.lane.b32.xlu0 %v8405, 32
        %v8538 = vpop.permute.xlu0 %8537
        %8539 = vrot.lane.b32.xlu0 %v8407, 32
        %v8540 = vpop.permute.xlu0 %8539
        %8541 = vrot.lane.b32.xlu0 %v8409, 32
        %v8542 = vpop.permute.xlu0 %8541
        %8543 = vrot.lane.b32.xlu0 %v8411, 32
        %v8544 = vpop.permute.xlu0 %8543
        %8545 = vrot.lane.b32.xlu0 %v8414, 32
        %v8546 = vpop.permute.xlu0 %8545
        %8547 = vrot.lane.b32.xlu0 %v8416, 32
        %v8548 = vpop.permute.xlu0 %8547
        %8549 = vrot.lane.b32.xlu0 %v8418, 32
        %v8550 = vpop.permute.xlu0 %8549
        %8551 = vrot.lane.b32.xlu0 %v8420, 32
        %v8552 = vpop.permute.xlu0 %8551
        %8553 = vrot.lane.b32.xlu0 %v8422, 32
        %v8554 = vpop.permute.xlu0 %8553
        %8555 = vrot.lane.b32.xlu0 %v8424, 32
        %v8556 = vpop.permute.xlu0 %8555
        %8557 = vrot.lane.b32.xlu0 %v8426, 32
        %v8558 = vpop.permute.xlu0 %8557
        %8559 = vrot.lane.b32.xlu0 %v8428, 32
        %v8560 = vpop.permute.xlu0 %8559
        %8561 = vrot.lane.b32.xlu0 %v8431, 32
        %v8562 = vpop.permute.xlu0 %8561
        %8563 = vrot.lane.b32.xlu0 %v8433, 32
        %v8564 = vpop.permute.xlu0 %8563
        %8565 = vrot.lane.b32.xlu0 %v8435, 32
        %v8566 = vpop.permute.xlu0 %8565
        %8567 = vrot.lane.b32.xlu0 %v8437, 32
        %v8568 = vpop.permute.xlu0 %8567
        %8569 = vrot.lane.b32.xlu0 %v8439, 32
        %v8570 = vpop.permute.xlu0 %8569
        %8571 = vrot.lane.b32.xlu0 %v8441, 32
        %v8572 = vpop.permute.xlu0 %8571
        %8573 = vrot.lane.b32.xlu0 %v8443, 32
        %v8574 = vpop.permute.xlu0 %8573
        %8575 = vrot.lane.b32.xlu0 %v8445, 32
        %v8576 = vpop.permute.xlu0 %8575
        %8577 = vrot.lane.b32.xlu0 %v8448, 32
        %v8578 = vpop.permute.xlu0 %8577
        %8579 = vrot.lane.b32.xlu0 %v8450, 32
        %v8580 = vpop.permute.xlu0 %8579
        %8581 = vrot.lane.b32.xlu0 %v8452, 32
        %v8582 = vpop.permute.xlu0 %8581
        %8583 = vrot.lane.b32.xlu0 %v8454, 32
        %v8584 = vpop.permute.xlu0 %8583
        %8585 = vrot.lane.b32.xlu0 %v8456, 32
        %v8586 = vpop.permute.xlu0 %8585
        %8587 = vrot.lane.b32.xlu0 %v8458, 32
        %v8588 = vpop.permute.xlu0 %8587
        %8589 = vrot.lane.b32.xlu0 %v8460, 32
        %v8590 = vpop.permute.xlu0 %8589
        %8591 = vrot.lane.b32.xlu0 %v8462, 32
        %v8592 = vpop.permute.xlu0 %8591
        %8593 = vrot.lane.b32.xlu0 %v8465, 32
        %v8594 = vpop.permute.xlu0 %8593
        %8595 = vrot.lane.b32.xlu0 %v8467, 32
        %v8596 = vpop.permute.xlu0 %8595
        %8597 = vrot.lane.b32.xlu0 %v8469, 32
        %v8598 = vpop.permute.xlu0 %8597
        %8599 = vrot.lane.b32.xlu0 %v8471, 32
        %v8600 = vpop.permute.xlu0 %8599
        %8601 = vrot.lane.b32.xlu0 %v8473, 32
        %v8602 = vpop.permute.xlu0 %8601
        %8603 = vrot.lane.b32.xlu0 %v8475, 32
        %v8604 = vpop.permute.xlu0 %8603
        %8605 = vrot.lane.b32.xlu0 %v8477, 32
        %v8606 = vpop.permute.xlu0 %8605
        %8607 = vrot.lane.b32.xlu0 %v8479, 32
        %v8608 = vpop.permute.xlu0 %8607
        %8609 = vrot.lane.b32.xlu0 %v8482, 32
        %v8610 = vpop.permute.xlu0 %8609
        %8611 = vrot.lane.b32.xlu0 %v8484, 32
        %v8612 = vpop.permute.xlu0 %8611
        %8613 = vrot.lane.b32.xlu0 %v8486, 32
        %v8614 = vpop.permute.xlu0 %8613
        %8615 = vrot.lane.b32.xlu0 %v8488, 32
        %v8616 = vpop.permute.xlu0 %8615
        %8617 = vrot.lane.b32.xlu0 %v8490, 32
        %v8618 = vpop.permute.xlu0 %8617
        %8619 = vrot.lane.b32.xlu0 %v8492, 32
        %v8620 = vpop.permute.xlu0 %8619
        %8621 = vrot.lane.b32.xlu0 %v8494, 32
        %v8622 = vpop.permute.xlu0 %8621
        %8623 = vrot.lane.b32.xlu0 %v8496, 32
        %v8624 = vpop.permute.xlu0 %8623
        %v8689 = vrot.slane %v7145, 6
        %v8690 = vrot.slane %v6955, 6
        %v8691 = vsel %vm2602, %v8689, %v8690
        %v8692 = vrot.slane %v6957, 6
        %v8693 = vsel %vm2602, %v8690, %v8692
        %v8694 = vrot.slane %v6959, 6
        %v8695 = vsel %vm2602, %v8692, %v8694
        %v8696 = vrot.slane %v6961, 6
        %v8697 = vsel %vm2602, %v8694, %v8696
        %v8698 = vrot.slane %v6963, 6
        %v8699 = vsel %vm2602, %v8696, %v8698
        %v8700 = vrot.slane %v6965, 6
        %v8701 = vsel %vm2602, %v8698, %v8700
        %v8702 = vrot.slane %v6967, 6
        %v8703 = vsel %vm2602, %v8700, %v8702
        %v8704 = vrot.slane %v7153, 6
        %v8705 = vsel %vm2602, %v8702, %v8704
        %v8706 = vrot.slane %v7146, 6
        %v8707 = vrot.slane %v6970, 6
        %v8708 = vsel %vm2602, %v8706, %v8707
        %v8709 = vrot.slane %v6972, 6
        %v8710 = vsel %vm2602, %v8707, %v8709
        %v8711 = vrot.slane %v6974, 6
        %v8712 = vsel %vm2602, %v8709, %v8711
        %v8713 = vrot.slane %v6976, 6
        %v8714 = vsel %vm2602, %v8711, %v8713
        %v8715 = vrot.slane %v6978, 6
        %v8716 = vsel %vm2602, %v8713, %v8715
        %v8717 = vrot.slane %v6980, 6
        %v8718 = vsel %vm2602, %v8715, %v8717
        %v8719 = vrot.slane %v6982, 6
        %v8720 = vsel %vm2602, %v8717, %v8719
        %v8721 = vrot.slane %v7154, 6
        %v8722 = vsel %vm2602, %v8719, %v8721
        %v8723 = vrot.slane %v7147, 6
        %v8724 = vrot.slane %v6985, 6
        %v8725 = vsel %vm2602, %v8723, %v8724
        %v8726 = vrot.slane %v6987, 6
        %v8727 = vsel %vm2602, %v8724, %v8726
        %v8728 = vrot.slane %v6989, 6
        %v8729 = vsel %vm2602, %v8726, %v8728
        %v8730 = vrot.slane %v6991, 6
        %v8731 = vsel %vm2602, %v8728, %v8730
        %v8732 = vrot.slane %v6993, 6
        %v8733 = vsel %vm2602, %v8730, %v8732
        %v8734 = vrot.slane %v6995, 6
        %v8735 = vsel %vm2602, %v8732, %v8734
        %v8736 = vrot.slane %v6997, 6
        %v8737 = vsel %vm2602, %v8734, %v8736
        %v8738 = vrot.slane %v7155, 6
        %v8739 = vsel %vm2602, %v8736, %v8738
        %v8740 = vrot.slane %v7148, 6
        %v8741 = vrot.slane %v7000, 6
        %v8742 = vsel %vm2602, %v8740, %v8741
        %v8743 = vrot.slane %v7002, 6
        %v8744 = vsel %vm2602, %v8741, %v8743
        %v8745 = vrot.slane %v7004, 6
        %v8746 = vsel %vm2602, %v8743, %v8745
        %v8747 = vrot.slane %v7006, 6
        %v8748 = vsel %vm2602, %v8745, %v8747
        %v8749 = vrot.slane %v7008, 6
        %v8750 = vsel %vm2602, %v8747, %v8749
        %v8751 = vrot.slane %v7010, 6
        %v8752 = vsel %vm2602, %v8749, %v8751
        %v8753 = vrot.slane %v7012, 6
        %v8754 = vsel %vm2602, %v8751, %v8753
        %v8755 = vrot.slane %v7156, 6
        %v8756 = vsel %vm2602, %v8753, %v8755
        %v8757 = vrot.slane %v7149, 6
        %v8758 = vrot.slane %v7015, 6
        %v8759 = vsel %vm2602, %v8757, %v8758
        %v8760 = vrot.slane %v7017, 6
        %v8761 = vsel %vm2602, %v8758, %v8760
        %v8762 = vrot.slane %v7019, 6
        %v8763 = vsel %vm2602, %v8760, %v8762
        %v8764 = vrot.slane %v7021, 6
        %v8765 = vsel %vm2602, %v8762, %v8764
        %v8766 = vrot.slane %v7023, 6
        %v8767 = vsel %vm2602, %v8764, %v8766
        %v8768 = vrot.slane %v7025, 6
        %v8769 = vsel %vm2602, %v8766, %v8768
        %v8770 = vrot.slane %v7027, 6
        %v8771 = vsel %vm2602, %v8768, %v8770
        %v8772 = vrot.slane %v7157, 6
        %v8773 = vsel %vm2602, %v8770, %v8772
        %v8774 = vrot.slane %v7150, 6
        %v8775 = vrot.slane %v7030, 6
        %v8776 = vsel %vm2602, %v8774, %v8775
        %v8777 = vrot.slane %v7032, 6
        %v8778 = vsel %vm2602, %v8775, %v8777
        %v8779 = vrot.slane %v7034, 6
        %v8780 = vsel %vm2602, %v8777, %v8779
        %v8781 = vrot.slane %v7036, 6
        %v8782 = vsel %vm2602, %v8779, %v8781
        %v8783 = vrot.slane %v7038, 6
        %v8784 = vsel %vm2602, %v8781, %v8783
        %v8785 = vrot.slane %v7040, 6
        %v8786 = vsel %vm2602, %v8783, %v8785
        %v8787 = vrot.slane %v7042, 6
        %v8788 = vsel %vm2602, %v8785, %v8787
        %v8789 = vrot.slane %v7158, 6
        %v8790 = vsel %vm2602, %v8787, %v8789
        %v8791 = vrot.slane %v7151, 6
        %v8792 = vrot.slane %v7045, 6
        %v8793 = vsel %vm2602, %v8791, %v8792
        %v8794 = vrot.slane %v7047, 6
        %v8795 = vsel %vm2602, %v8792, %v8794
        %v8796 = vrot.slane %v7049, 6
        %v8797 = vsel %vm2602, %v8794, %v8796
        %v8798 = vrot.slane %v7051, 6
        %v8799 = vsel %vm2602, %v8796, %v8798
        %v8800 = vrot.slane %v7053, 6
        %v8801 = vsel %vm2602, %v8798, %v8800
        %v8802 = vrot.slane %v7055, 6
        %v8803 = vsel %vm2602, %v8800, %v8802
        %v8804 = vrot.slane %v7057, 6
        %v8805 = vsel %vm2602, %v8802, %v8804
        %v8806 = vrot.slane %v7159, 6
        %v8807 = vsel %vm2602, %v8804, %v8806
        %v8808 = vrot.slane %v7152, 6
        %v8809 = vrot.slane %v7060, 6
        %v8810 = vsel %vm2602, %v8808, %v8809
        %v8811 = vrot.slane %v7062, 6
        %v8812 = vsel %vm2602, %v8809, %v8811
        %v8813 = vrot.slane %v7064, 6
        %v8814 = vsel %vm2602, %v8811, %v8813
        %v8815 = vrot.slane %v7066, 6
        %v8816 = vsel %vm2602, %v8813, %v8815
        %v8817 = vrot.slane %v7068, 6
        %v8818 = vsel %vm2602, %v8815, %v8817
        %v8819 = vrot.slane %v7070, 6
        %v8820 = vsel %vm2602, %v8817, %v8819
        %v8821 = vrot.slane %v7072, 6
        %v8822 = vsel %vm2602, %v8819, %v8821
        %v8823 = vrot.slane %v7160, 6
        %v8824 = vsel %vm2602, %v8821, %v8823
        %8825 = vrot.lane.b32.xlu0 %v8691, 64
        %v8826 = vpop.permute.xlu0 %8825
        %8827 = vrot.lane.b32.xlu0 %v8693, 64
        %v8828 = vpop.permute.xlu0 %8827
        %8829 = vrot.lane.b32.xlu0 %v8695, 64
        %v8830 = vpop.permute.xlu0 %8829
        %8831 = vrot.lane.b32.xlu0 %v8697, 64
        %v8832 = vpop.permute.xlu0 %8831
        %8833 = vrot.lane.b32.xlu0 %v8699, 64
        %v8834 = vpop.permute.xlu0 %8833
        %8835 = vrot.lane.b32.xlu0 %v8701, 64
        %v8836 = vpop.permute.xlu0 %8835
        %8837 = vrot.lane.b32.xlu0 %v8703, 64
        %v8838 = vpop.permute.xlu0 %8837
        %8839 = vrot.lane.b32.xlu0 %v8705, 64
        %v8840 = vpop.permute.xlu0 %8839
        %8841 = vrot.lane.b32.xlu0 %v8708, 64
        %v8842 = vpop.permute.xlu0 %8841
        %8843 = vrot.lane.b32.xlu0 %v8710, 64
        %v8844 = vpop.permute.xlu0 %8843
        %8845 = vrot.lane.b32.xlu0 %v8712, 64
        %v8846 = vpop.permute.xlu0 %8845
        %8847 = vrot.lane.b32.xlu0 %v8714, 64
        %v8848 = vpop.permute.xlu0 %8847
        %8849 = vrot.lane.b32.xlu0 %v8716, 64
        %v8850 = vpop.permute.xlu0 %8849
        %8851 = vrot.lane.b32.xlu0 %v8718, 64
        %v8852 = vpop.permute.xlu0 %8851
        %8853 = vrot.lane.b32.xlu0 %v8720, 64
        %v8854 = vpop.permute.xlu0 %8853
        %8855 = vrot.lane.b32.xlu0 %v8722, 64
        %v8856 = vpop.permute.xlu0 %8855
        %8857 = vrot.lane.b32.xlu0 %v8725, 64
        %v8858 = vpop.permute.xlu0 %8857
        %8859 = vrot.lane.b32.xlu0 %v8727, 64
        %v8860 = vpop.permute.xlu0 %8859
        %8861 = vrot.lane.b32.xlu0 %v8729, 64
        %v8862 = vpop.permute.xlu0 %8861
        %8863 = vrot.lane.b32.xlu0 %v8731, 64
        %v8864 = vpop.permute.xlu0 %8863
        %8865 = vrot.lane.b32.xlu0 %v8733, 64
        %v8866 = vpop.permute.xlu0 %8865
        %8867 = vrot.lane.b32.xlu0 %v8735, 64
        %v8868 = vpop.permute.xlu0 %8867
        %8869 = vrot.lane.b32.xlu0 %v8737, 64
        %v8870 = vpop.permute.xlu0 %8869
        %8871 = vrot.lane.b32.xlu0 %v8739, 64
        %v8872 = vpop.permute.xlu0 %8871
        %8873 = vrot.lane.b32.xlu0 %v8742, 64
        %v8874 = vpop.permute.xlu0 %8873
        %8875 = vrot.lane.b32.xlu0 %v8744, 64
        %v8876 = vpop.permute.xlu0 %8875
        %8877 = vrot.lane.b32.xlu0 %v8746, 64
        %v8878 = vpop.permute.xlu0 %8877
        %8879 = vrot.lane.b32.xlu0 %v8748, 64
        %v8880 = vpop.permute.xlu0 %8879
        %8881 = vrot.lane.b32.xlu0 %v8750, 64
        %v8882 = vpop.permute.xlu0 %8881
        %8883 = vrot.lane.b32.xlu0 %v8752, 64
        %v8884 = vpop.permute.xlu0 %8883
        %8885 = vrot.lane.b32.xlu0 %v8754, 64
        %v8886 = vpop.permute.xlu0 %8885
        %8887 = vrot.lane.b32.xlu0 %v8756, 64
        %v8888 = vpop.permute.xlu0 %8887
        %8889 = vrot.lane.b32.xlu0 %v8759, 64
        %v8890 = vpop.permute.xlu0 %8889
        %8891 = vrot.lane.b32.xlu0 %v8761, 64
        %v8892 = vpop.permute.xlu0 %8891
        %8893 = vrot.lane.b32.xlu0 %v8763, 64
        %v8894 = vpop.permute.xlu0 %8893
        %8895 = vrot.lane.b32.xlu0 %v8765, 64
        %v8896 = vpop.permute.xlu0 %8895
        %8897 = vrot.lane.b32.xlu0 %v8767, 64
        %v8898 = vpop.permute.xlu0 %8897
        %8899 = vrot.lane.b32.xlu0 %v8769, 64
        %v8900 = vpop.permute.xlu0 %8899
        %8901 = vrot.lane.b32.xlu0 %v8771, 64
        %v8902 = vpop.permute.xlu0 %8901
        %8903 = vrot.lane.b32.xlu0 %v8773, 64
        %v8904 = vpop.permute.xlu0 %8903
        %8905 = vrot.lane.b32.xlu0 %v8776, 64
        %v8906 = vpop.permute.xlu0 %8905
        %8907 = vrot.lane.b32.xlu0 %v8778, 64
        %v8908 = vpop.permute.xlu0 %8907
        %8909 = vrot.lane.b32.xlu0 %v8780, 64
        %v8910 = vpop.permute.xlu0 %8909
        %8911 = vrot.lane.b32.xlu0 %v8782, 64
        %v8912 = vpop.permute.xlu0 %8911
        %8913 = vrot.lane.b32.xlu0 %v8784, 64
        %v8914 = vpop.permute.xlu0 %8913
        %8915 = vrot.lane.b32.xlu0 %v8786, 64
        %v8916 = vpop.permute.xlu0 %8915
        %8917 = vrot.lane.b32.xlu0 %v8788, 64
        %v8918 = vpop.permute.xlu0 %8917
        %8919 = vrot.lane.b32.xlu0 %v8790, 64
        %v8920 = vpop.permute.xlu0 %8919
        %8921 = vrot.lane.b32.xlu0 %v8793, 64
        %v8922 = vpop.permute.xlu0 %8921
        %8923 = vrot.lane.b32.xlu0 %v8795, 64
        %v8924 = vpop.permute.xlu0 %8923
        %8925 = vrot.lane.b32.xlu0 %v8797, 64
        %v8926 = vpop.permute.xlu0 %8925
        %8927 = vrot.lane.b32.xlu0 %v8799, 64
        %v8928 = vpop.permute.xlu0 %8927
        %8929 = vrot.lane.b32.xlu0 %v8801, 64
        %v8930 = vpop.permute.xlu0 %8929
        %8931 = vrot.lane.b32.xlu0 %v8803, 64
        %v8932 = vpop.permute.xlu0 %8931
        %8933 = vrot.lane.b32.xlu0 %v8805, 64
        %v8934 = vpop.permute.xlu0 %8933
        %8935 = vrot.lane.b32.xlu0 %v8807, 64
        %v8936 = vpop.permute.xlu0 %8935
        %8937 = vrot.lane.b32.xlu0 %v8810, 64
        %v8938 = vpop.permute.xlu0 %8937
        %8939 = vrot.lane.b32.xlu0 %v8812, 64
        %v8940 = vpop.permute.xlu0 %8939
        %8941 = vrot.lane.b32.xlu0 %v8814, 64
        %v8942 = vpop.permute.xlu0 %8941
        %8943 = vrot.lane.b32.xlu0 %v8816, 64
        %v8944 = vpop.permute.xlu0 %8943
        %8945 = vrot.lane.b32.xlu0 %v8818, 64
        %v8946 = vpop.permute.xlu0 %8945
        %8947 = vrot.lane.b32.xlu0 %v8820, 64
        %v8948 = vpop.permute.xlu0 %8947
        %8949 = vrot.lane.b32.xlu0 %v8822, 64
        %v8950 = vpop.permute.xlu0 %8949
        %8951 = vrot.lane.b32.xlu0 %v8824, 64
        %v8952 = vpop.permute.xlu0 %8951
        %v9017 = vsel %vm6078, %v7145, %v7314
        %v9018 = vsel %vm6078, %v6955, %v7316
        %v9019 = vsel %vm6078, %v6957, %v7318
        %v9020 = vsel %vm6078, %v6959, %v7320
        %v9021 = vsel %vm6078, %v6961, %v7322
        %v9022 = vsel %vm6078, %v6963, %v7324
        %v9023 = vsel %vm6078, %v6965, %v7326
        %v9024 = vsel %vm6078, %v6967, %v7328
        %v9025 = vsel %vm6078, %v7146, %v7330
        %v9026 = vsel %vm6078, %v6970, %v7332
        %v9027 = vsel %vm6078, %v6972, %v7334
        %v9028 = vsel %vm6078, %v6974, %v7336
        %v9029 = vsel %vm6078, %v6976, %v7338
        %v9030 = vsel %vm6078, %v6978, %v7340
        %v9031 = vsel %vm6078, %v6980, %v7342
        %v9032 = vsel %vm6078, %v6982, %v7344
        %v9033 = vsel %vm6078, %v7147, %v7346
        %v9034 = vsel %vm6078, %v6985, %v7348
        %v9035 = vsel %vm6078, %v6987, %v7350
        %v9036 = vsel %vm6078, %v6989, %v7352
        %v9037 = vsel %vm6078, %v6991, %v7354
        %v9038 = vsel %vm6078, %v6993, %v7356
        %v9039 = vsel %vm6078, %v6995, %v7358
        %v9040 = vsel %vm6078, %v6997, %v7360
        %v9041 = vsel %vm6078, %v7148, %v7362
        %v9042 = vsel %vm6078, %v7000, %v7364
        %v9043 = vsel %vm6078, %v7002, %v7366
        %v9044 = vsel %vm6078, %v7004, %v7368
        %v9045 = vsel %vm6078, %v7006, %v7370
        %v9046 = vsel %vm6078, %v7008, %v7372
        %v9047 = vsel %vm6078, %v7010, %v7374
        %v9048 = vsel %vm6078, %v7012, %v7376
        %v9049 = vsel %vm6078, %v7149, %v7378
        %v9050 = vsel %vm6078, %v7015, %v7380
        %v9051 = vsel %vm6078, %v7017, %v7382
        %v9052 = vsel %vm6078, %v7019, %v7384
        %v9053 = vsel %vm6078, %v7021, %v7386
        %v9054 = vsel %vm6078, %v7023, %v7388
        %v9055 = vsel %vm6078, %v7025, %v7390
        %v9056 = vsel %vm6078, %v7027, %v7392
        %v9057 = vsel %vm6078, %v7150, %v7394
        %v9058 = vsel %vm6078, %v7030, %v7396
        %v9059 = vsel %vm6078, %v7032, %v7398
        %v9060 = vsel %vm6078, %v7034, %v7400
        %v9061 = vsel %vm6078, %v7036, %v7402
        %v9062 = vsel %vm6078, %v7038, %v7404
        %v9063 = vsel %vm6078, %v7040, %v7406
        %v9064 = vsel %vm6078, %v7042, %v7408
        %v9065 = vsel %vm6078, %v7151, %v7410
        %v9066 = vsel %vm6078, %v7045, %v7412
        %v9067 = vsel %vm6078, %v7047, %v7414
        %v9068 = vsel %vm6078, %v7049, %v7416
        %v9069 = vsel %vm6078, %v7051, %v7418
        %v9070 = vsel %vm6078, %v7053, %v7420
        %v9071 = vsel %vm6078, %v7055, %v7422
        %v9072 = vsel %vm6078, %v7057, %v7424
        %v9073 = vsel %vm6078, %v7152, %v7426
        %v9074 = vsel %vm6078, %v7060, %v7428
        %v9075 = vsel %vm6078, %v7062, %v7430
        %v9076 = vsel %vm6078, %v7064, %v7432
        %v9077 = vsel %vm6078, %v7066, %v7434
        %v9078 = vsel %vm6078, %v7068, %v7436
        %v9079 = vsel %vm6078, %v7070, %v7438
        %v9080 = vsel %vm6078, %v7072, %v7440
        %v9081 = vsel %vm6208, %v9017, %v7642
        %v9082 = vsel %vm6208, %v9018, %v7644
        %v9083 = vsel %vm6208, %v9019, %v7646
        %v9084 = vsel %vm6208, %v9020, %v7648
        %v9085 = vsel %vm6208, %v9021, %v7650
        %v9086 = vsel %vm6208, %v9022, %v7652
        %v9087 = vsel %vm6208, %v9023, %v7654
        %v9088 = vsel %vm6208, %v9024, %v7656
        %v9089 = vsel %vm6208, %v9025, %v7658
        %v9090 = vsel %vm6208, %v9026, %v7660
        %v9091 = vsel %vm6208, %v9027, %v7662
        %v9092 = vsel %vm6208, %v9028, %v7664
        %v9093 = vsel %vm6208, %v9029, %v7666
        %v9094 = vsel %vm6208, %v9030, %v7668
        %v9095 = vsel %vm6208, %v9031, %v7670
        %v9096 = vsel %vm6208, %v9032, %v7672
        %v9097 = vsel %vm6208, %v9033, %v7674
        %v9098 = vsel %vm6208, %v9034, %v7676
        %v9099 = vsel %vm6208, %v9035, %v7678
        %v9100 = vsel %vm6208, %v9036, %v7680
        %v9101 = vsel %vm6208, %v9037, %v7682
        %v9102 = vsel %vm6208, %v9038, %v7684
        %v9103 = vsel %vm6208, %v9039, %v7686
        %v9104 = vsel %vm6208, %v9040, %v7688
        %v9105 = vsel %vm6208, %v9041, %v7690
        %v9106 = vsel %vm6208, %v9042, %v7692
        %v9107 = vsel %vm6208, %v9043, %v7694
        %v9108 = vsel %vm6208, %v9044, %v7696
        %v9109 = vsel %vm6208, %v9045, %v7698
        %v9110 = vsel %vm6208, %v9046, %v7700
        %v9111 = vsel %vm6208, %v9047, %v7702
        %v9112 = vsel %vm6208, %v9048, %v7704
        %v9113 = vsel %vm6208, %v9049, %v7706
        %v9114 = vsel %vm6208, %v9050, %v7708
        %v9115 = vsel %vm6208, %v9051, %v7710
        %v9116 = vsel %vm6208, %v9052, %v7712
        %v9117 = vsel %vm6208, %v9053, %v7714
        %v9118 = vsel %vm6208, %v9054, %v7716
        %v9119 = vsel %vm6208, %v9055, %v7718
        %v9120 = vsel %vm6208, %v9056, %v7720
        %v9121 = vsel %vm6208, %v9057, %v7722
        %v9122 = vsel %vm6208, %v9058, %v7724
        %v9123 = vsel %vm6208, %v9059, %v7726
        %v9124 = vsel %vm6208, %v9060, %v7728
        %v9125 = vsel %vm6208, %v9061, %v7730
        %v9126 = vsel %vm6208, %v9062, %v7732
        %v9127 = vsel %vm6208, %v9063, %v7734
        %v9128 = vsel %vm6208, %v9064, %v7736
        %v9129 = vsel %vm6208, %v9065, %v7738
        %v9130 = vsel %vm6208, %v9066, %v7740
        %v9131 = vsel %vm6208, %v9067, %v7742
        %v9132 = vsel %vm6208, %v9068, %v7744
        %v9133 = vsel %vm6208, %v9069, %v7746
        %v9134 = vsel %vm6208, %v9070, %v7748
        %v9135 = vsel %vm6208, %v9071, %v7750
        %v9136 = vsel %vm6208, %v9072, %v7752
        %v9137 = vsel %vm6208, %v9073, %v7754
        %v9138 = vsel %vm6208, %v9074, %v7756
        %v9139 = vsel %vm6208, %v9075, %v7758
        %v9140 = vsel %vm6208, %v9076, %v7760
        %v9141 = vsel %vm6208, %v9077, %v7762
        %v9142 = vsel %vm6208, %v9078, %v7764
        %v9143 = vsel %vm6208, %v9079, %v7766
        %v9144 = vsel %vm6208, %v9080, %v7768
        %v9145 = vsel %vm6338, %v9081, %v7970
        %v9146 = vsel %vm6338, %v9082, %v7972
        %v9147 = vsel %vm6338, %v9083, %v7974
        %v9148 = vsel %vm6338, %v9084, %v7976
        %v9149 = vsel %vm6338, %v9085, %v7978
        %v9150 = vsel %vm6338, %v9086, %v7980
        %v9151 = vsel %vm6338, %v9087, %v7982
        %v9152 = vsel %vm6338, %v9088, %v7984
        %v9153 = vsel %vm6338, %v9089, %v7986
        %v9154 = vsel %vm6338, %v9090, %v7988
        %v9155 = vsel %vm6338, %v9091, %v7990
        %v9156 = vsel %vm6338, %v9092, %v7992
        %v9157 = vsel %vm6338, %v9093, %v7994
        %v9158 = vsel %vm6338, %v9094, %v7996
        %v9159 = vsel %vm6338, %v9095, %v7998
        %v9160 = vsel %vm6338, %v9096, %v8000
        %v9161 = vsel %vm6338, %v9097, %v8002
        %v9162 = vsel %vm6338, %v9098, %v8004
        %v9163 = vsel %vm6338, %v9099, %v8006
        %v9164 = vsel %vm6338, %v9100, %v8008
        %v9165 = vsel %vm6338, %v9101, %v8010
        %v9166 = vsel %vm6338, %v9102, %v8012
        %v9167 = vsel %vm6338, %v9103, %v8014
        %v9168 = vsel %vm6338, %v9104, %v8016
        %v9169 = vsel %vm6338, %v9105, %v8018
        %v9170 = vsel %vm6338, %v9106, %v8020
        %v9171 = vsel %vm6338, %v9107, %v8022
        %v9172 = vsel %vm6338, %v9108, %v8024
        %v9173 = vsel %vm6338, %v9109, %v8026
        %v9174 = vsel %vm6338, %v9110, %v8028
        %v9175 = vsel %vm6338, %v9111, %v8030
        %v9176 = vsel %vm6338, %v9112, %v8032
        %v9177 = vsel %vm6338, %v9113, %v8034
        %v9178 = vsel %vm6338, %v9114, %v8036
        %v9179 = vsel %vm6338, %v9115, %v8038
        %v9180 = vsel %vm6338, %v9116, %v8040
        %v9181 = vsel %vm6338, %v9117, %v8042
        %v9182 = vsel %vm6338, %v9118, %v8044
        %v9183 = vsel %vm6338, %v9119, %v8046
        %v9184 = vsel %vm6338, %v9120, %v8048
        %v9185 = vsel %vm6338, %v9121, %v8050
        %v9186 = vsel %vm6338, %v9122, %v8052
        %v9187 = vsel %vm6338, %v9123, %v8054
        %v9188 = vsel %vm6338, %v9124, %v8056
        %v9189 = vsel %vm6338, %v9125, %v8058
        %v9190 = vsel %vm6338, %v9126, %v8060
        %v9191 = vsel %vm6338, %v9127, %v8062
        %v9192 = vsel %vm6338, %v9128, %v8064
        %v9193 = vsel %vm6338, %v9129, %v8066
        %v9194 = vsel %vm6338, %v9130, %v8068
        %v9195 = vsel %vm6338, %v9131, %v8070
        %v9196 = vsel %vm6338, %v9132, %v8072
        %v9197 = vsel %vm6338, %v9133, %v8074
        %v9198 = vsel %vm6338, %v9134, %v8076
        %v9199 = vsel %vm6338, %v9135, %v8078
        %v9200 = vsel %vm6338, %v9136, %v8080
        %v9201 = vsel %vm6338, %v9137, %v8082
        %v9202 = vsel %vm6338, %v9138, %v8084
        %v9203 = vsel %vm6338, %v9139, %v8086
        %v9204 = vsel %vm6338, %v9140, %v8088
        %v9205 = vsel %vm6338, %v9141, %v8090
        %v9206 = vsel %vm6338, %v9142, %v8092
        %v9207 = vsel %vm6338, %v9143, %v8094
        %v9208 = vsel %vm6338, %v9144, %v8096
        %v9209 = vsel %vm6078, %v8163, %v8498
        %v9210 = vsel %vm6078, %v8165, %v8500
        %v9211 = vsel %vm6078, %v8167, %v8502
        %v9212 = vsel %vm6078, %v8169, %v8504
        %v9213 = vsel %vm6078, %v8171, %v8506
        %v9214 = vsel %vm6078, %v8173, %v8508
        %v9215 = vsel %vm6078, %v8175, %v8510
        %v9216 = vsel %vm6078, %v8177, %v8512
        %v9217 = vsel %vm6078, %v8180, %v8514
        %v9218 = vsel %vm6078, %v8182, %v8516
        %v9219 = vsel %vm6078, %v8184, %v8518
        %v9220 = vsel %vm6078, %v8186, %v8520
        %v9221 = vsel %vm6078, %v8188, %v8522
        %v9222 = vsel %vm6078, %v8190, %v8524
        %v9223 = vsel %vm6078, %v8192, %v8526
        %v9224 = vsel %vm6078, %v8194, %v8528
        %v9225 = vsel %vm6078, %v8197, %v8530
        %v9226 = vsel %vm6078, %v8199, %v8532
        %v9227 = vsel %vm6078, %v8201, %v8534
        %v9228 = vsel %vm6078, %v8203, %v8536
        %v9229 = vsel %vm6078, %v8205, %v8538
        %v9230 = vsel %vm6078, %v8207, %v8540
        %v9231 = vsel %vm6078, %v8209, %v8542
        %v9232 = vsel %vm6078, %v8211, %v8544
        %v9233 = vsel %vm6078, %v8214, %v8546
        %v9234 = vsel %vm6078, %v8216, %v8548
        %v9235 = vsel %vm6078, %v8218, %v8550
        %v9236 = vsel %vm6078, %v8220, %v8552
        %v9237 = vsel %vm6078, %v8222, %v8554
        %v9238 = vsel %vm6078, %v8224, %v8556
        %v9239 = vsel %vm6078, %v8226, %v8558
        %v9240 = vsel %vm6078, %v8228, %v8560
        %v9241 = vsel %vm6078, %v8231, %v8562
        %v9242 = vsel %vm6078, %v8233, %v8564
        %v9243 = vsel %vm6078, %v8235, %v8566
        %v9244 = vsel %vm6078, %v8237, %v8568
        %v9245 = vsel %vm6078, %v8239, %v8570
        %v9246 = vsel %vm6078, %v8241, %v8572
        %v9247 = vsel %vm6078, %v8243, %v8574
        %v9248 = vsel %vm6078, %v8245, %v8576
        %v9249 = vsel %vm6078, %v8248, %v8578
        %v9250 = vsel %vm6078, %v8250, %v8580
        %v9251 = vsel %vm6078, %v8252, %v8582
        %v9252 = vsel %vm6078, %v8254, %v8584
        %v9253 = vsel %vm6078, %v8256, %v8586
        %v9254 = vsel %vm6078, %v8258, %v8588
        %v9255 = vsel %vm6078, %v8260, %v8590
        %v9256 = vsel %vm6078, %v8262, %v8592
        %v9257 = vsel %vm6078, %v8265, %v8594
        %v9258 = vsel %vm6078, %v8267, %v8596
        %v9259 = vsel %vm6078, %v8269, %v8598
        %v9260 = vsel %vm6078, %v8271, %v8600
        %v9261 = vsel %vm6078, %v8273, %v8602
        %v9262 = vsel %vm6078, %v8275, %v8604
        %v9263 = vsel %vm6078, %v8277, %v8606
        %v9264 = vsel %vm6078, %v8279, %v8608
        %v9265 = vsel %vm6078, %v8282, %v8610
        %v9266 = vsel %vm6078, %v8284, %v8612
        %v9267 = vsel %vm6078, %v8286, %v8614
        %v9268 = vsel %vm6078, %v8288, %v8616
        %v9269 = vsel %vm6078, %v8290, %v8618
        %v9270 = vsel %vm6078, %v8292, %v8620
        %v9271 = vsel %vm6078, %v8294, %v8622
        %v9272 = vsel %vm6078, %v8296, %v8624
        %v9273 = vsel %vm6208, %v9209, %v8826
        %v9274 = vsel %vm6208, %v9210, %v8828
        %v9275 = vsel %vm6208, %v9211, %v8830
        %v9276 = vsel %vm6208, %v9212, %v8832
        %v9277 = vsel %vm6208, %v9213, %v8834
        %v9278 = vsel %vm6208, %v9214, %v8836
        %v9279 = vsel %vm6208, %v9215, %v8838
        %v9280 = vsel %vm6208, %v9216, %v8840
        %v9281 = vsel %vm6208, %v9217, %v8842
        %v9282 = vsel %vm6208, %v9218, %v8844
        %v9283 = vsel %vm6208, %v9219, %v8846
        %v9284 = vsel %vm6208, %v9220, %v8848
        %v9285 = vsel %vm6208, %v9221, %v8850
        %v9286 = vsel %vm6208, %v9222, %v8852
        %v9287 = vsel %vm6208, %v9223, %v8854
        %v9288 = vsel %vm6208, %v9224, %v8856
        %v9289 = vsel %vm6208, %v9225, %v8858
        %v9290 = vsel %vm6208, %v9226, %v8860
        %v9291 = vsel %vm6208, %v9227, %v8862
        %v9292 = vsel %vm6208, %v9228, %v8864
        %v9293 = vsel %vm6208, %v9229, %v8866
        %v9294 = vsel %vm6208, %v9230, %v8868
        %v9295 = vsel %vm6208, %v9231, %v8870
        %v9296 = vsel %vm6208, %v9232, %v8872
        %v9297 = vsel %vm6208, %v9233, %v8874
        %v9298 = vsel %vm6208, %v9234, %v8876
        %v9299 = vsel %vm6208, %v9235, %v8878
        %v9300 = vsel %vm6208, %v9236, %v8880
        %v9301 = vsel %vm6208, %v9237, %v8882
        %v9302 = vsel %vm6208, %v9238, %v8884
        %v9303 = vsel %vm6208, %v9239, %v8886
        %v9304 = vsel %vm6208, %v9240, %v8888
        %v9305 = vsel %vm6208, %v9241, %v8890
        %v9306 = vsel %vm6208, %v9242, %v8892
        %v9307 = vsel %vm6208, %v9243, %v8894
        %v9308 = vsel %vm6208, %v9244, %v8896
        %v9309 = vsel %vm6208, %v9245, %v8898
        %v9310 = vsel %vm6208, %v9246, %v8900
        %v9311 = vsel %vm6208, %v9247, %v8902
        %v9312 = vsel %vm6208, %v9248, %v8904
        %v9313 = vsel %vm6208, %v9249, %v8906
        %v9314 = vsel %vm6208, %v9250, %v8908
        %v9315 = vsel %vm6208, %v9251, %v8910
        %v9316 = vsel %vm6208, %v9252, %v8912
        %v9317 = vsel %vm6208, %v9253, %v8914
        %v9318 = vsel %vm6208, %v9254, %v8916
        %v9319 = vsel %vm6208, %v9255, %v8918
        %v9320 = vsel %vm6208, %v9256, %v8920
        %v9321 = vsel %vm6208, %v9257, %v8922
        %v9322 = vsel %vm6208, %v9258, %v8924
        %v9323 = vsel %vm6208, %v9259, %v8926
        %v9324 = vsel %vm6208, %v9260, %v8928
        %v9325 = vsel %vm6208, %v9261, %v8930
        %v9326 = vsel %vm6208, %v9262, %v8932
        %v9327 = vsel %vm6208, %v9263, %v8934
        %v9328 = vsel %vm6208, %v9264, %v8936
        %v9329 = vsel %vm6208, %v9265, %v8938
        %v9330 = vsel %vm6208, %v9266, %v8940
        %v9331 = vsel %vm6208, %v9267, %v8942
        %v9332 = vsel %vm6208, %v9268, %v8944
        %v9333 = vsel %vm6208, %v9269, %v8946
        %v9334 = vsel %vm6208, %v9270, %v8948
        %v9335 = vsel %vm6208, %v9271, %v8950
        %v9336 = vsel %vm6208, %v9272, %v8952
        %v9337 = vld [vmem:[%s5] sm:$0xff]
        %v9338 = vld [vmem:[%s5 + $0x8] sm:$0xff]
        %v9339 = vld [vmem:[%s5 + $0x10] sm:$0xff]
        %v9340 = vld [vmem:[%s5 + $0x18] sm:$0xff]
        %v9341 = vpack.c.bf16 %v9146, %v9145
        %v9342 = vpack.c.bf16 %v9274, %v9273
        %v9343 = vpack.c.bf16 %v9148, %v9147
        %v9344 = vpack.c.bf16 %v9276, %v9275
        %v9345 = vpack.c.bf16 %v9150, %v9149
        %v9346 = vpack.c.bf16 %v9278, %v9277
        %v9347 = vpack.c.bf16 %v9152, %v9151
        %v9348 = vpack.c.bf16 %v9280, %v9279
        %v9349 = vpack.c.bf16 %v9154, %v9153
        %v9350 = vpack.c.bf16 %v9282, %v9281
        %v9351 = vpack.c.bf16 %v9156, %v9155
        %v9352 = vpack.c.bf16 %v9284, %v9283
        %v9353 = vpack.c.bf16 %v9158, %v9157
        %v9354 = vpack.c.bf16 %v9286, %v9285
        %v9355 = vpack.c.bf16 %v9160, %v9159
        %v9356 = vpack.c.bf16 %v9288, %v9287
        %v9357 = vpack.c.bf16 %v9162, %v9161
        %v9358 = vpack.c.bf16 %v9290, %v9289
        %v9359 = vpack.c.bf16 %v9164, %v9163
        %v9360 = vpack.c.bf16 %v9292, %v9291
        %v9361 = vpack.c.bf16 %v9166, %v9165
        %v9362 = vpack.c.bf16 %v9294, %v9293
        %v9363 = vpack.c.bf16 %v9168, %v9167
        %v9364 = vpack.c.bf16 %v9296, %v9295
        %v9365 = vpack.c.bf16 %v9170, %v9169
        %v9366 = vpack.c.bf16 %v9298, %v9297
        %v9367 = vpack.c.bf16 %v9172, %v9171
        %v9368 = vpack.c.bf16 %v9300, %v9299
        %v9369 = vpack.c.bf16 %v9174, %v9173
        %v9370 = vpack.c.bf16 %v9302, %v9301
        %v9371 = vpack.c.bf16 %v9176, %v9175
        %v9372 = vpack.c.bf16 %v9304, %v9303
        %v9373 = vpack.c.bf16 %v9178, %v9177
        %v9374 = vpack.c.bf16 %v9306, %v9305
        %v9375 = vpack.c.bf16 %v9180, %v9179
        %v9376 = vpack.c.bf16 %v9308, %v9307
        %v9377 = vpack.c.bf16 %v9182, %v9181
        %v9378 = vpack.c.bf16 %v9310, %v9309
        %v9379 = vpack.c.bf16 %v9184, %v9183
        %v9380 = vpack.c.bf16 %v9312, %v9311
        %v9381 = vpack.c.bf16 %v9186, %v9185
        %v9382 = vpack.c.bf16 %v9314, %v9313
        %v9383 = vpack.c.bf16 %v9188, %v9187
        %v9384 = vpack.c.bf16 %v9316, %v9315
        %v9385 = vpack.c.bf16 %v9190, %v9189
        %v9386 = vpack.c.bf16 %v9318, %v9317
        %v9387 = vpack.c.bf16 %v9192, %v9191
        %v9388 = vpack.c.bf16 %v9320, %v9319
        %v9389 = vpack.c.bf16 %v9194, %v9193
        %v9390 = vpack.c.bf16 %v9322, %v9321
        %v9391 = vpack.c.bf16 %v9196, %v9195
        %v9392 = vpack.c.bf16 %v9324, %v9323
        %v9393 = vpack.c.bf16 %v9198, %v9197
        %v9394 = vpack.c.bf16 %v9326, %v9325
        %v9395 = vpack.c.bf16 %v9200, %v9199
        %v9396 = vpack.c.bf16 %v9328, %v9327
        %v9397 = vpack.c.bf16 %v9202, %v9201
        %v9398 = vpack.c.bf16 %v9330, %v9329
        %v9399 = vpack.c.bf16 %v9204, %v9203
        %v9400 = vpack.c.bf16 %v9332, %v9331
        %v9401 = vpack.c.bf16 %v9206, %v9205
        %v9402 = vpack.c.bf16 %v9334, %v9333
        %v9403 = vpack.c.bf16 %v9208, %v9207
        %v9404 = vpack.c.bf16 %v9336, %v9335
        %v9405 = vld [vmem:[%s6] sm:$0xff]
        %v9406 = vld [vmem:[%s6 + $0x8] sm:$0xff]
        %v9407 = vld [vmem:[%s6 + $0x10] sm:$0xff]
        %v9408 = vld [vmem:[%s6 + $0x18] sm:$0xff]
        %9410 = vset.pattern.permute.xlu0 0
        %9411 = vperm.xlu0 %9410, %v9405
        %v9412 = vpop.permute.xlu0 %9411
        %9415 = vset.pattern.permute.xlu0 0
        %9416 = vperm.xlu0 %9415, %v9406
        %v9417 = vpop.permute.xlu0 %9416
        %9420 = vset.pattern.permute.xlu0 0
        %9421 = vperm.xlu0 %9420, %v9407
        %v9422 = vpop.permute.xlu0 %9421
        %9425 = vset.pattern.permute.xlu0 0
        %9426 = vperm.xlu0 %9425, %v9408
        %v9427 = vpop.permute.xlu0 %9426
        %v9433 = vunpack.c.l.b16 %v9337
        %v9434 = vunpack.c.h.b16 %v9337
        %v9435 = vunpack.c.l.b16 %v9338
        %v9436 = vunpack.c.h.b16 %v9338
        %v9437 = vunpack.c.l.b16 %v9339
        %v9438 = vunpack.c.h.b16 %v9339
        %v9439 = vunpack.c.l.b16 %v9340
        %v9440 = vunpack.c.h.b16 %v9340
        %v9441 = vpack.c.b16 %v9435, %v9433
        %v9442 = vpack.c.b16 %v9436, %v9434
        %v9443 = vpack.c.b16 %v9439, %v9437
        %v9444 = vpack.c.b16 %v9440, %v9438
        %v9448 = vsel %vm6338, %v9442, 0
        %v9451 = vsel %vm6338, %v9444, 0
        %v9454 = vsel %vm6338, %v9342, 0
        %v9457 = vsel %vm6338, %v9344, 0
        %v9460 = vsel %vm6338, %v9346, 0
        %v9463 = vsel %vm6338, %v9348, 0
        %v9466 = vsel %vm6338, %v9350, 0
        %v9469 = vsel %vm6338, %v9352, 0
        %v9472 = vsel %vm6338, %v9354, 0
        %v9475 = vsel %vm6338, %v9356, 0
        %v9478 = vsel %vm6338, %v9358, 0
        %v9481 = vsel %vm6338, %v9360, 0
        %v9484 = vsel %vm6338, %v9362, 0
        %v9487 = vsel %vm6338, %v9364, 0
        %v9490 = vsel %vm6338, %v9366, 0
        %v9493 = vsel %vm6338, %v9368, 0
        %v9496 = vsel %vm6338, %v9370, 0
        %v9499 = vsel %vm6338, %v9372, 0
        %v9502 = vsel %vm6338, %v9374, 0
        %v9505 = vsel %vm6338, %v9376, 0
        %v9508 = vsel %vm6338, %v9378, 0
        %v9511 = vsel %vm6338, %v9380, 0
        %v9514 = vsel %vm6338, %v9382, 0
        %v9517 = vsel %vm6338, %v9384, 0
        %v9520 = vsel %vm6338, %v9386, 0
        %v9523 = vsel %vm6338, %v9388, 0
        %v9526 = vsel %vm6338, %v9390, 0
        %v9529 = vsel %vm6338, %v9392, 0
        %v9532 = vsel %vm6338, %v9394, 0
        %v9535 = vsel %vm6338, %v9396, 0
        %v9538 = vsel %vm6338, %v9398, 0
        %v9541 = vsel %vm6338, %v9400, 0
        %v9544 = vsel %vm6338, %v9402, 0
        %v9547 = vsel %vm6338, %v9404, 0
        %9549 = vmatpush.bf16.xpose.msra.mxu0 %v9355
        %9550 = vmatpush.bf16.xpose.msra.mxu0 %v9353
        %9551 = vmatpush.bf16.xpose.msra.mxu0 %v9351
        %9552 = vmatpush.bf16.xpose.msra.mxu0 %v9349
        %9553 = vmatpush.bf16.xpose.msra.mxu0 %v9347
        %9554 = vmatpush.bf16.xpose.msra.mxu0 %v9345
        %9555 = vmatpush.bf16.xpose.msra.mxu0 %v9343
        %9556 = vmatpush.bf16.xpose.msra.mxu0 %v9341
        %9557 = vmatmul.bf16.gmra.mxu0 %v9441
        %v9558 = vpop.f32.mrf.mxu0
        %v9559 = vadd.f32 %v9412, %v9558
        %v9560 = vpop.f32.mrf.mxu0
        %v9561 = vadd.f32 %v9417, %v9560
        %9562 = vmatmul.bf16.gmra.mxu0 %v9443
        %v9563 = vpop.f32.mrf.mxu0
        %v9564 = vadd.f32 %v9422, %v9563
        %v9565 = vpop.f32.mrf.mxu0
        %v9566 = vadd.f32 %v9427, %v9565
        %9567 = vdwg.mxu0
        %9568 = vmatpush.bf16.xpose.msra.mxu0 %v9475
        %9569 = vmatpush.bf16.xpose.msra.mxu0 %v9472
        %9570 = vmatpush.bf16.xpose.msra.mxu0 %v9469
        %9571 = vmatpush.bf16.xpose.msra.mxu0 %v9466
        %9572 = vmatpush.bf16.xpose.msra.mxu0 %v9463
        %9573 = vmatpush.bf16.xpose.msra.mxu0 %v9460
        %9574 = vmatpush.bf16.xpose.msra.mxu0 %v9457
        %9575 = vmatpush.bf16.xpose.msra.mxu0 %v9454
        %9576 = vmatmul.bf16.gmra.mxu0 %v9448
        %v9577 = vpop.f32.mrf.mxu0
        %v9578 = vadd.f32 %v9559, %v9577
        %v9579 = vpop.f32.mrf.mxu0
        %v9580 = vadd.f32 %v9561, %v9579
        %9581 = vmatmul.bf16.gmra.mxu0 %v9451
        %v9582 = vpop.f32.mrf.mxu0
        %v9583 = vadd.f32 %v9564, %v9582
        %v9584 = vpop.f32.mrf.mxu0
        %v9585 = vadd.f32 %v9566, %v9584
        %9586 = vdwg.mxu0
        %9587 = vmatpush.bf16.xpose.msra.mxu0 %v9371
        %9588 = vmatpush.bf16.xpose.msra.mxu0 %v9369
        %9589 = vmatpush.bf16.xpose.msra.mxu0 %v9367
        %9590 = vmatpush.bf16.xpose.msra.mxu0 %v9365
        %9591 = vmatpush.bf16.xpose.msra.mxu0 %v9363
        %9592 = vmatpush.bf16.xpose.msra.mxu0 %v9361
        %9593 = vmatpush.bf16.xpose.msra.mxu0 %v9359
        %9594 = vmatpush.bf16.xpose.msra.mxu0 %v9357
        %9595 = vmatmul.bf16.gmra.mxu0 %v9441
        %v9596 = vpop.f32.mrf.mxu0
        %v9597 = vadd.f32 %v9412, %v9596
        %v9598 = vpop.f32.mrf.mxu0
        %v9599 = vadd.f32 %v9417, %v9598
        %9600 = vmatmul.bf16.gmra.mxu0 %v9443
        %v9601 = vpop.f32.mrf.mxu0
        %v9602 = vadd.f32 %v9422, %v9601
        %v9603 = vpop.f32.mrf.mxu0
        %v9604 = vadd.f32 %v9427, %v9603
        %9605 = vdwg.mxu0
        %9606 = vmatpush.bf16.xpose.msra.mxu0 %v9499
        %9607 = vmatpush.bf16.xpose.msra.mxu0 %v9496
        %9608 = vmatpush.bf16.xpose.msra.mxu0 %v9493
        %9609 = vmatpush.bf16.xpose.msra.mxu0 %v9490
        %9610 = vmatpush.bf16.xpose.msra.mxu0 %v9487
        %9611 = vmatpush.bf16.xpose.msra.mxu0 %v9484
        %9612 = vmatpush.bf16.xpose.msra.mxu0 %v9481
        %9613 = vmatpush.bf16.xpose.msra.mxu0 %v9478
        %9614 = vmatmul.bf16.gmra.mxu0 %v9448
        %v9615 = vpop.f32.mrf.mxu0
        %v9616 = vadd.f32 %v9597, %v9615
        %v9617 = vpop.f32.mrf.mxu0
        %v9618 = vadd.f32 %v9599, %v9617
        %9619 = vmatmul.bf16.gmra.mxu0 %v9451
        %v9620 = vpop.f32.mrf.mxu0
        %v9621 = vadd.f32 %v9602, %v9620
        %v9622 = vpop.f32.mrf.mxu0
        %v9623 = vadd.f32 %v9604, %v9622
        %9624 = vdwg.mxu0
        %9625 = vmatpush.bf16.xpose.msra.mxu0 %v9387
        %9626 = vmatpush.bf16.xpose.msra.mxu0 %v9385
        %9627 = vmatpush.bf16.xpose.msra.mxu0 %v9383
        %9628 = vmatpush.bf16.xpose.msra.mxu0 %v9381
        %9629 = vmatpush.bf16.xpose.msra.mxu0 %v9379
        %9630 = vmatpush.bf16.xpose.msra.mxu0 %v9377
        %9631 = vmatpush.bf16.xpose.msra.mxu0 %v9375
        %9632 = vmatpush.bf16.xpose.msra.mxu0 %v9373
        %9633 = vmatmul.bf16.gmra.mxu0 %v9441
        %v9634 = vpop.f32.mrf.mxu0
        %v9635 = vadd.f32 %v9412, %v9634
        %v9636 = vpop.f32.mrf.mxu0
        %v9637 = vadd.f32 %v9417, %v9636
        %9638 = vmatmul.bf16.gmra.mxu0 %v9443
        %v9639 = vpop.f32.mrf.mxu0
        %v9640 = vadd.f32 %v9422, %v9639
        %v9641 = vpop.f32.mrf.mxu0
        %v9642 = vadd.f32 %v9427, %v9641
        %9643 = vdwg.mxu0
        %9644 = vmatpush.bf16.xpose.msra.mxu0 %v9523
        %9645 = vmatpush.bf16.xpose.msra.mxu0 %v9520
        %9646 = vmatpush.bf16.xpose.msra.mxu0 %v9517
        %9647 = vmatpush.bf16.xpose.msra.mxu0 %v9514
        %9648 = vmatpush.bf16.xpose.msra.mxu0 %v9511
        %9649 = vmatpush.bf16.xpose.msra.mxu0 %v9508
        %9650 = vmatpush.bf16.xpose.msra.mxu0 %v9505
        %9651 = vmatpush.bf16.xpose.msra.mxu0 %v9502
        %9652 = vmatmul.bf16.gmra.mxu0 %v9448
        %v9653 = vpop.f32.mrf.mxu0
        %v9654 = vadd.f32 %v9635, %v9653
        %v9655 = vpop.f32.mrf.mxu0
        %v9656 = vadd.f32 %v9637, %v9655
        %9657 = vmatmul.bf16.gmra.mxu0 %v9451
        %v9658 = vpop.f32.mrf.mxu0
        %v9659 = vadd.f32 %v9640, %v9658
        %v9660 = vpop.f32.mrf.mxu0
        %v9661 = vadd.f32 %v9642, %v9660
        %9662 = vdwg.mxu0
        %9663 = vmatpush.bf16.xpose.msra.mxu0 %v9403
        %9664 = vmatpush.bf16.xpose.msra.mxu0 %v9401
        %9665 = vmatpush.bf16.xpose.msra.mxu0 %v9399
        %9666 = vmatpush.bf16.xpose.msra.mxu0 %v9397
        %9667 = vmatpush.bf16.xpose.msra.mxu0 %v9395
        %9668 = vmatpush.bf16.xpose.msra.mxu0 %v9393
        %9669 = vmatpush.bf16.xpose.msra.mxu0 %v9391
        %9670 = vmatpush.bf16.xpose.msra.mxu0 %v9389
        %9671 = vmatmul.bf16.gmra.mxu0 %v9441
        %v9672 = vpop.f32.mrf.mxu0
        %v9673 = vadd.f32 %v9412, %v9672
        %v9674 = vpop.f32.mrf.mxu0
        %v9675 = vadd.f32 %v9417, %v9674
        %9676 = vmatmul.bf16.gmra.mxu0 %v9443
        %v9677 = vpop.f32.mrf.mxu0
        %v9678 = vadd.f32 %v9422, %v9677
        %v9679 = vpop.f32.mrf.mxu0
        %v9680 = vadd.f32 %v9427, %v9679
        %9681 = vdwg.mxu0
        %9682 = vmatpush.bf16.xpose.msra.mxu0 %v9547
        %9683 = vmatpush.bf16.xpose.msra.mxu0 %v9544
        %9684 = vmatpush.bf16.xpose.msra.mxu0 %v9541
        %9685 = vmatpush.bf16.xpose.msra.mxu0 %v9538
        %9686 = vmatpush.bf16.xpose.msra.mxu0 %v9535
        %9687 = vmatpush.bf16.xpose.msra.mxu0 %v9532
        %9688 = vmatpush.bf16.xpose.msra.mxu0 %v9529
        %9689 = vmatpush.bf16.xpose.msra.mxu0 %v9526
        %9690 = vmatmul.bf16.gmra.mxu0 %v9448
        %v9691 = vpop.f32.mrf.mxu0
        %v9692 = vadd.f32 %v9673, %v9691
        %v9693 = vpop.f32.mrf.mxu0
        %v9694 = vadd.f32 %v9675, %v9693
        %9695 = vmatmul.bf16.gmra.mxu0 %v9451
        %v9696 = vpop.f32.mrf.mxu0
        %v9697 = vadd.f32 %v9678, %v9696
        %v9698 = vpop.f32.mrf.mxu0
        %v9699 = vadd.f32 %v9680, %v9698
        %9700 = vdwg.mxu0
        %9701 = vst [vmem:[%s269] sm:$0xff] %v9578
        %9702 = vst [vmem:[%s269 + $0x8] sm:$0xff] %v9616
        %9703 = vst [vmem:[%s269 + $0x10] sm:$0xff] %v9654
        %9704 = vst [vmem:[%s269 + $0x18] sm:$0xff] %v9692
        %9705 = vst [vmem:[%s269 + $0x20] sm:$0xff] %v9580
        %9706 = vst [vmem:[%s269 + $0x28] sm:$0xff] %v9618
        %9707 = vst [vmem:[%s269 + $0x30] sm:$0xff] %v9656
        %9708 = vst [vmem:[%s269 + $0x38] sm:$0xff] %v9694
        %9709 = vst [vmem:[%s269 + $0x40] sm:$0xff] %v9583
        %9710 = vst [vmem:[%s269 + $0x48] sm:$0xff] %v9621
        %9711 = vst [vmem:[%s269 + $0x50] sm:$0xff] %v9659
        %9712 = vst [vmem:[%s269 + $0x58] sm:$0xff] %v9697
        %9713 = vst [vmem:[%s269 + $0x60] sm:$0xff] %v9585
        %9714 = vst [vmem:[%s269 + $0x68] sm:$0xff] %v9623
        %9715 = vst [vmem:[%s269 + $0x70] sm:$0xff] %v9661
        %9716 = vst [vmem:[%s269 + $0x78] sm:$0xff] %v9699
        %s9717 = sand.u32 %s181, 1
        %s9718 = scalar_lea.sflag [#allocation3], %s9717
        %s9719 = sand.u32 %s181, 1
        %s9720 = smul.addr %s9719, 128
        %s9721 = scalar_lea.vmem [#allocation2], %s9720
        // Predicated region
        $region49: #{tpu_custom_call.1} parent=47 // pred_check
          %p9722 = pneg %p191
        $region50: #{tpu_custom_call.1} parent=47 // pred_check_branch
          %9724 = sbr.rel (%p9722) target = $region52
        $region51: #{tpu_custom_call.1} parent=47 // pred_region
          %s9725 = smul.u32 4, %s21
          %9727 = vsyncadd %s9718, 0
          %s9728 = smul.addr %s9725, 8
          %s9729 = scalar_lea.hbm %s7, %s9728
          %s9730 = sshll.u32 %s9721, 4
          %s9731 = int_to_ptr.vmem [resolvable:$true] %s9730
          %s9732 = sshll.u32 %s9729, 4
          %s9733 = int_to_ptr.hbm [resolvable:$true] %s9732
          %9738 = dma.vmem_to_hbm [thread:$0]  %s9731, 2048, %s9733, %s9718, 512, 1024, 32
        $region52: #{tpu_custom_call.1} parent=47 // pred_fallthru
          _
      $region48: #{tpu_custom_call.1} parent=5 // pred_fallthru
        _
      %p9739 = scmp.le.s32.totalorder 2, %s16
      // Predicated region
      $region53: #{tpu_custom_call.1} parent=5 // pred_check
        %p9740 = pneg %p9739
      $region54: #{tpu_custom_call.1} parent=5 // pred_check_branch
        %9742 = sbr.rel (%p9740) target = $region56
      $region55: #{tpu_custom_call.1} parent=5 // pred_region
        %s9743 = ssub.s32 %s16, 2
        // Predicated region
        $region57: #{tpu_custom_call.1} parent=55 // pred_check
          %p9744 = pneg %p197
        $region58: #{tpu_custom_call.1} parent=55 // pred_check_branch
          %9746 = sbr.rel (%p9744) target = $region60
        $region59: #{tpu_custom_call.1} parent=55 // pred_region
          %s9747 = sand.u32 %s182, 1
          %s9748 = scalar_lea.sflag [#allocation3], %s9747
          %s9749 = sand.u32 %s182, 1
          %s9750 = smul.addr %s9749, 128
          %s9751 = scalar_lea.vmem [#allocation2], %s9750
          %9753 = dma.done %s9748, 2048
        $region60: #{tpu_custom_call.1} parent=55 // pred_fallthru
          _
      $region56: #{tpu_custom_call.1} parent=5 // pred_fallthru
        _
    $region6: #{tpu_custom_call.1} parent=1 // loop_footer
      %s20 = sadd.s32 1, %s16
    $region7: #{tpu_custom_call.1} parent=1 // loop_footer_branch
      %15 = sbr.rel target = $region3
    $region8: #{tpu_custom_call.1} parent=1 // loop_exit
      _
    %9754 = vsyncpa [#allocation3], 1
    %s9755 = scalar_lea.sflag [#allocation3], 1
    %9756 = vsyncpa %s9755, 1

</llo_original>
